<compile_context>
chip_gen: v5e
topology: v5e:2x2
jax: 0.10.0
libtpu: 0.0.40
codegen_flags: <defaults>
</compile_context>

<pallas_src>
import functools

import jax
import jax.numpy as jnp
from jax import lax
from jax.experimental import pallas as pl
from jax.experimental.pallas import tpu as pltpu

BN_EPS = 1e-5
COS_EPS = 1e-8
LANE = 128

# bf16 MXU operands (f32 accumulation + f32 BN/loss reductions) per the perf
# review -- big matmul win on every TPU generation.  Set to jnp.float32 for
# bit-exact PyTorch-f32 forward semantics.
MATMUL_DTYPE = jnp.bfloat16
_SUBLANE = 16 if MATMUL_DTYPE == jnp.bfloat16 else 8


def _rup(n, m=LANE):
    return ((n + m - 1) // m) * m


def _full_block(shape):
    """BlockSpec covering the whole array, for a grid=(1,) call."""
    nd = len(shape)
    return pl.BlockSpec(shape, lambda i, nd=nd: (0,) * nd)


# ---------------------------------------------------------------------------
# Fused Pallas kernel: backbone matmul + MLPs (per-view BN) + SimSiam loss
# ---------------------------------------------------------------------------
def simsiam_fused_kernel(*refs, batch, batch_pad, hw, layer_flags):
    """refs layout:
         [0] patches (2*Bp*HW, KP)  flattened im2col patches of both views
         [1] conv_w  (KP, D)        flattened 3x3 conv weight (lane-padded)
         [2] conv_b  (1, D)         conv bias (f32)
         then 2 refs per MLP layer:
             w   (Din, Dout)        weight (MATMUL_DTYPE, lane-padded)
             aux (2, Dout)          [gamma; beta] for BN layers, [bias; 0] else
         [-1] loss out (1, 1)
       Static config: batch (real per-view batch), batch_pad (sublane-padded
       per-view batch), hw (H*W), layer_flags tuple of
       (use_bn, use_relu, is_projector_out).
    """
    f32 = jnp.float32
    patches_ref, conv_w_ref, conv_b_ref = refs[0], refs[1], refs[2]
    out_ref = refs[-1]
    layer_refs = refs[3:-1]
    nb = 2 * batch_pad
    need_mask = batch_pad != batch            # static Python bool
    inv_b = 1.0 / batch                       # real-batch divisor (pads are 0)

    valid = None
    if need_mask:
        # (1, Bp, 1) 0/1 mask of real rows within each view slab.
        ridx = lax.broadcasted_iota(jnp.int32, (1, batch_pad, 1), 1)
        valid = (ridx < batch).astype(f32)

    # ---- backbone: ONE long-M matmul over all patch rows + ReLU + GAP ------
    y = jnp.dot(patches_ref[...], conv_w_ref[...], preferred_element_type=f32)
    y = jnp.maximum(y + conv_b_ref[...].astype(f32), 0.0)        # (2Bp*HW, D)
    d0 = y.shape[-1]
    h = jnp.sum(y.reshape(nb, hw, d0), axis=1) * (1.0 / hw)      # GAP (2Bp, D)
    h3 = h.reshape(2, batch_pad, d0)                             # (view,Bp,D)
    if need_mask:
        h3 = h3 * valid

    # ---- projector + predictor MLP chain, VMEM-resident activations --------
    z3 = None
    for li, (use_bn, use_relu, is_proj_out) in enumerate(layer_flags):
        w_ref, aux_ref = layer_refs[2 * li], layer_refs[2 * li + 1]
        din = h3.shape[-1]
        dout = w_ref.shape[-1]
        y = jnp.dot(h3.reshape(nb, din).astype(MATMUL_DTYPE), w_ref[...],
                    preferred_element_type=f32)
        y3 = y.reshape(2, batch_pad, dout)
        if use_bn:
            # training-mode BN, biased variance, per-view stats via the leading
            # view axis: one reduction pass + one broadcast affine.  Linear
            # bias is omitted entirely (cancels exactly under BN).
            gamma = aux_ref[0:1, :].astype(f32).reshape(1, 1, dout)
            beta = aux_ref[1:2, :].astype(f32).reshape(1, 1, dout)
            mu = jnp.sum(y3, axis=1, keepdims=True) * inv_b           # (2,1,D)
            ex2 = jnp.sum(y3 * y3, axis=1, keepdims=True) * inv_b
            var = jnp.maximum(ex2 - mu * mu, 0.0)
            scale = gamma * lax.rsqrt(var + BN_EPS)
            shift = beta - mu * scale
            y3 = y3 * scale + shift
        else:
            y3 = y3 + aux_ref[0:1, :].astype(f32).reshape(1, 1, dout)  # bias
        if use_relu:
            y3 = jnp.maximum(y3, 0.0)
        if need_mask and use_bn:
            y3 = y3 * valid        # keep zero-padded batch rows exactly zero
        h3 = y3
        if is_proj_out:
            z3 = h3                # projector output z
    pred3 = h3                     # predictor output p

    # ---- loss = 1 - 0.5*(mean cos(p1, z2) + mean cos(p2, z1)) --------------
    # Static per-view slices (no concatenate); padded rows contribute exactly
    # 0 to the sums because the z pad rows are exactly zero.
    eps2 = COS_EPS * COS_EPS

    def cos_rows(p, z):
        num = jnp.sum(p * z, axis=-1, keepdims=True)
        pp = jnp.sum(p * p, axis=-1, keepdims=True)
        zz = jnp.sum(z * z, axis=-1, keepdims=True)
        return num * (lax.rsqrt(jnp.maximum(pp, eps2)) *
                      lax.rsqrt(jnp.maximum(zz, eps2)))

    cos = cos_rows(pred3[0], z3[1]) + cos_rows(pred3[1], z3[0])    # (Bp, 1)
    total = jnp.sum(cos, axis=0, keepdims=True)                    # (1, 1)
    out_ref[...] = 1.0 - (0.5 * inv_b) * total


# ---------------------------------------------------------------------------
# Host-side glue: im2col, parameter init (lane-padded), forward wrapper
# ---------------------------------------------------------------------------
def _im2col_nchw(x):
    """(B, C, H, W) -> (B, H*W, C*9) patches of a 3x3 / pad=1 conv.

    # TODO(synk): at realistic image sizes do the conv in-kernel as 9 shifted
    # matmul-accumulates (or via lax.conv outside) instead of host im2col,
    # which pushes ~9x the input volume through HBM.  Negligible at toy sizes.
    """
    B, C, H, W = x.shape
    xp = jnp.pad(x, ((0, 0), (0, 0), (1, 1), (1, 1)))
    pats = jnp.stack(
        [xp[:, :, i:i + H, j:j + W] for i in range(3) for j in range(3)],
        axis=2)                                            # (B, C, 9, H, W)
    return pats.transpose(0, 3, 4, 1, 2).reshape(B, H * W, C * 9)


def init_mlp(key, in_dim, hidden, batchnorm_last=False):
    """SimSiam-style MLP params, zero-padded so every dim is a multiple of 128.
    BN layers carry NO linear bias (it cancels under BN).  Each layer gets one
    (2, Dout) aux array: [gamma; beta] for BN layers, [bias; 0] otherwise.
    Padded lanes of gamma/beta/bias/weights are zero -> padded lanes of all
    activations stay exactly zero through BN, ReLU and the loss.
    """
    hidden = (hidden,) if isinstance(hidden, int) else tuple(hidden)
    layers, flags = [], []
    prev = in_dim
    for i, hdim in enumerate(hidden):
        key, kw = jax.random.split(key)
        last = i == len(hidden) - 1
        use_bn = (not last) or batchnorm_last
        use_relu = not last
        din_p, dout_p = _rup(prev), _rup(hdim)
        w = jax.random.normal(kw, (prev, hdim), jnp.float32) / jnp.sqrt(prev)
        w = jnp.pad(w, ((0, din_p - prev), (0, dout_p - hdim)))
        if use_bn:
            row0 = jnp.pad(jnp.ones((1, hdim), jnp.float32),
                           ((0, 0), (0, dout_p - hdim)))          # gamma
        else:
            row0 = jnp.zeros((1, dout_p), jnp.float32)            # bias
        aux = jnp.concatenate([row0, jnp.zeros((1, dout_p), jnp.float32)], 0)
        layers.append(dict(w=w.astype(MATMUL_DTYPE), aux=aux))
        flags.append((use_bn, use_relu))
        prev = hdim
    return layers, flags


def init_simsiam(key, in_ch, repre_dim, projector_hidden, predictor_hidden):
    """Returns (params: arrays-only pytree, config: static Python structure)."""
    k_conv, k_proj, k_pred = jax.random.split(key, 3)
    projector_hidden = ((projector_hidden,) if isinstance(projector_hidden, int)
                        else tuple(projector_hidden))
    K = in_ch * 9
    KP, DP = _rup(K), _rup(repre_dim)
    w_conv = jax.random.normal(k_conv, (repre_dim, in_ch, 3, 3),
                               jnp.float32) / jnp.sqrt(K)
    w_flat = jnp.pad(w_conv.reshape(repre_dim, K).T,        # (K, repre_dim)
                     ((0, KP - K), (0, DP - repre_dim))).astype(MATMUL_DTYPE)

    proj_layers, proj_flags = init_mlp(k_proj, repre_dim, projector_hidden,
                                       batchnorm_last=True)
    proj_out = projector_hidden[-1]
    pred_hidden = predictor_hidden if predictor_hidden else projector_hidden
    pred_layers, pred_flags = init_mlp(k_pred, proj_out, pred_hidden,
                                       batchnorm_last=False)

    params = dict(conv_w=w_flat,
                  conv_b=jnp.zeros((1, DP), jnp.float32),
                  layers=proj_layers + pred_layers)
    n_proj = len(proj_flags)
    layer_flags = tuple((bn, relu, idx == n_proj - 1)
                        for idx, (bn, relu) in enumerate(proj_flags + pred_flags))
    config = dict(layer_flags=layer_flags)
    return params, config


def simsiam_forward(params, x1, x2, *, config):
    B, C, H, W = x1.shape
    HW = H * W
    Bp = ((B + _SUBLANE - 1) // _SUBLANE) * _SUBLANE      # sublane-aligned batch
    KP = params["conv_w"].shape[0]
    K = C * 9

    def prep_view(x):
        p = _im2col_nchw(x)                               # (B, HW, C*9)
        return jnp.pad(p, ((0, Bp - B), (0, 0), (0, KP - K)))

    # both views (batch-padded) in one pass -> each weight fetched once.
    patches = jnp.concatenate([prep_view(x1), prep_view(x2)], axis=0)
    patches = patches.reshape(2 * Bp * HW, KP).astype(MATMUL_DTYPE)

    layer_arrays = []
    for lyr in params["layers"]:
        layer_arrays += [lyr["w"], lyr["aux"]]
    inputs = [patches, params["conv_w"], params["conv_b"]] + layer_arrays

    kernel = functools.partial(simsiam_fused_kernel,
                               batch=B, batch_pad=Bp, hw=HW,
                               layer_flags=config["layer_flags"])
    # grid=(1,): whole model fits one block at these sizes.
    # TODO(synk): for real SimSiam dims (D=2048, B>=256) the full-block design
    # exceeds VMEM (esp. v7x's 64 MiB): tile the MLP matmuls over K/N (256-wide
    # tiles for the 256-wide v6e/v7x MXU) with an accumulator scratch +
    # pl.when init/finalize, stream weights from HBM with double-buffered
    # make_async_copy, and add a leading "parallel" grid axis over the patch
    # rows so both v7x TensorCores are used.
    loss = pl.pallas_call(
        kernel,
        out_shape=jax.ShapeDtypeStruct((1, 1), jnp.float32),
        grid=(1,),
        in_specs=[_full_block(a.shape) for a in inputs],
        out_specs=pl.BlockSpec((1, 1), lambda i: (0, 0)),
        compiler_params=pltpu.CompilerParams(
            dimension_semantics=("arbitrary",),
            vmem_limit_bytes=48 * 1024 * 1024),
    )(*inputs)
    return loss[0, 0]


if __name__ == "__main__":
    key = jax.random.PRNGKey(0)
    k_params, k_x1, k_x2 = jax.random.split(key, 3)

    B, C, H, W = 2, 4, 16, 16
    repre_dim = 32
    projector_hidden = (64, 64, 64)
    predictor_hidden = (16, 64)

    params, config = init_simsiam(k_params, C, repre_dim,
                                  projector_hidden, predictor_hidden)
    x1 = jax.random.normal(k_x1, (B, C, H, W), jnp.float32)
    x2 = jax.random.normal(k_x2, (B, C, H, W), jnp.float32)

    fwd = jax.jit(functools.partial(simsiam_forward, config=config))
    loss = fwd(params, x1, x2)
    jax.block_until_ready(loss)
    assert loss.shape == () and bool(jnp.isfinite(loss))
    print("KERNEL_OK")
</pallas_src>

<mosaic_0001>
module attributes {stable_mosaic.version = 11 : i64} {
  func.func @simsiam_fused_kernel(%arg0: i32, %arg1: memref<8192x128xbf16, #tpu.memory_space<vmem>>, %arg2: memref<128x128xbf16, #tpu.memory_space<vmem>>, %arg3: memref<1x128xf32, #tpu.memory_space<vmem>>, %arg4: memref<128x128xbf16, #tpu.memory_space<vmem>>, %arg5: memref<2x128xf32, #tpu.memory_space<vmem>>, %arg6: memref<128x128xbf16, #tpu.memory_space<vmem>>, %arg7: memref<2x128xf32, #tpu.memory_space<vmem>>, %arg8: memref<128x128xbf16, #tpu.memory_space<vmem>>, %arg9: memref<2x128xf32, #tpu.memory_space<vmem>>, %arg10: memref<128x128xbf16, #tpu.memory_space<vmem>>, %arg11: memref<2x128xf32, #tpu.memory_space<vmem>>, %arg12: memref<128x128xbf16, #tpu.memory_space<vmem>>, %arg13: memref<2x128xf32, #tpu.memory_space<vmem>>, %arg14: memref<1x1xf32, #tpu.memory_space<vmem>>) attributes {dimension_semantics = [#tpu.dimension_semantics<arbitrary>], iteration_bounds = array<i64: 1>, scalar_prefetch = 0 : i64, scratch_operands = 0 : i64, tpu.core_type = #tpu.core_type<tc>, window_params = [{pipeline_mode = #tpu.pipeline_mode<synchronous>, transform_indices = @transform_0, window_bounds = array<i64: 8192, 128>}, {pipeline_mode = #tpu.pipeline_mode<synchronous>, transform_indices = @transform_1, window_bounds = array<i64: 128, 128>}, {pipeline_mode = #tpu.pipeline_mode<synchronous>, transform_indices = @transform_2, window_bounds = array<i64: 1, 128>}, {pipeline_mode = #tpu.pipeline_mode<synchronous>, transform_indices = @transform_3, window_bounds = array<i64: 128, 128>}, {pipeline_mode = #tpu.pipeline_mode<synchronous>, transform_indices = @transform_4, window_bounds = array<i64: 2, 128>}, {pipeline_mode = #tpu.pipeline_mode<synchronous>, transform_indices = @transform_5, window_bounds = array<i64: 128, 128>}, {pipeline_mode = #tpu.pipeline_mode<synchronous>, transform_indices = @transform_6, window_bounds = array<i64: 2, 128>}, {pipeline_mode = #tpu.pipeline_mode<synchronous>, transform_indices = @transform_7, window_bounds = array<i64: 128, 128>}, {pipeline_mode = #tpu.pipeline_mode<synchronous>, transform_indices = @transform_8, window_bounds = array<i64: 2, 128>}, {pipeline_mode = #tpu.pipeline_mode<synchronous>, transform_indices = @transform_9, window_bounds = array<i64: 128, 128>}, {pipeline_mode = #tpu.pipeline_mode<synchronous>, transform_indices = @transform_10, window_bounds = array<i64: 2, 128>}, {pipeline_mode = #tpu.pipeline_mode<synchronous>, transform_indices = @transform_11, window_bounds = array<i64: 128, 128>}, {pipeline_mode = #tpu.pipeline_mode<synchronous>, transform_indices = @transform_12, window_bounds = array<i64: 2, 128>}, {pipeline_mode = #tpu.pipeline_mode<synchronous>, transform_indices = @transform_13, window_bounds = array<i64: 1, 1>}]} {
    %0 = tpu.iota {dimensions = array<i32: 1>} : vector<1x16x1xi32>
    %c2_i32 = arith.constant 2 : i32
    %1 = vector.broadcast %c2_i32 : i32 to vector<1x16x1xi32>
    %2 = arith.cmpi slt, %0, %1 : vector<1x16x1xi32>
    %3 = arith.extui %2 : vector<1x16x1xi1> to vector<1x16x1xi32>
    %4 = arith.sitofp %3 : vector<1x16x1xi32> to vector<1x16x1xf32>
    %c0 = arith.constant 0 : index
    %c0_0 = arith.constant 0 : index
    %5 = vector.load %arg1[%c0, %c0_0] : memref<8192x128xbf16, #tpu.memory_space<vmem>>, vector<8192x128xbf16>
    %c0_1 = arith.constant 0 : index
    %c0_2 = arith.constant 0 : index
    %6 = vector.load %arg2[%c0_1, %c0_2] : memref<128x128xbf16, #tpu.memory_space<vmem>>, vector<128x128xbf16>
    %cst = arith.constant dense<0.000000e+00> : vector<8192x128xf32>
    %7 = tpu.matmul %5, %6, %cst {dimension_numbers = #tpu.dot_dimension_numbers<[1], [0], [0], [1], [0, 0, 1, 1], [], []>} : vector<8192x128xbf16>, vector<128x128xbf16>, vector<8192x128xf32> -> vector<8192x128xf32>
    %c0_3 = arith.constant 0 : index
    %c0_4 = arith.constant 0 : index
    %8 = vector.load %arg3[%c0_3, %c0_4] : memref<1x128xf32, #tpu.memory_space<vmem>>, vector<1x128xf32>
    %9 = vector.broadcast %8 : vector<1x128xf32> to vector<8192x128xf32>
    %10 = arith.addf %7, %9 : vector<8192x128xf32>
    %cst_5 = arith.constant 0.000000e+00 : f32
    %11 = vector.broadcast %cst_5 : f32 to vector<8192x128xf32>
    %12 = arith.maximumf %10, %11 : vector<8192x128xf32>
    %13 = vector.shape_cast %12 : vector<8192x128xf32> to vector<32x256x128xf32>
    %cst_6 = arith.constant dense<0.000000e+00> : vector<32x128xf32>
    %14 = vector.multi_reduction <add>, %13, %cst_6 [1] : vector<32x256x128xf32> to vector<32x128xf32>
    %cst_7 = arith.constant 3.906250e-03 : f32
    %15 = vector.broadcast %cst_7 : f32 to vector<32x128xf32>
    %16 = arith.mulf %14, %15 : vector<32x128xf32>
    %17 = vector.shape_cast %16 : vector<32x128xf32> to vector<2x16x128xf32>
    %18 = vector.broadcast %4 : vector<1x16x1xf32> to vector<2x16x128xf32>
    %19 = arith.mulf %17, %18 : vector<2x16x128xf32>
    %20 = vector.shape_cast %19 : vector<2x16x128xf32> to vector<32x128xf32>
    %21 = arith.truncf %20 : vector<32x128xf32> to vector<32x128xbf16>
    %c0_8 = arith.constant 0 : index
    %c0_9 = arith.constant 0 : index
    %22 = vector.load %arg4[%c0_8, %c0_9] : memref<128x128xbf16, #tpu.memory_space<vmem>>, vector<128x128xbf16>
    %cst_10 = arith.constant dense<0.000000e+00> : vector<32x128xf32>
    %23 = tpu.matmul %21, %22, %cst_10 {dimension_numbers = #tpu.dot_dimension_numbers<[1], [0], [0], [1], [0, 0, 1, 1], [], []>} : vector<32x128xbf16>, vector<128x128xbf16>, vector<32x128xf32> -> vector<32x128xf32>
    %24 = vector.shape_cast %23 : vector<32x128xf32> to vector<2x16x128xf32>
    %c0_11 = arith.constant 0 : index
    %c0_12 = arith.constant 0 : index
    %25 = vector.load %arg5[%c0_11, %c0_12] : memref<2x128xf32, #tpu.memory_space<vmem>>, vector<1x128xf32>
    %26 = vector.shape_cast %25 : vector<1x128xf32> to vector<1x1x128xf32>
    %c1 = arith.constant 1 : index
    %c0_13 = arith.constant 0 : index
    %27 = vector.load %arg5[%c1, %c0_13] : memref<2x128xf32, #tpu.memory_space<vmem>>, vector<1x128xf32>
    %28 = vector.shape_cast %27 : vector<1x128xf32> to vector<1x1x128xf32>
    %cst_14 = arith.constant dense<0.000000e+00> : vector<2x128xf32>
    %29 = vector.multi_reduction <add>, %24, %cst_14 [1] : vector<2x16x128xf32> to vector<2x128xf32>
    %30 = vector.shape_cast %29 : vector<2x128xf32> to vector<2x1x128xf32>
    %cst_15 = arith.constant 5.000000e-01 : f32
    %31 = vector.broadcast %cst_15 : f32 to vector<2x1x128xf32>
    %32 = arith.mulf %30, %31 : vector<2x1x128xf32>
    %33 = arith.mulf %24, %24 : vector<2x16x128xf32>
    %cst_16 = arith.constant dense<0.000000e+00> : vector<2x128xf32>
    %34 = vector.multi_reduction <add>, %33, %cst_16 [1] : vector<2x16x128xf32> to vector<2x128xf32>
    %35 = vector.shape_cast %34 : vector<2x128xf32> to vector<2x1x128xf32>
    %cst_17 = arith.constant 5.000000e-01 : f32
    %36 = vector.broadcast %cst_17 : f32 to vector<2x1x128xf32>
    %37 = arith.mulf %35, %36 : vector<2x1x128xf32>
    %38 = arith.mulf %32, %32 : vector<2x1x128xf32>
    %39 = arith.subf %37, %38 : vector<2x1x128xf32>
    %cst_18 = arith.constant 0.000000e+00 : f32
    %40 = vector.broadcast %cst_18 : f32 to vector<2x1x128xf32>
    %41 = arith.maximumf %39, %40 : vector<2x1x128xf32>
    %cst_19 = arith.constant 9.99999974E-6 : f32
    %42 = vector.broadcast %cst_19 : f32 to vector<2x1x128xf32>
    %43 = arith.addf %41, %42 : vector<2x1x128xf32>
    %44 = math.rsqrt %43 : vector<2x1x128xf32>
    %45 = vector.broadcast %26 : vector<1x1x128xf32> to vector<2x1x128xf32>
    %46 = arith.mulf %45, %44 : vector<2x1x128xf32>
    %47 = arith.mulf %32, %46 : vector<2x1x128xf32>
    %48 = vector.broadcast %28 : vector<1x1x128xf32> to vector<2x1x128xf32>
    %49 = arith.subf %48, %47 : vector<2x1x128xf32>
    %50 = vector.broadcast %46 : vector<2x1x128xf32> to vector<2x16x128xf32>
    %51 = arith.mulf %24, %50 : vector<2x16x128xf32>
    %52 = vector.broadcast %49 : vector<2x1x128xf32> to vector<2x16x128xf32>
    %53 = arith.addf %51, %52 : vector<2x16x128xf32>
    %cst_20 = arith.constant 0.000000e+00 : f32
    %54 = vector.broadcast %cst_20 : f32 to vector<2x16x128xf32>
    %55 = arith.maximumf %53, %54 : vector<2x16x128xf32>
    %56 = vector.broadcast %4 : vector<1x16x1xf32> to vector<2x16x128xf32>
    %57 = arith.mulf %55, %56 : vector<2x16x128xf32>
    %58 = vector.shape_cast %57 : vector<2x16x128xf32> to vector<32x128xf32>
    %59 = arith.truncf %58 : vector<32x128xf32> to vector<32x128xbf16>
    %c0_21 = arith.constant 0 : index
    %c0_22 = arith.constant 0 : index
    %60 = vector.load %arg6[%c0_21, %c0_22] : memref<128x128xbf16, #tpu.memory_space<vmem>>, vector<128x128xbf16>
    %cst_23 = arith.constant dense<0.000000e+00> : vector<32x128xf32>
    %61 = tpu.matmul %59, %60, %cst_23 {dimension_numbers = #tpu.dot_dimension_numbers<[1], [0], [0], [1], [0, 0, 1, 1], [], []>} : vector<32x128xbf16>, vector<128x128xbf16>, vector<32x128xf32> -> vector<32x128xf32>
    %62 = vector.shape_cast %61 : vector<32x128xf32> to vector<2x16x128xf32>
    %c0_24 = arith.constant 0 : index
    %c0_25 = arith.constant 0 : index
    %63 = vector.load %arg7[%c0_24, %c0_25] : memref<2x128xf32, #tpu.memory_space<vmem>>, vector<1x128xf32>
    %64 = vector.shape_cast %63 : vector<1x128xf32> to vector<1x1x128xf32>
    %c1_26 = arith.constant 1 : index
    %c0_27 = arith.constant 0 : index
    %65 = vector.load %arg7[%c1_26, %c0_27] : memref<2x128xf32, #tpu.memory_space<vmem>>, vector<1x128xf32>
    %66 = vector.shape_cast %65 : vector<1x128xf32> to vector<1x1x128xf32>
    %cst_28 = arith.constant dense<0.000000e+00> : vector<2x128xf32>
    %67 = vector.multi_reduction <add>, %62, %cst_28 [1] : vector<2x16x128xf32> to vector<2x128xf32>
    %68 = vector.shape_cast %67 : vector<2x128xf32> to vector<2x1x128xf32>
    %cst_29 = arith.constant 5.000000e-01 : f32
    %69 = vector.broadcast %cst_29 : f32 to vector<2x1x128xf32>
    %70 = arith.mulf %68, %69 : vector<2x1x128xf32>
    %71 = arith.mulf %62, %62 : vector<2x16x128xf32>
    %cst_30 = arith.constant dense<0.000000e+00> : vector<2x128xf32>
    %72 = vector.multi_reduction <add>, %71, %cst_30 [1] : vector<2x16x128xf32> to vector<2x128xf32>
    %73 = vector.shape_cast %72 : vector<2x128xf32> to vector<2x1x128xf32>
    %cst_31 = arith.constant 5.000000e-01 : f32
    %74 = vector.broadcast %cst_31 : f32 to vector<2x1x128xf32>
    %75 = arith.mulf %73, %74 : vector<2x1x128xf32>
    %76 = arith.mulf %70, %70 : vector<2x1x128xf32>
    %77 = arith.subf %75, %76 : vector<2x1x128xf32>
    %cst_32 = arith.constant 0.000000e+00 : f32
    %78 = vector.broadcast %cst_32 : f32 to vector<2x1x128xf32>
    %79 = arith.maximumf %77, %78 : vector<2x1x128xf32>
    %cst_33 = arith.constant 9.99999974E-6 : f32
    %80 = vector.broadcast %cst_33 : f32 to vector<2x1x128xf32>
    %81 = arith.addf %79, %80 : vector<2x1x128xf32>
    %82 = math.rsqrt %81 : vector<2x1x128xf32>
    %83 = vector.broadcast %64 : vector<1x1x128xf32> to vector<2x1x128xf32>
    %84 = arith.mulf %83, %82 : vector<2x1x128xf32>
    %85 = arith.mulf %70, %84 : vector<2x1x128xf32>
    %86 = vector.broadcast %66 : vector<1x1x128xf32> to vector<2x1x128xf32>
    %87 = arith.subf %86, %85 : vector<2x1x128xf32>
    %88 = vector.broadcast %84 : vector<2x1x128xf32> to vector<2x16x128xf32>
    %89 = arith.mulf %62, %88 : vector<2x16x128xf32>
    %90 = vector.broadcast %87 : vector<2x1x128xf32> to vector<2x16x128xf32>
    %91 = arith.addf %89, %90 : vector<2x16x128xf32>
    %cst_34 = arith.constant 0.000000e+00 : f32
    %92 = vector.broadcast %cst_34 : f32 to vector<2x16x128xf32>
    %93 = arith.maximumf %91, %92 : vector<2x16x128xf32>
    %94 = vector.broadcast %4 : vector<1x16x1xf32> to vector<2x16x128xf32>
    %95 = arith.mulf %93, %94 : vector<2x16x128xf32>
    %96 = vector.shape_cast %95 : vector<2x16x128xf32> to vector<32x128xf32>
    %97 = arith.truncf %96 : vector<32x128xf32> to vector<32x128xbf16>
    %c0_35 = arith.constant 0 : index
    %c0_36 = arith.constant 0 : index
    %98 = vector.load %arg8[%c0_35, %c0_36] : memref<128x128xbf16, #tpu.memory_space<vmem>>, vector<128x128xbf16>
    %cst_37 = arith.constant dense<0.000000e+00> : vector<32x128xf32>
    %99 = tpu.matmul %97, %98, %cst_37 {dimension_numbers = #tpu.dot_dimension_numbers<[1], [0], [0], [1], [0, 0, 1, 1], [], []>} : vector<32x128xbf16>, vector<128x128xbf16>, vector<32x128xf32> -> vector<32x128xf32>
    %100 = vector.shape_cast %99 : vector<32x128xf32> to vector<2x16x128xf32>
    %c0_38 = arith.constant 0 : index
    %c0_39 = arith.constant 0 : index
    %101 = vector.load %arg9[%c0_38, %c0_39] : memref<2x128xf32, #tpu.memory_space<vmem>>, vector<1x128xf32>
    %102 = vector.shape_cast %101 : vector<1x128xf32> to vector<1x1x128xf32>
    %c1_40 = arith.constant 1 : index
    %c0_41 = arith.constant 0 : index
    %103 = vector.load %arg9[%c1_40, %c0_41] : memref<2x128xf32, #tpu.memory_space<vmem>>, vector<1x128xf32>
    %104 = vector.shape_cast %103 : vector<1x128xf32> to vector<1x1x128xf32>
    %cst_42 = arith.constant dense<0.000000e+00> : vector<2x128xf32>
    %105 = vector.multi_reduction <add>, %100, %cst_42 [1] : vector<2x16x128xf32> to vector<2x128xf32>
    %106 = vector.shape_cast %105 : vector<2x128xf32> to vector<2x1x128xf32>
    %cst_43 = arith.constant 5.000000e-01 : f32
    %107 = vector.broadcast %cst_43 : f32 to vector<2x1x128xf32>
    %108 = arith.mulf %106, %107 : vector<2x1x128xf32>
    %109 = arith.mulf %100, %100 : vector<2x16x128xf32>
    %cst_44 = arith.constant dense<0.000000e+00> : vector<2x128xf32>
    %110 = vector.multi_reduction <add>, %109, %cst_44 [1] : vector<2x16x128xf32> to vector<2x128xf32>
    %111 = vector.shape_cast %110 : vector<2x128xf32> to vector<2x1x128xf32>
    %cst_45 = arith.constant 5.000000e-01 : f32
    %112 = vector.broadcast %cst_45 : f32 to vector<2x1x128xf32>
    %113 = arith.mulf %111, %112 : vector<2x1x128xf32>
    %114 = arith.mulf %108, %108 : vector<2x1x128xf32>
    %115 = arith.subf %113, %114 : vector<2x1x128xf32>
    %cst_46 = arith.constant 0.000000e+00 : f32
    %116 = vector.broadcast %cst_46 : f32 to vector<2x1x128xf32>
    %117 = arith.maximumf %115, %116 : vector<2x1x128xf32>
    %cst_47 = arith.constant 9.99999974E-6 : f32
    %118 = vector.broadcast %cst_47 : f32 to vector<2x1x128xf32>
    %119 = arith.addf %117, %118 : vector<2x1x128xf32>
    %120 = math.rsqrt %119 : vector<2x1x128xf32>
    %121 = vector.broadcast %102 : vector<1x1x128xf32> to vector<2x1x128xf32>
    %122 = arith.mulf %121, %120 : vector<2x1x128xf32>
    %123 = arith.mulf %108, %122 : vector<2x1x128xf32>
    %124 = vector.broadcast %104 : vector<1x1x128xf32> to vector<2x1x128xf32>
    %125 = arith.subf %124, %123 : vector<2x1x128xf32>
    %126 = vector.broadcast %122 : vector<2x1x128xf32> to vector<2x16x128xf32>
    %127 = arith.mulf %100, %126 : vector<2x16x128xf32>
    %128 = vector.broadcast %125 : vector<2x1x128xf32> to vector<2x16x128xf32>
    %129 = arith.addf %127, %128 : vector<2x16x128xf32>
    %130 = vector.broadcast %4 : vector<1x16x1xf32> to vector<2x16x128xf32>
    %131 = arith.mulf %129, %130 : vector<2x16x128xf32>
    %132 = vector.shape_cast %131 : vector<2x16x128xf32> to vector<32x128xf32>
    %133 = arith.truncf %132 : vector<32x128xf32> to vector<32x128xbf16>
    %c0_48 = arith.constant 0 : index
    %c0_49 = arith.constant 0 : index
    %134 = vector.load %arg10[%c0_48, %c0_49] : memref<128x128xbf16, #tpu.memory_space<vmem>>, vector<128x128xbf16>
    %cst_50 = arith.constant dense<0.000000e+00> : vector<32x128xf32>
    %135 = tpu.matmul %133, %134, %cst_50 {dimension_numbers = #tpu.dot_dimension_numbers<[1], [0], [0], [1], [0, 0, 1, 1], [], []>} : vector<32x128xbf16>, vector<128x128xbf16>, vector<32x128xf32> -> vector<32x128xf32>
    %136 = vector.shape_cast %135 : vector<32x128xf32> to vector<2x16x128xf32>
    %c0_51 = arith.constant 0 : index
    %c0_52 = arith.constant 0 : index
    %137 = vector.load %arg11[%c0_51, %c0_52] : memref<2x128xf32, #tpu.memory_space<vmem>>, vector<1x128xf32>
    %138 = vector.shape_cast %137 : vector<1x128xf32> to vector<1x1x128xf32>
    %c1_53 = arith.constant 1 : index
    %c0_54 = arith.constant 0 : index
    %139 = vector.load %arg11[%c1_53, %c0_54] : memref<2x128xf32, #tpu.memory_space<vmem>>, vector<1x128xf32>
    %140 = vector.shape_cast %139 : vector<1x128xf32> to vector<1x1x128xf32>
    %cst_55 = arith.constant dense<0.000000e+00> : vector<2x128xf32>
    %141 = vector.multi_reduction <add>, %136, %cst_55 [1] : vector<2x16x128xf32> to vector<2x128xf32>
    %142 = vector.shape_cast %141 : vector<2x128xf32> to vector<2x1x128xf32>
    %cst_56 = arith.constant 5.000000e-01 : f32
    %143 = vector.broadcast %cst_56 : f32 to vector<2x1x128xf32>
    %144 = arith.mulf %142, %143 : vector<2x1x128xf32>
    %145 = arith.mulf %136, %136 : vector<2x16x128xf32>
    %cst_57 = arith.constant dense<0.000000e+00> : vector<2x128xf32>
    %146 = vector.multi_reduction <add>, %145, %cst_57 [1] : vector<2x16x128xf32> to vector<2x128xf32>
    %147 = vector.shape_cast %146 : vector<2x128xf32> to vector<2x1x128xf32>
    %cst_58 = arith.constant 5.000000e-01 : f32
    %148 = vector.broadcast %cst_58 : f32 to vector<2x1x128xf32>
    %149 = arith.mulf %147, %148 : vector<2x1x128xf32>
    %150 = arith.mulf %144, %144 : vector<2x1x128xf32>
    %151 = arith.subf %149, %150 : vector<2x1x128xf32>
    %cst_59 = arith.constant 0.000000e+00 : f32
    %152 = vector.broadcast %cst_59 : f32 to vector<2x1x128xf32>
    %153 = arith.maximumf %151, %152 : vector<2x1x128xf32>
    %cst_60 = arith.constant 9.99999974E-6 : f32
    %154 = vector.broadcast %cst_60 : f32 to vector<2x1x128xf32>
    %155 = arith.addf %153, %154 : vector<2x1x128xf32>
    %156 = math.rsqrt %155 : vector<2x1x128xf32>
    %157 = vector.broadcast %138 : vector<1x1x128xf32> to vector<2x1x128xf32>
    %158 = arith.mulf %157, %156 : vector<2x1x128xf32>
    %159 = arith.mulf %144, %158 : vector<2x1x128xf32>
    %160 = vector.broadcast %140 : vector<1x1x128xf32> to vector<2x1x128xf32>
    %161 = arith.subf %160, %159 : vector<2x1x128xf32>
    %162 = vector.broadcast %158 : vector<2x1x128xf32> to vector<2x16x128xf32>
    %163 = arith.mulf %136, %162 : vector<2x16x128xf32>
    %164 = vector.broadcast %161 : vector<2x1x128xf32> to vector<2x16x128xf32>
    %165 = arith.addf %163, %164 : vector<2x16x128xf32>
    %cst_61 = arith.constant 0.000000e+00 : f32
    %166 = vector.broadcast %cst_61 : f32 to vector<2x16x128xf32>
    %167 = arith.maximumf %165, %166 : vector<2x16x128xf32>
    %168 = vector.broadcast %4 : vector<1x16x1xf32> to vector<2x16x128xf32>
    %169 = arith.mulf %167, %168 : vector<2x16x128xf32>
    %170 = vector.shape_cast %169 : vector<2x16x128xf32> to vector<32x128xf32>
    %171 = arith.truncf %170 : vector<32x128xf32> to vector<32x128xbf16>
    %c0_62 = arith.constant 0 : index
    %c0_63 = arith.constant 0 : index
    %172 = vector.load %arg12[%c0_62, %c0_63] : memref<128x128xbf16, #tpu.memory_space<vmem>>, vector<128x128xbf16>
    %cst_64 = arith.constant dense<0.000000e+00> : vector<32x128xf32>
    %173 = tpu.matmul %171, %172, %cst_64 {dimension_numbers = #tpu.dot_dimension_numbers<[1], [0], [0], [1], [0, 0, 1, 1], [], []>} : vector<32x128xbf16>, vector<128x128xbf16>, vector<32x128xf32> -> vector<32x128xf32>
    %174 = vector.shape_cast %173 : vector<32x128xf32> to vector<2x16x128xf32>
    %c0_65 = arith.constant 0 : index
    %c0_66 = arith.constant 0 : index
    %175 = vector.load %arg13[%c0_65, %c0_66] : memref<2x128xf32, #tpu.memory_space<vmem>>, vector<1x128xf32>
    %176 = vector.shape_cast %175 : vector<1x128xf32> to vector<1x1x128xf32>
    %177 = vector.broadcast %176 : vector<1x1x128xf32> to vector<2x16x128xf32>
    %178 = arith.addf %174, %177 : vector<2x16x128xf32>
    %179 = vector.extract_strided_slice %178 {offsets = [0, 0, 0], sizes = [1, 16, 128], strides = [1, 1, 1]} : vector<2x16x128xf32> to vector<1x16x128xf32>
    %180 = vector.shape_cast %179 : vector<1x16x128xf32> to vector<16x128xf32>
    %181 = vector.extract_strided_slice %131 {offsets = [1, 0, 0], sizes = [1, 16, 128], strides = [1, 1, 1]} : vector<2x16x128xf32> to vector<1x16x128xf32>
    %182 = vector.shape_cast %181 : vector<1x16x128xf32> to vector<16x128xf32>
    %183 = arith.mulf %180, %182 : vector<16x128xf32>
    %cst_67 = arith.constant dense<0.000000e+00> : vector<16xf32>
    %184 = vector.multi_reduction <add>, %183, %cst_67 [1] : vector<16x128xf32> to vector<16xf32>
    %185 = vector.shape_cast %184 : vector<16xf32> to vector<16x1xf32>
    %186 = arith.mulf %180, %180 : vector<16x128xf32>
    %cst_68 = arith.constant dense<0.000000e+00> : vector<16xf32>
    %187 = vector.multi_reduction <add>, %186, %cst_68 [1] : vector<16x128xf32> to vector<16xf32>
    %188 = vector.shape_cast %187 : vector<16xf32> to vector<16x1xf32>
    %189 = arith.mulf %182, %182 : vector<16x128xf32>
    %cst_69 = arith.constant dense<0.000000e+00> : vector<16xf32>
    %190 = vector.multi_reduction <add>, %189, %cst_69 [1] : vector<16x128xf32> to vector<16xf32>
    %191 = vector.shape_cast %190 : vector<16xf32> to vector<16x1xf32>
    %cst_70 = arith.constant 1.000000e-16 : f32
    %192 = vector.broadcast %cst_70 : f32 to vector<16x1xf32>
    %193 = arith.maximumf %188, %192 : vector<16x1xf32>
    %194 = math.rsqrt %193 : vector<16x1xf32>
    %cst_71 = arith.constant 1.000000e-16 : f32
    %195 = vector.broadcast %cst_71 : f32 to vector<16x1xf32>
    %196 = arith.maximumf %191, %195 : vector<16x1xf32>
    %197 = math.rsqrt %196 : vector<16x1xf32>
    %198 = arith.mulf %194, %197 : vector<16x1xf32>
    %199 = arith.mulf %185, %198 : vector<16x1xf32>
    %200 = vector.extract_strided_slice %178 {offsets = [1, 0, 0], sizes = [1, 16, 128], strides = [1, 1, 1]} : vector<2x16x128xf32> to vector<1x16x128xf32>
    %201 = vector.shape_cast %200 : vector<1x16x128xf32> to vector<16x128xf32>
    %202 = vector.extract_strided_slice %131 {offsets = [0, 0, 0], sizes = [1, 16, 128], strides = [1, 1, 1]} : vector<2x16x128xf32> to vector<1x16x128xf32>
    %203 = vector.shape_cast %202 : vector<1x16x128xf32> to vector<16x128xf32>
    %204 = arith.mulf %201, %203 : vector<16x128xf32>
    %cst_72 = arith.constant dense<0.000000e+00> : vector<16xf32>
    %205 = vector.multi_reduction <add>, %204, %cst_72 [1] : vector<16x128xf32> to vector<16xf32>
    %206 = vector.shape_cast %205 : vector<16xf32> to vector<16x1xf32>
    %207 = arith.mulf %201, %201 : vector<16x128xf32>
    %cst_73 = arith.constant dense<0.000000e+00> : vector<16xf32>
    %208 = vector.multi_reduction <add>, %207, %cst_73 [1] : vector<16x128xf32> to vector<16xf32>
    %209 = vector.shape_cast %208 : vector<16xf32> to vector<16x1xf32>
    %210 = arith.mulf %203, %203 : vector<16x128xf32>
    %cst_74 = arith.constant dense<0.000000e+00> : vector<16xf32>
    %211 = vector.multi_reduction <add>, %210, %cst_74 [1] : vector<16x128xf32> to vector<16xf32>
    %212 = vector.shape_cast %211 : vector<16xf32> to vector<16x1xf32>
    %cst_75 = arith.constant 1.000000e-16 : f32
    %213 = vector.broadcast %cst_75 : f32 to vector<16x1xf32>
    %214 = arith.maximumf %209, %213 : vector<16x1xf32>
    %215 = math.rsqrt %214 : vector<16x1xf32>
    %cst_76 = arith.constant 1.000000e-16 : f32
    %216 = vector.broadcast %cst_76 : f32 to vector<16x1xf32>
    %217 = arith.maximumf %212, %216 : vector<16x1xf32>
    %218 = math.rsqrt %217 : vector<16x1xf32>
    %219 = arith.mulf %215, %218 : vector<16x1xf32>
    %220 = arith.mulf %206, %219 : vector<16x1xf32>
    %221 = arith.addf %199, %220 : vector<16x1xf32>
    %cst_77 = arith.constant dense<0.000000e+00> : vector<1xf32>
    %222 = vector.multi_reduction <add>, %221, %cst_77 [0] : vector<16x1xf32> to vector<1xf32>
    %223 = vector.shape_cast %222 : vector<1xf32> to vector<1x1xf32>
    %cst_78 = arith.constant 2.500000e-01 : f32
    %224 = vector.broadcast %cst_78 : f32 to vector<1x1xf32>
    %225 = arith.mulf %224, %223 : vector<1x1xf32>
    %cst_79 = arith.constant 1.000000e+00 : f32
    %226 = vector.broadcast %cst_79 : f32 to vector<1x1xf32>
    %227 = arith.subf %226, %225 : vector<1x1xf32>
    %c0_80 = arith.constant 0 : index
    %c0_81 = arith.constant 0 : index
    %228 = vector.load %arg14[%c0_80, %c0_81] : memref<1x1xf32, #tpu.memory_space<vmem>>, vector<1x1xf32>
    tpu.vector_store %arg14[%c0_80, %c0_81], %227 {strides = array<i32>} : memref<1x1xf32, #tpu.memory_space<vmem>>, vector<1x1xf32>,
    return
  }
  func.func @transform_0(%arg0: i32) -> (i32, i32) {
    %c0_i32 = arith.constant 0 : i32
    %c0_i32_0 = arith.constant 0 : i32
    %c0_i32_1 = arith.constant 0 : i32
    return %c0_i32, %c0_i32_0 : i32, i32
  }
  func.func @transform_1(%arg0: i32) -> (i32, i32) {
    %c0_i32 = arith.constant 0 : i32
    %c0_i32_0 = arith.constant 0 : i32
    %c0_i32_1 = arith.constant 0 : i32
    return %c0_i32, %c0_i32_0 : i32, i32
  }
  func.func @transform_2(%arg0: i32) -> (i32, i32) {
    %c0_i32 = arith.constant 0 : i32
    %c0_i32_0 = arith.constant 0 : i32
    %c0_i32_1 = arith.constant 0 : i32
    return %c0_i32, %c0_i32_0 : i32, i32
  }
  func.func @transform_3(%arg0: i32) -> (i32, i32) {
    %c0_i32 = arith.constant 0 : i32
    %c0_i32_0 = arith.constant 0 : i32
    %c0_i32_1 = arith.constant 0 : i32
    return %c0_i32, %c0_i32_0 : i32, i32
  }
  func.func @transform_4(%arg0: i32) -> (i32, i32) {
    %c0_i32 = arith.constant 0 : i32
    %c0_i32_0 = arith.constant 0 : i32
    %c0_i32_1 = arith.constant 0 : i32
    return %c0_i32, %c0_i32_0 : i32, i32
  }
  func.func @transform_5(%arg0: i32) -> (i32, i32) {
    %c0_i32 = arith.constant 0 : i32
    %c0_i32_0 = arith.constant 0 : i32
    %c0_i32_1 = arith.constant 0 : i32
    return %c0_i32, %c0_i32_0 : i32, i32
  }
  func.func @transform_6(%arg0: i32) -> (i32, i32) {
    %c0_i32 = arith.constant 0 : i32
    %c0_i32_0 = arith.constant 0 : i32
    %c0_i32_1 = arith.constant 0 : i32
    return %c0_i32, %c0_i32_0 : i32, i32
  }
  func.func @transform_7(%arg0: i32) -> (i32, i32) {
    %c0_i32 = arith.constant 0 : i32
    %c0_i32_0 = arith.constant 0 : i32
    %c0_i32_1 = arith.constant 0 : i32
    return %c0_i32, %c0_i32_0 : i32, i32
  }
  func.func @transform_8(%arg0: i32) -> (i32, i32) {
    %c0_i32 = arith.constant 0 : i32
    %c0_i32_0 = arith.constant 0 : i32
    %c0_i32_1 = arith.constant 0 : i32
    return %c0_i32, %c0_i32_0 : i32, i32
  }
  func.func @transform_9(%arg0: i32) -> (i32, i32) {
    %c0_i32 = arith.constant 0 : i32
    %c0_i32_0 = arith.constant 0 : i32
    %c0_i32_1 = arith.constant 0 : i32
    return %c0_i32, %c0_i32_0 : i32, i32
  }
  func.func @transform_10(%arg0: i32) -> (i32, i32) {
    %c0_i32 = arith.constant 0 : i32
    %c0_i32_0 = arith.constant 0 : i32
    %c0_i32_1 = arith.constant 0 : i32
    return %c0_i32, %c0_i32_0 : i32, i32
  }
  func.func @transform_11(%arg0: i32) -> (i32, i32) {
    %c0_i32 = arith.constant 0 : i32
    %c0_i32_0 = arith.constant 0 : i32
    %c0_i32_1 = arith.constant 0 : i32
    return %c0_i32, %c0_i32_0 : i32, i32
  }
  func.func @transform_12(%arg0: i32) -> (i32, i32) {
    %c0_i32 = arith.constant 0 : i32
    %c0_i32_0 = arith.constant 0 : i32
    %c0_i32_1 = arith.constant 0 : i32
    return %c0_i32, %c0_i32_0 : i32, i32
  }
  func.func @transform_13(%arg0: i32) -> (i32, i32) {
    %c0_i32 = arith.constant 0 : i32
    %c0_i32_0 = arith.constant 0 : i32
    %c0_i32_1 = arith.constant 0 : i32
    return %c0_i32, %c0_i32_0 : i32, i32
  }
}

</mosaic_0001>

<llo_original>
// kernel: simsiam_forward.1
$region0: #{simsiam_forward.1}
  #allocation0 [shape = 'u32[]', space=smem, size = 0x4, offset = 0x4, fixed_abs, tag = 'smem constant byte address 0x4 - core index']
  #allocation1 [shape = 'u32[72,128]{1,0:T(1,128)}', space=vmem, size = 0x9000, scoped, tag = 'internal scratch']
  %s0 = inlined_call_operand.vmem [shape: bf16[8192,128], index: 0, kind: input, shape index: {}]
  %s1 = inlined_call_operand.vmem [shape: bf16[128,128], index: 1, kind: input, shape index: {}]
  %s2 = inlined_call_operand.vmem [shape: f32[1,128], index: 2, kind: input, shape index: {}]
  %s3 = inlined_call_operand.vmem [shape: bf16[128,128], index: 3, kind: input, shape index: {}]
  %s4 = inlined_call_operand.vmem [shape: f32[2,128], index: 4, kind: input, shape index: {}]
  %s5 = inlined_call_operand.vmem [shape: bf16[128,128], index: 5, kind: input, shape index: {}]
  %s6 = inlined_call_operand.vmem [shape: f32[2,128], index: 6, kind: input, shape index: {}]
  %s7 = inlined_call_operand.vmem [shape: bf16[128,128], index: 7, kind: input, shape index: {}]
  %s8 = inlined_call_operand.vmem [shape: f32[2,128], index: 8, kind: input, shape index: {}]
  %s9 = inlined_call_operand.vmem [shape: bf16[128,128], index: 9, kind: input, shape index: {}]
  %s10 = inlined_call_operand.vmem [shape: f32[2,128], index: 10, kind: input, shape index: {}]
  %s11 = inlined_call_operand.vmem [shape: bf16[128,128], index: 11, kind: input, shape index: {}]
  %s12 = inlined_call_operand.vmem [shape: f32[2,128], index: 12, kind: input, shape index: {}]
  %s13 = inlined_call_operand.hbm [shape: f32[1,1], index: 13, kind: output, shape index: {}]
  %s14 = sld [smem:[#allocation0]]
  $region62: #{simsiam_forward.1} parent=0
    _
  %s16 = ssub.s32 1, %s14
  %s17 = scalar_select 0, %s16, %s14
  $region1: #{simsiam_forward.1} parent=0
    #allocation2 [shape = 'u8[512]{0}', space=vmem, size = 0x400, scoped, tag = 'output window, operand 0, single buffered']
    #allocation3 [shape = 's32[1]{0}', space=sflag, size = 0x4, scoped, tag = 'scoped memory for simsiam_forward.1']
    %18 = vsyncpa [#allocation3], 0
    // Predicated region
    $region2: #{simsiam_forward.1} parent=1 // pred_check
      _
    $region3: #{simsiam_forward.1} parent=1 // pred_check_branch
      %20 = sbr.rel (0) target = $region5
    $region4: #{simsiam_forward.1} parent=1 // pred_region
      _
    $region5: #{simsiam_forward.1} parent=1 // pred_fallthru
      _
    // Predicated region
    $region6: #{simsiam_forward.1} parent=1 // pred_check
      _
    $region7: #{simsiam_forward.1} parent=1 // pred_check_branch
      %22 = sbr.rel (0) target = $region9
    $region8: #{simsiam_forward.1} parent=1 // pred_region
      _
    $region9: #{simsiam_forward.1} parent=1 // pred_fallthru
      _
    // Predicated region
    $region10: #{simsiam_forward.1} parent=1 // pred_check
      _
    $region11: #{simsiam_forward.1} parent=1 // pred_check_branch
      %24 = sbr.rel (0) target = $region13
    $region12: #{simsiam_forward.1} parent=1 // pred_region
      _
    $region13: #{simsiam_forward.1} parent=1 // pred_fallthru
      _
    // Predicated region
    $region14: #{simsiam_forward.1} parent=1 // pred_check
      _
    $region15: #{simsiam_forward.1} parent=1 // pred_check_branch
      %26 = sbr.rel (0) target = $region17
    $region16: #{simsiam_forward.1} parent=1 // pred_region
      _
    $region17: #{simsiam_forward.1} parent=1 // pred_fallthru
      _
    // Predicated region
    $region18: #{simsiam_forward.1} parent=1 // pred_check
      _
    $region19: #{simsiam_forward.1} parent=1 // pred_check_branch
      %28 = sbr.rel (0) target = $region21
    $region20: #{simsiam_forward.1} parent=1 // pred_region
      _
    $region21: #{simsiam_forward.1} parent=1 // pred_fallthru
      _
    // Predicated region
    $region22: #{simsiam_forward.1} parent=1 // pred_check
      _
    $region23: #{simsiam_forward.1} parent=1 // pred_check_branch
      %30 = sbr.rel (0) target = $region25
    $region24: #{simsiam_forward.1} parent=1 // pred_region
      _
    $region25: #{simsiam_forward.1} parent=1 // pred_fallthru
      _
    // Predicated region
    $region26: #{simsiam_forward.1} parent=1 // pred_check
      _
    $region27: #{simsiam_forward.1} parent=1 // pred_check_branch
      %32 = sbr.rel (0) target = $region29
    $region28: #{simsiam_forward.1} parent=1 // pred_region
      _
    $region29: #{simsiam_forward.1} parent=1 // pred_fallthru
      _
    // Predicated region
    $region30: #{simsiam_forward.1} parent=1 // pred_check
      _
    $region31: #{simsiam_forward.1} parent=1 // pred_check_branch
      %34 = sbr.rel (0) target = $region33
    $region32: #{simsiam_forward.1} parent=1 // pred_region
      _
    $region33: #{simsiam_forward.1} parent=1 // pred_fallthru
      _
    // Predicated region
    $region34: #{simsiam_forward.1} parent=1 // pred_check
      _
    $region35: #{simsiam_forward.1} parent=1 // pred_check_branch
      %36 = sbr.rel (0) target = $region37
    $region36: #{simsiam_forward.1} parent=1 // pred_region
      _
    $region37: #{simsiam_forward.1} parent=1 // pred_fallthru
      _
    // Predicated region
    $region38: #{simsiam_forward.1} parent=1 // pred_check
      _
    $region39: #{simsiam_forward.1} parent=1 // pred_check_branch
      %38 = sbr.rel (0) target = $region41
    $region40: #{simsiam_forward.1} parent=1 // pred_region
      _
    $region41: #{simsiam_forward.1} parent=1 // pred_fallthru
      _
    // Predicated region
    $region42: #{simsiam_forward.1} parent=1 // pred_check
      _
    $region43: #{simsiam_forward.1} parent=1 // pred_check_branch
      %40 = sbr.rel (0) target = $region45
    $region44: #{simsiam_forward.1} parent=1 // pred_region
      _
    $region45: #{simsiam_forward.1} parent=1 // pred_fallthru
      _
    // Predicated region
    $region46: #{simsiam_forward.1} parent=1 // pred_check
      _
    $region47: #{simsiam_forward.1} parent=1 // pred_check_branch
      %42 = sbr.rel (0) target = $region49
    $region48: #{simsiam_forward.1} parent=1 // pred_region
      _
    $region49: #{simsiam_forward.1} parent=1 // pred_fallthru
      _
    // Predicated region
    $region50: #{simsiam_forward.1} parent=1 // pred_check
      _
    $region51: #{simsiam_forward.1} parent=1 // pred_check_branch
      %44 = sbr.rel (0) target = $region53
    $region52: #{simsiam_forward.1} parent=1 // pred_region
      _
    $region53: #{simsiam_forward.1} parent=1 // pred_fallthru
      _
    %v45 = vlaneseq
    %v46 = vshrl.u32 %v45, 7
    %v47 = vadd.s32 %v46, 8
    %vm48 = vcmp.lt.s32.totalorder %v46, 2
    %vm49 = vcmp.lt.s32.totalorder %v47, 2
    %v50 = vsel %vm48, 1, 0
    %v51 = vsel %vm49, 1, 0
    %v52 = vcvt.s32.f32 %v50
    %v53 = vcvt.s32.f32 %v51
    %v54 = vld [vmem:[%s0] sm:$0xf]
    %v55 = vld [vmem:[%s0 + $0x4] sm:$0xf]
    %v56 = vld [vmem:[%s0 + $0x8] sm:$0xf]
    %v57 = vld [vmem:[%s0 + $0xc] sm:$0xf]
    %v58 = vld [vmem:[%s0 + $0x10] sm:$0xf]
    %v59 = vld [vmem:[%s0 + $0x14] sm:$0xf]
    %v60 = vld [vmem:[%s0 + $0x18] sm:$0xf]
    %v61 = vld [vmem:[%s0 + $0x1c] sm:$0xf]
    %v62 = vld [vmem:[%s0 + $0x20] sm:$0xf]
    %v63 = vld [vmem:[%s0 + $0x24] sm:$0xf]
    %v64 = vld [vmem:[%s0 + $0x28] sm:$0xf]
    %v65 = vld [vmem:[%s0 + $0x2c] sm:$0xf]
    %v66 = vld [vmem:[%s0 + $0x30] sm:$0xf]
    %v67 = vld [vmem:[%s0 + $0x34] sm:$0xf]
    %v68 = vld [vmem:[%s0 + $0x38] sm:$0xf]
    %v69 = vld [vmem:[%s0 + $0x3c] sm:$0xf]
    %v70 = vld [vmem:[%s0 + $0x40] sm:$0xf]
    %v71 = vld [vmem:[%s0 + $0x44] sm:$0xf]
    %v72 = vld [vmem:[%s0 + $0x48] sm:$0xf]
    %v73 = vld [vmem:[%s0 + $0x4c] sm:$0xf]
    %v74 = vld [vmem:[%s0 + $0x50] sm:$0xf]
    %v75 = vld [vmem:[%s0 + $0x54] sm:$0xf]
    %v76 = vld [vmem:[%s0 + $0x58] sm:$0xf]
    %v77 = vld [vmem:[%s0 + $0x5c] sm:$0xf]
    %v78 = vld [vmem:[%s0 + $0x60] sm:$0xf]
    %v79 = vld [vmem:[%s0 + $0x64] sm:$0xf]
    %v80 = vld [vmem:[%s0 + $0x68] sm:$0xf]
    %v81 = vld [vmem:[%s0 + $0x6c] sm:$0xf]
    %v82 = vld [vmem:[%s0 + $0x70] sm:$0xf]
    %v83 = vld [vmem:[%s0 + $0x74] sm:$0xf]
    %v84 = vld [vmem:[%s0 + $0x78] sm:$0xf]
    %v85 = vld [vmem:[%s0 + $0x7c] sm:$0xf]
    %v86 = vld [vmem:[%s0 + $0x80] sm:$0xf]
    %v87 = vld [vmem:[%s0 + $0x84] sm:$0xf]
    %v88 = vld [vmem:[%s0 + $0x88] sm:$0xf]
    %v89 = vld [vmem:[%s0 + $0x8c] sm:$0xf]
    %v90 = vld [vmem:[%s0 + $0x90] sm:$0xf]
    %v91 = vld [vmem:[%s0 + $0x94] sm:$0xf]
    %v92 = vld [vmem:[%s0 + $0x98] sm:$0xf]
    %v93 = vld [vmem:[%s0 + $0x9c] sm:$0xf]
    %v94 = vld [vmem:[%s0 + $0xa0] sm:$0xf]
    %v95 = vld [vmem:[%s0 + $0xa4] sm:$0xf]
    %v96 = vld [vmem:[%s0 + $0xa8] sm:$0xf]
    %v97 = vld [vmem:[%s0 + $0xac] sm:$0xf]
    %v98 = vld [vmem:[%s0 + $0xb0] sm:$0xf]
    %v99 = vld [vmem:[%s0 + $0xb4] sm:$0xf]
    %v100 = vld [vmem:[%s0 + $0xb8] sm:$0xf]
    %v101 = vld [vmem:[%s0 + $0xbc] sm:$0xf]
    %v102 = vld [vmem:[%s0 + $0xc0] sm:$0xf]
    %v103 = vld [vmem:[%s0 + $0xc4] sm:$0xf]
    %v104 = vld [vmem:[%s0 + $0xc8] sm:$0xf]
    %v105 = vld [vmem:[%s0 + $0xcc] sm:$0xf]
    %v106 = vld [vmem:[%s0 + $0xd0] sm:$0xf]
    %v107 = vld [vmem:[%s0 + $0xd4] sm:$0xf]
    %v108 = vld [vmem:[%s0 + $0xd8] sm:$0xf]
    %v109 = vld [vmem:[%s0 + $0xdc] sm:$0xf]
    %v110 = vld [vmem:[%s0 + $0xe0] sm:$0xf]
    %v111 = vld [vmem:[%s0 + $0xe4] sm:$0xf]
    %v112 = vld [vmem:[%s0 + $0xe8] sm:$0xf]
    %v113 = vld [vmem:[%s0 + $0xec] sm:$0xf]
    %v114 = vld [vmem:[%s0 + $0xf0] sm:$0xf]
    %v115 = vld [vmem:[%s0 + $0xf4] sm:$0xf]
    %v116 = vld [vmem:[%s0 + $0xf8] sm:$0xf]
    %v117 = vld [vmem:[%s0 + $0xfc] sm:$0xf]
    %v118 = vld [vmem:[%s0 + $0x100] sm:$0xf]
    %v119 = vld [vmem:[%s0 + $0x104] sm:$0xf]
    %v120 = vld [vmem:[%s0 + $0x108] sm:$0xf]
    %v121 = vld [vmem:[%s0 + $0x10c] sm:$0xf]
    %v122 = vld [vmem:[%s0 + $0x110] sm:$0xf]
    %v123 = vld [vmem:[%s0 + $0x114] sm:$0xf]
    %v124 = vld [vmem:[%s0 + $0x118] sm:$0xf]
    %v125 = vld [vmem:[%s0 + $0x11c] sm:$0xf]
    %v126 = vld [vmem:[%s0 + $0x120] sm:$0xf]
    %v127 = vld [vmem:[%s0 + $0x124] sm:$0xf]
    %v128 = vld [vmem:[%s0 + $0x128] sm:$0xf]
    %v129 = vld [vmem:[%s0 + $0x12c] sm:$0xf]
    %v130 = vld [vmem:[%s0 + $0x130] sm:$0xf]
    %v131 = vld [vmem:[%s0 + $0x134] sm:$0xf]
    %v132 = vld [vmem:[%s0 + $0x138] sm:$0xf]
    %v133 = vld [vmem:[%s0 + $0x13c] sm:$0xf]
    %v134 = vld [vmem:[%s0 + $0x140] sm:$0xf]
    %v135 = vld [vmem:[%s0 + $0x144] sm:$0xf]
    %v136 = vld [vmem:[%s0 + $0x148] sm:$0xf]
    %v137 = vld [vmem:[%s0 + $0x14c] sm:$0xf]
    %v138 = vld [vmem:[%s0 + $0x150] sm:$0xf]
    %v139 = vld [vmem:[%s0 + $0x154] sm:$0xf]
    %v140 = vld [vmem:[%s0 + $0x158] sm:$0xf]
    %v141 = vld [vmem:[%s0 + $0x15c] sm:$0xf]
    %v142 = vld [vmem:[%s0 + $0x160] sm:$0xf]
    %v143 = vld [vmem:[%s0 + $0x164] sm:$0xf]
    %v144 = vld [vmem:[%s0 + $0x168] sm:$0xf]
    %v145 = vld [vmem:[%s0 + $0x16c] sm:$0xf]
    %v146 = vld [vmem:[%s0 + $0x170] sm:$0xf]
    %v147 = vld [vmem:[%s0 + $0x174] sm:$0xf]
    %v148 = vld [vmem:[%s0 + $0x178] sm:$0xf]
    %v149 = vld [vmem:[%s0 + $0x17c] sm:$0xf]
    %v150 = vld [vmem:[%s0 + $0x180] sm:$0xf]
    %v151 = vld [vmem:[%s0 + $0x184] sm:$0xf]
    %v152 = vld [vmem:[%s0 + $0x188] sm:$0xf]
    %v153 = vld [vmem:[%s0 + $0x18c] sm:$0xf]
    %v154 = vld [vmem:[%s0 + $0x190] sm:$0xf]
    %v155 = vld [vmem:[%s0 + $0x194] sm:$0xf]
    %v156 = vld [vmem:[%s0 + $0x198] sm:$0xf]
    %v157 = vld [vmem:[%s0 + $0x19c] sm:$0xf]
    %v158 = vld [vmem:[%s0 + $0x1a0] sm:$0xf]
    %v159 = vld [vmem:[%s0 + $0x1a4] sm:$0xf]
    %v160 = vld [vmem:[%s0 + $0x1a8] sm:$0xf]
    %v161 = vld [vmem:[%s0 + $0x1ac] sm:$0xf]
    %v162 = vld [vmem:[%s0 + $0x1b0] sm:$0xf]
    %v163 = vld [vmem:[%s0 + $0x1b4] sm:$0xf]
    %v164 = vld [vmem:[%s0 + $0x1b8] sm:$0xf]
    %v165 = vld [vmem:[%s0 + $0x1bc] sm:$0xf]
    %v166 = vld [vmem:[%s0 + $0x1c0] sm:$0xf]
    %v167 = vld [vmem:[%s0 + $0x1c4] sm:$0xf]
    %v168 = vld [vmem:[%s0 + $0x1c8] sm:$0xf]
    %v169 = vld [vmem:[%s0 + $0x1cc] sm:$0xf]
    %v170 = vld [vmem:[%s0 + $0x1d0] sm:$0xf]
    %v171 = vld [vmem:[%s0 + $0x1d4] sm:$0xf]
    %v172 = vld [vmem:[%s0 + $0x1d8] sm:$0xf]
    %v173 = vld [vmem:[%s0 + $0x1dc] sm:$0xf]
    %v174 = vld [vmem:[%s0 + $0x1e0] sm:$0xf]
    %v175 = vld [vmem:[%s0 + $0x1e4] sm:$0xf]
    %v176 = vld [vmem:[%s0 + $0x1e8] sm:$0xf]
    %v177 = vld [vmem:[%s0 + $0x1ec] sm:$0xf]
    %v178 = vld [vmem:[%s0 + $0x1f0] sm:$0xf]
    %v179 = vld [vmem:[%s0 + $0x1f4] sm:$0xf]
    %v180 = vld [vmem:[%s0 + $0x1f8] sm:$0xf]
    %v181 = vld [vmem:[%s0 + $0x1fc] sm:$0xf]
    %v182 = vld [vmem:[%s0 + $0x200] sm:$0xf]
    %v183 = vld [vmem:[%s0 + $0x204] sm:$0xf]
    %v184 = vld [vmem:[%s0 + $0x208] sm:$0xf]
    %v185 = vld [vmem:[%s0 + $0x20c] sm:$0xf]
    %v186 = vld [vmem:[%s0 + $0x210] sm:$0xf]
    %v187 = vld [vmem:[%s0 + $0x214] sm:$0xf]
    %v188 = vld [vmem:[%s0 + $0x218] sm:$0xf]
    %v189 = vld [vmem:[%s0 + $0x21c] sm:$0xf]
    %v190 = vld [vmem:[%s0 + $0x220] sm:$0xf]
    %v191 = vld [vmem:[%s0 + $0x224] sm:$0xf]
    %v192 = vld [vmem:[%s0 + $0x228] sm:$0xf]
    %v193 = vld [vmem:[%s0 + $0x22c] sm:$0xf]
    %v194 = vld [vmem:[%s0 + $0x230] sm:$0xf]
    %v195 = vld [vmem:[%s0 + $0x234] sm:$0xf]
    %v196 = vld [vmem:[%s0 + $0x238] sm:$0xf]
    %v197 = vld [vmem:[%s0 + $0x23c] sm:$0xf]
    %v198 = vld [vmem:[%s0 + $0x240] sm:$0xf]
    %v199 = vld [vmem:[%s0 + $0x244] sm:$0xf]
    %v200 = vld [vmem:[%s0 + $0x248] sm:$0xf]
    %v201 = vld [vmem:[%s0 + $0x24c] sm:$0xf]
    %v202 = vld [vmem:[%s0 + $0x250] sm:$0xf]
    %v203 = vld [vmem:[%s0 + $0x254] sm:$0xf]
    %v204 = vld [vmem:[%s0 + $0x258] sm:$0xf]
    %v205 = vld [vmem:[%s0 + $0x25c] sm:$0xf]
    %v206 = vld [vmem:[%s0 + $0x260] sm:$0xf]
    %v207 = vld [vmem:[%s0 + $0x264] sm:$0xf]
    %v208 = vld [vmem:[%s0 + $0x268] sm:$0xf]
    %v209 = vld [vmem:[%s0 + $0x26c] sm:$0xf]
    %v210 = vld [vmem:[%s0 + $0x270] sm:$0xf]
    %v211 = vld [vmem:[%s0 + $0x274] sm:$0xf]
    %v212 = vld [vmem:[%s0 + $0x278] sm:$0xf]
    %v213 = vld [vmem:[%s0 + $0x27c] sm:$0xf]
    %v214 = vld [vmem:[%s0 + $0x280] sm:$0xf]
    %v215 = vld [vmem:[%s0 + $0x284] sm:$0xf]
    %v216 = vld [vmem:[%s0 + $0x288] sm:$0xf]
    %v217 = vld [vmem:[%s0 + $0x28c] sm:$0xf]
    %v218 = vld [vmem:[%s0 + $0x290] sm:$0xf]
    %v219 = vld [vmem:[%s0 + $0x294] sm:$0xf]
    %v220 = vld [vmem:[%s0 + $0x298] sm:$0xf]
    %v221 = vld [vmem:[%s0 + $0x29c] sm:$0xf]
    %v222 = vld [vmem:[%s0 + $0x2a0] sm:$0xf]
    %v223 = vld [vmem:[%s0 + $0x2a4] sm:$0xf]
    %v224 = vld [vmem:[%s0 + $0x2a8] sm:$0xf]
    %v225 = vld [vmem:[%s0 + $0x2ac] sm:$0xf]
    %v226 = vld [vmem:[%s0 + $0x2b0] sm:$0xf]
    %v227 = vld [vmem:[%s0 + $0x2b4] sm:$0xf]
    %v228 = vld [vmem:[%s0 + $0x2b8] sm:$0xf]
    %v229 = vld [vmem:[%s0 + $0x2bc] sm:$0xf]
    %v230 = vld [vmem:[%s0 + $0x2c0] sm:$0xf]
    %v231 = vld [vmem:[%s0 + $0x2c4] sm:$0xf]
    %v232 = vld [vmem:[%s0 + $0x2c8] sm:$0xf]
    %v233 = vld [vmem:[%s0 + $0x2cc] sm:$0xf]
    %v234 = vld [vmem:[%s0 + $0x2d0] sm:$0xf]
    %v235 = vld [vmem:[%s0 + $0x2d4] sm:$0xf]
    %v236 = vld [vmem:[%s0 + $0x2d8] sm:$0xf]
    %v237 = vld [vmem:[%s0 + $0x2dc] sm:$0xf]
    %v238 = vld [vmem:[%s0 + $0x2e0] sm:$0xf]
    %v239 = vld [vmem:[%s0 + $0x2e4] sm:$0xf]
    %v240 = vld [vmem:[%s0 + $0x2e8] sm:$0xf]
    %v241 = vld [vmem:[%s0 + $0x2ec] sm:$0xf]
    %v242 = vld [vmem:[%s0 + $0x2f0] sm:$0xf]
    %v243 = vld [vmem:[%s0 + $0x2f4] sm:$0xf]
    %v244 = vld [vmem:[%s0 + $0x2f8] sm:$0xf]
    %v245 = vld [vmem:[%s0 + $0x2fc] sm:$0xf]
    %v246 = vld [vmem:[%s0 + $0x300] sm:$0xf]
    %v247 = vld [vmem:[%s0 + $0x304] sm:$0xf]
    %v248 = vld [vmem:[%s0 + $0x308] sm:$0xf]
    %v249 = vld [vmem:[%s0 + $0x30c] sm:$0xf]
    %v250 = vld [vmem:[%s0 + $0x310] sm:$0xf]
    %v251 = vld [vmem:[%s0 + $0x314] sm:$0xf]
    %v252 = vld [vmem:[%s0 + $0x318] sm:$0xf]
    %v253 = vld [vmem:[%s0 + $0x31c] sm:$0xf]
    %v254 = vld [vmem:[%s0 + $0x320] sm:$0xf]
    %v255 = vld [vmem:[%s0 + $0x324] sm:$0xf]
    %v256 = vld [vmem:[%s0 + $0x328] sm:$0xf]
    %v257 = vld [vmem:[%s0 + $0x32c] sm:$0xf]
    %v258 = vld [vmem:[%s0 + $0x330] sm:$0xf]
    %v259 = vld [vmem:[%s0 + $0x334] sm:$0xf]
    %v260 = vld [vmem:[%s0 + $0x338] sm:$0xf]
    %v261 = vld [vmem:[%s0 + $0x33c] sm:$0xf]
    %v262 = vld [vmem:[%s0 + $0x340] sm:$0xf]
    %v263 = vld [vmem:[%s0 + $0x344] sm:$0xf]
    %v264 = vld [vmem:[%s0 + $0x348] sm:$0xf]
    %v265 = vld [vmem:[%s0 + $0x34c] sm:$0xf]
    %v266 = vld [vmem:[%s0 + $0x350] sm:$0xf]
    %v267 = vld [vmem:[%s0 + $0x354] sm:$0xf]
    %v268 = vld [vmem:[%s0 + $0x358] sm:$0xf]
    %v269 = vld [vmem:[%s0 + $0x35c] sm:$0xf]
    %v270 = vld [vmem:[%s0 + $0x360] sm:$0xf]
    %v271 = vld [vmem:[%s0 + $0x364] sm:$0xf]
    %v272 = vld [vmem:[%s0 + $0x368] sm:$0xf]
    %v273 = vld [vmem:[%s0 + $0x36c] sm:$0xf]
    %v274 = vld [vmem:[%s0 + $0x370] sm:$0xf]
    %v275 = vld [vmem:[%s0 + $0x374] sm:$0xf]
    %v276 = vld [vmem:[%s0 + $0x378] sm:$0xf]
    %v277 = vld [vmem:[%s0 + $0x37c] sm:$0xf]
    %v278 = vld [vmem:[%s0 + $0x380] sm:$0xf]
    %v279 = vld [vmem:[%s0 + $0x384] sm:$0xf]
    %v280 = vld [vmem:[%s0 + $0x388] sm:$0xf]
    %v281 = vld [vmem:[%s0 + $0x38c] sm:$0xf]
    %v282 = vld [vmem:[%s0 + $0x390] sm:$0xf]
    %v283 = vld [vmem:[%s0 + $0x394] sm:$0xf]
    %v284 = vld [vmem:[%s0 + $0x398] sm:$0xf]
    %v285 = vld [vmem:[%s0 + $0x39c] sm:$0xf]
    %v286 = vld [vmem:[%s0 + $0x3a0] sm:$0xf]
    %v287 = vld [vmem:[%s0 + $0x3a4] sm:$0xf]
    %v288 = vld [vmem:[%s0 + $0x3a8] sm:$0xf]
    %v289 = vld [vmem:[%s0 + $0x3ac] sm:$0xf]
    %v290 = vld [vmem:[%s0 + $0x3b0] sm:$0xf]
    %v291 = vld [vmem:[%s0 + $0x3b4] sm:$0xf]
    %v292 = vld [vmem:[%s0 + $0x3b8] sm:$0xf]
    %v293 = vld [vmem:[%s0 + $0x3bc] sm:$0xf]
    %v294 = vld [vmem:[%s0 + $0x3c0] sm:$0xf]
    %v295 = vld [vmem:[%s0 + $0x3c4] sm:$0xf]
    %v296 = vld [vmem:[%s0 + $0x3c8] sm:$0xf]
    %v297 = vld [vmem:[%s0 + $0x3cc] sm:$0xf]
    %v298 = vld [vmem:[%s0 + $0x3d0] sm:$0xf]
    %v299 = vld [vmem:[%s0 + $0x3d4] sm:$0xf]
    %v300 = vld [vmem:[%s0 + $0x3d8] sm:$0xf]
    %v301 = vld [vmem:[%s0 + $0x3dc] sm:$0xf]
    %v302 = vld [vmem:[%s0 + $0x3e0] sm:$0xf]
    %v303 = vld [vmem:[%s0 + $0x3e4] sm:$0xf]
    %v304 = vld [vmem:[%s0 + $0x3e8] sm:$0xf]
    %v305 = vld [vmem:[%s0 + $0x3ec] sm:$0xf]
    %v306 = vld [vmem:[%s0 + $0x3f0] sm:$0xf]
    %v307 = vld [vmem:[%s0 + $0x3f4] sm:$0xf]
    %v308 = vld [vmem:[%s0 + $0x3f8] sm:$0xf]
    %v309 = vld [vmem:[%s0 + $0x3fc] sm:$0xf]
    %v310 = vld [vmem:[%s0 + $0x400] sm:$0xf]
    %v311 = vld [vmem:[%s0 + $0x404] sm:$0xf]
    %v312 = vld [vmem:[%s0 + $0x408] sm:$0xf]
    %v313 = vld [vmem:[%s0 + $0x40c] sm:$0xf]
    %v314 = vld [vmem:[%s0 + $0x410] sm:$0xf]
    %v315 = vld [vmem:[%s0 + $0x414] sm:$0xf]
    %v316 = vld [vmem:[%s0 + $0x418] sm:$0xf]
    %v317 = vld [vmem:[%s0 + $0x41c] sm:$0xf]
    %v318 = vld [vmem:[%s0 + $0x420] sm:$0xf]
    %v319 = vld [vmem:[%s0 + $0x424] sm:$0xf]
    %v320 = vld [vmem:[%s0 + $0x428] sm:$0xf]
    %v321 = vld [vmem:[%s0 + $0x42c] sm:$0xf]
    %v322 = vld [vmem:[%s0 + $0x430] sm:$0xf]
    %v323 = vld [vmem:[%s0 + $0x434] sm:$0xf]
    %v324 = vld [vmem:[%s0 + $0x438] sm:$0xf]
    %v325 = vld [vmem:[%s0 + $0x43c] sm:$0xf]
    %v326 = vld [vmem:[%s0 + $0x440] sm:$0xf]
    %v327 = vld [vmem:[%s0 + $0x444] sm:$0xf]
    %v328 = vld [vmem:[%s0 + $0x448] sm:$0xf]
    %v329 = vld [vmem:[%s0 + $0x44c] sm:$0xf]
    %v330 = vld [vmem:[%s0 + $0x450] sm:$0xf]
    %v331 = vld [vmem:[%s0 + $0x454] sm:$0xf]
    %v332 = vld [vmem:[%s0 + $0x458] sm:$0xf]
    %v333 = vld [vmem:[%s0 + $0x45c] sm:$0xf]
    %v334 = vld [vmem:[%s0 + $0x460] sm:$0xf]
    %v335 = vld [vmem:[%s0 + $0x464] sm:$0xf]
    %v336 = vld [vmem:[%s0 + $0x468] sm:$0xf]
    %v337 = vld [vmem:[%s0 + $0x46c] sm:$0xf]
    %v338 = vld [vmem:[%s0 + $0x470] sm:$0xf]
    %v339 = vld [vmem:[%s0 + $0x474] sm:$0xf]
    %v340 = vld [vmem:[%s0 + $0x478] sm:$0xf]
    %v341 = vld [vmem:[%s0 + $0x47c] sm:$0xf]
    %v342 = vld [vmem:[%s0 + $0x480] sm:$0xf]
    %v343 = vld [vmem:[%s0 + $0x484] sm:$0xf]
    %v344 = vld [vmem:[%s0 + $0x488] sm:$0xf]
    %v345 = vld [vmem:[%s0 + $0x48c] sm:$0xf]
    %v346 = vld [vmem:[%s0 + $0x490] sm:$0xf]
    %v347 = vld [vmem:[%s0 + $0x494] sm:$0xf]
    %v348 = vld [vmem:[%s0 + $0x498] sm:$0xf]
    %v349 = vld [vmem:[%s0 + $0x49c] sm:$0xf]
    %v350 = vld [vmem:[%s0 + $0x4a0] sm:$0xf]
    %v351 = vld [vmem:[%s0 + $0x4a4] sm:$0xf]
    %v352 = vld [vmem:[%s0 + $0x4a8] sm:$0xf]
    %v353 = vld [vmem:[%s0 + $0x4ac] sm:$0xf]
    %v354 = vld [vmem:[%s0 + $0x4b0] sm:$0xf]
    %v355 = vld [vmem:[%s0 + $0x4b4] sm:$0xf]
    %v356 = vld [vmem:[%s0 + $0x4b8] sm:$0xf]
    %v357 = vld [vmem:[%s0 + $0x4bc] sm:$0xf]
    %v358 = vld [vmem:[%s0 + $0x4c0] sm:$0xf]
    %v359 = vld [vmem:[%s0 + $0x4c4] sm:$0xf]
    %v360 = vld [vmem:[%s0 + $0x4c8] sm:$0xf]
    %v361 = vld [vmem:[%s0 + $0x4cc] sm:$0xf]
    %v362 = vld [vmem:[%s0 + $0x4d0] sm:$0xf]
    %v363 = vld [vmem:[%s0 + $0x4d4] sm:$0xf]
    %v364 = vld [vmem:[%s0 + $0x4d8] sm:$0xf]
    %v365 = vld [vmem:[%s0 + $0x4dc] sm:$0xf]
    %v366 = vld [vmem:[%s0 + $0x4e0] sm:$0xf]
    %v367 = vld [vmem:[%s0 + $0x4e4] sm:$0xf]
    %v368 = vld [vmem:[%s0 + $0x4e8] sm:$0xf]
    %v369 = vld [vmem:[%s0 + $0x4ec] sm:$0xf]
    %v370 = vld [vmem:[%s0 + $0x4f0] sm:$0xf]
    %v371 = vld [vmem:[%s0 + $0x4f4] sm:$0xf]
    %v372 = vld [vmem:[%s0 + $0x4f8] sm:$0xf]
    %v373 = vld [vmem:[%s0 + $0x4fc] sm:$0xf]
    %v374 = vld [vmem:[%s0 + $0x500] sm:$0xf]
    %v375 = vld [vmem:[%s0 + $0x504] sm:$0xf]
    %v376 = vld [vmem:[%s0 + $0x508] sm:$0xf]
    %v377 = vld [vmem:[%s0 + $0x50c] sm:$0xf]
    %v378 = vld [vmem:[%s0 + $0x510] sm:$0xf]
    %v379 = vld [vmem:[%s0 + $0x514] sm:$0xf]
    %v380 = vld [vmem:[%s0 + $0x518] sm:$0xf]
    %v381 = vld [vmem:[%s0 + $0x51c] sm:$0xf]
    %v382 = vld [vmem:[%s0 + $0x520] sm:$0xf]
    %v383 = vld [vmem:[%s0 + $0x524] sm:$0xf]
    %v384 = vld [vmem:[%s0 + $0x528] sm:$0xf]
    %v385 = vld [vmem:[%s0 + $0x52c] sm:$0xf]
    %v386 = vld [vmem:[%s0 + $0x530] sm:$0xf]
    %v387 = vld [vmem:[%s0 + $0x534] sm:$0xf]
    %v388 = vld [vmem:[%s0 + $0x538] sm:$0xf]
    %v389 = vld [vmem:[%s0 + $0x53c] sm:$0xf]
    %v390 = vld [vmem:[%s0 + $0x540] sm:$0xf]
    %v391 = vld [vmem:[%s0 + $0x544] sm:$0xf]
    %v392 = vld [vmem:[%s0 + $0x548] sm:$0xf]
    %v393 = vld [vmem:[%s0 + $0x54c] sm:$0xf]
    %v394 = vld [vmem:[%s0 + $0x550] sm:$0xf]
    %v395 = vld [vmem:[%s0 + $0x554] sm:$0xf]
    %v396 = vld [vmem:[%s0 + $0x558] sm:$0xf]
    %v397 = vld [vmem:[%s0 + $0x55c] sm:$0xf]
    %v398 = vld [vmem:[%s0 + $0x560] sm:$0xf]
    %v399 = vld [vmem:[%s0 + $0x564] sm:$0xf]
    %v400 = vld [vmem:[%s0 + $0x568] sm:$0xf]
    %v401 = vld [vmem:[%s0 + $0x56c] sm:$0xf]
    %v402 = vld [vmem:[%s0 + $0x570] sm:$0xf]
    %v403 = vld [vmem:[%s0 + $0x574] sm:$0xf]
    %v404 = vld [vmem:[%s0 + $0x578] sm:$0xf]
    %v405 = vld [vmem:[%s0 + $0x57c] sm:$0xf]
    %v406 = vld [vmem:[%s0 + $0x580] sm:$0xf]
    %v407 = vld [vmem:[%s0 + $0x584] sm:$0xf]
    %v408 = vld [vmem:[%s0 + $0x588] sm:$0xf]
    %v409 = vld [vmem:[%s0 + $0x58c] sm:$0xf]
    %v410 = vld [vmem:[%s0 + $0x590] sm:$0xf]
    %v411 = vld [vmem:[%s0 + $0x594] sm:$0xf]
    %v412 = vld [vmem:[%s0 + $0x598] sm:$0xf]
    %v413 = vld [vmem:[%s0 + $0x59c] sm:$0xf]
    %v414 = vld [vmem:[%s0 + $0x5a0] sm:$0xf]
    %v415 = vld [vmem:[%s0 + $0x5a4] sm:$0xf]
    %v416 = vld [vmem:[%s0 + $0x5a8] sm:$0xf]
    %v417 = vld [vmem:[%s0 + $0x5ac] sm:$0xf]
    %v418 = vld [vmem:[%s0 + $0x5b0] sm:$0xf]
    %v419 = vld [vmem:[%s0 + $0x5b4] sm:$0xf]
    %v420 = vld [vmem:[%s0 + $0x5b8] sm:$0xf]
    %v421 = vld [vmem:[%s0 + $0x5bc] sm:$0xf]
    %v422 = vld [vmem:[%s0 + $0x5c0] sm:$0xf]
    %v423 = vld [vmem:[%s0 + $0x5c4] sm:$0xf]
    %v424 = vld [vmem:[%s0 + $0x5c8] sm:$0xf]
    %v425 = vld [vmem:[%s0 + $0x5cc] sm:$0xf]
    %v426 = vld [vmem:[%s0 + $0x5d0] sm:$0xf]
    %v427 = vld [vmem:[%s0 + $0x5d4] sm:$0xf]
    %v428 = vld [vmem:[%s0 + $0x5d8] sm:$0xf]
    %v429 = vld [vmem:[%s0 + $0x5dc] sm:$0xf]
    %v430 = vld [vmem:[%s0 + $0x5e0] sm:$0xf]
    %v431 = vld [vmem:[%s0 + $0x5e4] sm:$0xf]
    %v432 = vld [vmem:[%s0 + $0x5e8] sm:$0xf]
    %v433 = vld [vmem:[%s0 + $0x5ec] sm:$0xf]
    %v434 = vld [vmem:[%s0 + $0x5f0] sm:$0xf]
    %v435 = vld [vmem:[%s0 + $0x5f4] sm:$0xf]
    %v436 = vld [vmem:[%s0 + $0x5f8] sm:$0xf]
    %v437 = vld [vmem:[%s0 + $0x5fc] sm:$0xf]
    %v438 = vld [vmem:[%s0 + $0x600] sm:$0xf]
    %v439 = vld [vmem:[%s0 + $0x604] sm:$0xf]
    %v440 = vld [vmem:[%s0 + $0x608] sm:$0xf]
    %v441 = vld [vmem:[%s0 + $0x60c] sm:$0xf]
    %v442 = vld [vmem:[%s0 + $0x610] sm:$0xf]
    %v443 = vld [vmem:[%s0 + $0x614] sm:$0xf]
    %v444 = vld [vmem:[%s0 + $0x618] sm:$0xf]
    %v445 = vld [vmem:[%s0 + $0x61c] sm:$0xf]
    %v446 = vld [vmem:[%s0 + $0x620] sm:$0xf]
    %v447 = vld [vmem:[%s0 + $0x624] sm:$0xf]
    %v448 = vld [vmem:[%s0 + $0x628] sm:$0xf]
    %v449 = vld [vmem:[%s0 + $0x62c] sm:$0xf]
    %v450 = vld [vmem:[%s0 + $0x630] sm:$0xf]
    %v451 = vld [vmem:[%s0 + $0x634] sm:$0xf]
    %v452 = vld [vmem:[%s0 + $0x638] sm:$0xf]
    %v453 = vld [vmem:[%s0 + $0x63c] sm:$0xf]
    %v454 = vld [vmem:[%s0 + $0x640] sm:$0xf]
    %v455 = vld [vmem:[%s0 + $0x644] sm:$0xf]
    %v456 = vld [vmem:[%s0 + $0x648] sm:$0xf]
    %v457 = vld [vmem:[%s0 + $0x64c] sm:$0xf]
    %v458 = vld [vmem:[%s0 + $0x650] sm:$0xf]
    %v459 = vld [vmem:[%s0 + $0x654] sm:$0xf]
    %v460 = vld [vmem:[%s0 + $0x658] sm:$0xf]
    %v461 = vld [vmem:[%s0 + $0x65c] sm:$0xf]
    %v462 = vld [vmem:[%s0 + $0x660] sm:$0xf]
    %v463 = vld [vmem:[%s0 + $0x664] sm:$0xf]
    %v464 = vld [vmem:[%s0 + $0x668] sm:$0xf]
    %v465 = vld [vmem:[%s0 + $0x66c] sm:$0xf]
    %v466 = vld [vmem:[%s0 + $0x670] sm:$0xf]
    %v467 = vld [vmem:[%s0 + $0x674] sm:$0xf]
    %v468 = vld [vmem:[%s0 + $0x678] sm:$0xf]
    %v469 = vld [vmem:[%s0 + $0x67c] sm:$0xf]
    %v470 = vld [vmem:[%s0 + $0x680] sm:$0xf]
    %v471 = vld [vmem:[%s0 + $0x684] sm:$0xf]
    %v472 = vld [vmem:[%s0 + $0x688] sm:$0xf]
    %v473 = vld [vmem:[%s0 + $0x68c] sm:$0xf]
    %v474 = vld [vmem:[%s0 + $0x690] sm:$0xf]
    %v475 = vld [vmem:[%s0 + $0x694] sm:$0xf]
    %v476 = vld [vmem:[%s0 + $0x698] sm:$0xf]
    %v477 = vld [vmem:[%s0 + $0x69c] sm:$0xf]
    %v478 = vld [vmem:[%s0 + $0x6a0] sm:$0xf]
    %v479 = vld [vmem:[%s0 + $0x6a4] sm:$0xf]
    %v480 = vld [vmem:[%s0 + $0x6a8] sm:$0xf]
    %v481 = vld [vmem:[%s0 + $0x6ac] sm:$0xf]
    %v482 = vld [vmem:[%s0 + $0x6b0] sm:$0xf]
    %v483 = vld [vmem:[%s0 + $0x6b4] sm:$0xf]
    %v484 = vld [vmem:[%s0 + $0x6b8] sm:$0xf]
    %v485 = vld [vmem:[%s0 + $0x6bc] sm:$0xf]
    %v486 = vld [vmem:[%s0 + $0x6c0] sm:$0xf]
    %v487 = vld [vmem:[%s0 + $0x6c4] sm:$0xf]
    %v488 = vld [vmem:[%s0 + $0x6c8] sm:$0xf]
    %v489 = vld [vmem:[%s0 + $0x6cc] sm:$0xf]
    %v490 = vld [vmem:[%s0 + $0x6d0] sm:$0xf]
    %v491 = vld [vmem:[%s0 + $0x6d4] sm:$0xf]
    %v492 = vld [vmem:[%s0 + $0x6d8] sm:$0xf]
    %v493 = vld [vmem:[%s0 + $0x6dc] sm:$0xf]
    %v494 = vld [vmem:[%s0 + $0x6e0] sm:$0xf]
    %v495 = vld [vmem:[%s0 + $0x6e4] sm:$0xf]
    %v496 = vld [vmem:[%s0 + $0x6e8] sm:$0xf]
    %v497 = vld [vmem:[%s0 + $0x6ec] sm:$0xf]
    %v498 = vld [vmem:[%s0 + $0x6f0] sm:$0xf]
    %v499 = vld [vmem:[%s0 + $0x6f4] sm:$0xf]
    %v500 = vld [vmem:[%s0 + $0x6f8] sm:$0xf]
    %v501 = vld [vmem:[%s0 + $0x6fc] sm:$0xf]
    %v502 = vld [vmem:[%s0 + $0x700] sm:$0xf]
    %v503 = vld [vmem:[%s0 + $0x704] sm:$0xf]
    %v504 = vld [vmem:[%s0 + $0x708] sm:$0xf]
    %v505 = vld [vmem:[%s0 + $0x70c] sm:$0xf]
    %v506 = vld [vmem:[%s0 + $0x710] sm:$0xf]
    %v507 = vld [vmem:[%s0 + $0x714] sm:$0xf]
    %v508 = vld [vmem:[%s0 + $0x718] sm:$0xf]
    %v509 = vld [vmem:[%s0 + $0x71c] sm:$0xf]
    %v510 = vld [vmem:[%s0 + $0x720] sm:$0xf]
    %v511 = vld [vmem:[%s0 + $0x724] sm:$0xf]
    %v512 = vld [vmem:[%s0 + $0x728] sm:$0xf]
    %v513 = vld [vmem:[%s0 + $0x72c] sm:$0xf]
    %v514 = vld [vmem:[%s0 + $0x730] sm:$0xf]
    %v515 = vld [vmem:[%s0 + $0x734] sm:$0xf]
    %v516 = vld [vmem:[%s0 + $0x738] sm:$0xf]
    %v517 = vld [vmem:[%s0 + $0x73c] sm:$0xf]
    %v518 = vld [vmem:[%s0 + $0x740] sm:$0xf]
    %v519 = vld [vmem:[%s0 + $0x744] sm:$0xf]
    %v520 = vld [vmem:[%s0 + $0x748] sm:$0xf]
    %v521 = vld [vmem:[%s0 + $0x74c] sm:$0xf]
    %v522 = vld [vmem:[%s0 + $0x750] sm:$0xf]
    %v523 = vld [vmem:[%s0 + $0x754] sm:$0xf]
    %v524 = vld [vmem:[%s0 + $0x758] sm:$0xf]
    %v525 = vld [vmem:[%s0 + $0x75c] sm:$0xf]
    %v526 = vld [vmem:[%s0 + $0x760] sm:$0xf]
    %v527 = vld [vmem:[%s0 + $0x764] sm:$0xf]
    %v528 = vld [vmem:[%s0 + $0x768] sm:$0xf]
    %v529 = vld [vmem:[%s0 + $0x76c] sm:$0xf]
    %v530 = vld [vmem:[%s0 + $0x770] sm:$0xf]
    %v531 = vld [vmem:[%s0 + $0x774] sm:$0xf]
    %v532 = vld [vmem:[%s0 + $0x778] sm:$0xf]
    %v533 = vld [vmem:[%s0 + $0x77c] sm:$0xf]
    %v534 = vld [vmem:[%s0 + $0x780] sm:$0xf]
    %v535 = vld [vmem:[%s0 + $0x784] sm:$0xf]
    %v536 = vld [vmem:[%s0 + $0x788] sm:$0xf]
    %v537 = vld [vmem:[%s0 + $0x78c] sm:$0xf]
    %v538 = vld [vmem:[%s0 + $0x790] sm:$0xf]
    %v539 = vld [vmem:[%s0 + $0x794] sm:$0xf]
    %v540 = vld [vmem:[%s0 + $0x798] sm:$0xf]
    %v541 = vld [vmem:[%s0 + $0x79c] sm:$0xf]
    %v542 = vld [vmem:[%s0 + $0x7a0] sm:$0xf]
    %v543 = vld [vmem:[%s0 + $0x7a4] sm:$0xf]
    %v544 = vld [vmem:[%s0 + $0x7a8] sm:$0xf]
    %v545 = vld [vmem:[%s0 + $0x7ac] sm:$0xf]
    %v546 = vld [vmem:[%s0 + $0x7b0] sm:$0xf]
    %v547 = vld [vmem:[%s0 + $0x7b4] sm:$0xf]
    %v548 = vld [vmem:[%s0 + $0x7b8] sm:$0xf]
    %v549 = vld [vmem:[%s0 + $0x7bc] sm:$0xf]
    %v550 = vld [vmem:[%s0 + $0x7c0] sm:$0xf]
    %v551 = vld [vmem:[%s0 + $0x7c4] sm:$0xf]
    %v552 = vld [vmem:[%s0 + $0x7c8] sm:$0xf]
    %v553 = vld [vmem:[%s0 + $0x7cc] sm:$0xf]
    %v554 = vld [vmem:[%s0 + $0x7d0] sm:$0xf]
    %v555 = vld [vmem:[%s0 + $0x7d4] sm:$0xf]
    %v556 = vld [vmem:[%s0 + $0x7d8] sm:$0xf]
    %v557 = vld [vmem:[%s0 + $0x7dc] sm:$0xf]
    %v558 = vld [vmem:[%s0 + $0x7e0] sm:$0xf]
    %v559 = vld [vmem:[%s0 + $0x7e4] sm:$0xf]
    %v560 = vld [vmem:[%s0 + $0x7e8] sm:$0xf]
    %v561 = vld [vmem:[%s0 + $0x7ec] sm:$0xf]
    %v562 = vld [vmem:[%s0 + $0x7f0] sm:$0xf]
    %v563 = vld [vmem:[%s0 + $0x7f4] sm:$0xf]
    %v564 = vld [vmem:[%s0 + $0x7f8] sm:$0xf]
    %v565 = vld [vmem:[%s0 + $0x7fc] sm:$0xf]
    %v566 = vld [vmem:[%s0 + $0x800] sm:$0xf]
    %v567 = vld [vmem:[%s0 + $0x804] sm:$0xf]
    %v568 = vld [vmem:[%s0 + $0x808] sm:$0xf]
    %v569 = vld [vmem:[%s0 + $0x80c] sm:$0xf]
    %v570 = vld [vmem:[%s0 + $0x810] sm:$0xf]
    %v571 = vld [vmem:[%s0 + $0x814] sm:$0xf]
    %v572 = vld [vmem:[%s0 + $0x818] sm:$0xf]
    %v573 = vld [vmem:[%s0 + $0x81c] sm:$0xf]
    %v574 = vld [vmem:[%s0 + $0x820] sm:$0xf]
    %v575 = vld [vmem:[%s0 + $0x824] sm:$0xf]
    %v576 = vld [vmem:[%s0 + $0x828] sm:$0xf]
    %v577 = vld [vmem:[%s0 + $0x82c] sm:$0xf]
    %v578 = vld [vmem:[%s0 + $0x830] sm:$0xf]
    %v579 = vld [vmem:[%s0 + $0x834] sm:$0xf]
    %v580 = vld [vmem:[%s0 + $0x838] sm:$0xf]
    %v581 = vld [vmem:[%s0 + $0x83c] sm:$0xf]
    %v582 = vld [vmem:[%s0 + $0x840] sm:$0xf]
    %v583 = vld [vmem:[%s0 + $0x844] sm:$0xf]
    %v584 = vld [vmem:[%s0 + $0x848] sm:$0xf]
    %v585 = vld [vmem:[%s0 + $0x84c] sm:$0xf]
    %v586 = vld [vmem:[%s0 + $0x850] sm:$0xf]
    %v587 = vld [vmem:[%s0 + $0x854] sm:$0xf]
    %v588 = vld [vmem:[%s0 + $0x858] sm:$0xf]
    %v589 = vld [vmem:[%s0 + $0x85c] sm:$0xf]
    %v590 = vld [vmem:[%s0 + $0x860] sm:$0xf]
    %v591 = vld [vmem:[%s0 + $0x864] sm:$0xf]
    %v592 = vld [vmem:[%s0 + $0x868] sm:$0xf]
    %v593 = vld [vmem:[%s0 + $0x86c] sm:$0xf]
    %v594 = vld [vmem:[%s0 + $0x870] sm:$0xf]
    %v595 = vld [vmem:[%s0 + $0x874] sm:$0xf]
    %v596 = vld [vmem:[%s0 + $0x878] sm:$0xf]
    %v597 = vld [vmem:[%s0 + $0x87c] sm:$0xf]
    %v598 = vld [vmem:[%s0 + $0x880] sm:$0xf]
    %v599 = vld [vmem:[%s0 + $0x884] sm:$0xf]
    %v600 = vld [vmem:[%s0 + $0x888] sm:$0xf]
    %v601 = vld [vmem:[%s0 + $0x88c] sm:$0xf]
    %v602 = vld [vmem:[%s0 + $0x890] sm:$0xf]
    %v603 = vld [vmem:[%s0 + $0x894] sm:$0xf]
    %v604 = vld [vmem:[%s0 + $0x898] sm:$0xf]
    %v605 = vld [vmem:[%s0 + $0x89c] sm:$0xf]
    %v606 = vld [vmem:[%s0 + $0x8a0] sm:$0xf]
    %v607 = vld [vmem:[%s0 + $0x8a4] sm:$0xf]
    %v608 = vld [vmem:[%s0 + $0x8a8] sm:$0xf]
    %v609 = vld [vmem:[%s0 + $0x8ac] sm:$0xf]
    %v610 = vld [vmem:[%s0 + $0x8b0] sm:$0xf]
    %v611 = vld [vmem:[%s0 + $0x8b4] sm:$0xf]
    %v612 = vld [vmem:[%s0 + $0x8b8] sm:$0xf]
    %v613 = vld [vmem:[%s0 + $0x8bc] sm:$0xf]
    %v614 = vld [vmem:[%s0 + $0x8c0] sm:$0xf]
    %v615 = vld [vmem:[%s0 + $0x8c4] sm:$0xf]
    %v616 = vld [vmem:[%s0 + $0x8c8] sm:$0xf]
    %v617 = vld [vmem:[%s0 + $0x8cc] sm:$0xf]
    %v618 = vld [vmem:[%s0 + $0x8d0] sm:$0xf]
    %v619 = vld [vmem:[%s0 + $0x8d4] sm:$0xf]
    %v620 = vld [vmem:[%s0 + $0x8d8] sm:$0xf]
    %v621 = vld [vmem:[%s0 + $0x8dc] sm:$0xf]
    %v622 = vld [vmem:[%s0 + $0x8e0] sm:$0xf]
    %v623 = vld [vmem:[%s0 + $0x8e4] sm:$0xf]
    %v624 = vld [vmem:[%s0 + $0x8e8] sm:$0xf]
    %v625 = vld [vmem:[%s0 + $0x8ec] sm:$0xf]
    %v626 = vld [vmem:[%s0 + $0x8f0] sm:$0xf]
    %v627 = vld [vmem:[%s0 + $0x8f4] sm:$0xf]
    %v628 = vld [vmem:[%s0 + $0x8f8] sm:$0xf]
    %v629 = vld [vmem:[%s0 + $0x8fc] sm:$0xf]
    %v630 = vld [vmem:[%s0 + $0x900] sm:$0xf]
    %v631 = vld [vmem:[%s0 + $0x904] sm:$0xf]
    %v632 = vld [vmem:[%s0 + $0x908] sm:$0xf]
    %v633 = vld [vmem:[%s0 + $0x90c] sm:$0xf]
    %v634 = vld [vmem:[%s0 + $0x910] sm:$0xf]
    %v635 = vld [vmem:[%s0 + $0x914] sm:$0xf]
    %v636 = vld [vmem:[%s0 + $0x918] sm:$0xf]
    %v637 = vld [vmem:[%s0 + $0x91c] sm:$0xf]
    %v638 = vld [vmem:[%s0 + $0x920] sm:$0xf]
    %v639 = vld [vmem:[%s0 + $0x924] sm:$0xf]
    %v640 = vld [vmem:[%s0 + $0x928] sm:$0xf]
    %v641 = vld [vmem:[%s0 + $0x92c] sm:$0xf]
    %v642 = vld [vmem:[%s0 + $0x930] sm:$0xf]
    %v643 = vld [vmem:[%s0 + $0x934] sm:$0xf]
    %v644 = vld [vmem:[%s0 + $0x938] sm:$0xf]
    %v645 = vld [vmem:[%s0 + $0x93c] sm:$0xf]
    %v646 = vld [vmem:[%s0 + $0x940] sm:$0xf]
    %v647 = vld [vmem:[%s0 + $0x944] sm:$0xf]
    %v648 = vld [vmem:[%s0 + $0x948] sm:$0xf]
    %v649 = vld [vmem:[%s0 + $0x94c] sm:$0xf]
    %v650 = vld [vmem:[%s0 + $0x950] sm:$0xf]
    %v651 = vld [vmem:[%s0 + $0x954] sm:$0xf]
    %v652 = vld [vmem:[%s0 + $0x958] sm:$0xf]
    %v653 = vld [vmem:[%s0 + $0x95c] sm:$0xf]
    %v654 = vld [vmem:[%s0 + $0x960] sm:$0xf]
    %v655 = vld [vmem:[%s0 + $0x964] sm:$0xf]
    %v656 = vld [vmem:[%s0 + $0x968] sm:$0xf]
    %v657 = vld [vmem:[%s0 + $0x96c] sm:$0xf]
    %v658 = vld [vmem:[%s0 + $0x970] sm:$0xf]
    %v659 = vld [vmem:[%s0 + $0x974] sm:$0xf]
    %v660 = vld [vmem:[%s0 + $0x978] sm:$0xf]
    %v661 = vld [vmem:[%s0 + $0x97c] sm:$0xf]
    %v662 = vld [vmem:[%s0 + $0x980] sm:$0xf]
    %v663 = vld [vmem:[%s0 + $0x984] sm:$0xf]
    %v664 = vld [vmem:[%s0 + $0x988] sm:$0xf]
    %v665 = vld [vmem:[%s0 + $0x98c] sm:$0xf]
    %v666 = vld [vmem:[%s0 + $0x990] sm:$0xf]
    %v667 = vld [vmem:[%s0 + $0x994] sm:$0xf]
    %v668 = vld [vmem:[%s0 + $0x998] sm:$0xf]
    %v669 = vld [vmem:[%s0 + $0x99c] sm:$0xf]
    %v670 = vld [vmem:[%s0 + $0x9a0] sm:$0xf]
    %v671 = vld [vmem:[%s0 + $0x9a4] sm:$0xf]
    %v672 = vld [vmem:[%s0 + $0x9a8] sm:$0xf]
    %v673 = vld [vmem:[%s0 + $0x9ac] sm:$0xf]
    %v674 = vld [vmem:[%s0 + $0x9b0] sm:$0xf]
    %v675 = vld [vmem:[%s0 + $0x9b4] sm:$0xf]
    %v676 = vld [vmem:[%s0 + $0x9b8] sm:$0xf]
    %v677 = vld [vmem:[%s0 + $0x9bc] sm:$0xf]
    %v678 = vld [vmem:[%s0 + $0x9c0] sm:$0xf]
    %v679 = vld [vmem:[%s0 + $0x9c4] sm:$0xf]
    %v680 = vld [vmem:[%s0 + $0x9c8] sm:$0xf]
    %v681 = vld [vmem:[%s0 + $0x9cc] sm:$0xf]
    %v682 = vld [vmem:[%s0 + $0x9d0] sm:$0xf]
    %v683 = vld [vmem:[%s0 + $0x9d4] sm:$0xf]
    %v684 = vld [vmem:[%s0 + $0x9d8] sm:$0xf]
    %v685 = vld [vmem:[%s0 + $0x9dc] sm:$0xf]
    %v686 = vld [vmem:[%s0 + $0x9e0] sm:$0xf]
    %v687 = vld [vmem:[%s0 + $0x9e4] sm:$0xf]
    %v688 = vld [vmem:[%s0 + $0x9e8] sm:$0xf]
    %v689 = vld [vmem:[%s0 + $0x9ec] sm:$0xf]
    %v690 = vld [vmem:[%s0 + $0x9f0] sm:$0xf]
    %v691 = vld [vmem:[%s0 + $0x9f4] sm:$0xf]
    %v692 = vld [vmem:[%s0 + $0x9f8] sm:$0xf]
    %v693 = vld [vmem:[%s0 + $0x9fc] sm:$0xf]
    %v694 = vld [vmem:[%s0 + $0xa00] sm:$0xf]
    %v695 = vld [vmem:[%s0 + $0xa04] sm:$0xf]
    %v696 = vld [vmem:[%s0 + $0xa08] sm:$0xf]
    %v697 = vld [vmem:[%s0 + $0xa0c] sm:$0xf]
    %v698 = vld [vmem:[%s0 + $0xa10] sm:$0xf]
    %v699 = vld [vmem:[%s0 + $0xa14] sm:$0xf]
    %v700 = vld [vmem:[%s0 + $0xa18] sm:$0xf]
    %v701 = vld [vmem:[%s0 + $0xa1c] sm:$0xf]
    %v702 = vld [vmem:[%s0 + $0xa20] sm:$0xf]
    %v703 = vld [vmem:[%s0 + $0xa24] sm:$0xf]
    %v704 = vld [vmem:[%s0 + $0xa28] sm:$0xf]
    %v705 = vld [vmem:[%s0 + $0xa2c] sm:$0xf]
    %v706 = vld [vmem:[%s0 + $0xa30] sm:$0xf]
    %v707 = vld [vmem:[%s0 + $0xa34] sm:$0xf]
    %v708 = vld [vmem:[%s0 + $0xa38] sm:$0xf]
    %v709 = vld [vmem:[%s0 + $0xa3c] sm:$0xf]
    %v710 = vld [vmem:[%s0 + $0xa40] sm:$0xf]
    %v711 = vld [vmem:[%s0 + $0xa44] sm:$0xf]
    %v712 = vld [vmem:[%s0 + $0xa48] sm:$0xf]
    %v713 = vld [vmem:[%s0 + $0xa4c] sm:$0xf]
    %v714 = vld [vmem:[%s0 + $0xa50] sm:$0xf]
    %v715 = vld [vmem:[%s0 + $0xa54] sm:$0xf]
    %v716 = vld [vmem:[%s0 + $0xa58] sm:$0xf]
    %v717 = vld [vmem:[%s0 + $0xa5c] sm:$0xf]
    %v718 = vld [vmem:[%s0 + $0xa60] sm:$0xf]
    %v719 = vld [vmem:[%s0 + $0xa64] sm:$0xf]
    %v720 = vld [vmem:[%s0 + $0xa68] sm:$0xf]
    %v721 = vld [vmem:[%s0 + $0xa6c] sm:$0xf]
    %v722 = vld [vmem:[%s0 + $0xa70] sm:$0xf]
    %v723 = vld [vmem:[%s0 + $0xa74] sm:$0xf]
    %v724 = vld [vmem:[%s0 + $0xa78] sm:$0xf]
    %v725 = vld [vmem:[%s0 + $0xa7c] sm:$0xf]
    %v726 = vld [vmem:[%s0 + $0xa80] sm:$0xf]
    %v727 = vld [vmem:[%s0 + $0xa84] sm:$0xf]
    %v728 = vld [vmem:[%s0 + $0xa88] sm:$0xf]
    %v729 = vld [vmem:[%s0 + $0xa8c] sm:$0xf]
    %v730 = vld [vmem:[%s0 + $0xa90] sm:$0xf]
    %v731 = vld [vmem:[%s0 + $0xa94] sm:$0xf]
    %v732 = vld [vmem:[%s0 + $0xa98] sm:$0xf]
    %v733 = vld [vmem:[%s0 + $0xa9c] sm:$0xf]
    %v734 = vld [vmem:[%s0 + $0xaa0] sm:$0xf]
    %v735 = vld [vmem:[%s0 + $0xaa4] sm:$0xf]
    %v736 = vld [vmem:[%s0 + $0xaa8] sm:$0xf]
    %v737 = vld [vmem:[%s0 + $0xaac] sm:$0xf]
    %v738 = vld [vmem:[%s0 + $0xab0] sm:$0xf]
    %v739 = vld [vmem:[%s0 + $0xab4] sm:$0xf]
    %v740 = vld [vmem:[%s0 + $0xab8] sm:$0xf]
    %v741 = vld [vmem:[%s0 + $0xabc] sm:$0xf]
    %v742 = vld [vmem:[%s0 + $0xac0] sm:$0xf]
    %v743 = vld [vmem:[%s0 + $0xac4] sm:$0xf]
    %v744 = vld [vmem:[%s0 + $0xac8] sm:$0xf]
    %v745 = vld [vmem:[%s0 + $0xacc] sm:$0xf]
    %v746 = vld [vmem:[%s0 + $0xad0] sm:$0xf]
    %v747 = vld [vmem:[%s0 + $0xad4] sm:$0xf]
    %v748 = vld [vmem:[%s0 + $0xad8] sm:$0xf]
    %v749 = vld [vmem:[%s0 + $0xadc] sm:$0xf]
    %v750 = vld [vmem:[%s0 + $0xae0] sm:$0xf]
    %v751 = vld [vmem:[%s0 + $0xae4] sm:$0xf]
    %v752 = vld [vmem:[%s0 + $0xae8] sm:$0xf]
    %v753 = vld [vmem:[%s0 + $0xaec] sm:$0xf]
    %v754 = vld [vmem:[%s0 + $0xaf0] sm:$0xf]
    %v755 = vld [vmem:[%s0 + $0xaf4] sm:$0xf]
    %v756 = vld [vmem:[%s0 + $0xaf8] sm:$0xf]
    %v757 = vld [vmem:[%s0 + $0xafc] sm:$0xf]
    %v758 = vld [vmem:[%s0 + $0xb00] sm:$0xf]
    %v759 = vld [vmem:[%s0 + $0xb04] sm:$0xf]
    %v760 = vld [vmem:[%s0 + $0xb08] sm:$0xf]
    %v761 = vld [vmem:[%s0 + $0xb0c] sm:$0xf]
    %v762 = vld [vmem:[%s0 + $0xb10] sm:$0xf]
    %v763 = vld [vmem:[%s0 + $0xb14] sm:$0xf]
    %v764 = vld [vmem:[%s0 + $0xb18] sm:$0xf]
    %v765 = vld [vmem:[%s0 + $0xb1c] sm:$0xf]
    %v766 = vld [vmem:[%s0 + $0xb20] sm:$0xf]
    %v767 = vld [vmem:[%s0 + $0xb24] sm:$0xf]
    %v768 = vld [vmem:[%s0 + $0xb28] sm:$0xf]
    %v769 = vld [vmem:[%s0 + $0xb2c] sm:$0xf]
    %v770 = vld [vmem:[%s0 + $0xb30] sm:$0xf]
    %v771 = vld [vmem:[%s0 + $0xb34] sm:$0xf]
    %v772 = vld [vmem:[%s0 + $0xb38] sm:$0xf]
    %v773 = vld [vmem:[%s0 + $0xb3c] sm:$0xf]
    %v774 = vld [vmem:[%s0 + $0xb40] sm:$0xf]
    %v775 = vld [vmem:[%s0 + $0xb44] sm:$0xf]
    %v776 = vld [vmem:[%s0 + $0xb48] sm:$0xf]
    %v777 = vld [vmem:[%s0 + $0xb4c] sm:$0xf]
    %v778 = vld [vmem:[%s0 + $0xb50] sm:$0xf]
    %v779 = vld [vmem:[%s0 + $0xb54] sm:$0xf]
    %v780 = vld [vmem:[%s0 + $0xb58] sm:$0xf]
    %v781 = vld [vmem:[%s0 + $0xb5c] sm:$0xf]
    %v782 = vld [vmem:[%s0 + $0xb60] sm:$0xf]
    %v783 = vld [vmem:[%s0 + $0xb64] sm:$0xf]
    %v784 = vld [vmem:[%s0 + $0xb68] sm:$0xf]
    %v785 = vld [vmem:[%s0 + $0xb6c] sm:$0xf]
    %v786 = vld [vmem:[%s0 + $0xb70] sm:$0xf]
    %v787 = vld [vmem:[%s0 + $0xb74] sm:$0xf]
    %v788 = vld [vmem:[%s0 + $0xb78] sm:$0xf]
    %v789 = vld [vmem:[%s0 + $0xb7c] sm:$0xf]
    %v790 = vld [vmem:[%s0 + $0xb80] sm:$0xf]
    %v791 = vld [vmem:[%s0 + $0xb84] sm:$0xf]
    %v792 = vld [vmem:[%s0 + $0xb88] sm:$0xf]
    %v793 = vld [vmem:[%s0 + $0xb8c] sm:$0xf]
    %v794 = vld [vmem:[%s0 + $0xb90] sm:$0xf]
    %v795 = vld [vmem:[%s0 + $0xb94] sm:$0xf]
    %v796 = vld [vmem:[%s0 + $0xb98] sm:$0xf]
    %v797 = vld [vmem:[%s0 + $0xb9c] sm:$0xf]
    %v798 = vld [vmem:[%s0 + $0xba0] sm:$0xf]
    %v799 = vld [vmem:[%s0 + $0xba4] sm:$0xf]
    %v800 = vld [vmem:[%s0 + $0xba8] sm:$0xf]
    %v801 = vld [vmem:[%s0 + $0xbac] sm:$0xf]
    %v802 = vld [vmem:[%s0 + $0xbb0] sm:$0xf]
    %v803 = vld [vmem:[%s0 + $0xbb4] sm:$0xf]
    %v804 = vld [vmem:[%s0 + $0xbb8] sm:$0xf]
    %v805 = vld [vmem:[%s0 + $0xbbc] sm:$0xf]
    %v806 = vld [vmem:[%s0 + $0xbc0] sm:$0xf]
    %v807 = vld [vmem:[%s0 + $0xbc4] sm:$0xf]
    %v808 = vld [vmem:[%s0 + $0xbc8] sm:$0xf]
    %v809 = vld [vmem:[%s0 + $0xbcc] sm:$0xf]
    %v810 = vld [vmem:[%s0 + $0xbd0] sm:$0xf]
    %v811 = vld [vmem:[%s0 + $0xbd4] sm:$0xf]
    %v812 = vld [vmem:[%s0 + $0xbd8] sm:$0xf]
    %v813 = vld [vmem:[%s0 + $0xbdc] sm:$0xf]
    %v814 = vld [vmem:[%s0 + $0xbe0] sm:$0xf]
    %v815 = vld [vmem:[%s0 + $0xbe4] sm:$0xf]
    %v816 = vld [vmem:[%s0 + $0xbe8] sm:$0xf]
    %v817 = vld [vmem:[%s0 + $0xbec] sm:$0xf]
    %v818 = vld [vmem:[%s0 + $0xbf0] sm:$0xf]
    %v819 = vld [vmem:[%s0 + $0xbf4] sm:$0xf]
    %v820 = vld [vmem:[%s0 + $0xbf8] sm:$0xf]
    %v821 = vld [vmem:[%s0 + $0xbfc] sm:$0xf]
    %v822 = vld [vmem:[%s0 + $0xc00] sm:$0xf]
    %v823 = vld [vmem:[%s0 + $0xc04] sm:$0xf]
    %v824 = vld [vmem:[%s0 + $0xc08] sm:$0xf]
    %v825 = vld [vmem:[%s0 + $0xc0c] sm:$0xf]
    %v826 = vld [vmem:[%s0 + $0xc10] sm:$0xf]
    %v827 = vld [vmem:[%s0 + $0xc14] sm:$0xf]
    %v828 = vld [vmem:[%s0 + $0xc18] sm:$0xf]
    %v829 = vld [vmem:[%s0 + $0xc1c] sm:$0xf]
    %v830 = vld [vmem:[%s0 + $0xc20] sm:$0xf]
    %v831 = vld [vmem:[%s0 + $0xc24] sm:$0xf]
    %v832 = vld [vmem:[%s0 + $0xc28] sm:$0xf]
    %v833 = vld [vmem:[%s0 + $0xc2c] sm:$0xf]
    %v834 = vld [vmem:[%s0 + $0xc30] sm:$0xf]
    %v835 = vld [vmem:[%s0 + $0xc34] sm:$0xf]
    %v836 = vld [vmem:[%s0 + $0xc38] sm:$0xf]
    %v837 = vld [vmem:[%s0 + $0xc3c] sm:$0xf]
    %v838 = vld [vmem:[%s0 + $0xc40] sm:$0xf]
    %v839 = vld [vmem:[%s0 + $0xc44] sm:$0xf]
    %v840 = vld [vmem:[%s0 + $0xc48] sm:$0xf]
    %v841 = vld [vmem:[%s0 + $0xc4c] sm:$0xf]
    %v842 = vld [vmem:[%s0 + $0xc50] sm:$0xf]
    %v843 = vld [vmem:[%s0 + $0xc54] sm:$0xf]
    %v844 = vld [vmem:[%s0 + $0xc58] sm:$0xf]
    %v845 = vld [vmem:[%s0 + $0xc5c] sm:$0xf]
    %v846 = vld [vmem:[%s0 + $0xc60] sm:$0xf]
    %v847 = vld [vmem:[%s0 + $0xc64] sm:$0xf]
    %v848 = vld [vmem:[%s0 + $0xc68] sm:$0xf]
    %v849 = vld [vmem:[%s0 + $0xc6c] sm:$0xf]
    %v850 = vld [vmem:[%s0 + $0xc70] sm:$0xf]
    %v851 = vld [vmem:[%s0 + $0xc74] sm:$0xf]
    %v852 = vld [vmem:[%s0 + $0xc78] sm:$0xf]
    %v853 = vld [vmem:[%s0 + $0xc7c] sm:$0xf]
    %v854 = vld [vmem:[%s0 + $0xc80] sm:$0xf]
    %v855 = vld [vmem:[%s0 + $0xc84] sm:$0xf]
    %v856 = vld [vmem:[%s0 + $0xc88] sm:$0xf]
    %v857 = vld [vmem:[%s0 + $0xc8c] sm:$0xf]
    %v858 = vld [vmem:[%s0 + $0xc90] sm:$0xf]
    %v859 = vld [vmem:[%s0 + $0xc94] sm:$0xf]
    %v860 = vld [vmem:[%s0 + $0xc98] sm:$0xf]
    %v861 = vld [vmem:[%s0 + $0xc9c] sm:$0xf]
    %v862 = vld [vmem:[%s0 + $0xca0] sm:$0xf]
    %v863 = vld [vmem:[%s0 + $0xca4] sm:$0xf]
    %v864 = vld [vmem:[%s0 + $0xca8] sm:$0xf]
    %v865 = vld [vmem:[%s0 + $0xcac] sm:$0xf]
    %v866 = vld [vmem:[%s0 + $0xcb0] sm:$0xf]
    %v867 = vld [vmem:[%s0 + $0xcb4] sm:$0xf]
    %v868 = vld [vmem:[%s0 + $0xcb8] sm:$0xf]
    %v869 = vld [vmem:[%s0 + $0xcbc] sm:$0xf]
    %v870 = vld [vmem:[%s0 + $0xcc0] sm:$0xf]
    %v871 = vld [vmem:[%s0 + $0xcc4] sm:$0xf]
    %v872 = vld [vmem:[%s0 + $0xcc8] sm:$0xf]
    %v873 = vld [vmem:[%s0 + $0xccc] sm:$0xf]
    %v874 = vld [vmem:[%s0 + $0xcd0] sm:$0xf]
    %v875 = vld [vmem:[%s0 + $0xcd4] sm:$0xf]
    %v876 = vld [vmem:[%s0 + $0xcd8] sm:$0xf]
    %v877 = vld [vmem:[%s0 + $0xcdc] sm:$0xf]
    %v878 = vld [vmem:[%s0 + $0xce0] sm:$0xf]
    %v879 = vld [vmem:[%s0 + $0xce4] sm:$0xf]
    %v880 = vld [vmem:[%s0 + $0xce8] sm:$0xf]
    %v881 = vld [vmem:[%s0 + $0xcec] sm:$0xf]
    %v882 = vld [vmem:[%s0 + $0xcf0] sm:$0xf]
    %v883 = vld [vmem:[%s0 + $0xcf4] sm:$0xf]
    %v884 = vld [vmem:[%s0 + $0xcf8] sm:$0xf]
    %v885 = vld [vmem:[%s0 + $0xcfc] sm:$0xf]
    %v886 = vld [vmem:[%s0 + $0xd00] sm:$0xf]
    %v887 = vld [vmem:[%s0 + $0xd04] sm:$0xf]
    %v888 = vld [vmem:[%s0 + $0xd08] sm:$0xf]
    %v889 = vld [vmem:[%s0 + $0xd0c] sm:$0xf]
    %v890 = vld [vmem:[%s0 + $0xd10] sm:$0xf]
    %v891 = vld [vmem:[%s0 + $0xd14] sm:$0xf]
    %v892 = vld [vmem:[%s0 + $0xd18] sm:$0xf]
    %v893 = vld [vmem:[%s0 + $0xd1c] sm:$0xf]
    %v894 = vld [vmem:[%s0 + $0xd20] sm:$0xf]
    %v895 = vld [vmem:[%s0 + $0xd24] sm:$0xf]
    %v896 = vld [vmem:[%s0 + $0xd28] sm:$0xf]
    %v897 = vld [vmem:[%s0 + $0xd2c] sm:$0xf]
    %v898 = vld [vmem:[%s0 + $0xd30] sm:$0xf]
    %v899 = vld [vmem:[%s0 + $0xd34] sm:$0xf]
    %v900 = vld [vmem:[%s0 + $0xd38] sm:$0xf]
    %v901 = vld [vmem:[%s0 + $0xd3c] sm:$0xf]
    %v902 = vld [vmem:[%s0 + $0xd40] sm:$0xf]
    %v903 = vld [vmem:[%s0 + $0xd44] sm:$0xf]
    %v904 = vld [vmem:[%s0 + $0xd48] sm:$0xf]
    %v905 = vld [vmem:[%s0 + $0xd4c] sm:$0xf]
    %v906 = vld [vmem:[%s0 + $0xd50] sm:$0xf]
    %v907 = vld [vmem:[%s0 + $0xd54] sm:$0xf]
    %v908 = vld [vmem:[%s0 + $0xd58] sm:$0xf]
    %v909 = vld [vmem:[%s0 + $0xd5c] sm:$0xf]
    %v910 = vld [vmem:[%s0 + $0xd60] sm:$0xf]
    %v911 = vld [vmem:[%s0 + $0xd64] sm:$0xf]
    %v912 = vld [vmem:[%s0 + $0xd68] sm:$0xf]
    %v913 = vld [vmem:[%s0 + $0xd6c] sm:$0xf]
    %v914 = vld [vmem:[%s0 + $0xd70] sm:$0xf]
    %v915 = vld [vmem:[%s0 + $0xd74] sm:$0xf]
    %v916 = vld [vmem:[%s0 + $0xd78] sm:$0xf]
    %v917 = vld [vmem:[%s0 + $0xd7c] sm:$0xf]
    %v918 = vld [vmem:[%s0 + $0xd80] sm:$0xf]
    %v919 = vld [vmem:[%s0 + $0xd84] sm:$0xf]
    %v920 = vld [vmem:[%s0 + $0xd88] sm:$0xf]
    %v921 = vld [vmem:[%s0 + $0xd8c] sm:$0xf]
    %v922 = vld [vmem:[%s0 + $0xd90] sm:$0xf]
    %v923 = vld [vmem:[%s0 + $0xd94] sm:$0xf]
    %v924 = vld [vmem:[%s0 + $0xd98] sm:$0xf]
    %v925 = vld [vmem:[%s0 + $0xd9c] sm:$0xf]
    %v926 = vld [vmem:[%s0 + $0xda0] sm:$0xf]
    %v927 = vld [vmem:[%s0 + $0xda4] sm:$0xf]
    %v928 = vld [vmem:[%s0 + $0xda8] sm:$0xf]
    %v929 = vld [vmem:[%s0 + $0xdac] sm:$0xf]
    %v930 = vld [vmem:[%s0 + $0xdb0] sm:$0xf]
    %v931 = vld [vmem:[%s0 + $0xdb4] sm:$0xf]
    %v932 = vld [vmem:[%s0 + $0xdb8] sm:$0xf]
    %v933 = vld [vmem:[%s0 + $0xdbc] sm:$0xf]
    %v934 = vld [vmem:[%s0 + $0xdc0] sm:$0xf]
    %v935 = vld [vmem:[%s0 + $0xdc4] sm:$0xf]
    %v936 = vld [vmem:[%s0 + $0xdc8] sm:$0xf]
    %v937 = vld [vmem:[%s0 + $0xdcc] sm:$0xf]
    %v938 = vld [vmem:[%s0 + $0xdd0] sm:$0xf]
    %v939 = vld [vmem:[%s0 + $0xdd4] sm:$0xf]
    %v940 = vld [vmem:[%s0 + $0xdd8] sm:$0xf]
    %v941 = vld [vmem:[%s0 + $0xddc] sm:$0xf]
    %v942 = vld [vmem:[%s0 + $0xde0] sm:$0xf]
    %v943 = vld [vmem:[%s0 + $0xde4] sm:$0xf]
    %v944 = vld [vmem:[%s0 + $0xde8] sm:$0xf]
    %v945 = vld [vmem:[%s0 + $0xdec] sm:$0xf]
    %v946 = vld [vmem:[%s0 + $0xdf0] sm:$0xf]
    %v947 = vld [vmem:[%s0 + $0xdf4] sm:$0xf]
    %v948 = vld [vmem:[%s0 + $0xdf8] sm:$0xf]
    %v949 = vld [vmem:[%s0 + $0xdfc] sm:$0xf]
    %v950 = vld [vmem:[%s0 + $0xe00] sm:$0xf]
    %v951 = vld [vmem:[%s0 + $0xe04] sm:$0xf]
    %v952 = vld [vmem:[%s0 + $0xe08] sm:$0xf]
    %v953 = vld [vmem:[%s0 + $0xe0c] sm:$0xf]
    %v954 = vld [vmem:[%s0 + $0xe10] sm:$0xf]
    %v955 = vld [vmem:[%s0 + $0xe14] sm:$0xf]
    %v956 = vld [vmem:[%s0 + $0xe18] sm:$0xf]
    %v957 = vld [vmem:[%s0 + $0xe1c] sm:$0xf]
    %v958 = vld [vmem:[%s0 + $0xe20] sm:$0xf]
    %v959 = vld [vmem:[%s0 + $0xe24] sm:$0xf]
    %v960 = vld [vmem:[%s0 + $0xe28] sm:$0xf]
    %v961 = vld [vmem:[%s0 + $0xe2c] sm:$0xf]
    %v962 = vld [vmem:[%s0 + $0xe30] sm:$0xf]
    %v963 = vld [vmem:[%s0 + $0xe34] sm:$0xf]
    %v964 = vld [vmem:[%s0 + $0xe38] sm:$0xf]
    %v965 = vld [vmem:[%s0 + $0xe3c] sm:$0xf]
    %v966 = vld [vmem:[%s0 + $0xe40] sm:$0xf]
    %v967 = vld [vmem:[%s0 + $0xe44] sm:$0xf]
    %v968 = vld [vmem:[%s0 + $0xe48] sm:$0xf]
    %v969 = vld [vmem:[%s0 + $0xe4c] sm:$0xf]
    %v970 = vld [vmem:[%s0 + $0xe50] sm:$0xf]
    %v971 = vld [vmem:[%s0 + $0xe54] sm:$0xf]
    %v972 = vld [vmem:[%s0 + $0xe58] sm:$0xf]
    %v973 = vld [vmem:[%s0 + $0xe5c] sm:$0xf]
    %v974 = vld [vmem:[%s0 + $0xe60] sm:$0xf]
    %v975 = vld [vmem:[%s0 + $0xe64] sm:$0xf]
    %v976 = vld [vmem:[%s0 + $0xe68] sm:$0xf]
    %v977 = vld [vmem:[%s0 + $0xe6c] sm:$0xf]
    %v978 = vld [vmem:[%s0 + $0xe70] sm:$0xf]
    %v979 = vld [vmem:[%s0 + $0xe74] sm:$0xf]
    %v980 = vld [vmem:[%s0 + $0xe78] sm:$0xf]
    %v981 = vld [vmem:[%s0 + $0xe7c] sm:$0xf]
    %v982 = vld [vmem:[%s0 + $0xe80] sm:$0xf]
    %v983 = vld [vmem:[%s0 + $0xe84] sm:$0xf]
    %v984 = vld [vmem:[%s0 + $0xe88] sm:$0xf]
    %v985 = vld [vmem:[%s0 + $0xe8c] sm:$0xf]
    %v986 = vld [vmem:[%s0 + $0xe90] sm:$0xf]
    %v987 = vld [vmem:[%s0 + $0xe94] sm:$0xf]
    %v988 = vld [vmem:[%s0 + $0xe98] sm:$0xf]
    %v989 = vld [vmem:[%s0 + $0xe9c] sm:$0xf]
    %v990 = vld [vmem:[%s0 + $0xea0] sm:$0xf]
    %v991 = vld [vmem:[%s0 + $0xea4] sm:$0xf]
    %v992 = vld [vmem:[%s0 + $0xea8] sm:$0xf]
    %v993 = vld [vmem:[%s0 + $0xeac] sm:$0xf]
    %v994 = vld [vmem:[%s0 + $0xeb0] sm:$0xf]
    %v995 = vld [vmem:[%s0 + $0xeb4] sm:$0xf]
    %v996 = vld [vmem:[%s0 + $0xeb8] sm:$0xf]
    %v997 = vld [vmem:[%s0 + $0xebc] sm:$0xf]
    %v998 = vld [vmem:[%s0 + $0xec0] sm:$0xf]
    %v999 = vld [vmem:[%s0 + $0xec4] sm:$0xf]
    %v1000 = vld [vmem:[%s0 + $0xec8] sm:$0xf]
    %v1001 = vld [vmem:[%s0 + $0xecc] sm:$0xf]
    %v1002 = vld [vmem:[%s0 + $0xed0] sm:$0xf]
    %v1003 = vld [vmem:[%s0 + $0xed4] sm:$0xf]
    %v1004 = vld [vmem:[%s0 + $0xed8] sm:$0xf]
    %v1005 = vld [vmem:[%s0 + $0xedc] sm:$0xf]
    %v1006 = vld [vmem:[%s0 + $0xee0] sm:$0xf]
    %v1007 = vld [vmem:[%s0 + $0xee4] sm:$0xf]
    %v1008 = vld [vmem:[%s0 + $0xee8] sm:$0xf]
    %v1009 = vld [vmem:[%s0 + $0xeec] sm:$0xf]
    %v1010 = vld [vmem:[%s0 + $0xef0] sm:$0xf]
    %v1011 = vld [vmem:[%s0 + $0xef4] sm:$0xf]
    %v1012 = vld [vmem:[%s0 + $0xef8] sm:$0xf]
    %v1013 = vld [vmem:[%s0 + $0xefc] sm:$0xf]
    %v1014 = vld [vmem:[%s0 + $0xf00] sm:$0xf]
    %v1015 = vld [vmem:[%s0 + $0xf04] sm:$0xf]
    %v1016 = vld [vmem:[%s0 + $0xf08] sm:$0xf]
    %v1017 = vld [vmem:[%s0 + $0xf0c] sm:$0xf]
    %v1018 = vld [vmem:[%s0 + $0xf10] sm:$0xf]
    %v1019 = vld [vmem:[%s0 + $0xf14] sm:$0xf]
    %v1020 = vld [vmem:[%s0 + $0xf18] sm:$0xf]
    %v1021 = vld [vmem:[%s0 + $0xf1c] sm:$0xf]
    %v1022 = vld [vmem:[%s0 + $0xf20] sm:$0xf]
    %v1023 = vld [vmem:[%s0 + $0xf24] sm:$0xf]
    %v1024 = vld [vmem:[%s0 + $0xf28] sm:$0xf]
    %v1025 = vld [vmem:[%s0 + $0xf2c] sm:$0xf]
    %v1026 = vld [vmem:[%s0 + $0xf30] sm:$0xf]
    %v1027 = vld [vmem:[%s0 + $0xf34] sm:$0xf]
    %v1028 = vld [vmem:[%s0 + $0xf38] sm:$0xf]
    %v1029 = vld [vmem:[%s0 + $0xf3c] sm:$0xf]
    %v1030 = vld [vmem:[%s0 + $0xf40] sm:$0xf]
    %v1031 = vld [vmem:[%s0 + $0xf44] sm:$0xf]
    %v1032 = vld [vmem:[%s0 + $0xf48] sm:$0xf]
    %v1033 = vld [vmem:[%s0 + $0xf4c] sm:$0xf]
    %v1034 = vld [vmem:[%s0 + $0xf50] sm:$0xf]
    %v1035 = vld [vmem:[%s0 + $0xf54] sm:$0xf]
    %v1036 = vld [vmem:[%s0 + $0xf58] sm:$0xf]
    %v1037 = vld [vmem:[%s0 + $0xf5c] sm:$0xf]
    %v1038 = vld [vmem:[%s0 + $0xf60] sm:$0xf]
    %v1039 = vld [vmem:[%s0 + $0xf64] sm:$0xf]
    %v1040 = vld [vmem:[%s0 + $0xf68] sm:$0xf]
    %v1041 = vld [vmem:[%s0 + $0xf6c] sm:$0xf]
    %v1042 = vld [vmem:[%s0 + $0xf70] sm:$0xf]
    %v1043 = vld [vmem:[%s0 + $0xf74] sm:$0xf]
    %v1044 = vld [vmem:[%s0 + $0xf78] sm:$0xf]
    %v1045 = vld [vmem:[%s0 + $0xf7c] sm:$0xf]
    %v1046 = vld [vmem:[%s0 + $0xf80] sm:$0xf]
    %v1047 = vld [vmem:[%s0 + $0xf84] sm:$0xf]
    %v1048 = vld [vmem:[%s0 + $0xf88] sm:$0xf]
    %v1049 = vld [vmem:[%s0 + $0xf8c] sm:$0xf]
    %v1050 = vld [vmem:[%s0 + $0xf90] sm:$0xf]
    %v1051 = vld [vmem:[%s0 + $0xf94] sm:$0xf]
    %v1052 = vld [vmem:[%s0 + $0xf98] sm:$0xf]
    %v1053 = vld [vmem:[%s0 + $0xf9c] sm:$0xf]
    %v1054 = vld [vmem:[%s0 + $0xfa0] sm:$0xf]
    %v1055 = vld [vmem:[%s0 + $0xfa4] sm:$0xf]
    %v1056 = vld [vmem:[%s0 + $0xfa8] sm:$0xf]
    %v1057 = vld [vmem:[%s0 + $0xfac] sm:$0xf]
    %v1058 = vld [vmem:[%s0 + $0xfb0] sm:$0xf]
    %v1059 = vld [vmem:[%s0 + $0xfb4] sm:$0xf]
    %v1060 = vld [vmem:[%s0 + $0xfb8] sm:$0xf]
    %v1061 = vld [vmem:[%s0 + $0xfbc] sm:$0xf]
    %v1062 = vld [vmem:[%s0 + $0xfc0] sm:$0xf]
    %v1063 = vld [vmem:[%s0 + $0xfc4] sm:$0xf]
    %v1064 = vld [vmem:[%s0 + $0xfc8] sm:$0xf]
    %v1065 = vld [vmem:[%s0 + $0xfcc] sm:$0xf]
    %v1066 = vld [vmem:[%s0 + $0xfd0] sm:$0xf]
    %v1067 = vld [vmem:[%s0 + $0xfd4] sm:$0xf]
    %v1068 = vld [vmem:[%s0 + $0xfd8] sm:$0xf]
    %v1069 = vld [vmem:[%s0 + $0xfdc] sm:$0xf]
    %v1070 = vld [vmem:[%s0 + $0xfe0] sm:$0xf]
    %v1071 = vld [vmem:[%s0 + $0xfe4] sm:$0xf]
    %v1072 = vld [vmem:[%s0 + $0xfe8] sm:$0xf]
    %v1073 = vld [vmem:[%s0 + $0xfec] sm:$0xf]
    %v1074 = vld [vmem:[%s0 + $0xff0] sm:$0xf]
    %v1075 = vld [vmem:[%s0 + $0xff4] sm:$0xf]
    %v1076 = vld [vmem:[%s0 + $0xff8] sm:$0xf]
    %v1077 = vld [vmem:[%s0 + $0xffc] sm:$0xf]
    %v1078 = vld [vmem:[%s1] sm:$0xf]
    %v1079 = vld [vmem:[%s1 + $0x4] sm:$0xf]
    %v1080 = vld [vmem:[%s1 + $0x8] sm:$0xf]
    %v1081 = vld [vmem:[%s1 + $0xc] sm:$0xf]
    %v1082 = vld [vmem:[%s1 + $0x10] sm:$0xf]
    %v1083 = vld [vmem:[%s1 + $0x14] sm:$0xf]
    %v1084 = vld [vmem:[%s1 + $0x18] sm:$0xf]
    %v1085 = vld [vmem:[%s1 + $0x1c] sm:$0xf]
    %v1086 = vld [vmem:[%s1 + $0x20] sm:$0xf]
    %v1087 = vld [vmem:[%s1 + $0x24] sm:$0xf]
    %v1088 = vld [vmem:[%s1 + $0x28] sm:$0xf]
    %v1089 = vld [vmem:[%s1 + $0x2c] sm:$0xf]
    %v1090 = vld [vmem:[%s1 + $0x30] sm:$0xf]
    %v1091 = vld [vmem:[%s1 + $0x34] sm:$0xf]
    %v1092 = vld [vmem:[%s1 + $0x38] sm:$0xf]
    %v1093 = vld [vmem:[%s1 + $0x3c] sm:$0xf]
    %v1094 = vld [vmem:[%s2] sm:$0x1]
    %v1096 = vperm.slane %v1094, 0
    %v2122 = vunpack.c.l.b16 %v54
    %v2123 = vunpack.c.l.b16 %v55
    %v2124 = vunpack.c.l.b16 %v56
    %v2125 = vunpack.c.l.b16 %v57
    %v2126 = vunpack.c.l.b16 %v58
    %v2127 = vunpack.c.l.b16 %v59
    %v2128 = vunpack.c.l.b16 %v60
    %v2129 = vunpack.c.l.b16 %v61
    %v2130 = vunpack.c.l.b16 %v62
    %v2131 = vunpack.c.l.b16 %v63
    %v2132 = vunpack.c.l.b16 %v64
    %v2133 = vunpack.c.l.b16 %v65
    %v2134 = vunpack.c.l.b16 %v66
    %v2135 = vunpack.c.l.b16 %v67
    %v2136 = vunpack.c.l.b16 %v68
    %v2137 = vunpack.c.l.b16 %v69
    %v2138 = vunpack.c.l.b16 %v70
    %v2139 = vunpack.c.l.b16 %v71
    %v2140 = vunpack.c.l.b16 %v72
    %v2141 = vunpack.c.l.b16 %v73
    %v2142 = vunpack.c.l.b16 %v74
    %v2143 = vunpack.c.l.b16 %v75
    %v2144 = vunpack.c.l.b16 %v76
    %v2145 = vunpack.c.l.b16 %v77
    %v2146 = vunpack.c.l.b16 %v78
    %v2147 = vunpack.c.l.b16 %v79
    %v2148 = vunpack.c.l.b16 %v80
    %v2149 = vunpack.c.l.b16 %v81
    %v2150 = vunpack.c.l.b16 %v82
    %v2151 = vunpack.c.l.b16 %v83
    %v2152 = vunpack.c.l.b16 %v84
    %v2153 = vunpack.c.l.b16 %v85
    %v2154 = vunpack.c.l.b16 %v86
    %v2155 = vunpack.c.l.b16 %v87
    %v2156 = vunpack.c.l.b16 %v88
    %v2157 = vunpack.c.l.b16 %v89
    %v2158 = vunpack.c.l.b16 %v90
    %v2159 = vunpack.c.l.b16 %v91
    %v2160 = vunpack.c.l.b16 %v92
    %v2161 = vunpack.c.l.b16 %v93
    %v2162 = vunpack.c.l.b16 %v94
    %v2163 = vunpack.c.l.b16 %v95
    %v2164 = vunpack.c.l.b16 %v96
    %v2165 = vunpack.c.l.b16 %v97
    %v2166 = vunpack.c.l.b16 %v98
    %v2167 = vunpack.c.l.b16 %v99
    %v2168 = vunpack.c.l.b16 %v100
    %v2169 = vunpack.c.l.b16 %v101
    %v2170 = vunpack.c.l.b16 %v102
    %v2171 = vunpack.c.l.b16 %v103
    %v2172 = vunpack.c.l.b16 %v104
    %v2173 = vunpack.c.l.b16 %v105
    %v2174 = vunpack.c.l.b16 %v106
    %v2175 = vunpack.c.l.b16 %v107
    %v2176 = vunpack.c.l.b16 %v108
    %v2177 = vunpack.c.l.b16 %v109
    %v2178 = vunpack.c.l.b16 %v110
    %v2179 = vunpack.c.l.b16 %v111
    %v2180 = vunpack.c.l.b16 %v112
    %v2181 = vunpack.c.l.b16 %v113
    %v2182 = vunpack.c.l.b16 %v114
    %v2183 = vunpack.c.l.b16 %v115
    %v2184 = vunpack.c.l.b16 %v116
    %v2185 = vunpack.c.l.b16 %v117
    %v2186 = vunpack.c.l.b16 %v118
    %v2187 = vunpack.c.l.b16 %v119
    %v2188 = vunpack.c.l.b16 %v120
    %v2189 = vunpack.c.l.b16 %v121
    %v2190 = vunpack.c.l.b16 %v122
    %v2191 = vunpack.c.l.b16 %v123
    %v2192 = vunpack.c.l.b16 %v124
    %v2193 = vunpack.c.l.b16 %v125
    %v2194 = vunpack.c.l.b16 %v126
    %v2195 = vunpack.c.l.b16 %v127
    %v2196 = vunpack.c.l.b16 %v128
    %v2197 = vunpack.c.l.b16 %v129
    %v2198 = vunpack.c.l.b16 %v130
    %v2199 = vunpack.c.l.b16 %v131
    %v2200 = vunpack.c.l.b16 %v132
    %v2201 = vunpack.c.l.b16 %v133
    %v2202 = vunpack.c.l.b16 %v134
    %v2203 = vunpack.c.l.b16 %v135
    %v2204 = vunpack.c.l.b16 %v136
    %v2205 = vunpack.c.l.b16 %v137
    %v2206 = vunpack.c.l.b16 %v138
    %v2207 = vunpack.c.l.b16 %v139
    %v2208 = vunpack.c.l.b16 %v140
    %v2209 = vunpack.c.l.b16 %v141
    %v2210 = vunpack.c.l.b16 %v142
    %v2211 = vunpack.c.l.b16 %v143
    %v2212 = vunpack.c.l.b16 %v144
    %v2213 = vunpack.c.l.b16 %v145
    %v2214 = vunpack.c.l.b16 %v146
    %v2215 = vunpack.c.l.b16 %v147
    %v2216 = vunpack.c.l.b16 %v148
    %v2217 = vunpack.c.l.b16 %v149
    %v2218 = vunpack.c.l.b16 %v150
    %v2219 = vunpack.c.l.b16 %v151
    %v2220 = vunpack.c.l.b16 %v152
    %v2221 = vunpack.c.l.b16 %v153
    %v2222 = vunpack.c.l.b16 %v154
    %v2223 = vunpack.c.l.b16 %v155
    %v2224 = vunpack.c.l.b16 %v156
    %v2225 = vunpack.c.l.b16 %v157
    %v2226 = vunpack.c.l.b16 %v158
    %v2227 = vunpack.c.l.b16 %v159
    %v2228 = vunpack.c.l.b16 %v160
    %v2229 = vunpack.c.l.b16 %v161
    %v2230 = vunpack.c.l.b16 %v162
    %v2231 = vunpack.c.l.b16 %v163
    %v2232 = vunpack.c.l.b16 %v164
    %v2233 = vunpack.c.l.b16 %v165
    %v2234 = vunpack.c.l.b16 %v166
    %v2235 = vunpack.c.l.b16 %v167
    %v2236 = vunpack.c.l.b16 %v168
    %v2237 = vunpack.c.l.b16 %v169
    %v2238 = vunpack.c.l.b16 %v170
    %v2239 = vunpack.c.l.b16 %v171
    %v2240 = vunpack.c.l.b16 %v172
    %v2241 = vunpack.c.l.b16 %v173
    %v2242 = vunpack.c.l.b16 %v174
    %v2243 = vunpack.c.l.b16 %v175
    %v2244 = vunpack.c.l.b16 %v176
    %v2245 = vunpack.c.l.b16 %v177
    %v2246 = vunpack.c.l.b16 %v178
    %v2247 = vunpack.c.l.b16 %v179
    %v2248 = vunpack.c.l.b16 %v180
    %v2249 = vunpack.c.l.b16 %v181
    %v2250 = vunpack.c.l.b16 %v182
    %v2251 = vunpack.c.l.b16 %v183
    %v2252 = vunpack.c.l.b16 %v184
    %v2253 = vunpack.c.l.b16 %v185
    %v2254 = vunpack.c.l.b16 %v186
    %v2255 = vunpack.c.l.b16 %v187
    %v2256 = vunpack.c.l.b16 %v188
    %v2257 = vunpack.c.l.b16 %v189
    %v2258 = vunpack.c.l.b16 %v190
    %v2259 = vunpack.c.l.b16 %v191
    %v2260 = vunpack.c.l.b16 %v192
    %v2261 = vunpack.c.l.b16 %v193
    %v2262 = vunpack.c.l.b16 %v194
    %v2263 = vunpack.c.l.b16 %v195
    %v2264 = vunpack.c.l.b16 %v196
    %v2265 = vunpack.c.l.b16 %v197
    %v2266 = vunpack.c.l.b16 %v198
    %v2267 = vunpack.c.l.b16 %v199
    %v2268 = vunpack.c.l.b16 %v200
    %v2269 = vunpack.c.l.b16 %v201
    %v2270 = vunpack.c.l.b16 %v202
    %v2271 = vunpack.c.l.b16 %v203
    %v2272 = vunpack.c.l.b16 %v204
    %v2273 = vunpack.c.l.b16 %v205
    %v2274 = vunpack.c.l.b16 %v206
    %v2275 = vunpack.c.l.b16 %v207
    %v2276 = vunpack.c.l.b16 %v208
    %v2277 = vunpack.c.l.b16 %v209
    %v2278 = vunpack.c.l.b16 %v210
    %v2279 = vunpack.c.l.b16 %v211
    %v2280 = vunpack.c.l.b16 %v212
    %v2281 = vunpack.c.l.b16 %v213
    %v2282 = vunpack.c.l.b16 %v214
    %v2283 = vunpack.c.l.b16 %v215
    %v2284 = vunpack.c.l.b16 %v216
    %v2285 = vunpack.c.l.b16 %v217
    %v2286 = vunpack.c.l.b16 %v218
    %v2287 = vunpack.c.l.b16 %v219
    %v2288 = vunpack.c.l.b16 %v220
    %v2289 = vunpack.c.l.b16 %v221
    %v2290 = vunpack.c.l.b16 %v222
    %v2291 = vunpack.c.l.b16 %v223
    %v2292 = vunpack.c.l.b16 %v224
    %v2293 = vunpack.c.l.b16 %v225
    %v2294 = vunpack.c.l.b16 %v226
    %v2295 = vunpack.c.l.b16 %v227
    %v2296 = vunpack.c.l.b16 %v228
    %v2297 = vunpack.c.l.b16 %v229
    %v2298 = vunpack.c.l.b16 %v230
    %v2299 = vunpack.c.l.b16 %v231
    %v2300 = vunpack.c.l.b16 %v232
    %v2301 = vunpack.c.l.b16 %v233
    %v2302 = vunpack.c.l.b16 %v234
    %v2303 = vunpack.c.l.b16 %v235
    %v2304 = vunpack.c.l.b16 %v236
    %v2305 = vunpack.c.l.b16 %v237
    %v2306 = vunpack.c.l.b16 %v238
    %v2307 = vunpack.c.l.b16 %v239
    %v2308 = vunpack.c.l.b16 %v240
    %v2309 = vunpack.c.l.b16 %v241
    %v2310 = vunpack.c.l.b16 %v242
    %v2311 = vunpack.c.l.b16 %v243
    %v2312 = vunpack.c.l.b16 %v244
    %v2313 = vunpack.c.l.b16 %v245
    %v2314 = vunpack.c.l.b16 %v246
    %v2315 = vunpack.c.l.b16 %v247
    %v2316 = vunpack.c.l.b16 %v248
    %v2317 = vunpack.c.l.b16 %v249
    %v2318 = vunpack.c.l.b16 %v250
    %v2319 = vunpack.c.l.b16 %v251
    %v2320 = vunpack.c.l.b16 %v252
    %v2321 = vunpack.c.l.b16 %v253
    %v2322 = vunpack.c.l.b16 %v254
    %v2323 = vunpack.c.l.b16 %v255
    %v2324 = vunpack.c.l.b16 %v256
    %v2325 = vunpack.c.l.b16 %v257
    %v2326 = vunpack.c.l.b16 %v258
    %v2327 = vunpack.c.l.b16 %v259
    %v2328 = vunpack.c.l.b16 %v260
    %v2329 = vunpack.c.l.b16 %v261
    %v2330 = vunpack.c.l.b16 %v262
    %v2331 = vunpack.c.l.b16 %v263
    %v2332 = vunpack.c.l.b16 %v264
    %v2333 = vunpack.c.l.b16 %v265
    %v2334 = vunpack.c.l.b16 %v266
    %v2335 = vunpack.c.l.b16 %v267
    %v2336 = vunpack.c.l.b16 %v268
    %v2337 = vunpack.c.l.b16 %v269
    %v2338 = vunpack.c.l.b16 %v270
    %v2339 = vunpack.c.l.b16 %v271
    %v2340 = vunpack.c.l.b16 %v272
    %v2341 = vunpack.c.l.b16 %v273
    %v2342 = vunpack.c.l.b16 %v274
    %v2343 = vunpack.c.l.b16 %v275
    %v2344 = vunpack.c.l.b16 %v276
    %v2345 = vunpack.c.l.b16 %v277
    %v2346 = vunpack.c.l.b16 %v278
    %v2347 = vunpack.c.l.b16 %v279
    %v2348 = vunpack.c.l.b16 %v280
    %v2349 = vunpack.c.l.b16 %v281
    %v2350 = vunpack.c.l.b16 %v282
    %v2351 = vunpack.c.l.b16 %v283
    %v2352 = vunpack.c.l.b16 %v284
    %v2353 = vunpack.c.l.b16 %v285
    %v2354 = vunpack.c.l.b16 %v286
    %v2355 = vunpack.c.l.b16 %v287
    %v2356 = vunpack.c.l.b16 %v288
    %v2357 = vunpack.c.l.b16 %v289
    %v2358 = vunpack.c.l.b16 %v290
    %v2359 = vunpack.c.l.b16 %v291
    %v2360 = vunpack.c.l.b16 %v292
    %v2361 = vunpack.c.l.b16 %v293
    %v2362 = vunpack.c.l.b16 %v294
    %v2363 = vunpack.c.l.b16 %v295
    %v2364 = vunpack.c.l.b16 %v296
    %v2365 = vunpack.c.l.b16 %v297
    %v2366 = vunpack.c.l.b16 %v298
    %v2367 = vunpack.c.l.b16 %v299
    %v2368 = vunpack.c.l.b16 %v300
    %v2369 = vunpack.c.l.b16 %v301
    %v2370 = vunpack.c.l.b16 %v302
    %v2371 = vunpack.c.l.b16 %v303
    %v2372 = vunpack.c.l.b16 %v304
    %v2373 = vunpack.c.l.b16 %v305
    %v2374 = vunpack.c.l.b16 %v306
    %v2375 = vunpack.c.l.b16 %v307
    %v2376 = vunpack.c.l.b16 %v308
    %v2377 = vunpack.c.l.b16 %v309
    %v2378 = vunpack.c.l.b16 %v310
    %v2379 = vunpack.c.l.b16 %v311
    %v2380 = vunpack.c.l.b16 %v312
    %v2381 = vunpack.c.l.b16 %v313
    %v2382 = vunpack.c.l.b16 %v314
    %v2383 = vunpack.c.l.b16 %v315
    %v2384 = vunpack.c.l.b16 %v316
    %v2385 = vunpack.c.l.b16 %v317
    %v2386 = vunpack.c.l.b16 %v318
    %v2387 = vunpack.c.l.b16 %v319
    %v2388 = vunpack.c.l.b16 %v320
    %v2389 = vunpack.c.l.b16 %v321
    %v2390 = vunpack.c.l.b16 %v322
    %v2391 = vunpack.c.l.b16 %v323
    %v2392 = vunpack.c.l.b16 %v324
    %v2393 = vunpack.c.l.b16 %v325
    %v2394 = vunpack.c.l.b16 %v326
    %v2395 = vunpack.c.l.b16 %v327
    %v2396 = vunpack.c.l.b16 %v328
    %v2397 = vunpack.c.l.b16 %v329
    %v2398 = vunpack.c.l.b16 %v330
    %v2399 = vunpack.c.l.b16 %v331
    %v2400 = vunpack.c.l.b16 %v332
    %v2401 = vunpack.c.l.b16 %v333
    %v2402 = vunpack.c.l.b16 %v334
    %v2403 = vunpack.c.l.b16 %v335
    %v2404 = vunpack.c.l.b16 %v336
    %v2405 = vunpack.c.l.b16 %v337
    %v2406 = vunpack.c.l.b16 %v338
    %v2407 = vunpack.c.l.b16 %v339
    %v2408 = vunpack.c.l.b16 %v340
    %v2409 = vunpack.c.l.b16 %v341
    %v2410 = vunpack.c.l.b16 %v342
    %v2411 = vunpack.c.l.b16 %v343
    %v2412 = vunpack.c.l.b16 %v344
    %v2413 = vunpack.c.l.b16 %v345
    %v2414 = vunpack.c.l.b16 %v346
    %v2415 = vunpack.c.l.b16 %v347
    %v2416 = vunpack.c.l.b16 %v348
    %v2417 = vunpack.c.l.b16 %v349
    %v2418 = vunpack.c.l.b16 %v350
    %v2419 = vunpack.c.l.b16 %v351
    %v2420 = vunpack.c.l.b16 %v352
    %v2421 = vunpack.c.l.b16 %v353
    %v2422 = vunpack.c.l.b16 %v354
    %v2423 = vunpack.c.l.b16 %v355
    %v2424 = vunpack.c.l.b16 %v356
    %v2425 = vunpack.c.l.b16 %v357
    %v2426 = vunpack.c.l.b16 %v358
    %v2427 = vunpack.c.l.b16 %v359
    %v2428 = vunpack.c.l.b16 %v360
    %v2429 = vunpack.c.l.b16 %v361
    %v2430 = vunpack.c.l.b16 %v362
    %v2431 = vunpack.c.l.b16 %v363
    %v2432 = vunpack.c.l.b16 %v364
    %v2433 = vunpack.c.l.b16 %v365
    %v2434 = vunpack.c.l.b16 %v366
    %v2435 = vunpack.c.l.b16 %v367
    %v2436 = vunpack.c.l.b16 %v368
    %v2437 = vunpack.c.l.b16 %v369
    %v2438 = vunpack.c.l.b16 %v370
    %v2439 = vunpack.c.l.b16 %v371
    %v2440 = vunpack.c.l.b16 %v372
    %v2441 = vunpack.c.l.b16 %v373
    %v2442 = vunpack.c.l.b16 %v374
    %v2443 = vunpack.c.l.b16 %v375
    %v2444 = vunpack.c.l.b16 %v376
    %v2445 = vunpack.c.l.b16 %v377
    %v2446 = vunpack.c.l.b16 %v378
    %v2447 = vunpack.c.l.b16 %v379
    %v2448 = vunpack.c.l.b16 %v380
    %v2449 = vunpack.c.l.b16 %v381
    %v2450 = vunpack.c.l.b16 %v382
    %v2451 = vunpack.c.l.b16 %v383
    %v2452 = vunpack.c.l.b16 %v384
    %v2453 = vunpack.c.l.b16 %v385
    %v2454 = vunpack.c.l.b16 %v386
    %v2455 = vunpack.c.l.b16 %v387
    %v2456 = vunpack.c.l.b16 %v388
    %v2457 = vunpack.c.l.b16 %v389
    %v2458 = vunpack.c.l.b16 %v390
    %v2459 = vunpack.c.l.b16 %v391
    %v2460 = vunpack.c.l.b16 %v392
    %v2461 = vunpack.c.l.b16 %v393
    %v2462 = vunpack.c.l.b16 %v394
    %v2463 = vunpack.c.l.b16 %v395
    %v2464 = vunpack.c.l.b16 %v396
    %v2465 = vunpack.c.l.b16 %v397
    %v2466 = vunpack.c.l.b16 %v398
    %v2467 = vunpack.c.l.b16 %v399
    %v2468 = vunpack.c.l.b16 %v400
    %v2469 = vunpack.c.l.b16 %v401
    %v2470 = vunpack.c.l.b16 %v402
    %v2471 = vunpack.c.l.b16 %v403
    %v2472 = vunpack.c.l.b16 %v404
    %v2473 = vunpack.c.l.b16 %v405
    %v2474 = vunpack.c.l.b16 %v406
    %v2475 = vunpack.c.l.b16 %v407
    %v2476 = vunpack.c.l.b16 %v408
    %v2477 = vunpack.c.l.b16 %v409
    %v2478 = vunpack.c.l.b16 %v410
    %v2479 = vunpack.c.l.b16 %v411
    %v2480 = vunpack.c.l.b16 %v412
    %v2481 = vunpack.c.l.b16 %v413
    %v2482 = vunpack.c.l.b16 %v414
    %v2483 = vunpack.c.l.b16 %v415
    %v2484 = vunpack.c.l.b16 %v416
    %v2485 = vunpack.c.l.b16 %v417
    %v2486 = vunpack.c.l.b16 %v418
    %v2487 = vunpack.c.l.b16 %v419
    %v2488 = vunpack.c.l.b16 %v420
    %v2489 = vunpack.c.l.b16 %v421
    %v2490 = vunpack.c.l.b16 %v422
    %v2491 = vunpack.c.l.b16 %v423
    %v2492 = vunpack.c.l.b16 %v424
    %v2493 = vunpack.c.l.b16 %v425
    %v2494 = vunpack.c.l.b16 %v426
    %v2495 = vunpack.c.l.b16 %v427
    %v2496 = vunpack.c.l.b16 %v428
    %v2497 = vunpack.c.l.b16 %v429
    %v2498 = vunpack.c.l.b16 %v430
    %v2499 = vunpack.c.l.b16 %v431
    %v2500 = vunpack.c.l.b16 %v432
    %v2501 = vunpack.c.l.b16 %v433
    %v2502 = vunpack.c.l.b16 %v434
    %v2503 = vunpack.c.l.b16 %v435
    %v2504 = vunpack.c.l.b16 %v436
    %v2505 = vunpack.c.l.b16 %v437
    %v2506 = vunpack.c.l.b16 %v438
    %v2507 = vunpack.c.l.b16 %v439
    %v2508 = vunpack.c.l.b16 %v440
    %v2509 = vunpack.c.l.b16 %v441
    %v2510 = vunpack.c.l.b16 %v442
    %v2511 = vunpack.c.l.b16 %v443
    %v2512 = vunpack.c.l.b16 %v444
    %v2513 = vunpack.c.l.b16 %v445
    %v2514 = vunpack.c.l.b16 %v446
    %v2515 = vunpack.c.l.b16 %v447
    %v2516 = vunpack.c.l.b16 %v448
    %v2517 = vunpack.c.l.b16 %v449
    %v2518 = vunpack.c.l.b16 %v450
    %v2519 = vunpack.c.l.b16 %v451
    %v2520 = vunpack.c.l.b16 %v452
    %v2521 = vunpack.c.l.b16 %v453
    %v2522 = vunpack.c.l.b16 %v454
    %v2523 = vunpack.c.l.b16 %v455
    %v2524 = vunpack.c.l.b16 %v456
    %v2525 = vunpack.c.l.b16 %v457
    %v2526 = vunpack.c.l.b16 %v458
    %v2527 = vunpack.c.l.b16 %v459
    %v2528 = vunpack.c.l.b16 %v460
    %v2529 = vunpack.c.l.b16 %v461
    %v2530 = vunpack.c.l.b16 %v462
    %v2531 = vunpack.c.l.b16 %v463
    %v2532 = vunpack.c.l.b16 %v464
    %v2533 = vunpack.c.l.b16 %v465
    %v2534 = vunpack.c.l.b16 %v466
    %v2535 = vunpack.c.l.b16 %v467
    %v2536 = vunpack.c.l.b16 %v468
    %v2537 = vunpack.c.l.b16 %v469
    %v2538 = vunpack.c.l.b16 %v470
    %v2539 = vunpack.c.l.b16 %v471
    %v2540 = vunpack.c.l.b16 %v472
    %v2541 = vunpack.c.l.b16 %v473
    %v2542 = vunpack.c.l.b16 %v474
    %v2543 = vunpack.c.l.b16 %v475
    %v2544 = vunpack.c.l.b16 %v476
    %v2545 = vunpack.c.l.b16 %v477
    %v2546 = vunpack.c.l.b16 %v478
    %v2547 = vunpack.c.l.b16 %v479
    %v2548 = vunpack.c.l.b16 %v480
    %v2549 = vunpack.c.l.b16 %v481
    %v2550 = vunpack.c.l.b16 %v482
    %v2551 = vunpack.c.l.b16 %v483
    %v2552 = vunpack.c.l.b16 %v484
    %v2553 = vunpack.c.l.b16 %v485
    %v2554 = vunpack.c.l.b16 %v486
    %v2555 = vunpack.c.l.b16 %v487
    %v2556 = vunpack.c.l.b16 %v488
    %v2557 = vunpack.c.l.b16 %v489
    %v2558 = vunpack.c.l.b16 %v490
    %v2559 = vunpack.c.l.b16 %v491
    %v2560 = vunpack.c.l.b16 %v492
    %v2561 = vunpack.c.l.b16 %v493
    %v2562 = vunpack.c.l.b16 %v494
    %v2563 = vunpack.c.l.b16 %v495
    %v2564 = vunpack.c.l.b16 %v496
    %v2565 = vunpack.c.l.b16 %v497
    %v2566 = vunpack.c.l.b16 %v498
    %v2567 = vunpack.c.l.b16 %v499
    %v2568 = vunpack.c.l.b16 %v500
    %v2569 = vunpack.c.l.b16 %v501
    %v2570 = vunpack.c.l.b16 %v502
    %v2571 = vunpack.c.l.b16 %v503
    %v2572 = vunpack.c.l.b16 %v504
    %v2573 = vunpack.c.l.b16 %v505
    %v2574 = vunpack.c.l.b16 %v506
    %v2575 = vunpack.c.l.b16 %v507
    %v2576 = vunpack.c.l.b16 %v508
    %v2577 = vunpack.c.l.b16 %v509
    %v2578 = vunpack.c.l.b16 %v510
    %v2579 = vunpack.c.l.b16 %v511
    %v2580 = vunpack.c.l.b16 %v512
    %v2581 = vunpack.c.l.b16 %v513
    %v2582 = vunpack.c.l.b16 %v514
    %v2583 = vunpack.c.l.b16 %v515
    %v2584 = vunpack.c.l.b16 %v516
    %v2585 = vunpack.c.l.b16 %v517
    %v2586 = vunpack.c.l.b16 %v518
    %v2587 = vunpack.c.l.b16 %v519
    %v2588 = vunpack.c.l.b16 %v520
    %v2589 = vunpack.c.l.b16 %v521
    %v2590 = vunpack.c.l.b16 %v522
    %v2591 = vunpack.c.l.b16 %v523
    %v2592 = vunpack.c.l.b16 %v524
    %v2593 = vunpack.c.l.b16 %v525
    %v2594 = vunpack.c.l.b16 %v526
    %v2595 = vunpack.c.l.b16 %v527
    %v2596 = vunpack.c.l.b16 %v528
    %v2597 = vunpack.c.l.b16 %v529
    %v2598 = vunpack.c.l.b16 %v530
    %v2599 = vunpack.c.l.b16 %v531
    %v2600 = vunpack.c.l.b16 %v532
    %v2601 = vunpack.c.l.b16 %v533
    %v2602 = vunpack.c.l.b16 %v534
    %v2603 = vunpack.c.l.b16 %v535
    %v2604 = vunpack.c.l.b16 %v536
    %v2605 = vunpack.c.l.b16 %v537
    %v2606 = vunpack.c.l.b16 %v538
    %v2607 = vunpack.c.l.b16 %v539
    %v2608 = vunpack.c.l.b16 %v540
    %v2609 = vunpack.c.l.b16 %v541
    %v2610 = vunpack.c.l.b16 %v542
    %v2611 = vunpack.c.l.b16 %v543
    %v2612 = vunpack.c.l.b16 %v544
    %v2613 = vunpack.c.l.b16 %v545
    %v2614 = vunpack.c.l.b16 %v546
    %v2615 = vunpack.c.l.b16 %v547
    %v2616 = vunpack.c.l.b16 %v548
    %v2617 = vunpack.c.l.b16 %v549
    %v2618 = vunpack.c.l.b16 %v550
    %v2619 = vunpack.c.l.b16 %v551
    %v2620 = vunpack.c.l.b16 %v552
    %v2621 = vunpack.c.l.b16 %v553
    %v2622 = vunpack.c.l.b16 %v554
    %v2623 = vunpack.c.l.b16 %v555
    %v2624 = vunpack.c.l.b16 %v556
    %v2625 = vunpack.c.l.b16 %v557
    %v2626 = vunpack.c.l.b16 %v558
    %v2627 = vunpack.c.l.b16 %v559
    %v2628 = vunpack.c.l.b16 %v560
    %v2629 = vunpack.c.l.b16 %v561
    %v2630 = vunpack.c.l.b16 %v562
    %v2631 = vunpack.c.l.b16 %v563
    %v2632 = vunpack.c.l.b16 %v564
    %v2633 = vunpack.c.l.b16 %v565
    %v2634 = vunpack.c.l.b16 %v566
    %v2635 = vunpack.c.l.b16 %v567
    %v2636 = vunpack.c.l.b16 %v568
    %v2637 = vunpack.c.l.b16 %v569
    %v2638 = vunpack.c.l.b16 %v570
    %v2639 = vunpack.c.l.b16 %v571
    %v2640 = vunpack.c.l.b16 %v572
    %v2641 = vunpack.c.l.b16 %v573
    %v2642 = vunpack.c.l.b16 %v574
    %v2643 = vunpack.c.l.b16 %v575
    %v2644 = vunpack.c.l.b16 %v576
    %v2645 = vunpack.c.l.b16 %v577
    %v2646 = vunpack.c.l.b16 %v578
    %v2647 = vunpack.c.l.b16 %v579
    %v2648 = vunpack.c.l.b16 %v580
    %v2649 = vunpack.c.l.b16 %v581
    %v2650 = vunpack.c.l.b16 %v582
    %v2651 = vunpack.c.l.b16 %v583
    %v2652 = vunpack.c.l.b16 %v584
    %v2653 = vunpack.c.l.b16 %v585
    %v2654 = vunpack.c.l.b16 %v586
    %v2655 = vunpack.c.l.b16 %v587
    %v2656 = vunpack.c.l.b16 %v588
    %v2657 = vunpack.c.l.b16 %v589
    %v2658 = vunpack.c.l.b16 %v590
    %v2659 = vunpack.c.l.b16 %v591
    %v2660 = vunpack.c.l.b16 %v592
    %v2661 = vunpack.c.l.b16 %v593
    %v2662 = vunpack.c.l.b16 %v594
    %v2663 = vunpack.c.l.b16 %v595
    %v2664 = vunpack.c.l.b16 %v596
    %v2665 = vunpack.c.l.b16 %v597
    %v2666 = vunpack.c.l.b16 %v598
    %v2667 = vunpack.c.l.b16 %v599
    %v2668 = vunpack.c.l.b16 %v600
    %v2669 = vunpack.c.l.b16 %v601
    %v2670 = vunpack.c.l.b16 %v602
    %v2671 = vunpack.c.l.b16 %v603
    %v2672 = vunpack.c.l.b16 %v604
    %v2673 = vunpack.c.l.b16 %v605
    %v2674 = vunpack.c.l.b16 %v606
    %v2675 = vunpack.c.l.b16 %v607
    %v2676 = vunpack.c.l.b16 %v608
    %v2677 = vunpack.c.l.b16 %v609
    %v2678 = vunpack.c.l.b16 %v610
    %v2679 = vunpack.c.l.b16 %v611
    %v2680 = vunpack.c.l.b16 %v612
    %v2681 = vunpack.c.l.b16 %v613
    %v2682 = vunpack.c.l.b16 %v614
    %v2683 = vunpack.c.l.b16 %v615
    %v2684 = vunpack.c.l.b16 %v616
    %v2685 = vunpack.c.l.b16 %v617
    %v2686 = vunpack.c.l.b16 %v618
    %v2687 = vunpack.c.l.b16 %v619
    %v2688 = vunpack.c.l.b16 %v620
    %v2689 = vunpack.c.l.b16 %v621
    %v2690 = vunpack.c.l.b16 %v622
    %v2691 = vunpack.c.l.b16 %v623
    %v2692 = vunpack.c.l.b16 %v624
    %v2693 = vunpack.c.l.b16 %v625
    %v2694 = vunpack.c.l.b16 %v626
    %v2695 = vunpack.c.l.b16 %v627
    %v2696 = vunpack.c.l.b16 %v628
    %v2697 = vunpack.c.l.b16 %v629
    %v2698 = vunpack.c.l.b16 %v630
    %v2699 = vunpack.c.l.b16 %v631
    %v2700 = vunpack.c.l.b16 %v632
    %v2701 = vunpack.c.l.b16 %v633
    %v2702 = vunpack.c.l.b16 %v634
    %v2703 = vunpack.c.l.b16 %v635
    %v2704 = vunpack.c.l.b16 %v636
    %v2705 = vunpack.c.l.b16 %v637
    %v2706 = vunpack.c.l.b16 %v638
    %v2707 = vunpack.c.l.b16 %v639
    %v2708 = vunpack.c.l.b16 %v640
    %v2709 = vunpack.c.l.b16 %v641
    %v2710 = vunpack.c.l.b16 %v642
    %v2711 = vunpack.c.l.b16 %v643
    %v2712 = vunpack.c.l.b16 %v644
    %v2713 = vunpack.c.l.b16 %v645
    %v2714 = vunpack.c.l.b16 %v646
    %v2715 = vunpack.c.l.b16 %v647
    %v2716 = vunpack.c.l.b16 %v648
    %v2717 = vunpack.c.l.b16 %v649
    %v2718 = vunpack.c.l.b16 %v650
    %v2719 = vunpack.c.l.b16 %v651
    %v2720 = vunpack.c.l.b16 %v652
    %v2721 = vunpack.c.l.b16 %v653
    %v2722 = vunpack.c.l.b16 %v654
    %v2723 = vunpack.c.l.b16 %v655
    %v2724 = vunpack.c.l.b16 %v656
    %v2725 = vunpack.c.l.b16 %v657
    %v2726 = vunpack.c.l.b16 %v658
    %v2727 = vunpack.c.l.b16 %v659
    %v2728 = vunpack.c.l.b16 %v660
    %v2729 = vunpack.c.l.b16 %v661
    %v2730 = vunpack.c.l.b16 %v662
    %v2731 = vunpack.c.l.b16 %v663
    %v2732 = vunpack.c.l.b16 %v664
    %v2733 = vunpack.c.l.b16 %v665
    %v2734 = vunpack.c.l.b16 %v666
    %v2735 = vunpack.c.l.b16 %v667
    %v2736 = vunpack.c.l.b16 %v668
    %v2737 = vunpack.c.l.b16 %v669
    %v2738 = vunpack.c.l.b16 %v670
    %v2739 = vunpack.c.l.b16 %v671
    %v2740 = vunpack.c.l.b16 %v672
    %v2741 = vunpack.c.l.b16 %v673
    %v2742 = vunpack.c.l.b16 %v674
    %v2743 = vunpack.c.l.b16 %v675
    %v2744 = vunpack.c.l.b16 %v676
    %v2745 = vunpack.c.l.b16 %v677
    %v2746 = vunpack.c.l.b16 %v678
    %v2747 = vunpack.c.l.b16 %v679
    %v2748 = vunpack.c.l.b16 %v680
    %v2749 = vunpack.c.l.b16 %v681
    %v2750 = vunpack.c.l.b16 %v682
    %v2751 = vunpack.c.l.b16 %v683
    %v2752 = vunpack.c.l.b16 %v684
    %v2753 = vunpack.c.l.b16 %v685
    %v2754 = vunpack.c.l.b16 %v686
    %v2755 = vunpack.c.l.b16 %v687
    %v2756 = vunpack.c.l.b16 %v688
    %v2757 = vunpack.c.l.b16 %v689
    %v2758 = vunpack.c.l.b16 %v690
    %v2759 = vunpack.c.l.b16 %v691
    %v2760 = vunpack.c.l.b16 %v692
    %v2761 = vunpack.c.l.b16 %v693
    %v2762 = vunpack.c.l.b16 %v694
    %v2763 = vunpack.c.l.b16 %v695
    %v2764 = vunpack.c.l.b16 %v696
    %v2765 = vunpack.c.l.b16 %v697
    %v2766 = vunpack.c.l.b16 %v698
    %v2767 = vunpack.c.l.b16 %v699
    %v2768 = vunpack.c.l.b16 %v700
    %v2769 = vunpack.c.l.b16 %v701
    %v2770 = vunpack.c.l.b16 %v702
    %v2771 = vunpack.c.l.b16 %v703
    %v2772 = vunpack.c.l.b16 %v704
    %v2773 = vunpack.c.l.b16 %v705
    %v2774 = vunpack.c.l.b16 %v706
    %v2775 = vunpack.c.l.b16 %v707
    %v2776 = vunpack.c.l.b16 %v708
    %v2777 = vunpack.c.l.b16 %v709
    %v2778 = vunpack.c.l.b16 %v710
    %v2779 = vunpack.c.l.b16 %v711
    %v2780 = vunpack.c.l.b16 %v712
    %v2781 = vunpack.c.l.b16 %v713
    %v2782 = vunpack.c.l.b16 %v714
    %v2783 = vunpack.c.l.b16 %v715
    %v2784 = vunpack.c.l.b16 %v716
    %v2785 = vunpack.c.l.b16 %v717
    %v2786 = vunpack.c.l.b16 %v718
    %v2787 = vunpack.c.l.b16 %v719
    %v2788 = vunpack.c.l.b16 %v720
    %v2789 = vunpack.c.l.b16 %v721
    %v2790 = vunpack.c.l.b16 %v722
    %v2791 = vunpack.c.l.b16 %v723
    %v2792 = vunpack.c.l.b16 %v724
    %v2793 = vunpack.c.l.b16 %v725
    %v2794 = vunpack.c.l.b16 %v726
    %v2795 = vunpack.c.l.b16 %v727
    %v2796 = vunpack.c.l.b16 %v728
    %v2797 = vunpack.c.l.b16 %v729
    %v2798 = vunpack.c.l.b16 %v730
    %v2799 = vunpack.c.l.b16 %v731
    %v2800 = vunpack.c.l.b16 %v732
    %v2801 = vunpack.c.l.b16 %v733
    %v2802 = vunpack.c.l.b16 %v734
    %v2803 = vunpack.c.l.b16 %v735
    %v2804 = vunpack.c.l.b16 %v736
    %v2805 = vunpack.c.l.b16 %v737
    %v2806 = vunpack.c.l.b16 %v738
    %v2807 = vunpack.c.l.b16 %v739
    %v2808 = vunpack.c.l.b16 %v740
    %v2809 = vunpack.c.l.b16 %v741
    %v2810 = vunpack.c.l.b16 %v742
    %v2811 = vunpack.c.l.b16 %v743
    %v2812 = vunpack.c.l.b16 %v744
    %v2813 = vunpack.c.l.b16 %v745
    %v2814 = vunpack.c.l.b16 %v746
    %v2815 = vunpack.c.l.b16 %v747
    %v2816 = vunpack.c.l.b16 %v748
    %v2817 = vunpack.c.l.b16 %v749
    %v2818 = vunpack.c.l.b16 %v750
    %v2819 = vunpack.c.l.b16 %v751
    %v2820 = vunpack.c.l.b16 %v752
    %v2821 = vunpack.c.l.b16 %v753
    %v2822 = vunpack.c.l.b16 %v754
    %v2823 = vunpack.c.l.b16 %v755
    %v2824 = vunpack.c.l.b16 %v756
    %v2825 = vunpack.c.l.b16 %v757
    %v2826 = vunpack.c.l.b16 %v758
    %v2827 = vunpack.c.l.b16 %v759
    %v2828 = vunpack.c.l.b16 %v760
    %v2829 = vunpack.c.l.b16 %v761
    %v2830 = vunpack.c.l.b16 %v762
    %v2831 = vunpack.c.l.b16 %v763
    %v2832 = vunpack.c.l.b16 %v764
    %v2833 = vunpack.c.l.b16 %v765
    %v2834 = vunpack.c.l.b16 %v766
    %v2835 = vunpack.c.l.b16 %v767
    %v2836 = vunpack.c.l.b16 %v768
    %v2837 = vunpack.c.l.b16 %v769
    %v2838 = vunpack.c.l.b16 %v770
    %v2839 = vunpack.c.l.b16 %v771
    %v2840 = vunpack.c.l.b16 %v772
    %v2841 = vunpack.c.l.b16 %v773
    %v2842 = vunpack.c.l.b16 %v774
    %v2843 = vunpack.c.l.b16 %v775
    %v2844 = vunpack.c.l.b16 %v776
    %v2845 = vunpack.c.l.b16 %v777
    %v2846 = vunpack.c.l.b16 %v778
    %v2847 = vunpack.c.l.b16 %v779
    %v2848 = vunpack.c.l.b16 %v780
    %v2849 = vunpack.c.l.b16 %v781
    %v2850 = vunpack.c.l.b16 %v782
    %v2851 = vunpack.c.l.b16 %v783
    %v2852 = vunpack.c.l.b16 %v784
    %v2853 = vunpack.c.l.b16 %v785
    %v2854 = vunpack.c.l.b16 %v786
    %v2855 = vunpack.c.l.b16 %v787
    %v2856 = vunpack.c.l.b16 %v788
    %v2857 = vunpack.c.l.b16 %v789
    %v2858 = vunpack.c.l.b16 %v790
    %v2859 = vunpack.c.l.b16 %v791
    %v2860 = vunpack.c.l.b16 %v792
    %v2861 = vunpack.c.l.b16 %v793
    %v2862 = vunpack.c.l.b16 %v794
    %v2863 = vunpack.c.l.b16 %v795
    %v2864 = vunpack.c.l.b16 %v796
    %v2865 = vunpack.c.l.b16 %v797
    %v2866 = vunpack.c.l.b16 %v798
    %v2867 = vunpack.c.l.b16 %v799
    %v2868 = vunpack.c.l.b16 %v800
    %v2869 = vunpack.c.l.b16 %v801
    %v2870 = vunpack.c.l.b16 %v802
    %v2871 = vunpack.c.l.b16 %v803
    %v2872 = vunpack.c.l.b16 %v804
    %v2873 = vunpack.c.l.b16 %v805
    %v2874 = vunpack.c.l.b16 %v806
    %v2875 = vunpack.c.l.b16 %v807
    %v2876 = vunpack.c.l.b16 %v808
    %v2877 = vunpack.c.l.b16 %v809
    %v2878 = vunpack.c.l.b16 %v810
    %v2879 = vunpack.c.l.b16 %v811
    %v2880 = vunpack.c.l.b16 %v812
    %v2881 = vunpack.c.l.b16 %v813
    %v2882 = vunpack.c.l.b16 %v814
    %v2883 = vunpack.c.l.b16 %v815
    %v2884 = vunpack.c.l.b16 %v816
    %v2885 = vunpack.c.l.b16 %v817
    %v2886 = vunpack.c.l.b16 %v818
    %v2887 = vunpack.c.l.b16 %v819
    %v2888 = vunpack.c.l.b16 %v820
    %v2889 = vunpack.c.l.b16 %v821
    %v2890 = vunpack.c.l.b16 %v822
    %v2891 = vunpack.c.l.b16 %v823
    %v2892 = vunpack.c.l.b16 %v824
    %v2893 = vunpack.c.l.b16 %v825
    %v2894 = vunpack.c.l.b16 %v826
    %v2895 = vunpack.c.l.b16 %v827
    %v2896 = vunpack.c.l.b16 %v828
    %v2897 = vunpack.c.l.b16 %v829
    %v2898 = vunpack.c.l.b16 %v830
    %v2899 = vunpack.c.l.b16 %v831
    %v2900 = vunpack.c.l.b16 %v832
    %v2901 = vunpack.c.l.b16 %v833
    %v2902 = vunpack.c.l.b16 %v834
    %v2903 = vunpack.c.l.b16 %v835
    %v2904 = vunpack.c.l.b16 %v836
    %v2905 = vunpack.c.l.b16 %v837
    %v2906 = vunpack.c.l.b16 %v838
    %v2907 = vunpack.c.l.b16 %v839
    %v2908 = vunpack.c.l.b16 %v840
    %v2909 = vunpack.c.l.b16 %v841
    %v2910 = vunpack.c.l.b16 %v842
    %v2911 = vunpack.c.l.b16 %v843
    %v2912 = vunpack.c.l.b16 %v844
    %v2913 = vunpack.c.l.b16 %v845
    %v2914 = vunpack.c.l.b16 %v846
    %v2915 = vunpack.c.l.b16 %v847
    %v2916 = vunpack.c.l.b16 %v848
    %v2917 = vunpack.c.l.b16 %v849
    %v2918 = vunpack.c.l.b16 %v850
    %v2919 = vunpack.c.l.b16 %v851
    %v2920 = vunpack.c.l.b16 %v852
    %v2921 = vunpack.c.l.b16 %v853
    %v2922 = vunpack.c.l.b16 %v854
    %v2923 = vunpack.c.l.b16 %v855
    %v2924 = vunpack.c.l.b16 %v856
    %v2925 = vunpack.c.l.b16 %v857
    %v2926 = vunpack.c.l.b16 %v858
    %v2927 = vunpack.c.l.b16 %v859
    %v2928 = vunpack.c.l.b16 %v860
    %v2929 = vunpack.c.l.b16 %v861
    %v2930 = vunpack.c.l.b16 %v862
    %v2931 = vunpack.c.l.b16 %v863
    %v2932 = vunpack.c.l.b16 %v864
    %v2933 = vunpack.c.l.b16 %v865
    %v2934 = vunpack.c.l.b16 %v866
    %v2935 = vunpack.c.l.b16 %v867
    %v2936 = vunpack.c.l.b16 %v868
    %v2937 = vunpack.c.l.b16 %v869
    %v2938 = vunpack.c.l.b16 %v870
    %v2939 = vunpack.c.l.b16 %v871
    %v2940 = vunpack.c.l.b16 %v872
    %v2941 = vunpack.c.l.b16 %v873
    %v2942 = vunpack.c.l.b16 %v874
    %v2943 = vunpack.c.l.b16 %v875
    %v2944 = vunpack.c.l.b16 %v876
    %v2945 = vunpack.c.l.b16 %v877
    %v2946 = vunpack.c.l.b16 %v878
    %v2947 = vunpack.c.l.b16 %v879
    %v2948 = vunpack.c.l.b16 %v880
    %v2949 = vunpack.c.l.b16 %v881
    %v2950 = vunpack.c.l.b16 %v882
    %v2951 = vunpack.c.l.b16 %v883
    %v2952 = vunpack.c.l.b16 %v884
    %v2953 = vunpack.c.l.b16 %v885
    %v2954 = vunpack.c.l.b16 %v886
    %v2955 = vunpack.c.l.b16 %v887
    %v2956 = vunpack.c.l.b16 %v888
    %v2957 = vunpack.c.l.b16 %v889
    %v2958 = vunpack.c.l.b16 %v890
    %v2959 = vunpack.c.l.b16 %v891
    %v2960 = vunpack.c.l.b16 %v892
    %v2961 = vunpack.c.l.b16 %v893
    %v2962 = vunpack.c.l.b16 %v894
    %v2963 = vunpack.c.l.b16 %v895
    %v2964 = vunpack.c.l.b16 %v896
    %v2965 = vunpack.c.l.b16 %v897
    %v2966 = vunpack.c.l.b16 %v898
    %v2967 = vunpack.c.l.b16 %v899
    %v2968 = vunpack.c.l.b16 %v900
    %v2969 = vunpack.c.l.b16 %v901
    %v2970 = vunpack.c.l.b16 %v902
    %v2971 = vunpack.c.l.b16 %v903
    %v2972 = vunpack.c.l.b16 %v904
    %v2973 = vunpack.c.l.b16 %v905
    %v2974 = vunpack.c.l.b16 %v906
    %v2975 = vunpack.c.l.b16 %v907
    %v2976 = vunpack.c.l.b16 %v908
    %v2977 = vunpack.c.l.b16 %v909
    %v2978 = vunpack.c.l.b16 %v910
    %v2979 = vunpack.c.l.b16 %v911
    %v2980 = vunpack.c.l.b16 %v912
    %v2981 = vunpack.c.l.b16 %v913
    %v2982 = vunpack.c.l.b16 %v914
    %v2983 = vunpack.c.l.b16 %v915
    %v2984 = vunpack.c.l.b16 %v916
    %v2985 = vunpack.c.l.b16 %v917
    %v2986 = vunpack.c.l.b16 %v918
    %v2987 = vunpack.c.l.b16 %v919
    %v2988 = vunpack.c.l.b16 %v920
    %v2989 = vunpack.c.l.b16 %v921
    %v2990 = vunpack.c.l.b16 %v922
    %v2991 = vunpack.c.l.b16 %v923
    %v2992 = vunpack.c.l.b16 %v924
    %v2993 = vunpack.c.l.b16 %v925
    %v2994 = vunpack.c.l.b16 %v926
    %v2995 = vunpack.c.l.b16 %v927
    %v2996 = vunpack.c.l.b16 %v928
    %v2997 = vunpack.c.l.b16 %v929
    %v2998 = vunpack.c.l.b16 %v930
    %v2999 = vunpack.c.l.b16 %v931
    %v3000 = vunpack.c.l.b16 %v932
    %v3001 = vunpack.c.l.b16 %v933
    %v3002 = vunpack.c.l.b16 %v934
    %v3003 = vunpack.c.l.b16 %v935
    %v3004 = vunpack.c.l.b16 %v936
    %v3005 = vunpack.c.l.b16 %v937
    %v3006 = vunpack.c.l.b16 %v938
    %v3007 = vunpack.c.l.b16 %v939
    %v3008 = vunpack.c.l.b16 %v940
    %v3009 = vunpack.c.l.b16 %v941
    %v3010 = vunpack.c.l.b16 %v942
    %v3011 = vunpack.c.l.b16 %v943
    %v3012 = vunpack.c.l.b16 %v944
    %v3013 = vunpack.c.l.b16 %v945
    %v3014 = vunpack.c.l.b16 %v946
    %v3015 = vunpack.c.l.b16 %v947
    %v3016 = vunpack.c.l.b16 %v948
    %v3017 = vunpack.c.l.b16 %v949
    %v3018 = vunpack.c.l.b16 %v950
    %v3019 = vunpack.c.l.b16 %v951
    %v3020 = vunpack.c.l.b16 %v952
    %v3021 = vunpack.c.l.b16 %v953
    %v3022 = vunpack.c.l.b16 %v954
    %v3023 = vunpack.c.l.b16 %v955
    %v3024 = vunpack.c.l.b16 %v956
    %v3025 = vunpack.c.l.b16 %v957
    %v3026 = vunpack.c.l.b16 %v958
    %v3027 = vunpack.c.l.b16 %v959
    %v3028 = vunpack.c.l.b16 %v960
    %v3029 = vunpack.c.l.b16 %v961
    %v3030 = vunpack.c.l.b16 %v962
    %v3031 = vunpack.c.l.b16 %v963
    %v3032 = vunpack.c.l.b16 %v964
    %v3033 = vunpack.c.l.b16 %v965
    %v3034 = vunpack.c.l.b16 %v966
    %v3035 = vunpack.c.l.b16 %v967
    %v3036 = vunpack.c.l.b16 %v968
    %v3037 = vunpack.c.l.b16 %v969
    %v3038 = vunpack.c.l.b16 %v970
    %v3039 = vunpack.c.l.b16 %v971
    %v3040 = vunpack.c.l.b16 %v972
    %v3041 = vunpack.c.l.b16 %v973
    %v3042 = vunpack.c.l.b16 %v974
    %v3043 = vunpack.c.l.b16 %v975
    %v3044 = vunpack.c.l.b16 %v976
    %v3045 = vunpack.c.l.b16 %v977
    %v3046 = vunpack.c.l.b16 %v978
    %v3047 = vunpack.c.l.b16 %v979
    %v3048 = vunpack.c.l.b16 %v980
    %v3049 = vunpack.c.l.b16 %v981
    %v3050 = vunpack.c.l.b16 %v982
    %v3051 = vunpack.c.l.b16 %v983
    %v3052 = vunpack.c.l.b16 %v984
    %v3053 = vunpack.c.l.b16 %v985
    %v3054 = vunpack.c.l.b16 %v986
    %v3055 = vunpack.c.l.b16 %v987
    %v3056 = vunpack.c.l.b16 %v988
    %v3057 = vunpack.c.l.b16 %v989
    %v3058 = vunpack.c.l.b16 %v990
    %v3059 = vunpack.c.l.b16 %v991
    %v3060 = vunpack.c.l.b16 %v992
    %v3061 = vunpack.c.l.b16 %v993
    %v3062 = vunpack.c.l.b16 %v994
    %v3063 = vunpack.c.l.b16 %v995
    %v3064 = vunpack.c.l.b16 %v996
    %v3065 = vunpack.c.l.b16 %v997
    %v3066 = vunpack.c.l.b16 %v998
    %v3067 = vunpack.c.l.b16 %v999
    %v3068 = vunpack.c.l.b16 %v1000
    %v3069 = vunpack.c.l.b16 %v1001
    %v3070 = vunpack.c.l.b16 %v1002
    %v3071 = vunpack.c.l.b16 %v1003
    %v3072 = vunpack.c.l.b16 %v1004
    %v3073 = vunpack.c.l.b16 %v1005
    %v3074 = vunpack.c.l.b16 %v1006
    %v3075 = vunpack.c.l.b16 %v1007
    %v3076 = vunpack.c.l.b16 %v1008
    %v3077 = vunpack.c.l.b16 %v1009
    %v3078 = vunpack.c.l.b16 %v1010
    %v3079 = vunpack.c.l.b16 %v1011
    %v3080 = vunpack.c.l.b16 %v1012
    %v3081 = vunpack.c.l.b16 %v1013
    %v3082 = vunpack.c.l.b16 %v1014
    %v3083 = vunpack.c.l.b16 %v1015
    %v3084 = vunpack.c.l.b16 %v1016
    %v3085 = vunpack.c.l.b16 %v1017
    %v3086 = vunpack.c.l.b16 %v1018
    %v3087 = vunpack.c.l.b16 %v1019
    %v3088 = vunpack.c.l.b16 %v1020
    %v3089 = vunpack.c.l.b16 %v1021
    %v3090 = vunpack.c.l.b16 %v1022
    %v3091 = vunpack.c.l.b16 %v1023
    %v3092 = vunpack.c.l.b16 %v1024
    %v3093 = vunpack.c.l.b16 %v1025
    %v3094 = vunpack.c.l.b16 %v1026
    %v3095 = vunpack.c.l.b16 %v1027
    %v3096 = vunpack.c.l.b16 %v1028
    %v3097 = vunpack.c.l.b16 %v1029
    %v3098 = vunpack.c.l.b16 %v1030
    %v3099 = vunpack.c.l.b16 %v1031
    %v3100 = vunpack.c.l.b16 %v1032
    %v3101 = vunpack.c.l.b16 %v1033
    %v3102 = vunpack.c.l.b16 %v1034
    %v3103 = vunpack.c.l.b16 %v1035
    %v3104 = vunpack.c.l.b16 %v1036
    %v3105 = vunpack.c.l.b16 %v1037
    %v3106 = vunpack.c.l.b16 %v1038
    %v3107 = vunpack.c.l.b16 %v1039
    %v3108 = vunpack.c.l.b16 %v1040
    %v3109 = vunpack.c.l.b16 %v1041
    %v3110 = vunpack.c.l.b16 %v1042
    %v3111 = vunpack.c.l.b16 %v1043
    %v3112 = vunpack.c.l.b16 %v1044
    %v3113 = vunpack.c.l.b16 %v1045
    %v3114 = vunpack.c.l.b16 %v1046
    %v3115 = vunpack.c.l.b16 %v1047
    %v3116 = vunpack.c.l.b16 %v1048
    %v3117 = vunpack.c.l.b16 %v1049
    %v3118 = vunpack.c.l.b16 %v1050
    %v3119 = vunpack.c.l.b16 %v1051
    %v3120 = vunpack.c.l.b16 %v1052
    %v3121 = vunpack.c.l.b16 %v1053
    %v3122 = vunpack.c.l.b16 %v1054
    %v3123 = vunpack.c.l.b16 %v1055
    %v3124 = vunpack.c.l.b16 %v1056
    %v3125 = vunpack.c.l.b16 %v1057
    %v3126 = vunpack.c.l.b16 %v1058
    %v3127 = vunpack.c.l.b16 %v1059
    %v3128 = vunpack.c.l.b16 %v1060
    %v3129 = vunpack.c.l.b16 %v1061
    %v3130 = vunpack.c.l.b16 %v1062
    %v3131 = vunpack.c.l.b16 %v1063
    %v3132 = vunpack.c.l.b16 %v1064
    %v3133 = vunpack.c.l.b16 %v1065
    %v3134 = vunpack.c.l.b16 %v1066
    %v3135 = vunpack.c.l.b16 %v1067
    %v3136 = vunpack.c.l.b16 %v1068
    %v3137 = vunpack.c.l.b16 %v1069
    %v3138 = vunpack.c.l.b16 %v1070
    %v3139 = vunpack.c.l.b16 %v1071
    %v3140 = vunpack.c.l.b16 %v1072
    %v3141 = vunpack.c.l.b16 %v1073
    %v3142 = vunpack.c.l.b16 %v1074
    %v3143 = vunpack.c.l.b16 %v1075
    %v3144 = vunpack.c.l.b16 %v1076
    %v3145 = vunpack.c.l.b16 %v1077
    %v3146 = vpack.c.b16 %v2123, %v2122
    %v3147 = vpack.c.b16 %v2125, %v2124
    %v3148 = vpack.c.b16 %v2127, %v2126
    %v3149 = vpack.c.b16 %v2129, %v2128
    %v3150 = vpack.c.b16 %v2131, %v2130
    %v3151 = vpack.c.b16 %v2133, %v2132
    %v3152 = vpack.c.b16 %v2135, %v2134
    %v3153 = vpack.c.b16 %v2137, %v2136
    %v3154 = vpack.c.b16 %v2139, %v2138
    %v3155 = vpack.c.b16 %v2141, %v2140
    %v3156 = vpack.c.b16 %v2143, %v2142
    %v3157 = vpack.c.b16 %v2145, %v2144
    %v3158 = vpack.c.b16 %v2147, %v2146
    %v3159 = vpack.c.b16 %v2149, %v2148
    %v3160 = vpack.c.b16 %v2151, %v2150
    %v3161 = vpack.c.b16 %v2153, %v2152
    %v3162 = vpack.c.b16 %v2155, %v2154
    %v3163 = vpack.c.b16 %v2157, %v2156
    %v3164 = vpack.c.b16 %v2159, %v2158
    %v3165 = vpack.c.b16 %v2161, %v2160
    %v3166 = vpack.c.b16 %v2163, %v2162
    %v3167 = vpack.c.b16 %v2165, %v2164
    %v3168 = vpack.c.b16 %v2167, %v2166
    %v3169 = vpack.c.b16 %v2169, %v2168
    %v3170 = vpack.c.b16 %v2171, %v2170
    %v3171 = vpack.c.b16 %v2173, %v2172
    %v3172 = vpack.c.b16 %v2175, %v2174
    %v3173 = vpack.c.b16 %v2177, %v2176
    %v3174 = vpack.c.b16 %v2179, %v2178
    %v3175 = vpack.c.b16 %v2181, %v2180
    %v3176 = vpack.c.b16 %v2183, %v2182
    %v3177 = vpack.c.b16 %v2185, %v2184
    %v3178 = vpack.c.b16 %v2187, %v2186
    %v3179 = vpack.c.b16 %v2189, %v2188
    %v3180 = vpack.c.b16 %v2191, %v2190
    %v3181 = vpack.c.b16 %v2193, %v2192
    %v3182 = vpack.c.b16 %v2195, %v2194
    %v3183 = vpack.c.b16 %v2197, %v2196
    %v3184 = vpack.c.b16 %v2199, %v2198
    %v3185 = vpack.c.b16 %v2201, %v2200
    %v3186 = vpack.c.b16 %v2203, %v2202
    %v3187 = vpack.c.b16 %v2205, %v2204
    %v3188 = vpack.c.b16 %v2207, %v2206
    %v3189 = vpack.c.b16 %v2209, %v2208
    %v3190 = vpack.c.b16 %v2211, %v2210
    %v3191 = vpack.c.b16 %v2213, %v2212
    %v3192 = vpack.c.b16 %v2215, %v2214
    %v3193 = vpack.c.b16 %v2217, %v2216
    %v3194 = vpack.c.b16 %v2219, %v2218
    %v3195 = vpack.c.b16 %v2221, %v2220
    %v3196 = vpack.c.b16 %v2223, %v2222
    %v3197 = vpack.c.b16 %v2225, %v2224
    %v3198 = vpack.c.b16 %v2227, %v2226
    %v3199 = vpack.c.b16 %v2229, %v2228
    %v3200 = vpack.c.b16 %v2231, %v2230
    %v3201 = vpack.c.b16 %v2233, %v2232
    %v3202 = vpack.c.b16 %v2235, %v2234
    %v3203 = vpack.c.b16 %v2237, %v2236
    %v3204 = vpack.c.b16 %v2239, %v2238
    %v3205 = vpack.c.b16 %v2241, %v2240
    %v3206 = vpack.c.b16 %v2243, %v2242
    %v3207 = vpack.c.b16 %v2245, %v2244
    %v3208 = vpack.c.b16 %v2247, %v2246
    %v3209 = vpack.c.b16 %v2249, %v2248
    %v3210 = vpack.c.b16 %v2251, %v2250
    %v3211 = vpack.c.b16 %v2253, %v2252
    %v3212 = vpack.c.b16 %v2255, %v2254
    %v3213 = vpack.c.b16 %v2257, %v2256
    %v3214 = vpack.c.b16 %v2259, %v2258
    %v3215 = vpack.c.b16 %v2261, %v2260
    %v3216 = vpack.c.b16 %v2263, %v2262
    %v3217 = vpack.c.b16 %v2265, %v2264
    %v3218 = vpack.c.b16 %v2267, %v2266
    %v3219 = vpack.c.b16 %v2269, %v2268
    %v3220 = vpack.c.b16 %v2271, %v2270
    %v3221 = vpack.c.b16 %v2273, %v2272
    %v3222 = vpack.c.b16 %v2275, %v2274
    %v3223 = vpack.c.b16 %v2277, %v2276
    %v3224 = vpack.c.b16 %v2279, %v2278
    %v3225 = vpack.c.b16 %v2281, %v2280
    %v3226 = vpack.c.b16 %v2283, %v2282
    %v3227 = vpack.c.b16 %v2285, %v2284
    %v3228 = vpack.c.b16 %v2287, %v2286
    %v3229 = vpack.c.b16 %v2289, %v2288
    %v3230 = vpack.c.b16 %v2291, %v2290
    %v3231 = vpack.c.b16 %v2293, %v2292
    %v3232 = vpack.c.b16 %v2295, %v2294
    %v3233 = vpack.c.b16 %v2297, %v2296
    %v3234 = vpack.c.b16 %v2299, %v2298
    %v3235 = vpack.c.b16 %v2301, %v2300
    %v3236 = vpack.c.b16 %v2303, %v2302
    %v3237 = vpack.c.b16 %v2305, %v2304
    %v3238 = vpack.c.b16 %v2307, %v2306
    %v3239 = vpack.c.b16 %v2309, %v2308
    %v3240 = vpack.c.b16 %v2311, %v2310
    %v3241 = vpack.c.b16 %v2313, %v2312
    %v3242 = vpack.c.b16 %v2315, %v2314
    %v3243 = vpack.c.b16 %v2317, %v2316
    %v3244 = vpack.c.b16 %v2319, %v2318
    %v3245 = vpack.c.b16 %v2321, %v2320
    %v3246 = vpack.c.b16 %v2323, %v2322
    %v3247 = vpack.c.b16 %v2325, %v2324
    %v3248 = vpack.c.b16 %v2327, %v2326
    %v3249 = vpack.c.b16 %v2329, %v2328
    %v3250 = vpack.c.b16 %v2331, %v2330
    %v3251 = vpack.c.b16 %v2333, %v2332
    %v3252 = vpack.c.b16 %v2335, %v2334
    %v3253 = vpack.c.b16 %v2337, %v2336
    %v3254 = vpack.c.b16 %v2339, %v2338
    %v3255 = vpack.c.b16 %v2341, %v2340
    %v3256 = vpack.c.b16 %v2343, %v2342
    %v3257 = vpack.c.b16 %v2345, %v2344
    %v3258 = vpack.c.b16 %v2347, %v2346
    %v3259 = vpack.c.b16 %v2349, %v2348
    %v3260 = vpack.c.b16 %v2351, %v2350
    %v3261 = vpack.c.b16 %v2353, %v2352
    %v3262 = vpack.c.b16 %v2355, %v2354
    %v3263 = vpack.c.b16 %v2357, %v2356
    %v3264 = vpack.c.b16 %v2359, %v2358
    %v3265 = vpack.c.b16 %v2361, %v2360
    %v3266 = vpack.c.b16 %v2363, %v2362
    %v3267 = vpack.c.b16 %v2365, %v2364
    %v3268 = vpack.c.b16 %v2367, %v2366
    %v3269 = vpack.c.b16 %v2369, %v2368
    %v3270 = vpack.c.b16 %v2371, %v2370
    %v3271 = vpack.c.b16 %v2373, %v2372
    %v3272 = vpack.c.b16 %v2375, %v2374
    %v3273 = vpack.c.b16 %v2377, %v2376
    %v3274 = vpack.c.b16 %v2379, %v2378
    %v3275 = vpack.c.b16 %v2381, %v2380
    %v3276 = vpack.c.b16 %v2383, %v2382
    %v3277 = vpack.c.b16 %v2385, %v2384
    %v3278 = vpack.c.b16 %v2387, %v2386
    %v3279 = vpack.c.b16 %v2389, %v2388
    %v3280 = vpack.c.b16 %v2391, %v2390
    %v3281 = vpack.c.b16 %v2393, %v2392
    %v3282 = vpack.c.b16 %v2395, %v2394
    %v3283 = vpack.c.b16 %v2397, %v2396
    %v3284 = vpack.c.b16 %v2399, %v2398
    %v3285 = vpack.c.b16 %v2401, %v2400
    %v3286 = vpack.c.b16 %v2403, %v2402
    %v3287 = vpack.c.b16 %v2405, %v2404
    %v3288 = vpack.c.b16 %v2407, %v2406
    %v3289 = vpack.c.b16 %v2409, %v2408
    %v3290 = vpack.c.b16 %v2411, %v2410
    %v3291 = vpack.c.b16 %v2413, %v2412
    %v3292 = vpack.c.b16 %v2415, %v2414
    %v3293 = vpack.c.b16 %v2417, %v2416
    %v3294 = vpack.c.b16 %v2419, %v2418
    %v3295 = vpack.c.b16 %v2421, %v2420
    %v3296 = vpack.c.b16 %v2423, %v2422
    %v3297 = vpack.c.b16 %v2425, %v2424
    %v3298 = vpack.c.b16 %v2427, %v2426
    %v3299 = vpack.c.b16 %v2429, %v2428
    %v3300 = vpack.c.b16 %v2431, %v2430
    %v3301 = vpack.c.b16 %v2433, %v2432
    %v3302 = vpack.c.b16 %v2435, %v2434
    %v3303 = vpack.c.b16 %v2437, %v2436
    %v3304 = vpack.c.b16 %v2439, %v2438
    %v3305 = vpack.c.b16 %v2441, %v2440
    %v3306 = vpack.c.b16 %v2443, %v2442
    %v3307 = vpack.c.b16 %v2445, %v2444
    %v3308 = vpack.c.b16 %v2447, %v2446
    %v3309 = vpack.c.b16 %v2449, %v2448
    %v3310 = vpack.c.b16 %v2451, %v2450
    %v3311 = vpack.c.b16 %v2453, %v2452
    %v3312 = vpack.c.b16 %v2455, %v2454
    %v3313 = vpack.c.b16 %v2457, %v2456
    %v3314 = vpack.c.b16 %v2459, %v2458
    %v3315 = vpack.c.b16 %v2461, %v2460
    %v3316 = vpack.c.b16 %v2463, %v2462
    %v3317 = vpack.c.b16 %v2465, %v2464
    %v3318 = vpack.c.b16 %v2467, %v2466
    %v3319 = vpack.c.b16 %v2469, %v2468
    %v3320 = vpack.c.b16 %v2471, %v2470
    %v3321 = vpack.c.b16 %v2473, %v2472
    %v3322 = vpack.c.b16 %v2475, %v2474
    %v3323 = vpack.c.b16 %v2477, %v2476
    %v3324 = vpack.c.b16 %v2479, %v2478
    %v3325 = vpack.c.b16 %v2481, %v2480
    %v3326 = vpack.c.b16 %v2483, %v2482
    %v3327 = vpack.c.b16 %v2485, %v2484
    %v3328 = vpack.c.b16 %v2487, %v2486
    %v3329 = vpack.c.b16 %v2489, %v2488
    %v3330 = vpack.c.b16 %v2491, %v2490
    %v3331 = vpack.c.b16 %v2493, %v2492
    %v3332 = vpack.c.b16 %v2495, %v2494
    %v3333 = vpack.c.b16 %v2497, %v2496
    %v3334 = vpack.c.b16 %v2499, %v2498
    %v3335 = vpack.c.b16 %v2501, %v2500
    %v3336 = vpack.c.b16 %v2503, %v2502
    %v3337 = vpack.c.b16 %v2505, %v2504
    %v3338 = vpack.c.b16 %v2507, %v2506
    %v3339 = vpack.c.b16 %v2509, %v2508
    %v3340 = vpack.c.b16 %v2511, %v2510
    %v3341 = vpack.c.b16 %v2513, %v2512
    %v3342 = vpack.c.b16 %v2515, %v2514
    %v3343 = vpack.c.b16 %v2517, %v2516
    %v3344 = vpack.c.b16 %v2519, %v2518
    %v3345 = vpack.c.b16 %v2521, %v2520
    %v3346 = vpack.c.b16 %v2523, %v2522
    %v3347 = vpack.c.b16 %v2525, %v2524
    %v3348 = vpack.c.b16 %v2527, %v2526
    %v3349 = vpack.c.b16 %v2529, %v2528
    %v3350 = vpack.c.b16 %v2531, %v2530
    %v3351 = vpack.c.b16 %v2533, %v2532
    %v3352 = vpack.c.b16 %v2535, %v2534
    %v3353 = vpack.c.b16 %v2537, %v2536
    %v3354 = vpack.c.b16 %v2539, %v2538
    %v3355 = vpack.c.b16 %v2541, %v2540
    %v3356 = vpack.c.b16 %v2543, %v2542
    %v3357 = vpack.c.b16 %v2545, %v2544
    %v3358 = vpack.c.b16 %v2547, %v2546
    %v3359 = vpack.c.b16 %v2549, %v2548
    %v3360 = vpack.c.b16 %v2551, %v2550
    %v3361 = vpack.c.b16 %v2553, %v2552
    %v3362 = vpack.c.b16 %v2555, %v2554
    %v3363 = vpack.c.b16 %v2557, %v2556
    %v3364 = vpack.c.b16 %v2559, %v2558
    %v3365 = vpack.c.b16 %v2561, %v2560
    %v3366 = vpack.c.b16 %v2563, %v2562
    %v3367 = vpack.c.b16 %v2565, %v2564
    %v3368 = vpack.c.b16 %v2567, %v2566
    %v3369 = vpack.c.b16 %v2569, %v2568
    %v3370 = vpack.c.b16 %v2571, %v2570
    %v3371 = vpack.c.b16 %v2573, %v2572
    %v3372 = vpack.c.b16 %v2575, %v2574
    %v3373 = vpack.c.b16 %v2577, %v2576
    %v3374 = vpack.c.b16 %v2579, %v2578
    %v3375 = vpack.c.b16 %v2581, %v2580
    %v3376 = vpack.c.b16 %v2583, %v2582
    %v3377 = vpack.c.b16 %v2585, %v2584
    %v3378 = vpack.c.b16 %v2587, %v2586
    %v3379 = vpack.c.b16 %v2589, %v2588
    %v3380 = vpack.c.b16 %v2591, %v2590
    %v3381 = vpack.c.b16 %v2593, %v2592
    %v3382 = vpack.c.b16 %v2595, %v2594
    %v3383 = vpack.c.b16 %v2597, %v2596
    %v3384 = vpack.c.b16 %v2599, %v2598
    %v3385 = vpack.c.b16 %v2601, %v2600
    %v3386 = vpack.c.b16 %v2603, %v2602
    %v3387 = vpack.c.b16 %v2605, %v2604
    %v3388 = vpack.c.b16 %v2607, %v2606
    %v3389 = vpack.c.b16 %v2609, %v2608
    %v3390 = vpack.c.b16 %v2611, %v2610
    %v3391 = vpack.c.b16 %v2613, %v2612
    %v3392 = vpack.c.b16 %v2615, %v2614
    %v3393 = vpack.c.b16 %v2617, %v2616
    %v3394 = vpack.c.b16 %v2619, %v2618
    %v3395 = vpack.c.b16 %v2621, %v2620
    %v3396 = vpack.c.b16 %v2623, %v2622
    %v3397 = vpack.c.b16 %v2625, %v2624
    %v3398 = vpack.c.b16 %v2627, %v2626
    %v3399 = vpack.c.b16 %v2629, %v2628
    %v3400 = vpack.c.b16 %v2631, %v2630
    %v3401 = vpack.c.b16 %v2633, %v2632
    %v3402 = vpack.c.b16 %v2635, %v2634
    %v3403 = vpack.c.b16 %v2637, %v2636
    %v3404 = vpack.c.b16 %v2639, %v2638
    %v3405 = vpack.c.b16 %v2641, %v2640
    %v3406 = vpack.c.b16 %v2643, %v2642
    %v3407 = vpack.c.b16 %v2645, %v2644
    %v3408 = vpack.c.b16 %v2647, %v2646
    %v3409 = vpack.c.b16 %v2649, %v2648
    %v3410 = vpack.c.b16 %v2651, %v2650
    %v3411 = vpack.c.b16 %v2653, %v2652
    %v3412 = vpack.c.b16 %v2655, %v2654
    %v3413 = vpack.c.b16 %v2657, %v2656
    %v3414 = vpack.c.b16 %v2659, %v2658
    %v3415 = vpack.c.b16 %v2661, %v2660
    %v3416 = vpack.c.b16 %v2663, %v2662
    %v3417 = vpack.c.b16 %v2665, %v2664
    %v3418 = vpack.c.b16 %v2667, %v2666
    %v3419 = vpack.c.b16 %v2669, %v2668
    %v3420 = vpack.c.b16 %v2671, %v2670
    %v3421 = vpack.c.b16 %v2673, %v2672
    %v3422 = vpack.c.b16 %v2675, %v2674
    %v3423 = vpack.c.b16 %v2677, %v2676
    %v3424 = vpack.c.b16 %v2679, %v2678
    %v3425 = vpack.c.b16 %v2681, %v2680
    %v3426 = vpack.c.b16 %v2683, %v2682
    %v3427 = vpack.c.b16 %v2685, %v2684
    %v3428 = vpack.c.b16 %v2687, %v2686
    %v3429 = vpack.c.b16 %v2689, %v2688
    %v3430 = vpack.c.b16 %v2691, %v2690
    %v3431 = vpack.c.b16 %v2693, %v2692
    %v3432 = vpack.c.b16 %v2695, %v2694
    %v3433 = vpack.c.b16 %v2697, %v2696
    %v3434 = vpack.c.b16 %v2699, %v2698
    %v3435 = vpack.c.b16 %v2701, %v2700
    %v3436 = vpack.c.b16 %v2703, %v2702
    %v3437 = vpack.c.b16 %v2705, %v2704
    %v3438 = vpack.c.b16 %v2707, %v2706
    %v3439 = vpack.c.b16 %v2709, %v2708
    %v3440 = vpack.c.b16 %v2711, %v2710
    %v3441 = vpack.c.b16 %v2713, %v2712
    %v3442 = vpack.c.b16 %v2715, %v2714
    %v3443 = vpack.c.b16 %v2717, %v2716
    %v3444 = vpack.c.b16 %v2719, %v2718
    %v3445 = vpack.c.b16 %v2721, %v2720
    %v3446 = vpack.c.b16 %v2723, %v2722
    %v3447 = vpack.c.b16 %v2725, %v2724
    %v3448 = vpack.c.b16 %v2727, %v2726
    %v3449 = vpack.c.b16 %v2729, %v2728
    %v3450 = vpack.c.b16 %v2731, %v2730
    %v3451 = vpack.c.b16 %v2733, %v2732
    %v3452 = vpack.c.b16 %v2735, %v2734
    %v3453 = vpack.c.b16 %v2737, %v2736
    %v3454 = vpack.c.b16 %v2739, %v2738
    %v3455 = vpack.c.b16 %v2741, %v2740
    %v3456 = vpack.c.b16 %v2743, %v2742
    %v3457 = vpack.c.b16 %v2745, %v2744
    %v3458 = vpack.c.b16 %v2747, %v2746
    %v3459 = vpack.c.b16 %v2749, %v2748
    %v3460 = vpack.c.b16 %v2751, %v2750
    %v3461 = vpack.c.b16 %v2753, %v2752
    %v3462 = vpack.c.b16 %v2755, %v2754
    %v3463 = vpack.c.b16 %v2757, %v2756
    %v3464 = vpack.c.b16 %v2759, %v2758
    %v3465 = vpack.c.b16 %v2761, %v2760
    %v3466 = vpack.c.b16 %v2763, %v2762
    %v3467 = vpack.c.b16 %v2765, %v2764
    %v3468 = vpack.c.b16 %v2767, %v2766
    %v3469 = vpack.c.b16 %v2769, %v2768
    %v3470 = vpack.c.b16 %v2771, %v2770
    %v3471 = vpack.c.b16 %v2773, %v2772
    %v3472 = vpack.c.b16 %v2775, %v2774
    %v3473 = vpack.c.b16 %v2777, %v2776
    %v3474 = vpack.c.b16 %v2779, %v2778
    %v3475 = vpack.c.b16 %v2781, %v2780
    %v3476 = vpack.c.b16 %v2783, %v2782
    %v3477 = vpack.c.b16 %v2785, %v2784
    %v3478 = vpack.c.b16 %v2787, %v2786
    %v3479 = vpack.c.b16 %v2789, %v2788
    %v3480 = vpack.c.b16 %v2791, %v2790
    %v3481 = vpack.c.b16 %v2793, %v2792
    %v3482 = vpack.c.b16 %v2795, %v2794
    %v3483 = vpack.c.b16 %v2797, %v2796
    %v3484 = vpack.c.b16 %v2799, %v2798
    %v3485 = vpack.c.b16 %v2801, %v2800
    %v3486 = vpack.c.b16 %v2803, %v2802
    %v3487 = vpack.c.b16 %v2805, %v2804
    %v3488 = vpack.c.b16 %v2807, %v2806
    %v3489 = vpack.c.b16 %v2809, %v2808
    %v3490 = vpack.c.b16 %v2811, %v2810
    %v3491 = vpack.c.b16 %v2813, %v2812
    %v3492 = vpack.c.b16 %v2815, %v2814
    %v3493 = vpack.c.b16 %v2817, %v2816
    %v3494 = vpack.c.b16 %v2819, %v2818
    %v3495 = vpack.c.b16 %v2821, %v2820
    %v3496 = vpack.c.b16 %v2823, %v2822
    %v3497 = vpack.c.b16 %v2825, %v2824
    %v3498 = vpack.c.b16 %v2827, %v2826
    %v3499 = vpack.c.b16 %v2829, %v2828
    %v3500 = vpack.c.b16 %v2831, %v2830
    %v3501 = vpack.c.b16 %v2833, %v2832
    %v3502 = vpack.c.b16 %v2835, %v2834
    %v3503 = vpack.c.b16 %v2837, %v2836
    %v3504 = vpack.c.b16 %v2839, %v2838
    %v3505 = vpack.c.b16 %v2841, %v2840
    %v3506 = vpack.c.b16 %v2843, %v2842
    %v3507 = vpack.c.b16 %v2845, %v2844
    %v3508 = vpack.c.b16 %v2847, %v2846
    %v3509 = vpack.c.b16 %v2849, %v2848
    %v3510 = vpack.c.b16 %v2851, %v2850
    %v3511 = vpack.c.b16 %v2853, %v2852
    %v3512 = vpack.c.b16 %v2855, %v2854
    %v3513 = vpack.c.b16 %v2857, %v2856
    %v3514 = vpack.c.b16 %v2859, %v2858
    %v3515 = vpack.c.b16 %v2861, %v2860
    %v3516 = vpack.c.b16 %v2863, %v2862
    %v3517 = vpack.c.b16 %v2865, %v2864
    %v3518 = vpack.c.b16 %v2867, %v2866
    %v3519 = vpack.c.b16 %v2869, %v2868
    %v3520 = vpack.c.b16 %v2871, %v2870
    %v3521 = vpack.c.b16 %v2873, %v2872
    %v3522 = vpack.c.b16 %v2875, %v2874
    %v3523 = vpack.c.b16 %v2877, %v2876
    %v3524 = vpack.c.b16 %v2879, %v2878
    %v3525 = vpack.c.b16 %v2881, %v2880
    %v3526 = vpack.c.b16 %v2883, %v2882
    %v3527 = vpack.c.b16 %v2885, %v2884
    %v3528 = vpack.c.b16 %v2887, %v2886
    %v3529 = vpack.c.b16 %v2889, %v2888
    %v3530 = vpack.c.b16 %v2891, %v2890
    %v3531 = vpack.c.b16 %v2893, %v2892
    %v3532 = vpack.c.b16 %v2895, %v2894
    %v3533 = vpack.c.b16 %v2897, %v2896
    %v3534 = vpack.c.b16 %v2899, %v2898
    %v3535 = vpack.c.b16 %v2901, %v2900
    %v3536 = vpack.c.b16 %v2903, %v2902
    %v3537 = vpack.c.b16 %v2905, %v2904
    %v3538 = vpack.c.b16 %v2907, %v2906
    %v3539 = vpack.c.b16 %v2909, %v2908
    %v3540 = vpack.c.b16 %v2911, %v2910
    %v3541 = vpack.c.b16 %v2913, %v2912
    %v3542 = vpack.c.b16 %v2915, %v2914
    %v3543 = vpack.c.b16 %v2917, %v2916
    %v3544 = vpack.c.b16 %v2919, %v2918
    %v3545 = vpack.c.b16 %v2921, %v2920
    %v3546 = vpack.c.b16 %v2923, %v2922
    %v3547 = vpack.c.b16 %v2925, %v2924
    %v3548 = vpack.c.b16 %v2927, %v2926
    %v3549 = vpack.c.b16 %v2929, %v2928
    %v3550 = vpack.c.b16 %v2931, %v2930
    %v3551 = vpack.c.b16 %v2933, %v2932
    %v3552 = vpack.c.b16 %v2935, %v2934
    %v3553 = vpack.c.b16 %v2937, %v2936
    %v3554 = vpack.c.b16 %v2939, %v2938
    %v3555 = vpack.c.b16 %v2941, %v2940
    %v3556 = vpack.c.b16 %v2943, %v2942
    %v3557 = vpack.c.b16 %v2945, %v2944
    %v3558 = vpack.c.b16 %v2947, %v2946
    %v3559 = vpack.c.b16 %v2949, %v2948
    %v3560 = vpack.c.b16 %v2951, %v2950
    %v3561 = vpack.c.b16 %v2953, %v2952
    %v3562 = vpack.c.b16 %v2955, %v2954
    %v3563 = vpack.c.b16 %v2957, %v2956
    %v3564 = vpack.c.b16 %v2959, %v2958
    %v3565 = vpack.c.b16 %v2961, %v2960
    %v3566 = vpack.c.b16 %v2963, %v2962
    %v3567 = vpack.c.b16 %v2965, %v2964
    %v3568 = vpack.c.b16 %v2967, %v2966
    %v3569 = vpack.c.b16 %v2969, %v2968
    %v3570 = vpack.c.b16 %v2971, %v2970
    %v3571 = vpack.c.b16 %v2973, %v2972
    %v3572 = vpack.c.b16 %v2975, %v2974
    %v3573 = vpack.c.b16 %v2977, %v2976
    %v3574 = vpack.c.b16 %v2979, %v2978
    %v3575 = vpack.c.b16 %v2981, %v2980
    %v3576 = vpack.c.b16 %v2983, %v2982
    %v3577 = vpack.c.b16 %v2985, %v2984
    %v3578 = vpack.c.b16 %v2987, %v2986
    %v3579 = vpack.c.b16 %v2989, %v2988
    %v3580 = vpack.c.b16 %v2991, %v2990
    %v3581 = vpack.c.b16 %v2993, %v2992
    %v3582 = vpack.c.b16 %v2995, %v2994
    %v3583 = vpack.c.b16 %v2997, %v2996
    %v3584 = vpack.c.b16 %v2999, %v2998
    %v3585 = vpack.c.b16 %v3001, %v3000
    %v3586 = vpack.c.b16 %v3003, %v3002
    %v3587 = vpack.c.b16 %v3005, %v3004
    %v3588 = vpack.c.b16 %v3007, %v3006
    %v3589 = vpack.c.b16 %v3009, %v3008
    %v3590 = vpack.c.b16 %v3011, %v3010
    %v3591 = vpack.c.b16 %v3013, %v3012
    %v3592 = vpack.c.b16 %v3015, %v3014
    %v3593 = vpack.c.b16 %v3017, %v3016
    %v3594 = vpack.c.b16 %v3019, %v3018
    %v3595 = vpack.c.b16 %v3021, %v3020
    %v3596 = vpack.c.b16 %v3023, %v3022
    %v3597 = vpack.c.b16 %v3025, %v3024
    %v3598 = vpack.c.b16 %v3027, %v3026
    %v3599 = vpack.c.b16 %v3029, %v3028
    %v3600 = vpack.c.b16 %v3031, %v3030
    %v3601 = vpack.c.b16 %v3033, %v3032
    %v3602 = vpack.c.b16 %v3035, %v3034
    %v3603 = vpack.c.b16 %v3037, %v3036
    %v3604 = vpack.c.b16 %v3039, %v3038
    %v3605 = vpack.c.b16 %v3041, %v3040
    %v3606 = vpack.c.b16 %v3043, %v3042
    %v3607 = vpack.c.b16 %v3045, %v3044
    %v3608 = vpack.c.b16 %v3047, %v3046
    %v3609 = vpack.c.b16 %v3049, %v3048
    %v3610 = vpack.c.b16 %v3051, %v3050
    %v3611 = vpack.c.b16 %v3053, %v3052
    %v3612 = vpack.c.b16 %v3055, %v3054
    %v3613 = vpack.c.b16 %v3057, %v3056
    %v3614 = vpack.c.b16 %v3059, %v3058
    %v3615 = vpack.c.b16 %v3061, %v3060
    %v3616 = vpack.c.b16 %v3063, %v3062
    %v3617 = vpack.c.b16 %v3065, %v3064
    %v3618 = vpack.c.b16 %v3067, %v3066
    %v3619 = vpack.c.b16 %v3069, %v3068
    %v3620 = vpack.c.b16 %v3071, %v3070
    %v3621 = vpack.c.b16 %v3073, %v3072
    %v3622 = vpack.c.b16 %v3075, %v3074
    %v3623 = vpack.c.b16 %v3077, %v3076
    %v3624 = vpack.c.b16 %v3079, %v3078
    %v3625 = vpack.c.b16 %v3081, %v3080
    %v3626 = vpack.c.b16 %v3083, %v3082
    %v3627 = vpack.c.b16 %v3085, %v3084
    %v3628 = vpack.c.b16 %v3087, %v3086
    %v3629 = vpack.c.b16 %v3089, %v3088
    %v3630 = vpack.c.b16 %v3091, %v3090
    %v3631 = vpack.c.b16 %v3093, %v3092
    %v3632 = vpack.c.b16 %v3095, %v3094
    %v3633 = vpack.c.b16 %v3097, %v3096
    %v3634 = vpack.c.b16 %v3099, %v3098
    %v3635 = vpack.c.b16 %v3101, %v3100
    %v3636 = vpack.c.b16 %v3103, %v3102
    %v3637 = vpack.c.b16 %v3105, %v3104
    %v3638 = vpack.c.b16 %v3107, %v3106
    %v3639 = vpack.c.b16 %v3109, %v3108
    %v3640 = vpack.c.b16 %v3111, %v3110
    %v3641 = vpack.c.b16 %v3113, %v3112
    %v3642 = vpack.c.b16 %v3115, %v3114
    %v3643 = vpack.c.b16 %v3117, %v3116
    %v3644 = vpack.c.b16 %v3119, %v3118
    %v3645 = vpack.c.b16 %v3121, %v3120
    %v3646 = vpack.c.b16 %v3123, %v3122
    %v3647 = vpack.c.b16 %v3125, %v3124
    %v3648 = vpack.c.b16 %v3127, %v3126
    %v3649 = vpack.c.b16 %v3129, %v3128
    %v3650 = vpack.c.b16 %v3131, %v3130
    %v3651 = vpack.c.b16 %v3133, %v3132
    %v3652 = vpack.c.b16 %v3135, %v3134
    %v3653 = vpack.c.b16 %v3137, %v3136
    %v3654 = vpack.c.b16 %v3139, %v3138
    %v3655 = vpack.c.b16 %v3141, %v3140
    %v3656 = vpack.c.b16 %v3143, %v3142
    %v3657 = vpack.c.b16 %v3145, %v3144
    %v4186 = vunpack.c.l.b16 %v1078
    %v4187 = vunpack.c.l.b16 %v1079
    %v4188 = vunpack.c.l.b16 %v1080
    %v4189 = vunpack.c.l.b16 %v1081
    %v4190 = vunpack.c.l.b16 %v1082
    %v4191 = vunpack.c.l.b16 %v1083
    %v4192 = vunpack.c.l.b16 %v1084
    %v4193 = vunpack.c.l.b16 %v1085
    %v4194 = vunpack.c.l.b16 %v1086
    %v4195 = vunpack.c.l.b16 %v1087
    %v4196 = vunpack.c.l.b16 %v1088
    %v4197 = vunpack.c.l.b16 %v1089
    %v4198 = vunpack.c.l.b16 %v1090
    %v4199 = vunpack.c.l.b16 %v1091
    %v4200 = vunpack.c.l.b16 %v1092
    %v4201 = vunpack.c.l.b16 %v1093
    %v4202 = vpack.c.b16 %v4187, %v4186
    %v4203 = vpack.c.b16 %v4189, %v4188
    %v4204 = vpack.c.b16 %v4191, %v4190
    %v4205 = vpack.c.b16 %v4193, %v4192
    %v4206 = vpack.c.b16 %v4195, %v4194
    %v4207 = vpack.c.b16 %v4197, %v4196
    %v4208 = vpack.c.b16 %v4199, %v4198
    %v4209 = vpack.c.b16 %v4201, %v4200
    %4218 = vmatpush.bf16.msra.mxu0 %v4209
    %4219 = vmatpush.bf16.msra.mxu0 %v4208
    %4220 = vmatpush.bf16.msra.mxu0 %v4207
    %4221 = vmatpush.bf16.msra.mxu0 %v4206
    %4222 = vmatpush.bf16.msra.mxu0 %v4205
    %4223 = vmatpush.bf16.msra.mxu0 %v4204
    %4224 = vmatpush.bf16.msra.mxu0 %v4203
    %4225 = vmatpush.bf16.msra.mxu0 %v4202
    %4226 = vmatmul.bf16.gmra.mxu0 %v3146
    %v4227 = vpop.f32.mrf.mxu0
    %v4228 = vadd.f32 %v1096, %v4227
    %v4229 = vpop.f32.mrf.mxu0
    %v4230 = vadd.f32 %v1096, %v4229
    %4231 = vmatmul.bf16.gmra.mxu0 %v3147
    %v4232 = vpop.f32.mrf.mxu0
    %v4233 = vadd.f32 %v1096, %v4232
    %v4234 = vpop.f32.mrf.mxu0
    %v4235 = vadd.f32 %v1096, %v4234
    %4236 = vmatmul.bf16.gmra.mxu0 %v3148
    %v4237 = vpop.f32.mrf.mxu0
    %v4238 = vadd.f32 %v1096, %v4237
    %v4239 = vpop.f32.mrf.mxu0
    %v4240 = vadd.f32 %v1096, %v4239
    %4241 = vmatmul.bf16.gmra.mxu0 %v3149
    %v4242 = vpop.f32.mrf.mxu0
    %v4243 = vadd.f32 %v1096, %v4242
    %v4244 = vpop.f32.mrf.mxu0
    %v4245 = vadd.f32 %v1096, %v4244
    %4246 = vmatmul.bf16.gmra.mxu0 %v3150
    %v4247 = vpop.f32.mrf.mxu0
    %v4248 = vadd.f32 %v1096, %v4247
    %v4249 = vpop.f32.mrf.mxu0
    %v4250 = vadd.f32 %v1096, %v4249
    %4251 = vmatmul.bf16.gmra.mxu0 %v3151
    %v4252 = vpop.f32.mrf.mxu0
    %v4253 = vadd.f32 %v1096, %v4252
    %v4254 = vpop.f32.mrf.mxu0
    %v4255 = vadd.f32 %v1096, %v4254
    %4256 = vmatmul.bf16.gmra.mxu0 %v3152
    %v4257 = vpop.f32.mrf.mxu0
    %v4258 = vadd.f32 %v1096, %v4257
    %v4259 = vpop.f32.mrf.mxu0
    %v4260 = vadd.f32 %v1096, %v4259
    %4261 = vmatmul.bf16.gmra.mxu0 %v3153
    %v4262 = vpop.f32.mrf.mxu0
    %v4263 = vadd.f32 %v1096, %v4262
    %v4264 = vpop.f32.mrf.mxu0
    %v4265 = vadd.f32 %v1096, %v4264
    %4266 = vmatmul.bf16.gmra.mxu0 %v3154
    %v4267 = vpop.f32.mrf.mxu0
    %v4268 = vadd.f32 %v1096, %v4267
    %v4269 = vpop.f32.mrf.mxu0
    %v4270 = vadd.f32 %v1096, %v4269
    %4271 = vmatmul.bf16.gmra.mxu0 %v3155
    %v4272 = vpop.f32.mrf.mxu0
    %v4273 = vadd.f32 %v1096, %v4272
    %v4274 = vpop.f32.mrf.mxu0
    %v4275 = vadd.f32 %v1096, %v4274
    %4276 = vmatmul.bf16.gmra.mxu0 %v3156
    %v4277 = vpop.f32.mrf.mxu0
    %v4278 = vadd.f32 %v1096, %v4277
    %v4279 = vpop.f32.mrf.mxu0
    %v4280 = vadd.f32 %v1096, %v4279
    %4281 = vmatmul.bf16.gmra.mxu0 %v3157
    %v4282 = vpop.f32.mrf.mxu0
    %v4283 = vadd.f32 %v1096, %v4282
    %v4284 = vpop.f32.mrf.mxu0
    %v4285 = vadd.f32 %v1096, %v4284
    %4286 = vmatmul.bf16.gmra.mxu0 %v3158
    %v4287 = vpop.f32.mrf.mxu0
    %v4288 = vadd.f32 %v1096, %v4287
    %v4289 = vpop.f32.mrf.mxu0
    %v4290 = vadd.f32 %v1096, %v4289
    %4291 = vmatmul.bf16.gmra.mxu0 %v3159
    %v4292 = vpop.f32.mrf.mxu0
    %v4293 = vadd.f32 %v1096, %v4292
    %v4294 = vpop.f32.mrf.mxu0
    %v4295 = vadd.f32 %v1096, %v4294
    %4296 = vmatmul.bf16.gmra.mxu0 %v3160
    %v4297 = vpop.f32.mrf.mxu0
    %v4298 = vadd.f32 %v1096, %v4297
    %v4299 = vpop.f32.mrf.mxu0
    %v4300 = vadd.f32 %v1096, %v4299
    %4301 = vmatmul.bf16.gmra.mxu0 %v3161
    %v4302 = vpop.f32.mrf.mxu0
    %v4303 = vadd.f32 %v1096, %v4302
    %v4304 = vpop.f32.mrf.mxu0
    %v4305 = vadd.f32 %v1096, %v4304
    %4306 = vmatmul.bf16.gmra.mxu0 %v3162
    %v4307 = vpop.f32.mrf.mxu0
    %v4308 = vadd.f32 %v1096, %v4307
    %v4309 = vpop.f32.mrf.mxu0
    %v4310 = vadd.f32 %v1096, %v4309
    %4311 = vmatmul.bf16.gmra.mxu0 %v3163
    %v4312 = vpop.f32.mrf.mxu0
    %v4313 = vadd.f32 %v1096, %v4312
    %v4314 = vpop.f32.mrf.mxu0
    %v4315 = vadd.f32 %v1096, %v4314
    %4316 = vmatmul.bf16.gmra.mxu0 %v3164
    %v4317 = vpop.f32.mrf.mxu0
    %v4318 = vadd.f32 %v1096, %v4317
    %v4319 = vpop.f32.mrf.mxu0
    %v4320 = vadd.f32 %v1096, %v4319
    %4321 = vmatmul.bf16.gmra.mxu0 %v3165
    %v4322 = vpop.f32.mrf.mxu0
    %v4323 = vadd.f32 %v1096, %v4322
    %v4324 = vpop.f32.mrf.mxu0
    %v4325 = vadd.f32 %v1096, %v4324
    %4326 = vmatmul.bf16.gmra.mxu0 %v3166
    %v4327 = vpop.f32.mrf.mxu0
    %v4328 = vadd.f32 %v1096, %v4327
    %v4329 = vpop.f32.mrf.mxu0
    %v4330 = vadd.f32 %v1096, %v4329
    %4331 = vmatmul.bf16.gmra.mxu0 %v3167
    %v4332 = vpop.f32.mrf.mxu0
    %v4333 = vadd.f32 %v1096, %v4332
    %v4334 = vpop.f32.mrf.mxu0
    %v4335 = vadd.f32 %v1096, %v4334
    %4336 = vmatmul.bf16.gmra.mxu0 %v3168
    %v4337 = vpop.f32.mrf.mxu0
    %v4338 = vadd.f32 %v1096, %v4337
    %v4339 = vpop.f32.mrf.mxu0
    %v4340 = vadd.f32 %v1096, %v4339
    %4341 = vmatmul.bf16.gmra.mxu0 %v3169
    %v4342 = vpop.f32.mrf.mxu0
    %v4343 = vadd.f32 %v1096, %v4342
    %v4344 = vpop.f32.mrf.mxu0
    %v4345 = vadd.f32 %v1096, %v4344
    %4346 = vmatmul.bf16.gmra.mxu0 %v3170
    %v4347 = vpop.f32.mrf.mxu0
    %v4348 = vadd.f32 %v1096, %v4347
    %v4349 = vpop.f32.mrf.mxu0
    %v4350 = vadd.f32 %v1096, %v4349
    %4351 = vmatmul.bf16.gmra.mxu0 %v3171
    %v4352 = vpop.f32.mrf.mxu0
    %v4353 = vadd.f32 %v1096, %v4352
    %v4354 = vpop.f32.mrf.mxu0
    %v4355 = vadd.f32 %v1096, %v4354
    %4356 = vmatmul.bf16.gmra.mxu0 %v3172
    %v4357 = vpop.f32.mrf.mxu0
    %v4358 = vadd.f32 %v1096, %v4357
    %v4359 = vpop.f32.mrf.mxu0
    %v4360 = vadd.f32 %v1096, %v4359
    %4361 = vmatmul.bf16.gmra.mxu0 %v3173
    %v4362 = vpop.f32.mrf.mxu0
    %v4363 = vadd.f32 %v1096, %v4362
    %v4364 = vpop.f32.mrf.mxu0
    %v4365 = vadd.f32 %v1096, %v4364
    %4366 = vmatmul.bf16.gmra.mxu0 %v3174
    %v4367 = vpop.f32.mrf.mxu0
    %v4368 = vadd.f32 %v1096, %v4367
    %v4369 = vpop.f32.mrf.mxu0
    %v4370 = vadd.f32 %v1096, %v4369
    %4371 = vmatmul.bf16.gmra.mxu0 %v3175
    %v4372 = vpop.f32.mrf.mxu0
    %v4373 = vadd.f32 %v1096, %v4372
    %v4374 = vpop.f32.mrf.mxu0
    %v4375 = vadd.f32 %v1096, %v4374
    %4376 = vmatmul.bf16.gmra.mxu0 %v3176
    %v4377 = vpop.f32.mrf.mxu0
    %v4378 = vadd.f32 %v1096, %v4377
    %v4379 = vpop.f32.mrf.mxu0
    %v4380 = vadd.f32 %v1096, %v4379
    %4381 = vmatmul.bf16.gmra.mxu0 %v3177
    %v4382 = vpop.f32.mrf.mxu0
    %v4383 = vadd.f32 %v1096, %v4382
    %v4384 = vpop.f32.mrf.mxu0
    %v4385 = vadd.f32 %v1096, %v4384
    %4386 = vmatmul.bf16.gmra.mxu0 %v3178
    %v4387 = vpop.f32.mrf.mxu0
    %v4388 = vadd.f32 %v1096, %v4387
    %v4389 = vpop.f32.mrf.mxu0
    %v4390 = vadd.f32 %v1096, %v4389
    %4391 = vmatmul.bf16.gmra.mxu0 %v3179
    %v4392 = vpop.f32.mrf.mxu0
    %v4393 = vadd.f32 %v1096, %v4392
    %v4394 = vpop.f32.mrf.mxu0
    %v4395 = vadd.f32 %v1096, %v4394
    %4396 = vmatmul.bf16.gmra.mxu0 %v3180
    %v4397 = vpop.f32.mrf.mxu0
    %v4398 = vadd.f32 %v1096, %v4397
    %v4399 = vpop.f32.mrf.mxu0
    %v4400 = vadd.f32 %v1096, %v4399
    %4401 = vmatmul.bf16.gmra.mxu0 %v3181
    %v4402 = vpop.f32.mrf.mxu0
    %v4403 = vadd.f32 %v1096, %v4402
    %v4404 = vpop.f32.mrf.mxu0
    %v4405 = vadd.f32 %v1096, %v4404
    %4406 = vmatmul.bf16.gmra.mxu0 %v3182
    %v4407 = vpop.f32.mrf.mxu0
    %v4408 = vadd.f32 %v1096, %v4407
    %v4409 = vpop.f32.mrf.mxu0
    %v4410 = vadd.f32 %v1096, %v4409
    %4411 = vmatmul.bf16.gmra.mxu0 %v3183
    %v4412 = vpop.f32.mrf.mxu0
    %v4413 = vadd.f32 %v1096, %v4412
    %v4414 = vpop.f32.mrf.mxu0
    %v4415 = vadd.f32 %v1096, %v4414
    %4416 = vmatmul.bf16.gmra.mxu0 %v3184
    %v4417 = vpop.f32.mrf.mxu0
    %v4418 = vadd.f32 %v1096, %v4417
    %v4419 = vpop.f32.mrf.mxu0
    %v4420 = vadd.f32 %v1096, %v4419
    %4421 = vmatmul.bf16.gmra.mxu0 %v3185
    %v4422 = vpop.f32.mrf.mxu0
    %v4423 = vadd.f32 %v1096, %v4422
    %v4424 = vpop.f32.mrf.mxu0
    %v4425 = vadd.f32 %v1096, %v4424
    %4426 = vmatmul.bf16.gmra.mxu0 %v3186
    %v4427 = vpop.f32.mrf.mxu0
    %v4428 = vadd.f32 %v1096, %v4427
    %v4429 = vpop.f32.mrf.mxu0
    %v4430 = vadd.f32 %v1096, %v4429
    %4431 = vmatmul.bf16.gmra.mxu0 %v3187
    %v4432 = vpop.f32.mrf.mxu0
    %v4433 = vadd.f32 %v1096, %v4432
    %v4434 = vpop.f32.mrf.mxu0
    %v4435 = vadd.f32 %v1096, %v4434
    %4436 = vmatmul.bf16.gmra.mxu0 %v3188
    %v4437 = vpop.f32.mrf.mxu0
    %v4438 = vadd.f32 %v1096, %v4437
    %v4439 = vpop.f32.mrf.mxu0
    %v4440 = vadd.f32 %v1096, %v4439
    %4441 = vmatmul.bf16.gmra.mxu0 %v3189
    %v4442 = vpop.f32.mrf.mxu0
    %v4443 = vadd.f32 %v1096, %v4442
    %v4444 = vpop.f32.mrf.mxu0
    %v4445 = vadd.f32 %v1096, %v4444
    %4446 = vmatmul.bf16.gmra.mxu0 %v3190
    %v4447 = vpop.f32.mrf.mxu0
    %v4448 = vadd.f32 %v1096, %v4447
    %v4449 = vpop.f32.mrf.mxu0
    %v4450 = vadd.f32 %v1096, %v4449
    %4451 = vmatmul.bf16.gmra.mxu0 %v3191
    %v4452 = vpop.f32.mrf.mxu0
    %v4453 = vadd.f32 %v1096, %v4452
    %v4454 = vpop.f32.mrf.mxu0
    %v4455 = vadd.f32 %v1096, %v4454
    %4456 = vmatmul.bf16.gmra.mxu0 %v3192
    %v4457 = vpop.f32.mrf.mxu0
    %v4458 = vadd.f32 %v1096, %v4457
    %v4459 = vpop.f32.mrf.mxu0
    %v4460 = vadd.f32 %v1096, %v4459
    %4461 = vmatmul.bf16.gmra.mxu0 %v3193
    %v4462 = vpop.f32.mrf.mxu0
    %v4463 = vadd.f32 %v1096, %v4462
    %v4464 = vpop.f32.mrf.mxu0
    %v4465 = vadd.f32 %v1096, %v4464
    %4466 = vmatmul.bf16.gmra.mxu0 %v3194
    %v4467 = vpop.f32.mrf.mxu0
    %v4468 = vadd.f32 %v1096, %v4467
    %v4469 = vpop.f32.mrf.mxu0
    %v4470 = vadd.f32 %v1096, %v4469
    %4471 = vmatmul.bf16.gmra.mxu0 %v3195
    %v4472 = vpop.f32.mrf.mxu0
    %v4473 = vadd.f32 %v1096, %v4472
    %v4474 = vpop.f32.mrf.mxu0
    %v4475 = vadd.f32 %v1096, %v4474
    %4476 = vmatmul.bf16.gmra.mxu0 %v3196
    %v4477 = vpop.f32.mrf.mxu0
    %v4478 = vadd.f32 %v1096, %v4477
    %v4479 = vpop.f32.mrf.mxu0
    %v4480 = vadd.f32 %v1096, %v4479
    %4481 = vmatmul.bf16.gmra.mxu0 %v3197
    %v4482 = vpop.f32.mrf.mxu0
    %v4483 = vadd.f32 %v1096, %v4482
    %v4484 = vpop.f32.mrf.mxu0
    %v4485 = vadd.f32 %v1096, %v4484
    %4486 = vmatmul.bf16.gmra.mxu0 %v3198
    %v4487 = vpop.f32.mrf.mxu0
    %v4488 = vadd.f32 %v1096, %v4487
    %v4489 = vpop.f32.mrf.mxu0
    %v4490 = vadd.f32 %v1096, %v4489
    %4491 = vmatmul.bf16.gmra.mxu0 %v3199
    %v4492 = vpop.f32.mrf.mxu0
    %v4493 = vadd.f32 %v1096, %v4492
    %v4494 = vpop.f32.mrf.mxu0
    %v4495 = vadd.f32 %v1096, %v4494
    %4496 = vmatmul.bf16.gmra.mxu0 %v3200
    %v4497 = vpop.f32.mrf.mxu0
    %v4498 = vadd.f32 %v1096, %v4497
    %v4499 = vpop.f32.mrf.mxu0
    %v4500 = vadd.f32 %v1096, %v4499
    %4501 = vmatmul.bf16.gmra.mxu0 %v3201
    %v4502 = vpop.f32.mrf.mxu0
    %v4503 = vadd.f32 %v1096, %v4502
    %v4504 = vpop.f32.mrf.mxu0
    %v4505 = vadd.f32 %v1096, %v4504
    %4506 = vmatmul.bf16.gmra.mxu0 %v3202
    %v4507 = vpop.f32.mrf.mxu0
    %v4508 = vadd.f32 %v1096, %v4507
    %v4509 = vpop.f32.mrf.mxu0
    %v4510 = vadd.f32 %v1096, %v4509
    %4511 = vmatmul.bf16.gmra.mxu0 %v3203
    %v4512 = vpop.f32.mrf.mxu0
    %v4513 = vadd.f32 %v1096, %v4512
    %v4514 = vpop.f32.mrf.mxu0
    %v4515 = vadd.f32 %v1096, %v4514
    %4516 = vmatmul.bf16.gmra.mxu0 %v3204
    %v4517 = vpop.f32.mrf.mxu0
    %v4518 = vadd.f32 %v1096, %v4517
    %v4519 = vpop.f32.mrf.mxu0
    %v4520 = vadd.f32 %v1096, %v4519
    %4521 = vmatmul.bf16.gmra.mxu0 %v3205
    %v4522 = vpop.f32.mrf.mxu0
    %v4523 = vadd.f32 %v1096, %v4522
    %v4524 = vpop.f32.mrf.mxu0
    %v4525 = vadd.f32 %v1096, %v4524
    %4526 = vmatmul.bf16.gmra.mxu0 %v3206
    %v4527 = vpop.f32.mrf.mxu0
    %v4528 = vadd.f32 %v1096, %v4527
    %v4529 = vpop.f32.mrf.mxu0
    %v4530 = vadd.f32 %v1096, %v4529
    %4531 = vmatmul.bf16.gmra.mxu0 %v3207
    %v4532 = vpop.f32.mrf.mxu0
    %v4533 = vadd.f32 %v1096, %v4532
    %v4534 = vpop.f32.mrf.mxu0
    %v4535 = vadd.f32 %v1096, %v4534
    %4536 = vmatmul.bf16.gmra.mxu0 %v3208
    %v4537 = vpop.f32.mrf.mxu0
    %v4538 = vadd.f32 %v1096, %v4537
    %v4539 = vpop.f32.mrf.mxu0
    %v4540 = vadd.f32 %v1096, %v4539
    %4541 = vmatmul.bf16.gmra.mxu0 %v3209
    %v4542 = vpop.f32.mrf.mxu0
    %v4543 = vadd.f32 %v1096, %v4542
    %v4544 = vpop.f32.mrf.mxu0
    %v4545 = vadd.f32 %v1096, %v4544
    %4546 = vmatmul.bf16.gmra.mxu0 %v3210
    %v4547 = vpop.f32.mrf.mxu0
    %v4548 = vadd.f32 %v1096, %v4547
    %v4549 = vpop.f32.mrf.mxu0
    %v4550 = vadd.f32 %v1096, %v4549
    %4551 = vmatmul.bf16.gmra.mxu0 %v3211
    %v4552 = vpop.f32.mrf.mxu0
    %v4553 = vadd.f32 %v1096, %v4552
    %v4554 = vpop.f32.mrf.mxu0
    %v4555 = vadd.f32 %v1096, %v4554
    %4556 = vmatmul.bf16.gmra.mxu0 %v3212
    %v4557 = vpop.f32.mrf.mxu0
    %v4558 = vadd.f32 %v1096, %v4557
    %v4559 = vpop.f32.mrf.mxu0
    %v4560 = vadd.f32 %v1096, %v4559
    %4561 = vmatmul.bf16.gmra.mxu0 %v3213
    %v4562 = vpop.f32.mrf.mxu0
    %v4563 = vadd.f32 %v1096, %v4562
    %v4564 = vpop.f32.mrf.mxu0
    %v4565 = vadd.f32 %v1096, %v4564
    %4566 = vmatmul.bf16.gmra.mxu0 %v3214
    %v4567 = vpop.f32.mrf.mxu0
    %v4568 = vadd.f32 %v1096, %v4567
    %v4569 = vpop.f32.mrf.mxu0
    %v4570 = vadd.f32 %v1096, %v4569
    %4571 = vmatmul.bf16.gmra.mxu0 %v3215
    %v4572 = vpop.f32.mrf.mxu0
    %v4573 = vadd.f32 %v1096, %v4572
    %v4574 = vpop.f32.mrf.mxu0
    %v4575 = vadd.f32 %v1096, %v4574
    %4576 = vmatmul.bf16.gmra.mxu0 %v3216
    %v4577 = vpop.f32.mrf.mxu0
    %v4578 = vadd.f32 %v1096, %v4577
    %v4579 = vpop.f32.mrf.mxu0
    %v4580 = vadd.f32 %v1096, %v4579
    %4581 = vmatmul.bf16.gmra.mxu0 %v3217
    %v4582 = vpop.f32.mrf.mxu0
    %v4583 = vadd.f32 %v1096, %v4582
    %v4584 = vpop.f32.mrf.mxu0
    %v4585 = vadd.f32 %v1096, %v4584
    %4586 = vmatmul.bf16.gmra.mxu0 %v3218
    %v4587 = vpop.f32.mrf.mxu0
    %v4588 = vadd.f32 %v1096, %v4587
    %v4589 = vpop.f32.mrf.mxu0
    %v4590 = vadd.f32 %v1096, %v4589
    %4591 = vmatmul.bf16.gmra.mxu0 %v3219
    %v4592 = vpop.f32.mrf.mxu0
    %v4593 = vadd.f32 %v1096, %v4592
    %v4594 = vpop.f32.mrf.mxu0
    %v4595 = vadd.f32 %v1096, %v4594
    %4596 = vmatmul.bf16.gmra.mxu0 %v3220
    %v4597 = vpop.f32.mrf.mxu0
    %v4598 = vadd.f32 %v1096, %v4597
    %v4599 = vpop.f32.mrf.mxu0
    %v4600 = vadd.f32 %v1096, %v4599
    %4601 = vmatmul.bf16.gmra.mxu0 %v3221
    %v4602 = vpop.f32.mrf.mxu0
    %v4603 = vadd.f32 %v1096, %v4602
    %v4604 = vpop.f32.mrf.mxu0
    %v4605 = vadd.f32 %v1096, %v4604
    %4606 = vmatmul.bf16.gmra.mxu0 %v3222
    %v4607 = vpop.f32.mrf.mxu0
    %v4608 = vadd.f32 %v1096, %v4607
    %v4609 = vpop.f32.mrf.mxu0
    %v4610 = vadd.f32 %v1096, %v4609
    %4611 = vmatmul.bf16.gmra.mxu0 %v3223
    %v4612 = vpop.f32.mrf.mxu0
    %v4613 = vadd.f32 %v1096, %v4612
    %v4614 = vpop.f32.mrf.mxu0
    %v4615 = vadd.f32 %v1096, %v4614
    %4616 = vmatmul.bf16.gmra.mxu0 %v3224
    %v4617 = vpop.f32.mrf.mxu0
    %v4618 = vadd.f32 %v1096, %v4617
    %v4619 = vpop.f32.mrf.mxu0
    %v4620 = vadd.f32 %v1096, %v4619
    %4621 = vmatmul.bf16.gmra.mxu0 %v3225
    %v4622 = vpop.f32.mrf.mxu0
    %v4623 = vadd.f32 %v1096, %v4622
    %v4624 = vpop.f32.mrf.mxu0
    %v4625 = vadd.f32 %v1096, %v4624
    %4626 = vmatmul.bf16.gmra.mxu0 %v3226
    %v4627 = vpop.f32.mrf.mxu0
    %v4628 = vadd.f32 %v1096, %v4627
    %v4629 = vpop.f32.mrf.mxu0
    %v4630 = vadd.f32 %v1096, %v4629
    %4631 = vmatmul.bf16.gmra.mxu0 %v3227
    %v4632 = vpop.f32.mrf.mxu0
    %v4633 = vadd.f32 %v1096, %v4632
    %v4634 = vpop.f32.mrf.mxu0
    %v4635 = vadd.f32 %v1096, %v4634
    %4636 = vmatmul.bf16.gmra.mxu0 %v3228
    %v4637 = vpop.f32.mrf.mxu0
    %v4638 = vadd.f32 %v1096, %v4637
    %v4639 = vpop.f32.mrf.mxu0
    %v4640 = vadd.f32 %v1096, %v4639
    %4641 = vmatmul.bf16.gmra.mxu0 %v3229
    %v4642 = vpop.f32.mrf.mxu0
    %v4643 = vadd.f32 %v1096, %v4642
    %v4644 = vpop.f32.mrf.mxu0
    %v4645 = vadd.f32 %v1096, %v4644
    %4646 = vmatmul.bf16.gmra.mxu0 %v3230
    %v4647 = vpop.f32.mrf.mxu0
    %v4648 = vadd.f32 %v1096, %v4647
    %v4649 = vpop.f32.mrf.mxu0
    %v4650 = vadd.f32 %v1096, %v4649
    %4651 = vmatmul.bf16.gmra.mxu0 %v3231
    %v4652 = vpop.f32.mrf.mxu0
    %v4653 = vadd.f32 %v1096, %v4652
    %v4654 = vpop.f32.mrf.mxu0
    %v4655 = vadd.f32 %v1096, %v4654
    %4656 = vmatmul.bf16.gmra.mxu0 %v3232
    %v4657 = vpop.f32.mrf.mxu0
    %v4658 = vadd.f32 %v1096, %v4657
    %v4659 = vpop.f32.mrf.mxu0
    %v4660 = vadd.f32 %v1096, %v4659
    %4661 = vmatmul.bf16.gmra.mxu0 %v3233
    %v4662 = vpop.f32.mrf.mxu0
    %v4663 = vadd.f32 %v1096, %v4662
    %v4664 = vpop.f32.mrf.mxu0
    %v4665 = vadd.f32 %v1096, %v4664
    %4666 = vmatmul.bf16.gmra.mxu0 %v3234
    %v4667 = vpop.f32.mrf.mxu0
    %v4668 = vadd.f32 %v1096, %v4667
    %v4669 = vpop.f32.mrf.mxu0
    %v4670 = vadd.f32 %v1096, %v4669
    %4671 = vmatmul.bf16.gmra.mxu0 %v3235
    %v4672 = vpop.f32.mrf.mxu0
    %v4673 = vadd.f32 %v1096, %v4672
    %v4674 = vpop.f32.mrf.mxu0
    %v4675 = vadd.f32 %v1096, %v4674
    %4676 = vmatmul.bf16.gmra.mxu0 %v3236
    %v4677 = vpop.f32.mrf.mxu0
    %v4678 = vadd.f32 %v1096, %v4677
    %v4679 = vpop.f32.mrf.mxu0
    %v4680 = vadd.f32 %v1096, %v4679
    %4681 = vmatmul.bf16.gmra.mxu0 %v3237
    %v4682 = vpop.f32.mrf.mxu0
    %v4683 = vadd.f32 %v1096, %v4682
    %v4684 = vpop.f32.mrf.mxu0
    %v4685 = vadd.f32 %v1096, %v4684
    %4686 = vmatmul.bf16.gmra.mxu0 %v3238
    %v4687 = vpop.f32.mrf.mxu0
    %v4688 = vadd.f32 %v1096, %v4687
    %v4689 = vpop.f32.mrf.mxu0
    %v4690 = vadd.f32 %v1096, %v4689
    %4691 = vmatmul.bf16.gmra.mxu0 %v3239
    %v4692 = vpop.f32.mrf.mxu0
    %v4693 = vadd.f32 %v1096, %v4692
    %v4694 = vpop.f32.mrf.mxu0
    %v4695 = vadd.f32 %v1096, %v4694
    %4696 = vmatmul.bf16.gmra.mxu0 %v3240
    %v4697 = vpop.f32.mrf.mxu0
    %v4698 = vadd.f32 %v1096, %v4697
    %v4699 = vpop.f32.mrf.mxu0
    %v4700 = vadd.f32 %v1096, %v4699
    %4701 = vmatmul.bf16.gmra.mxu0 %v3241
    %v4702 = vpop.f32.mrf.mxu0
    %v4703 = vadd.f32 %v1096, %v4702
    %v4704 = vpop.f32.mrf.mxu0
    %v4705 = vadd.f32 %v1096, %v4704
    %4706 = vmatmul.bf16.gmra.mxu0 %v3242
    %v4707 = vpop.f32.mrf.mxu0
    %v4708 = vadd.f32 %v1096, %v4707
    %v4709 = vpop.f32.mrf.mxu0
    %v4710 = vadd.f32 %v1096, %v4709
    %4711 = vmatmul.bf16.gmra.mxu0 %v3243
    %v4712 = vpop.f32.mrf.mxu0
    %v4713 = vadd.f32 %v1096, %v4712
    %v4714 = vpop.f32.mrf.mxu0
    %v4715 = vadd.f32 %v1096, %v4714
    %4716 = vmatmul.bf16.gmra.mxu0 %v3244
    %v4717 = vpop.f32.mrf.mxu0
    %v4718 = vadd.f32 %v1096, %v4717
    %v4719 = vpop.f32.mrf.mxu0
    %v4720 = vadd.f32 %v1096, %v4719
    %4721 = vmatmul.bf16.gmra.mxu0 %v3245
    %v4722 = vpop.f32.mrf.mxu0
    %v4723 = vadd.f32 %v1096, %v4722
    %v4724 = vpop.f32.mrf.mxu0
    %v4725 = vadd.f32 %v1096, %v4724
    %4726 = vmatmul.bf16.gmra.mxu0 %v3246
    %v4727 = vpop.f32.mrf.mxu0
    %v4728 = vadd.f32 %v1096, %v4727
    %v4729 = vpop.f32.mrf.mxu0
    %v4730 = vadd.f32 %v1096, %v4729
    %4731 = vmatmul.bf16.gmra.mxu0 %v3247
    %v4732 = vpop.f32.mrf.mxu0
    %v4733 = vadd.f32 %v1096, %v4732
    %v4734 = vpop.f32.mrf.mxu0
    %v4735 = vadd.f32 %v1096, %v4734
    %4736 = vmatmul.bf16.gmra.mxu0 %v3248
    %v4737 = vpop.f32.mrf.mxu0
    %v4738 = vadd.f32 %v1096, %v4737
    %v4739 = vpop.f32.mrf.mxu0
    %v4740 = vadd.f32 %v1096, %v4739
    %4741 = vmatmul.bf16.gmra.mxu0 %v3249
    %v4742 = vpop.f32.mrf.mxu0
    %v4743 = vadd.f32 %v1096, %v4742
    %v4744 = vpop.f32.mrf.mxu0
    %v4745 = vadd.f32 %v1096, %v4744
    %4746 = vmatmul.bf16.gmra.mxu0 %v3250
    %v4747 = vpop.f32.mrf.mxu0
    %v4748 = vadd.f32 %v1096, %v4747
    %v4749 = vpop.f32.mrf.mxu0
    %v4750 = vadd.f32 %v1096, %v4749
    %4751 = vmatmul.bf16.gmra.mxu0 %v3251
    %v4752 = vpop.f32.mrf.mxu0
    %v4753 = vadd.f32 %v1096, %v4752
    %v4754 = vpop.f32.mrf.mxu0
    %v4755 = vadd.f32 %v1096, %v4754
    %4756 = vmatmul.bf16.gmra.mxu0 %v3252
    %v4757 = vpop.f32.mrf.mxu0
    %v4758 = vadd.f32 %v1096, %v4757
    %v4759 = vpop.f32.mrf.mxu0
    %v4760 = vadd.f32 %v1096, %v4759
    %4761 = vmatmul.bf16.gmra.mxu0 %v3253
    %v4762 = vpop.f32.mrf.mxu0
    %v4763 = vadd.f32 %v1096, %v4762
    %v4764 = vpop.f32.mrf.mxu0
    %v4765 = vadd.f32 %v1096, %v4764
    %4766 = vmatmul.bf16.gmra.mxu0 %v3254
    %v4767 = vpop.f32.mrf.mxu0
    %v4768 = vadd.f32 %v1096, %v4767
    %v4769 = vpop.f32.mrf.mxu0
    %v4770 = vadd.f32 %v1096, %v4769
    %4771 = vmatmul.bf16.gmra.mxu0 %v3255
    %v4772 = vpop.f32.mrf.mxu0
    %v4773 = vadd.f32 %v1096, %v4772
    %v4774 = vpop.f32.mrf.mxu0
    %v4775 = vadd.f32 %v1096, %v4774
    %4776 = vmatmul.bf16.gmra.mxu0 %v3256
    %v4777 = vpop.f32.mrf.mxu0
    %v4778 = vadd.f32 %v1096, %v4777
    %v4779 = vpop.f32.mrf.mxu0
    %v4780 = vadd.f32 %v1096, %v4779
    %4781 = vmatmul.bf16.gmra.mxu0 %v3257
    %v4782 = vpop.f32.mrf.mxu0
    %v4783 = vadd.f32 %v1096, %v4782
    %v4784 = vpop.f32.mrf.mxu0
    %v4785 = vadd.f32 %v1096, %v4784
    %4786 = vmatmul.bf16.gmra.mxu0 %v3258
    %v4787 = vpop.f32.mrf.mxu0
    %v4788 = vadd.f32 %v1096, %v4787
    %v4789 = vpop.f32.mrf.mxu0
    %v4790 = vadd.f32 %v1096, %v4789
    %4791 = vmatmul.bf16.gmra.mxu0 %v3259
    %v4792 = vpop.f32.mrf.mxu0
    %v4793 = vadd.f32 %v1096, %v4792
    %v4794 = vpop.f32.mrf.mxu0
    %v4795 = vadd.f32 %v1096, %v4794
    %4796 = vmatmul.bf16.gmra.mxu0 %v3260
    %v4797 = vpop.f32.mrf.mxu0
    %v4798 = vadd.f32 %v1096, %v4797
    %v4799 = vpop.f32.mrf.mxu0
    %v4800 = vadd.f32 %v1096, %v4799
    %4801 = vmatmul.bf16.gmra.mxu0 %v3261
    %v4802 = vpop.f32.mrf.mxu0
    %v4803 = vadd.f32 %v1096, %v4802
    %v4804 = vpop.f32.mrf.mxu0
    %v4805 = vadd.f32 %v1096, %v4804
    %4806 = vmatmul.bf16.gmra.mxu0 %v3262
    %v4807 = vpop.f32.mrf.mxu0
    %v4808 = vadd.f32 %v1096, %v4807
    %v4809 = vpop.f32.mrf.mxu0
    %v4810 = vadd.f32 %v1096, %v4809
    %4811 = vmatmul.bf16.gmra.mxu0 %v3263
    %v4812 = vpop.f32.mrf.mxu0
    %v4813 = vadd.f32 %v1096, %v4812
    %v4814 = vpop.f32.mrf.mxu0
    %v4815 = vadd.f32 %v1096, %v4814
    %4816 = vmatmul.bf16.gmra.mxu0 %v3264
    %v4817 = vpop.f32.mrf.mxu0
    %v4818 = vadd.f32 %v1096, %v4817
    %v4819 = vpop.f32.mrf.mxu0
    %v4820 = vadd.f32 %v1096, %v4819
    %4821 = vmatmul.bf16.gmra.mxu0 %v3265
    %v4822 = vpop.f32.mrf.mxu0
    %v4823 = vadd.f32 %v1096, %v4822
    %v4824 = vpop.f32.mrf.mxu0
    %v4825 = vadd.f32 %v1096, %v4824
    %4826 = vmatmul.bf16.gmra.mxu0 %v3266
    %v4827 = vpop.f32.mrf.mxu0
    %v4828 = vadd.f32 %v1096, %v4827
    %v4829 = vpop.f32.mrf.mxu0
    %v4830 = vadd.f32 %v1096, %v4829
    %4831 = vmatmul.bf16.gmra.mxu0 %v3267
    %v4832 = vpop.f32.mrf.mxu0
    %v4833 = vadd.f32 %v1096, %v4832
    %v4834 = vpop.f32.mrf.mxu0
    %v4835 = vadd.f32 %v1096, %v4834
    %4836 = vmatmul.bf16.gmra.mxu0 %v3268
    %v4837 = vpop.f32.mrf.mxu0
    %v4838 = vadd.f32 %v1096, %v4837
    %v4839 = vpop.f32.mrf.mxu0
    %v4840 = vadd.f32 %v1096, %v4839
    %4841 = vmatmul.bf16.gmra.mxu0 %v3269
    %v4842 = vpop.f32.mrf.mxu0
    %v4843 = vadd.f32 %v1096, %v4842
    %v4844 = vpop.f32.mrf.mxu0
    %v4845 = vadd.f32 %v1096, %v4844
    %4846 = vmatmul.bf16.gmra.mxu0 %v3270
    %v4847 = vpop.f32.mrf.mxu0
    %v4848 = vadd.f32 %v1096, %v4847
    %v4849 = vpop.f32.mrf.mxu0
    %v4850 = vadd.f32 %v1096, %v4849
    %4851 = vmatmul.bf16.gmra.mxu0 %v3271
    %v4852 = vpop.f32.mrf.mxu0
    %v4853 = vadd.f32 %v1096, %v4852
    %v4854 = vpop.f32.mrf.mxu0
    %v4855 = vadd.f32 %v1096, %v4854
    %4856 = vmatmul.bf16.gmra.mxu0 %v3272
    %v4857 = vpop.f32.mrf.mxu0
    %v4858 = vadd.f32 %v1096, %v4857
    %v4859 = vpop.f32.mrf.mxu0
    %v4860 = vadd.f32 %v1096, %v4859
    %4861 = vmatmul.bf16.gmra.mxu0 %v3273
    %v4862 = vpop.f32.mrf.mxu0
    %v4863 = vadd.f32 %v1096, %v4862
    %v4864 = vpop.f32.mrf.mxu0
    %v4865 = vadd.f32 %v1096, %v4864
    %4866 = vmatmul.bf16.gmra.mxu0 %v3274
    %v4867 = vpop.f32.mrf.mxu0
    %v4868 = vadd.f32 %v1096, %v4867
    %v4869 = vpop.f32.mrf.mxu0
    %v4870 = vadd.f32 %v1096, %v4869
    %4871 = vmatmul.bf16.gmra.mxu0 %v3275
    %v4872 = vpop.f32.mrf.mxu0
    %v4873 = vadd.f32 %v1096, %v4872
    %v4874 = vpop.f32.mrf.mxu0
    %v4875 = vadd.f32 %v1096, %v4874
    %4876 = vmatmul.bf16.gmra.mxu0 %v3276
    %v4877 = vpop.f32.mrf.mxu0
    %v4878 = vadd.f32 %v1096, %v4877
    %v4879 = vpop.f32.mrf.mxu0
    %v4880 = vadd.f32 %v1096, %v4879
    %4881 = vmatmul.bf16.gmra.mxu0 %v3277
    %v4882 = vpop.f32.mrf.mxu0
    %v4883 = vadd.f32 %v1096, %v4882
    %v4884 = vpop.f32.mrf.mxu0
    %v4885 = vadd.f32 %v1096, %v4884
    %4886 = vmatmul.bf16.gmra.mxu0 %v3278
    %v4887 = vpop.f32.mrf.mxu0
    %v4888 = vadd.f32 %v1096, %v4887
    %v4889 = vpop.f32.mrf.mxu0
    %v4890 = vadd.f32 %v1096, %v4889
    %4891 = vmatmul.bf16.gmra.mxu0 %v3279
    %v4892 = vpop.f32.mrf.mxu0
    %v4893 = vadd.f32 %v1096, %v4892
    %v4894 = vpop.f32.mrf.mxu0
    %v4895 = vadd.f32 %v1096, %v4894
    %4896 = vmatmul.bf16.gmra.mxu0 %v3280
    %v4897 = vpop.f32.mrf.mxu0
    %v4898 = vadd.f32 %v1096, %v4897
    %v4899 = vpop.f32.mrf.mxu0
    %v4900 = vadd.f32 %v1096, %v4899
    %4901 = vmatmul.bf16.gmra.mxu0 %v3281
    %v4902 = vpop.f32.mrf.mxu0
    %v4903 = vadd.f32 %v1096, %v4902
    %v4904 = vpop.f32.mrf.mxu0
    %v4905 = vadd.f32 %v1096, %v4904
    %4906 = vmatmul.bf16.gmra.mxu0 %v3282
    %v4907 = vpop.f32.mrf.mxu0
    %v4908 = vadd.f32 %v1096, %v4907
    %v4909 = vpop.f32.mrf.mxu0
    %v4910 = vadd.f32 %v1096, %v4909
    %4911 = vmatmul.bf16.gmra.mxu0 %v3283
    %v4912 = vpop.f32.mrf.mxu0
    %v4913 = vadd.f32 %v1096, %v4912
    %v4914 = vpop.f32.mrf.mxu0
    %v4915 = vadd.f32 %v1096, %v4914
    %4916 = vmatmul.bf16.gmra.mxu0 %v3284
    %v4917 = vpop.f32.mrf.mxu0
    %v4918 = vadd.f32 %v1096, %v4917
    %v4919 = vpop.f32.mrf.mxu0
    %v4920 = vadd.f32 %v1096, %v4919
    %4921 = vmatmul.bf16.gmra.mxu0 %v3285
    %v4922 = vpop.f32.mrf.mxu0
    %v4923 = vadd.f32 %v1096, %v4922
    %v4924 = vpop.f32.mrf.mxu0
    %v4925 = vadd.f32 %v1096, %v4924
    %4926 = vmatmul.bf16.gmra.mxu0 %v3286
    %v4927 = vpop.f32.mrf.mxu0
    %v4928 = vadd.f32 %v1096, %v4927
    %v4929 = vpop.f32.mrf.mxu0
    %v4930 = vadd.f32 %v1096, %v4929
    %4931 = vmatmul.bf16.gmra.mxu0 %v3287
    %v4932 = vpop.f32.mrf.mxu0
    %v4933 = vadd.f32 %v1096, %v4932
    %v4934 = vpop.f32.mrf.mxu0
    %v4935 = vadd.f32 %v1096, %v4934
    %4936 = vmatmul.bf16.gmra.mxu0 %v3288
    %v4937 = vpop.f32.mrf.mxu0
    %v4938 = vadd.f32 %v1096, %v4937
    %v4939 = vpop.f32.mrf.mxu0
    %v4940 = vadd.f32 %v1096, %v4939
    %4941 = vmatmul.bf16.gmra.mxu0 %v3289
    %v4942 = vpop.f32.mrf.mxu0
    %v4943 = vadd.f32 %v1096, %v4942
    %v4944 = vpop.f32.mrf.mxu0
    %v4945 = vadd.f32 %v1096, %v4944
    %4946 = vmatmul.bf16.gmra.mxu0 %v3290
    %v4947 = vpop.f32.mrf.mxu0
    %v4948 = vadd.f32 %v1096, %v4947
    %v4949 = vpop.f32.mrf.mxu0
    %v4950 = vadd.f32 %v1096, %v4949
    %4951 = vmatmul.bf16.gmra.mxu0 %v3291
    %v4952 = vpop.f32.mrf.mxu0
    %v4953 = vadd.f32 %v1096, %v4952
    %v4954 = vpop.f32.mrf.mxu0
    %v4955 = vadd.f32 %v1096, %v4954
    %4956 = vmatmul.bf16.gmra.mxu0 %v3292
    %v4957 = vpop.f32.mrf.mxu0
    %v4958 = vadd.f32 %v1096, %v4957
    %v4959 = vpop.f32.mrf.mxu0
    %v4960 = vadd.f32 %v1096, %v4959
    %4961 = vmatmul.bf16.gmra.mxu0 %v3293
    %v4962 = vpop.f32.mrf.mxu0
    %v4963 = vadd.f32 %v1096, %v4962
    %v4964 = vpop.f32.mrf.mxu0
    %v4965 = vadd.f32 %v1096, %v4964
    %4966 = vmatmul.bf16.gmra.mxu0 %v3294
    %v4967 = vpop.f32.mrf.mxu0
    %v4968 = vadd.f32 %v1096, %v4967
    %v4969 = vpop.f32.mrf.mxu0
    %v4970 = vadd.f32 %v1096, %v4969
    %4971 = vmatmul.bf16.gmra.mxu0 %v3295
    %v4972 = vpop.f32.mrf.mxu0
    %v4973 = vadd.f32 %v1096, %v4972
    %v4974 = vpop.f32.mrf.mxu0
    %v4975 = vadd.f32 %v1096, %v4974
    %4976 = vmatmul.bf16.gmra.mxu0 %v3296
    %v4977 = vpop.f32.mrf.mxu0
    %v4978 = vadd.f32 %v1096, %v4977
    %v4979 = vpop.f32.mrf.mxu0
    %v4980 = vadd.f32 %v1096, %v4979
    %4981 = vmatmul.bf16.gmra.mxu0 %v3297
    %v4982 = vpop.f32.mrf.mxu0
    %v4983 = vadd.f32 %v1096, %v4982
    %v4984 = vpop.f32.mrf.mxu0
    %v4985 = vadd.f32 %v1096, %v4984
    %4986 = vmatmul.bf16.gmra.mxu0 %v3298
    %v4987 = vpop.f32.mrf.mxu0
    %v4988 = vadd.f32 %v1096, %v4987
    %v4989 = vpop.f32.mrf.mxu0
    %v4990 = vadd.f32 %v1096, %v4989
    %4991 = vmatmul.bf16.gmra.mxu0 %v3299
    %v4992 = vpop.f32.mrf.mxu0
    %v4993 = vadd.f32 %v1096, %v4992
    %v4994 = vpop.f32.mrf.mxu0
    %v4995 = vadd.f32 %v1096, %v4994
    %4996 = vmatmul.bf16.gmra.mxu0 %v3300
    %v4997 = vpop.f32.mrf.mxu0
    %v4998 = vadd.f32 %v1096, %v4997
    %v4999 = vpop.f32.mrf.mxu0
    %v5000 = vadd.f32 %v1096, %v4999
    %5001 = vmatmul.bf16.gmra.mxu0 %v3301
    %v5002 = vpop.f32.mrf.mxu0
    %v5003 = vadd.f32 %v1096, %v5002
    %v5004 = vpop.f32.mrf.mxu0
    %v5005 = vadd.f32 %v1096, %v5004
    %5006 = vmatmul.bf16.gmra.mxu0 %v3302
    %v5007 = vpop.f32.mrf.mxu0
    %v5008 = vadd.f32 %v1096, %v5007
    %v5009 = vpop.f32.mrf.mxu0
    %v5010 = vadd.f32 %v1096, %v5009
    %5011 = vmatmul.bf16.gmra.mxu0 %v3303
    %v5012 = vpop.f32.mrf.mxu0
    %v5013 = vadd.f32 %v1096, %v5012
    %v5014 = vpop.f32.mrf.mxu0
    %v5015 = vadd.f32 %v1096, %v5014
    %5016 = vmatmul.bf16.gmra.mxu0 %v3304
    %v5017 = vpop.f32.mrf.mxu0
    %v5018 = vadd.f32 %v1096, %v5017
    %v5019 = vpop.f32.mrf.mxu0
    %v5020 = vadd.f32 %v1096, %v5019
    %5021 = vmatmul.bf16.gmra.mxu0 %v3305
    %v5022 = vpop.f32.mrf.mxu0
    %v5023 = vadd.f32 %v1096, %v5022
    %v5024 = vpop.f32.mrf.mxu0
    %v5025 = vadd.f32 %v1096, %v5024
    %5026 = vmatmul.bf16.gmra.mxu0 %v3306
    %v5027 = vpop.f32.mrf.mxu0
    %v5028 = vadd.f32 %v1096, %v5027
    %v5029 = vpop.f32.mrf.mxu0
    %v5030 = vadd.f32 %v1096, %v5029
    %5031 = vmatmul.bf16.gmra.mxu0 %v3307
    %v5032 = vpop.f32.mrf.mxu0
    %v5033 = vadd.f32 %v1096, %v5032
    %v5034 = vpop.f32.mrf.mxu0
    %v5035 = vadd.f32 %v1096, %v5034
    %5036 = vmatmul.bf16.gmra.mxu0 %v3308
    %v5037 = vpop.f32.mrf.mxu0
    %v5038 = vadd.f32 %v1096, %v5037
    %v5039 = vpop.f32.mrf.mxu0
    %v5040 = vadd.f32 %v1096, %v5039
    %5041 = vmatmul.bf16.gmra.mxu0 %v3309
    %v5042 = vpop.f32.mrf.mxu0
    %v5043 = vadd.f32 %v1096, %v5042
    %v5044 = vpop.f32.mrf.mxu0
    %v5045 = vadd.f32 %v1096, %v5044
    %5046 = vmatmul.bf16.gmra.mxu0 %v3310
    %v5047 = vpop.f32.mrf.mxu0
    %v5048 = vadd.f32 %v1096, %v5047
    %v5049 = vpop.f32.mrf.mxu0
    %v5050 = vadd.f32 %v1096, %v5049
    %5051 = vmatmul.bf16.gmra.mxu0 %v3311
    %v5052 = vpop.f32.mrf.mxu0
    %v5053 = vadd.f32 %v1096, %v5052
    %v5054 = vpop.f32.mrf.mxu0
    %v5055 = vadd.f32 %v1096, %v5054
    %5056 = vmatmul.bf16.gmra.mxu0 %v3312
    %v5057 = vpop.f32.mrf.mxu0
    %v5058 = vadd.f32 %v1096, %v5057
    %v5059 = vpop.f32.mrf.mxu0
    %v5060 = vadd.f32 %v1096, %v5059
    %5061 = vmatmul.bf16.gmra.mxu0 %v3313
    %v5062 = vpop.f32.mrf.mxu0
    %v5063 = vadd.f32 %v1096, %v5062
    %v5064 = vpop.f32.mrf.mxu0
    %v5065 = vadd.f32 %v1096, %v5064
    %5066 = vmatmul.bf16.gmra.mxu0 %v3314
    %v5067 = vpop.f32.mrf.mxu0
    %v5068 = vadd.f32 %v1096, %v5067
    %v5069 = vpop.f32.mrf.mxu0
    %v5070 = vadd.f32 %v1096, %v5069
    %5071 = vmatmul.bf16.gmra.mxu0 %v3315
    %v5072 = vpop.f32.mrf.mxu0
    %v5073 = vadd.f32 %v1096, %v5072
    %v5074 = vpop.f32.mrf.mxu0
    %v5075 = vadd.f32 %v1096, %v5074
    %5076 = vmatmul.bf16.gmra.mxu0 %v3316
    %v5077 = vpop.f32.mrf.mxu0
    %v5078 = vadd.f32 %v1096, %v5077
    %v5079 = vpop.f32.mrf.mxu0
    %v5080 = vadd.f32 %v1096, %v5079
    %5081 = vmatmul.bf16.gmra.mxu0 %v3317
    %v5082 = vpop.f32.mrf.mxu0
    %v5083 = vadd.f32 %v1096, %v5082
    %v5084 = vpop.f32.mrf.mxu0
    %v5085 = vadd.f32 %v1096, %v5084
    %5086 = vmatmul.bf16.gmra.mxu0 %v3318
    %v5087 = vpop.f32.mrf.mxu0
    %v5088 = vadd.f32 %v1096, %v5087
    %v5089 = vpop.f32.mrf.mxu0
    %v5090 = vadd.f32 %v1096, %v5089
    %5091 = vmatmul.bf16.gmra.mxu0 %v3319
    %v5092 = vpop.f32.mrf.mxu0
    %v5093 = vadd.f32 %v1096, %v5092
    %v5094 = vpop.f32.mrf.mxu0
    %v5095 = vadd.f32 %v1096, %v5094
    %5096 = vmatmul.bf16.gmra.mxu0 %v3320
    %v5097 = vpop.f32.mrf.mxu0
    %v5098 = vadd.f32 %v1096, %v5097
    %v5099 = vpop.f32.mrf.mxu0
    %v5100 = vadd.f32 %v1096, %v5099
    %5101 = vmatmul.bf16.gmra.mxu0 %v3321
    %v5102 = vpop.f32.mrf.mxu0
    %v5103 = vadd.f32 %v1096, %v5102
    %v5104 = vpop.f32.mrf.mxu0
    %v5105 = vadd.f32 %v1096, %v5104
    %5106 = vmatmul.bf16.gmra.mxu0 %v3322
    %v5107 = vpop.f32.mrf.mxu0
    %v5108 = vadd.f32 %v1096, %v5107
    %v5109 = vpop.f32.mrf.mxu0
    %v5110 = vadd.f32 %v1096, %v5109
    %5111 = vmatmul.bf16.gmra.mxu0 %v3323
    %v5112 = vpop.f32.mrf.mxu0
    %v5113 = vadd.f32 %v1096, %v5112
    %v5114 = vpop.f32.mrf.mxu0
    %v5115 = vadd.f32 %v1096, %v5114
    %5116 = vmatmul.bf16.gmra.mxu0 %v3324
    %v5117 = vpop.f32.mrf.mxu0
    %v5118 = vadd.f32 %v1096, %v5117
    %v5119 = vpop.f32.mrf.mxu0
    %v5120 = vadd.f32 %v1096, %v5119
    %5121 = vmatmul.bf16.gmra.mxu0 %v3325
    %v5122 = vpop.f32.mrf.mxu0
    %v5123 = vadd.f32 %v1096, %v5122
    %v5124 = vpop.f32.mrf.mxu0
    %v5125 = vadd.f32 %v1096, %v5124
    %5126 = vmatmul.bf16.gmra.mxu0 %v3326
    %v5127 = vpop.f32.mrf.mxu0
    %v5128 = vadd.f32 %v1096, %v5127
    %v5129 = vpop.f32.mrf.mxu0
    %v5130 = vadd.f32 %v1096, %v5129
    %5131 = vmatmul.bf16.gmra.mxu0 %v3327
    %v5132 = vpop.f32.mrf.mxu0
    %v5133 = vadd.f32 %v1096, %v5132
    %v5134 = vpop.f32.mrf.mxu0
    %v5135 = vadd.f32 %v1096, %v5134
    %5136 = vmatmul.bf16.gmra.mxu0 %v3328
    %v5137 = vpop.f32.mrf.mxu0
    %v5138 = vadd.f32 %v1096, %v5137
    %v5139 = vpop.f32.mrf.mxu0
    %v5140 = vadd.f32 %v1096, %v5139
    %5141 = vmatmul.bf16.gmra.mxu0 %v3329
    %v5142 = vpop.f32.mrf.mxu0
    %v5143 = vadd.f32 %v1096, %v5142
    %v5144 = vpop.f32.mrf.mxu0
    %v5145 = vadd.f32 %v1096, %v5144
    %5146 = vmatmul.bf16.gmra.mxu0 %v3330
    %v5147 = vpop.f32.mrf.mxu0
    %v5148 = vadd.f32 %v1096, %v5147
    %v5149 = vpop.f32.mrf.mxu0
    %v5150 = vadd.f32 %v1096, %v5149
    %5151 = vmatmul.bf16.gmra.mxu0 %v3331
    %v5152 = vpop.f32.mrf.mxu0
    %v5153 = vadd.f32 %v1096, %v5152
    %v5154 = vpop.f32.mrf.mxu0
    %v5155 = vadd.f32 %v1096, %v5154
    %5156 = vmatmul.bf16.gmra.mxu0 %v3332
    %v5157 = vpop.f32.mrf.mxu0
    %v5158 = vadd.f32 %v1096, %v5157
    %v5159 = vpop.f32.mrf.mxu0
    %v5160 = vadd.f32 %v1096, %v5159
    %5161 = vmatmul.bf16.gmra.mxu0 %v3333
    %v5162 = vpop.f32.mrf.mxu0
    %v5163 = vadd.f32 %v1096, %v5162
    %v5164 = vpop.f32.mrf.mxu0
    %v5165 = vadd.f32 %v1096, %v5164
    %5166 = vmatmul.bf16.gmra.mxu0 %v3334
    %v5167 = vpop.f32.mrf.mxu0
    %v5168 = vadd.f32 %v1096, %v5167
    %v5169 = vpop.f32.mrf.mxu0
    %v5170 = vadd.f32 %v1096, %v5169
    %5171 = vmatmul.bf16.gmra.mxu0 %v3335
    %v5172 = vpop.f32.mrf.mxu0
    %v5173 = vadd.f32 %v1096, %v5172
    %v5174 = vpop.f32.mrf.mxu0
    %v5175 = vadd.f32 %v1096, %v5174
    %5176 = vmatmul.bf16.gmra.mxu0 %v3336
    %v5177 = vpop.f32.mrf.mxu0
    %v5178 = vadd.f32 %v1096, %v5177
    %v5179 = vpop.f32.mrf.mxu0
    %v5180 = vadd.f32 %v1096, %v5179
    %5181 = vmatmul.bf16.gmra.mxu0 %v3337
    %v5182 = vpop.f32.mrf.mxu0
    %v5183 = vadd.f32 %v1096, %v5182
    %v5184 = vpop.f32.mrf.mxu0
    %v5185 = vadd.f32 %v1096, %v5184
    %5186 = vmatmul.bf16.gmra.mxu0 %v3338
    %v5187 = vpop.f32.mrf.mxu0
    %v5188 = vadd.f32 %v1096, %v5187
    %v5189 = vpop.f32.mrf.mxu0
    %v5190 = vadd.f32 %v1096, %v5189
    %5191 = vmatmul.bf16.gmra.mxu0 %v3339
    %v5192 = vpop.f32.mrf.mxu0
    %v5193 = vadd.f32 %v1096, %v5192
    %v5194 = vpop.f32.mrf.mxu0
    %v5195 = vadd.f32 %v1096, %v5194
    %5196 = vmatmul.bf16.gmra.mxu0 %v3340
    %v5197 = vpop.f32.mrf.mxu0
    %v5198 = vadd.f32 %v1096, %v5197
    %v5199 = vpop.f32.mrf.mxu0
    %v5200 = vadd.f32 %v1096, %v5199
    %5201 = vmatmul.bf16.gmra.mxu0 %v3341
    %v5202 = vpop.f32.mrf.mxu0
    %v5203 = vadd.f32 %v1096, %v5202
    %v5204 = vpop.f32.mrf.mxu0
    %v5205 = vadd.f32 %v1096, %v5204
    %5206 = vmatmul.bf16.gmra.mxu0 %v3342
    %v5207 = vpop.f32.mrf.mxu0
    %v5208 = vadd.f32 %v1096, %v5207
    %v5209 = vpop.f32.mrf.mxu0
    %v5210 = vadd.f32 %v1096, %v5209
    %5211 = vmatmul.bf16.gmra.mxu0 %v3343
    %v5212 = vpop.f32.mrf.mxu0
    %v5213 = vadd.f32 %v1096, %v5212
    %v5214 = vpop.f32.mrf.mxu0
    %v5215 = vadd.f32 %v1096, %v5214
    %5216 = vmatmul.bf16.gmra.mxu0 %v3344
    %v5217 = vpop.f32.mrf.mxu0
    %v5218 = vadd.f32 %v1096, %v5217
    %v5219 = vpop.f32.mrf.mxu0
    %v5220 = vadd.f32 %v1096, %v5219
    %5221 = vmatmul.bf16.gmra.mxu0 %v3345
    %v5222 = vpop.f32.mrf.mxu0
    %v5223 = vadd.f32 %v1096, %v5222
    %v5224 = vpop.f32.mrf.mxu0
    %v5225 = vadd.f32 %v1096, %v5224
    %5226 = vmatmul.bf16.gmra.mxu0 %v3346
    %v5227 = vpop.f32.mrf.mxu0
    %v5228 = vadd.f32 %v1096, %v5227
    %v5229 = vpop.f32.mrf.mxu0
    %v5230 = vadd.f32 %v1096, %v5229
    %5231 = vmatmul.bf16.gmra.mxu0 %v3347
    %v5232 = vpop.f32.mrf.mxu0
    %v5233 = vadd.f32 %v1096, %v5232
    %v5234 = vpop.f32.mrf.mxu0
    %v5235 = vadd.f32 %v1096, %v5234
    %5236 = vmatmul.bf16.gmra.mxu0 %v3348
    %v5237 = vpop.f32.mrf.mxu0
    %v5238 = vadd.f32 %v1096, %v5237
    %v5239 = vpop.f32.mrf.mxu0
    %v5240 = vadd.f32 %v1096, %v5239
    %5241 = vmatmul.bf16.gmra.mxu0 %v3349
    %v5242 = vpop.f32.mrf.mxu0
    %v5243 = vadd.f32 %v1096, %v5242
    %v5244 = vpop.f32.mrf.mxu0
    %v5245 = vadd.f32 %v1096, %v5244
    %5246 = vmatmul.bf16.gmra.mxu0 %v3350
    %v5247 = vpop.f32.mrf.mxu0
    %v5248 = vadd.f32 %v1096, %v5247
    %v5249 = vpop.f32.mrf.mxu0
    %v5250 = vadd.f32 %v1096, %v5249
    %5251 = vmatmul.bf16.gmra.mxu0 %v3351
    %v5252 = vpop.f32.mrf.mxu0
    %v5253 = vadd.f32 %v1096, %v5252
    %v5254 = vpop.f32.mrf.mxu0
    %v5255 = vadd.f32 %v1096, %v5254
    %5256 = vmatmul.bf16.gmra.mxu0 %v3352
    %v5257 = vpop.f32.mrf.mxu0
    %v5258 = vadd.f32 %v1096, %v5257
    %v5259 = vpop.f32.mrf.mxu0
    %v5260 = vadd.f32 %v1096, %v5259
    %5261 = vmatmul.bf16.gmra.mxu0 %v3353
    %v5262 = vpop.f32.mrf.mxu0
    %v5263 = vadd.f32 %v1096, %v5262
    %v5264 = vpop.f32.mrf.mxu0
    %v5265 = vadd.f32 %v1096, %v5264
    %5266 = vmatmul.bf16.gmra.mxu0 %v3354
    %v5267 = vpop.f32.mrf.mxu0
    %v5268 = vadd.f32 %v1096, %v5267
    %v5269 = vpop.f32.mrf.mxu0
    %v5270 = vadd.f32 %v1096, %v5269
    %5271 = vmatmul.bf16.gmra.mxu0 %v3355
    %v5272 = vpop.f32.mrf.mxu0
    %v5273 = vadd.f32 %v1096, %v5272
    %v5274 = vpop.f32.mrf.mxu0
    %v5275 = vadd.f32 %v1096, %v5274
    %5276 = vmatmul.bf16.gmra.mxu0 %v3356
    %v5277 = vpop.f32.mrf.mxu0
    %v5278 = vadd.f32 %v1096, %v5277
    %v5279 = vpop.f32.mrf.mxu0
    %v5280 = vadd.f32 %v1096, %v5279
    %5281 = vmatmul.bf16.gmra.mxu0 %v3357
    %v5282 = vpop.f32.mrf.mxu0
    %v5283 = vadd.f32 %v1096, %v5282
    %v5284 = vpop.f32.mrf.mxu0
    %v5285 = vadd.f32 %v1096, %v5284
    %5286 = vmatmul.bf16.gmra.mxu0 %v3358
    %v5287 = vpop.f32.mrf.mxu0
    %v5288 = vadd.f32 %v1096, %v5287
    %v5289 = vpop.f32.mrf.mxu0
    %v5290 = vadd.f32 %v1096, %v5289
    %5291 = vmatmul.bf16.gmra.mxu0 %v3359
    %v5292 = vpop.f32.mrf.mxu0
    %v5293 = vadd.f32 %v1096, %v5292
    %v5294 = vpop.f32.mrf.mxu0
    %v5295 = vadd.f32 %v1096, %v5294
    %5296 = vmatmul.bf16.gmra.mxu0 %v3360
    %v5297 = vpop.f32.mrf.mxu0
    %v5298 = vadd.f32 %v1096, %v5297
    %v5299 = vpop.f32.mrf.mxu0
    %v5300 = vadd.f32 %v1096, %v5299
    %5301 = vmatmul.bf16.gmra.mxu0 %v3361
    %v5302 = vpop.f32.mrf.mxu0
    %v5303 = vadd.f32 %v1096, %v5302
    %v5304 = vpop.f32.mrf.mxu0
    %v5305 = vadd.f32 %v1096, %v5304
    %5306 = vmatmul.bf16.gmra.mxu0 %v3362
    %v5307 = vpop.f32.mrf.mxu0
    %v5308 = vadd.f32 %v1096, %v5307
    %v5309 = vpop.f32.mrf.mxu0
    %v5310 = vadd.f32 %v1096, %v5309
    %5311 = vmatmul.bf16.gmra.mxu0 %v3363
    %v5312 = vpop.f32.mrf.mxu0
    %v5313 = vadd.f32 %v1096, %v5312
    %v5314 = vpop.f32.mrf.mxu0
    %v5315 = vadd.f32 %v1096, %v5314
    %5316 = vmatmul.bf16.gmra.mxu0 %v3364
    %v5317 = vpop.f32.mrf.mxu0
    %v5318 = vadd.f32 %v1096, %v5317
    %v5319 = vpop.f32.mrf.mxu0
    %v5320 = vadd.f32 %v1096, %v5319
    %5321 = vmatmul.bf16.gmra.mxu0 %v3365
    %v5322 = vpop.f32.mrf.mxu0
    %v5323 = vadd.f32 %v1096, %v5322
    %v5324 = vpop.f32.mrf.mxu0
    %v5325 = vadd.f32 %v1096, %v5324
    %5326 = vmatmul.bf16.gmra.mxu0 %v3366
    %v5327 = vpop.f32.mrf.mxu0
    %v5328 = vadd.f32 %v1096, %v5327
    %v5329 = vpop.f32.mrf.mxu0
    %v5330 = vadd.f32 %v1096, %v5329
    %5331 = vmatmul.bf16.gmra.mxu0 %v3367
    %v5332 = vpop.f32.mrf.mxu0
    %v5333 = vadd.f32 %v1096, %v5332
    %v5334 = vpop.f32.mrf.mxu0
    %v5335 = vadd.f32 %v1096, %v5334
    %5336 = vmatmul.bf16.gmra.mxu0 %v3368
    %v5337 = vpop.f32.mrf.mxu0
    %v5338 = vadd.f32 %v1096, %v5337
    %v5339 = vpop.f32.mrf.mxu0
    %v5340 = vadd.f32 %v1096, %v5339
    %5341 = vmatmul.bf16.gmra.mxu0 %v3369
    %v5342 = vpop.f32.mrf.mxu0
    %v5343 = vadd.f32 %v1096, %v5342
    %v5344 = vpop.f32.mrf.mxu0
    %v5345 = vadd.f32 %v1096, %v5344
    %5346 = vmatmul.bf16.gmra.mxu0 %v3370
    %v5347 = vpop.f32.mrf.mxu0
    %v5348 = vadd.f32 %v1096, %v5347
    %v5349 = vpop.f32.mrf.mxu0
    %v5350 = vadd.f32 %v1096, %v5349
    %5351 = vmatmul.bf16.gmra.mxu0 %v3371
    %v5352 = vpop.f32.mrf.mxu0
    %v5353 = vadd.f32 %v1096, %v5352
    %v5354 = vpop.f32.mrf.mxu0
    %v5355 = vadd.f32 %v1096, %v5354
    %5356 = vmatmul.bf16.gmra.mxu0 %v3372
    %v5357 = vpop.f32.mrf.mxu0
    %v5358 = vadd.f32 %v1096, %v5357
    %v5359 = vpop.f32.mrf.mxu0
    %v5360 = vadd.f32 %v1096, %v5359
    %5361 = vmatmul.bf16.gmra.mxu0 %v3373
    %v5362 = vpop.f32.mrf.mxu0
    %v5363 = vadd.f32 %v1096, %v5362
    %v5364 = vpop.f32.mrf.mxu0
    %v5365 = vadd.f32 %v1096, %v5364
    %5366 = vmatmul.bf16.gmra.mxu0 %v3374
    %v5367 = vpop.f32.mrf.mxu0
    %v5368 = vadd.f32 %v1096, %v5367
    %v5369 = vpop.f32.mrf.mxu0
    %v5370 = vadd.f32 %v1096, %v5369
    %5371 = vmatmul.bf16.gmra.mxu0 %v3375
    %v5372 = vpop.f32.mrf.mxu0
    %v5373 = vadd.f32 %v1096, %v5372
    %v5374 = vpop.f32.mrf.mxu0
    %v5375 = vadd.f32 %v1096, %v5374
    %5376 = vmatmul.bf16.gmra.mxu0 %v3376
    %v5377 = vpop.f32.mrf.mxu0
    %v5378 = vadd.f32 %v1096, %v5377
    %v5379 = vpop.f32.mrf.mxu0
    %v5380 = vadd.f32 %v1096, %v5379
    %5381 = vmatmul.bf16.gmra.mxu0 %v3377
    %v5382 = vpop.f32.mrf.mxu0
    %v5383 = vadd.f32 %v1096, %v5382
    %v5384 = vpop.f32.mrf.mxu0
    %v5385 = vadd.f32 %v1096, %v5384
    %5386 = vmatmul.bf16.gmra.mxu0 %v3378
    %v5387 = vpop.f32.mrf.mxu0
    %v5388 = vadd.f32 %v1096, %v5387
    %v5389 = vpop.f32.mrf.mxu0
    %v5390 = vadd.f32 %v1096, %v5389
    %5391 = vmatmul.bf16.gmra.mxu0 %v3379
    %v5392 = vpop.f32.mrf.mxu0
    %v5393 = vadd.f32 %v1096, %v5392
    %v5394 = vpop.f32.mrf.mxu0
    %v5395 = vadd.f32 %v1096, %v5394
    %5396 = vmatmul.bf16.gmra.mxu0 %v3380
    %v5397 = vpop.f32.mrf.mxu0
    %v5398 = vadd.f32 %v1096, %v5397
    %v5399 = vpop.f32.mrf.mxu0
    %v5400 = vadd.f32 %v1096, %v5399
    %5401 = vmatmul.bf16.gmra.mxu0 %v3381
    %v5402 = vpop.f32.mrf.mxu0
    %v5403 = vadd.f32 %v1096, %v5402
    %v5404 = vpop.f32.mrf.mxu0
    %v5405 = vadd.f32 %v1096, %v5404
    %5406 = vmatmul.bf16.gmra.mxu0 %v3382
    %v5407 = vpop.f32.mrf.mxu0
    %v5408 = vadd.f32 %v1096, %v5407
    %v5409 = vpop.f32.mrf.mxu0
    %v5410 = vadd.f32 %v1096, %v5409
    %5411 = vmatmul.bf16.gmra.mxu0 %v3383
    %v5412 = vpop.f32.mrf.mxu0
    %v5413 = vadd.f32 %v1096, %v5412
    %v5414 = vpop.f32.mrf.mxu0
    %v5415 = vadd.f32 %v1096, %v5414
    %5416 = vmatmul.bf16.gmra.mxu0 %v3384
    %v5417 = vpop.f32.mrf.mxu0
    %v5418 = vadd.f32 %v1096, %v5417
    %v5419 = vpop.f32.mrf.mxu0
    %v5420 = vadd.f32 %v1096, %v5419
    %5421 = vmatmul.bf16.gmra.mxu0 %v3385
    %v5422 = vpop.f32.mrf.mxu0
    %v5423 = vadd.f32 %v1096, %v5422
    %v5424 = vpop.f32.mrf.mxu0
    %v5425 = vadd.f32 %v1096, %v5424
    %5426 = vmatmul.bf16.gmra.mxu0 %v3386
    %v5427 = vpop.f32.mrf.mxu0
    %v5428 = vadd.f32 %v1096, %v5427
    %v5429 = vpop.f32.mrf.mxu0
    %v5430 = vadd.f32 %v1096, %v5429
    %5431 = vmatmul.bf16.gmra.mxu0 %v3387
    %v5432 = vpop.f32.mrf.mxu0
    %v5433 = vadd.f32 %v1096, %v5432
    %v5434 = vpop.f32.mrf.mxu0
    %v5435 = vadd.f32 %v1096, %v5434
    %5436 = vmatmul.bf16.gmra.mxu0 %v3388
    %v5437 = vpop.f32.mrf.mxu0
    %v5438 = vadd.f32 %v1096, %v5437
    %v5439 = vpop.f32.mrf.mxu0
    %v5440 = vadd.f32 %v1096, %v5439
    %5441 = vmatmul.bf16.gmra.mxu0 %v3389
    %v5442 = vpop.f32.mrf.mxu0
    %v5443 = vadd.f32 %v1096, %v5442
    %v5444 = vpop.f32.mrf.mxu0
    %v5445 = vadd.f32 %v1096, %v5444
    %5446 = vmatmul.bf16.gmra.mxu0 %v3390
    %v5447 = vpop.f32.mrf.mxu0
    %v5448 = vadd.f32 %v1096, %v5447
    %v5449 = vpop.f32.mrf.mxu0
    %v5450 = vadd.f32 %v1096, %v5449
    %5451 = vmatmul.bf16.gmra.mxu0 %v3391
    %v5452 = vpop.f32.mrf.mxu0
    %v5453 = vadd.f32 %v1096, %v5452
    %v5454 = vpop.f32.mrf.mxu0
    %v5455 = vadd.f32 %v1096, %v5454
    %5456 = vmatmul.bf16.gmra.mxu0 %v3392
    %v5457 = vpop.f32.mrf.mxu0
    %v5458 = vadd.f32 %v1096, %v5457
    %v5459 = vpop.f32.mrf.mxu0
    %v5460 = vadd.f32 %v1096, %v5459
    %5461 = vmatmul.bf16.gmra.mxu0 %v3393
    %v5462 = vpop.f32.mrf.mxu0
    %v5463 = vadd.f32 %v1096, %v5462
    %v5464 = vpop.f32.mrf.mxu0
    %v5465 = vadd.f32 %v1096, %v5464
    %5466 = vmatmul.bf16.gmra.mxu0 %v3394
    %v5467 = vpop.f32.mrf.mxu0
    %v5468 = vadd.f32 %v1096, %v5467
    %v5469 = vpop.f32.mrf.mxu0
    %v5470 = vadd.f32 %v1096, %v5469
    %5471 = vmatmul.bf16.gmra.mxu0 %v3395
    %v5472 = vpop.f32.mrf.mxu0
    %v5473 = vadd.f32 %v1096, %v5472
    %v5474 = vpop.f32.mrf.mxu0
    %v5475 = vadd.f32 %v1096, %v5474
    %5476 = vmatmul.bf16.gmra.mxu0 %v3396
    %v5477 = vpop.f32.mrf.mxu0
    %v5478 = vadd.f32 %v1096, %v5477
    %v5479 = vpop.f32.mrf.mxu0
    %v5480 = vadd.f32 %v1096, %v5479
    %5481 = vmatmul.bf16.gmra.mxu0 %v3397
    %v5482 = vpop.f32.mrf.mxu0
    %v5483 = vadd.f32 %v1096, %v5482
    %v5484 = vpop.f32.mrf.mxu0
    %v5485 = vadd.f32 %v1096, %v5484
    %5486 = vmatmul.bf16.gmra.mxu0 %v3398
    %v5487 = vpop.f32.mrf.mxu0
    %v5488 = vadd.f32 %v1096, %v5487
    %v5489 = vpop.f32.mrf.mxu0
    %v5490 = vadd.f32 %v1096, %v5489
    %5491 = vmatmul.bf16.gmra.mxu0 %v3399
    %v5492 = vpop.f32.mrf.mxu0
    %v5493 = vadd.f32 %v1096, %v5492
    %v5494 = vpop.f32.mrf.mxu0
    %v5495 = vadd.f32 %v1096, %v5494
    %5496 = vmatmul.bf16.gmra.mxu0 %v3400
    %v5497 = vpop.f32.mrf.mxu0
    %v5498 = vadd.f32 %v1096, %v5497
    %v5499 = vpop.f32.mrf.mxu0
    %v5500 = vadd.f32 %v1096, %v5499
    %5501 = vmatmul.bf16.gmra.mxu0 %v3401
    %v5502 = vpop.f32.mrf.mxu0
    %v5503 = vadd.f32 %v1096, %v5502
    %v5504 = vpop.f32.mrf.mxu0
    %v5505 = vadd.f32 %v1096, %v5504
    %5506 = vmatmul.bf16.gmra.mxu0 %v3402
    %v5507 = vpop.f32.mrf.mxu0
    %v5508 = vadd.f32 %v1096, %v5507
    %v5509 = vpop.f32.mrf.mxu0
    %v5510 = vadd.f32 %v1096, %v5509
    %5511 = vmatmul.bf16.gmra.mxu0 %v3403
    %v5512 = vpop.f32.mrf.mxu0
    %v5513 = vadd.f32 %v1096, %v5512
    %v5514 = vpop.f32.mrf.mxu0
    %v5515 = vadd.f32 %v1096, %v5514
    %5516 = vmatmul.bf16.gmra.mxu0 %v3404
    %v5517 = vpop.f32.mrf.mxu0
    %v5518 = vadd.f32 %v1096, %v5517
    %v5519 = vpop.f32.mrf.mxu0
    %v5520 = vadd.f32 %v1096, %v5519
    %5521 = vmatmul.bf16.gmra.mxu0 %v3405
    %v5522 = vpop.f32.mrf.mxu0
    %v5523 = vadd.f32 %v1096, %v5522
    %v5524 = vpop.f32.mrf.mxu0
    %v5525 = vadd.f32 %v1096, %v5524
    %5526 = vmatmul.bf16.gmra.mxu0 %v3406
    %v5527 = vpop.f32.mrf.mxu0
    %v5528 = vadd.f32 %v1096, %v5527
    %v5529 = vpop.f32.mrf.mxu0
    %v5530 = vadd.f32 %v1096, %v5529
    %5531 = vmatmul.bf16.gmra.mxu0 %v3407
    %v5532 = vpop.f32.mrf.mxu0
    %v5533 = vadd.f32 %v1096, %v5532
    %v5534 = vpop.f32.mrf.mxu0
    %v5535 = vadd.f32 %v1096, %v5534
    %5536 = vmatmul.bf16.gmra.mxu0 %v3408
    %v5537 = vpop.f32.mrf.mxu0
    %v5538 = vadd.f32 %v1096, %v5537
    %v5539 = vpop.f32.mrf.mxu0
    %v5540 = vadd.f32 %v1096, %v5539
    %5541 = vmatmul.bf16.gmra.mxu0 %v3409
    %v5542 = vpop.f32.mrf.mxu0
    %v5543 = vadd.f32 %v1096, %v5542
    %v5544 = vpop.f32.mrf.mxu0
    %v5545 = vadd.f32 %v1096, %v5544
    %5546 = vmatmul.bf16.gmra.mxu0 %v3410
    %v5547 = vpop.f32.mrf.mxu0
    %v5548 = vadd.f32 %v1096, %v5547
    %v5549 = vpop.f32.mrf.mxu0
    %v5550 = vadd.f32 %v1096, %v5549
    %5551 = vmatmul.bf16.gmra.mxu0 %v3411
    %v5552 = vpop.f32.mrf.mxu0
    %v5553 = vadd.f32 %v1096, %v5552
    %v5554 = vpop.f32.mrf.mxu0
    %v5555 = vadd.f32 %v1096, %v5554
    %5556 = vmatmul.bf16.gmra.mxu0 %v3412
    %v5557 = vpop.f32.mrf.mxu0
    %v5558 = vadd.f32 %v1096, %v5557
    %v5559 = vpop.f32.mrf.mxu0
    %v5560 = vadd.f32 %v1096, %v5559
    %5561 = vmatmul.bf16.gmra.mxu0 %v3413
    %v5562 = vpop.f32.mrf.mxu0
    %v5563 = vadd.f32 %v1096, %v5562
    %v5564 = vpop.f32.mrf.mxu0
    %v5565 = vadd.f32 %v1096, %v5564
    %5566 = vmatmul.bf16.gmra.mxu0 %v3414
    %v5567 = vpop.f32.mrf.mxu0
    %v5568 = vadd.f32 %v1096, %v5567
    %v5569 = vpop.f32.mrf.mxu0
    %v5570 = vadd.f32 %v1096, %v5569
    %5571 = vmatmul.bf16.gmra.mxu0 %v3415
    %v5572 = vpop.f32.mrf.mxu0
    %v5573 = vadd.f32 %v1096, %v5572
    %v5574 = vpop.f32.mrf.mxu0
    %v5575 = vadd.f32 %v1096, %v5574
    %5576 = vmatmul.bf16.gmra.mxu0 %v3416
    %v5577 = vpop.f32.mrf.mxu0
    %v5578 = vadd.f32 %v1096, %v5577
    %v5579 = vpop.f32.mrf.mxu0
    %v5580 = vadd.f32 %v1096, %v5579
    %5581 = vmatmul.bf16.gmra.mxu0 %v3417
    %v5582 = vpop.f32.mrf.mxu0
    %v5583 = vadd.f32 %v1096, %v5582
    %v5584 = vpop.f32.mrf.mxu0
    %v5585 = vadd.f32 %v1096, %v5584
    %5586 = vmatmul.bf16.gmra.mxu0 %v3418
    %v5587 = vpop.f32.mrf.mxu0
    %v5588 = vadd.f32 %v1096, %v5587
    %v5589 = vpop.f32.mrf.mxu0
    %v5590 = vadd.f32 %v1096, %v5589
    %5591 = vmatmul.bf16.gmra.mxu0 %v3419
    %v5592 = vpop.f32.mrf.mxu0
    %v5593 = vadd.f32 %v1096, %v5592
    %v5594 = vpop.f32.mrf.mxu0
    %v5595 = vadd.f32 %v1096, %v5594
    %5596 = vmatmul.bf16.gmra.mxu0 %v3420
    %v5597 = vpop.f32.mrf.mxu0
    %v5598 = vadd.f32 %v1096, %v5597
    %v5599 = vpop.f32.mrf.mxu0
    %v5600 = vadd.f32 %v1096, %v5599
    %5601 = vmatmul.bf16.gmra.mxu0 %v3421
    %v5602 = vpop.f32.mrf.mxu0
    %v5603 = vadd.f32 %v1096, %v5602
    %v5604 = vpop.f32.mrf.mxu0
    %v5605 = vadd.f32 %v1096, %v5604
    %5606 = vmatmul.bf16.gmra.mxu0 %v3422
    %v5607 = vpop.f32.mrf.mxu0
    %v5608 = vadd.f32 %v1096, %v5607
    %v5609 = vpop.f32.mrf.mxu0
    %v5610 = vadd.f32 %v1096, %v5609
    %5611 = vmatmul.bf16.gmra.mxu0 %v3423
    %v5612 = vpop.f32.mrf.mxu0
    %v5613 = vadd.f32 %v1096, %v5612
    %v5614 = vpop.f32.mrf.mxu0
    %v5615 = vadd.f32 %v1096, %v5614
    %5616 = vmatmul.bf16.gmra.mxu0 %v3424
    %v5617 = vpop.f32.mrf.mxu0
    %v5618 = vadd.f32 %v1096, %v5617
    %v5619 = vpop.f32.mrf.mxu0
    %v5620 = vadd.f32 %v1096, %v5619
    %5621 = vmatmul.bf16.gmra.mxu0 %v3425
    %v5622 = vpop.f32.mrf.mxu0
    %v5623 = vadd.f32 %v1096, %v5622
    %v5624 = vpop.f32.mrf.mxu0
    %v5625 = vadd.f32 %v1096, %v5624
    %5626 = vmatmul.bf16.gmra.mxu0 %v3426
    %v5627 = vpop.f32.mrf.mxu0
    %v5628 = vadd.f32 %v1096, %v5627
    %v5629 = vpop.f32.mrf.mxu0
    %v5630 = vadd.f32 %v1096, %v5629
    %5631 = vmatmul.bf16.gmra.mxu0 %v3427
    %v5632 = vpop.f32.mrf.mxu0
    %v5633 = vadd.f32 %v1096, %v5632
    %v5634 = vpop.f32.mrf.mxu0
    %v5635 = vadd.f32 %v1096, %v5634
    %5636 = vmatmul.bf16.gmra.mxu0 %v3428
    %v5637 = vpop.f32.mrf.mxu0
    %v5638 = vadd.f32 %v1096, %v5637
    %v5639 = vpop.f32.mrf.mxu0
    %v5640 = vadd.f32 %v1096, %v5639
    %5641 = vmatmul.bf16.gmra.mxu0 %v3429
    %v5642 = vpop.f32.mrf.mxu0
    %v5643 = vadd.f32 %v1096, %v5642
    %v5644 = vpop.f32.mrf.mxu0
    %v5645 = vadd.f32 %v1096, %v5644
    %5646 = vmatmul.bf16.gmra.mxu0 %v3430
    %v5647 = vpop.f32.mrf.mxu0
    %v5648 = vadd.f32 %v1096, %v5647
    %v5649 = vpop.f32.mrf.mxu0
    %v5650 = vadd.f32 %v1096, %v5649
    %5651 = vmatmul.bf16.gmra.mxu0 %v3431
    %v5652 = vpop.f32.mrf.mxu0
    %v5653 = vadd.f32 %v1096, %v5652
    %v5654 = vpop.f32.mrf.mxu0
    %v5655 = vadd.f32 %v1096, %v5654
    %5656 = vmatmul.bf16.gmra.mxu0 %v3432
    %v5657 = vpop.f32.mrf.mxu0
    %v5658 = vadd.f32 %v1096, %v5657
    %v5659 = vpop.f32.mrf.mxu0
    %v5660 = vadd.f32 %v1096, %v5659
    %5661 = vmatmul.bf16.gmra.mxu0 %v3433
    %v5662 = vpop.f32.mrf.mxu0
    %v5663 = vadd.f32 %v1096, %v5662
    %v5664 = vpop.f32.mrf.mxu0
    %v5665 = vadd.f32 %v1096, %v5664
    %5666 = vmatmul.bf16.gmra.mxu0 %v3434
    %v5667 = vpop.f32.mrf.mxu0
    %v5668 = vadd.f32 %v1096, %v5667
    %v5669 = vpop.f32.mrf.mxu0
    %v5670 = vadd.f32 %v1096, %v5669
    %5671 = vmatmul.bf16.gmra.mxu0 %v3435
    %v5672 = vpop.f32.mrf.mxu0
    %v5673 = vadd.f32 %v1096, %v5672
    %v5674 = vpop.f32.mrf.mxu0
    %v5675 = vadd.f32 %v1096, %v5674
    %5676 = vmatmul.bf16.gmra.mxu0 %v3436
    %v5677 = vpop.f32.mrf.mxu0
    %v5678 = vadd.f32 %v1096, %v5677
    %v5679 = vpop.f32.mrf.mxu0
    %v5680 = vadd.f32 %v1096, %v5679
    %5681 = vmatmul.bf16.gmra.mxu0 %v3437
    %v5682 = vpop.f32.mrf.mxu0
    %v5683 = vadd.f32 %v1096, %v5682
    %v5684 = vpop.f32.mrf.mxu0
    %v5685 = vadd.f32 %v1096, %v5684
    %5686 = vmatmul.bf16.gmra.mxu0 %v3438
    %v5687 = vpop.f32.mrf.mxu0
    %v5688 = vadd.f32 %v1096, %v5687
    %v5689 = vpop.f32.mrf.mxu0
    %v5690 = vadd.f32 %v1096, %v5689
    %5691 = vmatmul.bf16.gmra.mxu0 %v3439
    %v5692 = vpop.f32.mrf.mxu0
    %v5693 = vadd.f32 %v1096, %v5692
    %v5694 = vpop.f32.mrf.mxu0
    %v5695 = vadd.f32 %v1096, %v5694
    %5696 = vmatmul.bf16.gmra.mxu0 %v3440
    %v5697 = vpop.f32.mrf.mxu0
    %v5698 = vadd.f32 %v1096, %v5697
    %v5699 = vpop.f32.mrf.mxu0
    %v5700 = vadd.f32 %v1096, %v5699
    %5701 = vmatmul.bf16.gmra.mxu0 %v3441
    %v5702 = vpop.f32.mrf.mxu0
    %v5703 = vadd.f32 %v1096, %v5702
    %v5704 = vpop.f32.mrf.mxu0
    %v5705 = vadd.f32 %v1096, %v5704
    %5706 = vmatmul.bf16.gmra.mxu0 %v3442
    %v5707 = vpop.f32.mrf.mxu0
    %v5708 = vadd.f32 %v1096, %v5707
    %v5709 = vpop.f32.mrf.mxu0
    %v5710 = vadd.f32 %v1096, %v5709
    %5711 = vmatmul.bf16.gmra.mxu0 %v3443
    %v5712 = vpop.f32.mrf.mxu0
    %v5713 = vadd.f32 %v1096, %v5712
    %v5714 = vpop.f32.mrf.mxu0
    %v5715 = vadd.f32 %v1096, %v5714
    %5716 = vmatmul.bf16.gmra.mxu0 %v3444
    %v5717 = vpop.f32.mrf.mxu0
    %v5718 = vadd.f32 %v1096, %v5717
    %v5719 = vpop.f32.mrf.mxu0
    %v5720 = vadd.f32 %v1096, %v5719
    %5721 = vmatmul.bf16.gmra.mxu0 %v3445
    %v5722 = vpop.f32.mrf.mxu0
    %v5723 = vadd.f32 %v1096, %v5722
    %v5724 = vpop.f32.mrf.mxu0
    %v5725 = vadd.f32 %v1096, %v5724
    %5726 = vmatmul.bf16.gmra.mxu0 %v3446
    %v5727 = vpop.f32.mrf.mxu0
    %v5728 = vadd.f32 %v1096, %v5727
    %v5729 = vpop.f32.mrf.mxu0
    %v5730 = vadd.f32 %v1096, %v5729
    %5731 = vmatmul.bf16.gmra.mxu0 %v3447
    %v5732 = vpop.f32.mrf.mxu0
    %v5733 = vadd.f32 %v1096, %v5732
    %v5734 = vpop.f32.mrf.mxu0
    %v5735 = vadd.f32 %v1096, %v5734
    %5736 = vmatmul.bf16.gmra.mxu0 %v3448
    %v5737 = vpop.f32.mrf.mxu0
    %v5738 = vadd.f32 %v1096, %v5737
    %v5739 = vpop.f32.mrf.mxu0
    %v5740 = vadd.f32 %v1096, %v5739
    %5741 = vmatmul.bf16.gmra.mxu0 %v3449
    %v5742 = vpop.f32.mrf.mxu0
    %v5743 = vadd.f32 %v1096, %v5742
    %v5744 = vpop.f32.mrf.mxu0
    %v5745 = vadd.f32 %v1096, %v5744
    %5746 = vmatmul.bf16.gmra.mxu0 %v3450
    %v5747 = vpop.f32.mrf.mxu0
    %v5748 = vadd.f32 %v1096, %v5747
    %v5749 = vpop.f32.mrf.mxu0
    %v5750 = vadd.f32 %v1096, %v5749
    %5751 = vmatmul.bf16.gmra.mxu0 %v3451
    %v5752 = vpop.f32.mrf.mxu0
    %v5753 = vadd.f32 %v1096, %v5752
    %v5754 = vpop.f32.mrf.mxu0
    %v5755 = vadd.f32 %v1096, %v5754
    %5756 = vmatmul.bf16.gmra.mxu0 %v3452
    %v5757 = vpop.f32.mrf.mxu0
    %v5758 = vadd.f32 %v1096, %v5757
    %v5759 = vpop.f32.mrf.mxu0
    %v5760 = vadd.f32 %v1096, %v5759
    %5761 = vmatmul.bf16.gmra.mxu0 %v3453
    %v5762 = vpop.f32.mrf.mxu0
    %v5763 = vadd.f32 %v1096, %v5762
    %v5764 = vpop.f32.mrf.mxu0
    %v5765 = vadd.f32 %v1096, %v5764
    %5766 = vmatmul.bf16.gmra.mxu0 %v3454
    %v5767 = vpop.f32.mrf.mxu0
    %v5768 = vadd.f32 %v1096, %v5767
    %v5769 = vpop.f32.mrf.mxu0
    %v5770 = vadd.f32 %v1096, %v5769
    %5771 = vmatmul.bf16.gmra.mxu0 %v3455
    %v5772 = vpop.f32.mrf.mxu0
    %v5773 = vadd.f32 %v1096, %v5772
    %v5774 = vpop.f32.mrf.mxu0
    %v5775 = vadd.f32 %v1096, %v5774
    %5776 = vmatmul.bf16.gmra.mxu0 %v3456
    %v5777 = vpop.f32.mrf.mxu0
    %v5778 = vadd.f32 %v1096, %v5777
    %v5779 = vpop.f32.mrf.mxu0
    %v5780 = vadd.f32 %v1096, %v5779
    %5781 = vmatmul.bf16.gmra.mxu0 %v3457
    %v5782 = vpop.f32.mrf.mxu0
    %v5783 = vadd.f32 %v1096, %v5782
    %v5784 = vpop.f32.mrf.mxu0
    %v5785 = vadd.f32 %v1096, %v5784
    %5786 = vmatmul.bf16.gmra.mxu0 %v3458
    %v5787 = vpop.f32.mrf.mxu0
    %v5788 = vadd.f32 %v1096, %v5787
    %v5789 = vpop.f32.mrf.mxu0
    %v5790 = vadd.f32 %v1096, %v5789
    %5791 = vmatmul.bf16.gmra.mxu0 %v3459
    %v5792 = vpop.f32.mrf.mxu0
    %v5793 = vadd.f32 %v1096, %v5792
    %v5794 = vpop.f32.mrf.mxu0
    %v5795 = vadd.f32 %v1096, %v5794
    %5796 = vmatmul.bf16.gmra.mxu0 %v3460
    %v5797 = vpop.f32.mrf.mxu0
    %v5798 = vadd.f32 %v1096, %v5797
    %v5799 = vpop.f32.mrf.mxu0
    %v5800 = vadd.f32 %v1096, %v5799
    %5801 = vmatmul.bf16.gmra.mxu0 %v3461
    %v5802 = vpop.f32.mrf.mxu0
    %v5803 = vadd.f32 %v1096, %v5802
    %v5804 = vpop.f32.mrf.mxu0
    %v5805 = vadd.f32 %v1096, %v5804
    %5806 = vmatmul.bf16.gmra.mxu0 %v3462
    %v5807 = vpop.f32.mrf.mxu0
    %v5808 = vadd.f32 %v1096, %v5807
    %v5809 = vpop.f32.mrf.mxu0
    %v5810 = vadd.f32 %v1096, %v5809
    %5811 = vmatmul.bf16.gmra.mxu0 %v3463
    %v5812 = vpop.f32.mrf.mxu0
    %v5813 = vadd.f32 %v1096, %v5812
    %v5814 = vpop.f32.mrf.mxu0
    %v5815 = vadd.f32 %v1096, %v5814
    %5816 = vmatmul.bf16.gmra.mxu0 %v3464
    %v5817 = vpop.f32.mrf.mxu0
    %v5818 = vadd.f32 %v1096, %v5817
    %v5819 = vpop.f32.mrf.mxu0
    %v5820 = vadd.f32 %v1096, %v5819
    %5821 = vmatmul.bf16.gmra.mxu0 %v3465
    %v5822 = vpop.f32.mrf.mxu0
    %v5823 = vadd.f32 %v1096, %v5822
    %v5824 = vpop.f32.mrf.mxu0
    %v5825 = vadd.f32 %v1096, %v5824
    %5826 = vmatmul.bf16.gmra.mxu0 %v3466
    %v5827 = vpop.f32.mrf.mxu0
    %v5828 = vadd.f32 %v1096, %v5827
    %v5829 = vpop.f32.mrf.mxu0
    %v5830 = vadd.f32 %v1096, %v5829
    %5831 = vmatmul.bf16.gmra.mxu0 %v3467
    %v5832 = vpop.f32.mrf.mxu0
    %v5833 = vadd.f32 %v1096, %v5832
    %v5834 = vpop.f32.mrf.mxu0
    %v5835 = vadd.f32 %v1096, %v5834
    %5836 = vmatmul.bf16.gmra.mxu0 %v3468
    %v5837 = vpop.f32.mrf.mxu0
    %v5838 = vadd.f32 %v1096, %v5837
    %v5839 = vpop.f32.mrf.mxu0
    %v5840 = vadd.f32 %v1096, %v5839
    %5841 = vmatmul.bf16.gmra.mxu0 %v3469
    %v5842 = vpop.f32.mrf.mxu0
    %v5843 = vadd.f32 %v1096, %v5842
    %v5844 = vpop.f32.mrf.mxu0
    %v5845 = vadd.f32 %v1096, %v5844
    %5846 = vmatmul.bf16.gmra.mxu0 %v3470
    %v5847 = vpop.f32.mrf.mxu0
    %v5848 = vadd.f32 %v1096, %v5847
    %v5849 = vpop.f32.mrf.mxu0
    %v5850 = vadd.f32 %v1096, %v5849
    %5851 = vmatmul.bf16.gmra.mxu0 %v3471
    %v5852 = vpop.f32.mrf.mxu0
    %v5853 = vadd.f32 %v1096, %v5852
    %v5854 = vpop.f32.mrf.mxu0
    %v5855 = vadd.f32 %v1096, %v5854
    %5856 = vmatmul.bf16.gmra.mxu0 %v3472
    %v5857 = vpop.f32.mrf.mxu0
    %v5858 = vadd.f32 %v1096, %v5857
    %v5859 = vpop.f32.mrf.mxu0
    %v5860 = vadd.f32 %v1096, %v5859
    %5861 = vmatmul.bf16.gmra.mxu0 %v3473
    %v5862 = vpop.f32.mrf.mxu0
    %v5863 = vadd.f32 %v1096, %v5862
    %v5864 = vpop.f32.mrf.mxu0
    %v5865 = vadd.f32 %v1096, %v5864
    %5866 = vmatmul.bf16.gmra.mxu0 %v3474
    %v5867 = vpop.f32.mrf.mxu0
    %v5868 = vadd.f32 %v1096, %v5867
    %v5869 = vpop.f32.mrf.mxu0
    %v5870 = vadd.f32 %v1096, %v5869
    %5871 = vmatmul.bf16.gmra.mxu0 %v3475
    %v5872 = vpop.f32.mrf.mxu0
    %v5873 = vadd.f32 %v1096, %v5872
    %v5874 = vpop.f32.mrf.mxu0
    %v5875 = vadd.f32 %v1096, %v5874
    %5876 = vmatmul.bf16.gmra.mxu0 %v3476
    %v5877 = vpop.f32.mrf.mxu0
    %v5878 = vadd.f32 %v1096, %v5877
    %v5879 = vpop.f32.mrf.mxu0
    %v5880 = vadd.f32 %v1096, %v5879
    %5881 = vmatmul.bf16.gmra.mxu0 %v3477
    %v5882 = vpop.f32.mrf.mxu0
    %v5883 = vadd.f32 %v1096, %v5882
    %v5884 = vpop.f32.mrf.mxu0
    %v5885 = vadd.f32 %v1096, %v5884
    %5886 = vmatmul.bf16.gmra.mxu0 %v3478
    %v5887 = vpop.f32.mrf.mxu0
    %v5888 = vadd.f32 %v1096, %v5887
    %v5889 = vpop.f32.mrf.mxu0
    %v5890 = vadd.f32 %v1096, %v5889
    %5891 = vmatmul.bf16.gmra.mxu0 %v3479
    %v5892 = vpop.f32.mrf.mxu0
    %v5893 = vadd.f32 %v1096, %v5892
    %v5894 = vpop.f32.mrf.mxu0
    %v5895 = vadd.f32 %v1096, %v5894
    %5896 = vmatmul.bf16.gmra.mxu0 %v3480
    %v5897 = vpop.f32.mrf.mxu0
    %v5898 = vadd.f32 %v1096, %v5897
    %v5899 = vpop.f32.mrf.mxu0
    %v5900 = vadd.f32 %v1096, %v5899
    %5901 = vmatmul.bf16.gmra.mxu0 %v3481
    %v5902 = vpop.f32.mrf.mxu0
    %v5903 = vadd.f32 %v1096, %v5902
    %v5904 = vpop.f32.mrf.mxu0
    %v5905 = vadd.f32 %v1096, %v5904
    %5906 = vmatmul.bf16.gmra.mxu0 %v3482
    %v5907 = vpop.f32.mrf.mxu0
    %v5908 = vadd.f32 %v1096, %v5907
    %v5909 = vpop.f32.mrf.mxu0
    %v5910 = vadd.f32 %v1096, %v5909
    %5911 = vmatmul.bf16.gmra.mxu0 %v3483
    %v5912 = vpop.f32.mrf.mxu0
    %v5913 = vadd.f32 %v1096, %v5912
    %v5914 = vpop.f32.mrf.mxu0
    %v5915 = vadd.f32 %v1096, %v5914
    %5916 = vmatmul.bf16.gmra.mxu0 %v3484
    %v5917 = vpop.f32.mrf.mxu0
    %v5918 = vadd.f32 %v1096, %v5917
    %v5919 = vpop.f32.mrf.mxu0
    %v5920 = vadd.f32 %v1096, %v5919
    %5921 = vmatmul.bf16.gmra.mxu0 %v3485
    %v5922 = vpop.f32.mrf.mxu0
    %v5923 = vadd.f32 %v1096, %v5922
    %v5924 = vpop.f32.mrf.mxu0
    %v5925 = vadd.f32 %v1096, %v5924
    %5926 = vmatmul.bf16.gmra.mxu0 %v3486
    %v5927 = vpop.f32.mrf.mxu0
    %v5928 = vadd.f32 %v1096, %v5927
    %v5929 = vpop.f32.mrf.mxu0
    %v5930 = vadd.f32 %v1096, %v5929
    %5931 = vmatmul.bf16.gmra.mxu0 %v3487
    %v5932 = vpop.f32.mrf.mxu0
    %v5933 = vadd.f32 %v1096, %v5932
    %v5934 = vpop.f32.mrf.mxu0
    %v5935 = vadd.f32 %v1096, %v5934
    %5936 = vmatmul.bf16.gmra.mxu0 %v3488
    %v5937 = vpop.f32.mrf.mxu0
    %v5938 = vadd.f32 %v1096, %v5937
    %v5939 = vpop.f32.mrf.mxu0
    %v5940 = vadd.f32 %v1096, %v5939
    %5941 = vmatmul.bf16.gmra.mxu0 %v3489
    %v5942 = vpop.f32.mrf.mxu0
    %v5943 = vadd.f32 %v1096, %v5942
    %v5944 = vpop.f32.mrf.mxu0
    %v5945 = vadd.f32 %v1096, %v5944
    %5946 = vmatmul.bf16.gmra.mxu0 %v3490
    %v5947 = vpop.f32.mrf.mxu0
    %v5948 = vadd.f32 %v1096, %v5947
    %v5949 = vpop.f32.mrf.mxu0
    %v5950 = vadd.f32 %v1096, %v5949
    %5951 = vmatmul.bf16.gmra.mxu0 %v3491
    %v5952 = vpop.f32.mrf.mxu0
    %v5953 = vadd.f32 %v1096, %v5952
    %v5954 = vpop.f32.mrf.mxu0
    %v5955 = vadd.f32 %v1096, %v5954
    %5956 = vmatmul.bf16.gmra.mxu0 %v3492
    %v5957 = vpop.f32.mrf.mxu0
    %v5958 = vadd.f32 %v1096, %v5957
    %v5959 = vpop.f32.mrf.mxu0
    %v5960 = vadd.f32 %v1096, %v5959
    %5961 = vmatmul.bf16.gmra.mxu0 %v3493
    %v5962 = vpop.f32.mrf.mxu0
    %v5963 = vadd.f32 %v1096, %v5962
    %v5964 = vpop.f32.mrf.mxu0
    %v5965 = vadd.f32 %v1096, %v5964
    %5966 = vmatmul.bf16.gmra.mxu0 %v3494
    %v5967 = vpop.f32.mrf.mxu0
    %v5968 = vadd.f32 %v1096, %v5967
    %v5969 = vpop.f32.mrf.mxu0
    %v5970 = vadd.f32 %v1096, %v5969
    %5971 = vmatmul.bf16.gmra.mxu0 %v3495
    %v5972 = vpop.f32.mrf.mxu0
    %v5973 = vadd.f32 %v1096, %v5972
    %v5974 = vpop.f32.mrf.mxu0
    %v5975 = vadd.f32 %v1096, %v5974
    %5976 = vmatmul.bf16.gmra.mxu0 %v3496
    %v5977 = vpop.f32.mrf.mxu0
    %v5978 = vadd.f32 %v1096, %v5977
    %v5979 = vpop.f32.mrf.mxu0
    %v5980 = vadd.f32 %v1096, %v5979
    %5981 = vmatmul.bf16.gmra.mxu0 %v3497
    %v5982 = vpop.f32.mrf.mxu0
    %v5983 = vadd.f32 %v1096, %v5982
    %v5984 = vpop.f32.mrf.mxu0
    %v5985 = vadd.f32 %v1096, %v5984
    %5986 = vmatmul.bf16.gmra.mxu0 %v3498
    %v5987 = vpop.f32.mrf.mxu0
    %v5988 = vadd.f32 %v1096, %v5987
    %v5989 = vpop.f32.mrf.mxu0
    %v5990 = vadd.f32 %v1096, %v5989
    %5991 = vmatmul.bf16.gmra.mxu0 %v3499
    %v5992 = vpop.f32.mrf.mxu0
    %v5993 = vadd.f32 %v1096, %v5992
    %v5994 = vpop.f32.mrf.mxu0
    %v5995 = vadd.f32 %v1096, %v5994
    %5996 = vmatmul.bf16.gmra.mxu0 %v3500
    %v5997 = vpop.f32.mrf.mxu0
    %v5998 = vadd.f32 %v1096, %v5997
    %v5999 = vpop.f32.mrf.mxu0
    %v6000 = vadd.f32 %v1096, %v5999
    %6001 = vmatmul.bf16.gmra.mxu0 %v3501
    %v6002 = vpop.f32.mrf.mxu0
    %v6003 = vadd.f32 %v1096, %v6002
    %v6004 = vpop.f32.mrf.mxu0
    %v6005 = vadd.f32 %v1096, %v6004
    %6006 = vmatmul.bf16.gmra.mxu0 %v3502
    %v6007 = vpop.f32.mrf.mxu0
    %v6008 = vadd.f32 %v1096, %v6007
    %v6009 = vpop.f32.mrf.mxu0
    %v6010 = vadd.f32 %v1096, %v6009
    %6011 = vmatmul.bf16.gmra.mxu0 %v3503
    %v6012 = vpop.f32.mrf.mxu0
    %v6013 = vadd.f32 %v1096, %v6012
    %v6014 = vpop.f32.mrf.mxu0
    %v6015 = vadd.f32 %v1096, %v6014
    %6016 = vmatmul.bf16.gmra.mxu0 %v3504
    %v6017 = vpop.f32.mrf.mxu0
    %v6018 = vadd.f32 %v1096, %v6017
    %v6019 = vpop.f32.mrf.mxu0
    %v6020 = vadd.f32 %v1096, %v6019
    %6021 = vmatmul.bf16.gmra.mxu0 %v3505
    %v6022 = vpop.f32.mrf.mxu0
    %v6023 = vadd.f32 %v1096, %v6022
    %v6024 = vpop.f32.mrf.mxu0
    %v6025 = vadd.f32 %v1096, %v6024
    %6026 = vmatmul.bf16.gmra.mxu0 %v3506
    %v6027 = vpop.f32.mrf.mxu0
    %v6028 = vadd.f32 %v1096, %v6027
    %v6029 = vpop.f32.mrf.mxu0
    %v6030 = vadd.f32 %v1096, %v6029
    %6031 = vmatmul.bf16.gmra.mxu0 %v3507
    %v6032 = vpop.f32.mrf.mxu0
    %v6033 = vadd.f32 %v1096, %v6032
    %v6034 = vpop.f32.mrf.mxu0
    %v6035 = vadd.f32 %v1096, %v6034
    %6036 = vmatmul.bf16.gmra.mxu0 %v3508
    %v6037 = vpop.f32.mrf.mxu0
    %v6038 = vadd.f32 %v1096, %v6037
    %v6039 = vpop.f32.mrf.mxu0
    %v6040 = vadd.f32 %v1096, %v6039
    %6041 = vmatmul.bf16.gmra.mxu0 %v3509
    %v6042 = vpop.f32.mrf.mxu0
    %v6043 = vadd.f32 %v1096, %v6042
    %v6044 = vpop.f32.mrf.mxu0
    %v6045 = vadd.f32 %v1096, %v6044
    %6046 = vmatmul.bf16.gmra.mxu0 %v3510
    %v6047 = vpop.f32.mrf.mxu0
    %v6048 = vadd.f32 %v1096, %v6047
    %v6049 = vpop.f32.mrf.mxu0
    %v6050 = vadd.f32 %v1096, %v6049
    %6051 = vmatmul.bf16.gmra.mxu0 %v3511
    %v6052 = vpop.f32.mrf.mxu0
    %v6053 = vadd.f32 %v1096, %v6052
    %v6054 = vpop.f32.mrf.mxu0
    %v6055 = vadd.f32 %v1096, %v6054
    %6056 = vmatmul.bf16.gmra.mxu0 %v3512
    %v6057 = vpop.f32.mrf.mxu0
    %v6058 = vadd.f32 %v1096, %v6057
    %v6059 = vpop.f32.mrf.mxu0
    %v6060 = vadd.f32 %v1096, %v6059
    %6061 = vmatmul.bf16.gmra.mxu0 %v3513
    %v6062 = vpop.f32.mrf.mxu0
    %v6063 = vadd.f32 %v1096, %v6062
    %v6064 = vpop.f32.mrf.mxu0
    %v6065 = vadd.f32 %v1096, %v6064
    %6066 = vmatmul.bf16.gmra.mxu0 %v3514
    %v6067 = vpop.f32.mrf.mxu0
    %v6068 = vadd.f32 %v1096, %v6067
    %v6069 = vpop.f32.mrf.mxu0
    %v6070 = vadd.f32 %v1096, %v6069
    %6071 = vmatmul.bf16.gmra.mxu0 %v3515
    %v6072 = vpop.f32.mrf.mxu0
    %v6073 = vadd.f32 %v1096, %v6072
    %v6074 = vpop.f32.mrf.mxu0
    %v6075 = vadd.f32 %v1096, %v6074
    %6076 = vmatmul.bf16.gmra.mxu0 %v3516
    %v6077 = vpop.f32.mrf.mxu0
    %v6078 = vadd.f32 %v1096, %v6077
    %v6079 = vpop.f32.mrf.mxu0
    %v6080 = vadd.f32 %v1096, %v6079
    %6081 = vmatmul.bf16.gmra.mxu0 %v3517
    %v6082 = vpop.f32.mrf.mxu0
    %v6083 = vadd.f32 %v1096, %v6082
    %v6084 = vpop.f32.mrf.mxu0
    %v6085 = vadd.f32 %v1096, %v6084
    %6086 = vmatmul.bf16.gmra.mxu0 %v3518
    %v6087 = vpop.f32.mrf.mxu0
    %v6088 = vadd.f32 %v1096, %v6087
    %v6089 = vpop.f32.mrf.mxu0
    %v6090 = vadd.f32 %v1096, %v6089
    %6091 = vmatmul.bf16.gmra.mxu0 %v3519
    %v6092 = vpop.f32.mrf.mxu0
    %v6093 = vadd.f32 %v1096, %v6092
    %v6094 = vpop.f32.mrf.mxu0
    %v6095 = vadd.f32 %v1096, %v6094
    %6096 = vmatmul.bf16.gmra.mxu0 %v3520
    %v6097 = vpop.f32.mrf.mxu0
    %v6098 = vadd.f32 %v1096, %v6097
    %v6099 = vpop.f32.mrf.mxu0
    %v6100 = vadd.f32 %v1096, %v6099
    %6101 = vmatmul.bf16.gmra.mxu0 %v3521
    %v6102 = vpop.f32.mrf.mxu0
    %v6103 = vadd.f32 %v1096, %v6102
    %v6104 = vpop.f32.mrf.mxu0
    %v6105 = vadd.f32 %v1096, %v6104
    %6106 = vmatmul.bf16.gmra.mxu0 %v3522
    %v6107 = vpop.f32.mrf.mxu0
    %v6108 = vadd.f32 %v1096, %v6107
    %v6109 = vpop.f32.mrf.mxu0
    %v6110 = vadd.f32 %v1096, %v6109
    %6111 = vmatmul.bf16.gmra.mxu0 %v3523
    %v6112 = vpop.f32.mrf.mxu0
    %v6113 = vadd.f32 %v1096, %v6112
    %v6114 = vpop.f32.mrf.mxu0
    %v6115 = vadd.f32 %v1096, %v6114
    %6116 = vmatmul.bf16.gmra.mxu0 %v3524
    %v6117 = vpop.f32.mrf.mxu0
    %v6118 = vadd.f32 %v1096, %v6117
    %v6119 = vpop.f32.mrf.mxu0
    %v6120 = vadd.f32 %v1096, %v6119
    %6121 = vmatmul.bf16.gmra.mxu0 %v3525
    %v6122 = vpop.f32.mrf.mxu0
    %v6123 = vadd.f32 %v1096, %v6122
    %v6124 = vpop.f32.mrf.mxu0
    %v6125 = vadd.f32 %v1096, %v6124
    %6126 = vmatmul.bf16.gmra.mxu0 %v3526
    %v6127 = vpop.f32.mrf.mxu0
    %v6128 = vadd.f32 %v1096, %v6127
    %v6129 = vpop.f32.mrf.mxu0
    %v6130 = vadd.f32 %v1096, %v6129
    %6131 = vmatmul.bf16.gmra.mxu0 %v3527
    %v6132 = vpop.f32.mrf.mxu0
    %v6133 = vadd.f32 %v1096, %v6132
    %v6134 = vpop.f32.mrf.mxu0
    %v6135 = vadd.f32 %v1096, %v6134
    %6136 = vmatmul.bf16.gmra.mxu0 %v3528
    %v6137 = vpop.f32.mrf.mxu0
    %v6138 = vadd.f32 %v1096, %v6137
    %v6139 = vpop.f32.mrf.mxu0
    %v6140 = vadd.f32 %v1096, %v6139
    %6141 = vmatmul.bf16.gmra.mxu0 %v3529
    %v6142 = vpop.f32.mrf.mxu0
    %v6143 = vadd.f32 %v1096, %v6142
    %v6144 = vpop.f32.mrf.mxu0
    %v6145 = vadd.f32 %v1096, %v6144
    %6146 = vmatmul.bf16.gmra.mxu0 %v3530
    %v6147 = vpop.f32.mrf.mxu0
    %v6148 = vadd.f32 %v1096, %v6147
    %v6149 = vpop.f32.mrf.mxu0
    %v6150 = vadd.f32 %v1096, %v6149
    %6151 = vmatmul.bf16.gmra.mxu0 %v3531
    %v6152 = vpop.f32.mrf.mxu0
    %v6153 = vadd.f32 %v1096, %v6152
    %v6154 = vpop.f32.mrf.mxu0
    %v6155 = vadd.f32 %v1096, %v6154
    %6156 = vmatmul.bf16.gmra.mxu0 %v3532
    %v6157 = vpop.f32.mrf.mxu0
    %v6158 = vadd.f32 %v1096, %v6157
    %v6159 = vpop.f32.mrf.mxu0
    %v6160 = vadd.f32 %v1096, %v6159
    %6161 = vmatmul.bf16.gmra.mxu0 %v3533
    %v6162 = vpop.f32.mrf.mxu0
    %v6163 = vadd.f32 %v1096, %v6162
    %v6164 = vpop.f32.mrf.mxu0
    %v6165 = vadd.f32 %v1096, %v6164
    %6166 = vmatmul.bf16.gmra.mxu0 %v3534
    %v6167 = vpop.f32.mrf.mxu0
    %v6168 = vadd.f32 %v1096, %v6167
    %v6169 = vpop.f32.mrf.mxu0
    %v6170 = vadd.f32 %v1096, %v6169
    %6171 = vmatmul.bf16.gmra.mxu0 %v3535
    %v6172 = vpop.f32.mrf.mxu0
    %v6173 = vadd.f32 %v1096, %v6172
    %v6174 = vpop.f32.mrf.mxu0
    %v6175 = vadd.f32 %v1096, %v6174
    %6176 = vmatmul.bf16.gmra.mxu0 %v3536
    %v6177 = vpop.f32.mrf.mxu0
    %v6178 = vadd.f32 %v1096, %v6177
    %v6179 = vpop.f32.mrf.mxu0
    %v6180 = vadd.f32 %v1096, %v6179
    %6181 = vmatmul.bf16.gmra.mxu0 %v3537
    %v6182 = vpop.f32.mrf.mxu0
    %v6183 = vadd.f32 %v1096, %v6182
    %v6184 = vpop.f32.mrf.mxu0
    %v6185 = vadd.f32 %v1096, %v6184
    %6186 = vmatmul.bf16.gmra.mxu0 %v3538
    %v6187 = vpop.f32.mrf.mxu0
    %v6188 = vadd.f32 %v1096, %v6187
    %v6189 = vpop.f32.mrf.mxu0
    %v6190 = vadd.f32 %v1096, %v6189
    %6191 = vmatmul.bf16.gmra.mxu0 %v3539
    %v6192 = vpop.f32.mrf.mxu0
    %v6193 = vadd.f32 %v1096, %v6192
    %v6194 = vpop.f32.mrf.mxu0
    %v6195 = vadd.f32 %v1096, %v6194
    %6196 = vmatmul.bf16.gmra.mxu0 %v3540
    %v6197 = vpop.f32.mrf.mxu0
    %v6198 = vadd.f32 %v1096, %v6197
    %v6199 = vpop.f32.mrf.mxu0
    %v6200 = vadd.f32 %v1096, %v6199
    %6201 = vmatmul.bf16.gmra.mxu0 %v3541
    %v6202 = vpop.f32.mrf.mxu0
    %v6203 = vadd.f32 %v1096, %v6202
    %v6204 = vpop.f32.mrf.mxu0
    %v6205 = vadd.f32 %v1096, %v6204
    %6206 = vmatmul.bf16.gmra.mxu0 %v3542
    %v6207 = vpop.f32.mrf.mxu0
    %v6208 = vadd.f32 %v1096, %v6207
    %v6209 = vpop.f32.mrf.mxu0
    %v6210 = vadd.f32 %v1096, %v6209
    %6211 = vmatmul.bf16.gmra.mxu0 %v3543
    %v6212 = vpop.f32.mrf.mxu0
    %v6213 = vadd.f32 %v1096, %v6212
    %v6214 = vpop.f32.mrf.mxu0
    %v6215 = vadd.f32 %v1096, %v6214
    %6216 = vmatmul.bf16.gmra.mxu0 %v3544
    %v6217 = vpop.f32.mrf.mxu0
    %v6218 = vadd.f32 %v1096, %v6217
    %v6219 = vpop.f32.mrf.mxu0
    %v6220 = vadd.f32 %v1096, %v6219
    %6221 = vmatmul.bf16.gmra.mxu0 %v3545
    %v6222 = vpop.f32.mrf.mxu0
    %v6223 = vadd.f32 %v1096, %v6222
    %v6224 = vpop.f32.mrf.mxu0
    %v6225 = vadd.f32 %v1096, %v6224
    %6226 = vmatmul.bf16.gmra.mxu0 %v3546
    %v6227 = vpop.f32.mrf.mxu0
    %v6228 = vadd.f32 %v1096, %v6227
    %v6229 = vpop.f32.mrf.mxu0
    %v6230 = vadd.f32 %v1096, %v6229
    %6231 = vmatmul.bf16.gmra.mxu0 %v3547
    %v6232 = vpop.f32.mrf.mxu0
    %v6233 = vadd.f32 %v1096, %v6232
    %v6234 = vpop.f32.mrf.mxu0
    %v6235 = vadd.f32 %v1096, %v6234
    %6236 = vmatmul.bf16.gmra.mxu0 %v3548
    %v6237 = vpop.f32.mrf.mxu0
    %v6238 = vadd.f32 %v1096, %v6237
    %v6239 = vpop.f32.mrf.mxu0
    %v6240 = vadd.f32 %v1096, %v6239
    %6241 = vmatmul.bf16.gmra.mxu0 %v3549
    %v6242 = vpop.f32.mrf.mxu0
    %v6243 = vadd.f32 %v1096, %v6242
    %v6244 = vpop.f32.mrf.mxu0
    %v6245 = vadd.f32 %v1096, %v6244
    %6246 = vmatmul.bf16.gmra.mxu0 %v3550
    %v6247 = vpop.f32.mrf.mxu0
    %v6248 = vadd.f32 %v1096, %v6247
    %v6249 = vpop.f32.mrf.mxu0
    %v6250 = vadd.f32 %v1096, %v6249
    %6251 = vmatmul.bf16.gmra.mxu0 %v3551
    %v6252 = vpop.f32.mrf.mxu0
    %v6253 = vadd.f32 %v1096, %v6252
    %v6254 = vpop.f32.mrf.mxu0
    %v6255 = vadd.f32 %v1096, %v6254
    %6256 = vmatmul.bf16.gmra.mxu0 %v3552
    %v6257 = vpop.f32.mrf.mxu0
    %v6258 = vadd.f32 %v1096, %v6257
    %v6259 = vpop.f32.mrf.mxu0
    %v6260 = vadd.f32 %v1096, %v6259
    %6261 = vmatmul.bf16.gmra.mxu0 %v3553
    %v6262 = vpop.f32.mrf.mxu0
    %v6263 = vadd.f32 %v1096, %v6262
    %v6264 = vpop.f32.mrf.mxu0
    %v6265 = vadd.f32 %v1096, %v6264
    %6266 = vmatmul.bf16.gmra.mxu0 %v3554
    %v6267 = vpop.f32.mrf.mxu0
    %v6268 = vadd.f32 %v1096, %v6267
    %v6269 = vpop.f32.mrf.mxu0
    %v6270 = vadd.f32 %v1096, %v6269
    %6271 = vmatmul.bf16.gmra.mxu0 %v3555
    %v6272 = vpop.f32.mrf.mxu0
    %v6273 = vadd.f32 %v1096, %v6272
    %v6274 = vpop.f32.mrf.mxu0
    %v6275 = vadd.f32 %v1096, %v6274
    %6276 = vmatmul.bf16.gmra.mxu0 %v3556
    %v6277 = vpop.f32.mrf.mxu0
    %v6278 = vadd.f32 %v1096, %v6277
    %v6279 = vpop.f32.mrf.mxu0
    %v6280 = vadd.f32 %v1096, %v6279
    %6281 = vmatmul.bf16.gmra.mxu0 %v3557
    %v6282 = vpop.f32.mrf.mxu0
    %v6283 = vadd.f32 %v1096, %v6282
    %v6284 = vpop.f32.mrf.mxu0
    %v6285 = vadd.f32 %v1096, %v6284
    %6286 = vmatmul.bf16.gmra.mxu0 %v3558
    %v6287 = vpop.f32.mrf.mxu0
    %v6288 = vadd.f32 %v1096, %v6287
    %v6289 = vpop.f32.mrf.mxu0
    %v6290 = vadd.f32 %v1096, %v6289
    %6291 = vmatmul.bf16.gmra.mxu0 %v3559
    %v6292 = vpop.f32.mrf.mxu0
    %v6293 = vadd.f32 %v1096, %v6292
    %v6294 = vpop.f32.mrf.mxu0
    %v6295 = vadd.f32 %v1096, %v6294
    %6296 = vmatmul.bf16.gmra.mxu0 %v3560
    %v6297 = vpop.f32.mrf.mxu0
    %v6298 = vadd.f32 %v1096, %v6297
    %v6299 = vpop.f32.mrf.mxu0
    %v6300 = vadd.f32 %v1096, %v6299
    %6301 = vmatmul.bf16.gmra.mxu0 %v3561
    %v6302 = vpop.f32.mrf.mxu0
    %v6303 = vadd.f32 %v1096, %v6302
    %v6304 = vpop.f32.mrf.mxu0
    %v6305 = vadd.f32 %v1096, %v6304
    %6306 = vmatmul.bf16.gmra.mxu0 %v3562
    %v6307 = vpop.f32.mrf.mxu0
    %v6308 = vadd.f32 %v1096, %v6307
    %v6309 = vpop.f32.mrf.mxu0
    %v6310 = vadd.f32 %v1096, %v6309
    %6311 = vmatmul.bf16.gmra.mxu0 %v3563
    %v6312 = vpop.f32.mrf.mxu0
    %v6313 = vadd.f32 %v1096, %v6312
    %v6314 = vpop.f32.mrf.mxu0
    %v6315 = vadd.f32 %v1096, %v6314
    %6316 = vmatmul.bf16.gmra.mxu0 %v3564
    %v6317 = vpop.f32.mrf.mxu0
    %v6318 = vadd.f32 %v1096, %v6317
    %v6319 = vpop.f32.mrf.mxu0
    %v6320 = vadd.f32 %v1096, %v6319
    %6321 = vmatmul.bf16.gmra.mxu0 %v3565
    %v6322 = vpop.f32.mrf.mxu0
    %v6323 = vadd.f32 %v1096, %v6322
    %v6324 = vpop.f32.mrf.mxu0
    %v6325 = vadd.f32 %v1096, %v6324
    %6326 = vmatmul.bf16.gmra.mxu0 %v3566
    %v6327 = vpop.f32.mrf.mxu0
    %v6328 = vadd.f32 %v1096, %v6327
    %v6329 = vpop.f32.mrf.mxu0
    %v6330 = vadd.f32 %v1096, %v6329
    %6331 = vmatmul.bf16.gmra.mxu0 %v3567
    %v6332 = vpop.f32.mrf.mxu0
    %v6333 = vadd.f32 %v1096, %v6332
    %v6334 = vpop.f32.mrf.mxu0
    %v6335 = vadd.f32 %v1096, %v6334
    %6336 = vmatmul.bf16.gmra.mxu0 %v3568
    %v6337 = vpop.f32.mrf.mxu0
    %v6338 = vadd.f32 %v1096, %v6337
    %v6339 = vpop.f32.mrf.mxu0
    %v6340 = vadd.f32 %v1096, %v6339
    %6341 = vmatmul.bf16.gmra.mxu0 %v3569
    %v6342 = vpop.f32.mrf.mxu0
    %v6343 = vadd.f32 %v1096, %v6342
    %v6344 = vpop.f32.mrf.mxu0
    %v6345 = vadd.f32 %v1096, %v6344
    %6346 = vmatmul.bf16.gmra.mxu0 %v3570
    %v6347 = vpop.f32.mrf.mxu0
    %v6348 = vadd.f32 %v1096, %v6347
    %v6349 = vpop.f32.mrf.mxu0
    %v6350 = vadd.f32 %v1096, %v6349
    %6351 = vmatmul.bf16.gmra.mxu0 %v3571
    %v6352 = vpop.f32.mrf.mxu0
    %v6353 = vadd.f32 %v1096, %v6352
    %v6354 = vpop.f32.mrf.mxu0
    %v6355 = vadd.f32 %v1096, %v6354
    %6356 = vmatmul.bf16.gmra.mxu0 %v3572
    %v6357 = vpop.f32.mrf.mxu0
    %v6358 = vadd.f32 %v1096, %v6357
    %v6359 = vpop.f32.mrf.mxu0
    %v6360 = vadd.f32 %v1096, %v6359
    %6361 = vmatmul.bf16.gmra.mxu0 %v3573
    %v6362 = vpop.f32.mrf.mxu0
    %v6363 = vadd.f32 %v1096, %v6362
    %v6364 = vpop.f32.mrf.mxu0
    %v6365 = vadd.f32 %v1096, %v6364
    %6366 = vmatmul.bf16.gmra.mxu0 %v3574
    %v6367 = vpop.f32.mrf.mxu0
    %v6368 = vadd.f32 %v1096, %v6367
    %v6369 = vpop.f32.mrf.mxu0
    %v6370 = vadd.f32 %v1096, %v6369
    %6371 = vmatmul.bf16.gmra.mxu0 %v3575
    %v6372 = vpop.f32.mrf.mxu0
    %v6373 = vadd.f32 %v1096, %v6372
    %v6374 = vpop.f32.mrf.mxu0
    %v6375 = vadd.f32 %v1096, %v6374
    %6376 = vmatmul.bf16.gmra.mxu0 %v3576
    %v6377 = vpop.f32.mrf.mxu0
    %v6378 = vadd.f32 %v1096, %v6377
    %v6379 = vpop.f32.mrf.mxu0
    %v6380 = vadd.f32 %v1096, %v6379
    %6381 = vmatmul.bf16.gmra.mxu0 %v3577
    %v6382 = vpop.f32.mrf.mxu0
    %v6383 = vadd.f32 %v1096, %v6382
    %v6384 = vpop.f32.mrf.mxu0
    %v6385 = vadd.f32 %v1096, %v6384
    %6386 = vmatmul.bf16.gmra.mxu0 %v3578
    %v6387 = vpop.f32.mrf.mxu0
    %v6388 = vadd.f32 %v1096, %v6387
    %v6389 = vpop.f32.mrf.mxu0
    %v6390 = vadd.f32 %v1096, %v6389
    %6391 = vmatmul.bf16.gmra.mxu0 %v3579
    %v6392 = vpop.f32.mrf.mxu0
    %v6393 = vadd.f32 %v1096, %v6392
    %v6394 = vpop.f32.mrf.mxu0
    %v6395 = vadd.f32 %v1096, %v6394
    %6396 = vmatmul.bf16.gmra.mxu0 %v3580
    %v6397 = vpop.f32.mrf.mxu0
    %v6398 = vadd.f32 %v1096, %v6397
    %v6399 = vpop.f32.mrf.mxu0
    %v6400 = vadd.f32 %v1096, %v6399
    %6401 = vmatmul.bf16.gmra.mxu0 %v3581
    %v6402 = vpop.f32.mrf.mxu0
    %v6403 = vadd.f32 %v1096, %v6402
    %v6404 = vpop.f32.mrf.mxu0
    %v6405 = vadd.f32 %v1096, %v6404
    %6406 = vmatmul.bf16.gmra.mxu0 %v3582
    %v6407 = vpop.f32.mrf.mxu0
    %v6408 = vadd.f32 %v1096, %v6407
    %v6409 = vpop.f32.mrf.mxu0
    %v6410 = vadd.f32 %v1096, %v6409
    %6411 = vmatmul.bf16.gmra.mxu0 %v3583
    %v6412 = vpop.f32.mrf.mxu0
    %v6413 = vadd.f32 %v1096, %v6412
    %v6414 = vpop.f32.mrf.mxu0
    %v6415 = vadd.f32 %v1096, %v6414
    %6416 = vmatmul.bf16.gmra.mxu0 %v3584
    %v6417 = vpop.f32.mrf.mxu0
    %v6418 = vadd.f32 %v1096, %v6417
    %v6419 = vpop.f32.mrf.mxu0
    %v6420 = vadd.f32 %v1096, %v6419
    %6421 = vmatmul.bf16.gmra.mxu0 %v3585
    %v6422 = vpop.f32.mrf.mxu0
    %v6423 = vadd.f32 %v1096, %v6422
    %v6424 = vpop.f32.mrf.mxu0
    %v6425 = vadd.f32 %v1096, %v6424
    %6426 = vmatmul.bf16.gmra.mxu0 %v3586
    %v6427 = vpop.f32.mrf.mxu0
    %v6428 = vadd.f32 %v1096, %v6427
    %v6429 = vpop.f32.mrf.mxu0
    %v6430 = vadd.f32 %v1096, %v6429
    %6431 = vmatmul.bf16.gmra.mxu0 %v3587
    %v6432 = vpop.f32.mrf.mxu0
    %v6433 = vadd.f32 %v1096, %v6432
    %v6434 = vpop.f32.mrf.mxu0
    %v6435 = vadd.f32 %v1096, %v6434
    %6436 = vmatmul.bf16.gmra.mxu0 %v3588
    %v6437 = vpop.f32.mrf.mxu0
    %v6438 = vadd.f32 %v1096, %v6437
    %v6439 = vpop.f32.mrf.mxu0
    %v6440 = vadd.f32 %v1096, %v6439
    %6441 = vmatmul.bf16.gmra.mxu0 %v3589
    %v6442 = vpop.f32.mrf.mxu0
    %v6443 = vadd.f32 %v1096, %v6442
    %v6444 = vpop.f32.mrf.mxu0
    %v6445 = vadd.f32 %v1096, %v6444
    %6446 = vmatmul.bf16.gmra.mxu0 %v3590
    %v6447 = vpop.f32.mrf.mxu0
    %v6448 = vadd.f32 %v1096, %v6447
    %v6449 = vpop.f32.mrf.mxu0
    %v6450 = vadd.f32 %v1096, %v6449
    %6451 = vmatmul.bf16.gmra.mxu0 %v3591
    %v6452 = vpop.f32.mrf.mxu0
    %v6453 = vadd.f32 %v1096, %v6452
    %v6454 = vpop.f32.mrf.mxu0
    %v6455 = vadd.f32 %v1096, %v6454
    %6456 = vmatmul.bf16.gmra.mxu0 %v3592
    %v6457 = vpop.f32.mrf.mxu0
    %v6458 = vadd.f32 %v1096, %v6457
    %v6459 = vpop.f32.mrf.mxu0
    %v6460 = vadd.f32 %v1096, %v6459
    %6461 = vmatmul.bf16.gmra.mxu0 %v3593
    %v6462 = vpop.f32.mrf.mxu0
    %v6463 = vadd.f32 %v1096, %v6462
    %v6464 = vpop.f32.mrf.mxu0
    %v6465 = vadd.f32 %v1096, %v6464
    %6466 = vmatmul.bf16.gmra.mxu0 %v3594
    %v6467 = vpop.f32.mrf.mxu0
    %v6468 = vadd.f32 %v1096, %v6467
    %v6469 = vpop.f32.mrf.mxu0
    %v6470 = vadd.f32 %v1096, %v6469
    %6471 = vmatmul.bf16.gmra.mxu0 %v3595
    %v6472 = vpop.f32.mrf.mxu0
    %v6473 = vadd.f32 %v1096, %v6472
    %v6474 = vpop.f32.mrf.mxu0
    %v6475 = vadd.f32 %v1096, %v6474
    %6476 = vmatmul.bf16.gmra.mxu0 %v3596
    %v6477 = vpop.f32.mrf.mxu0
    %v6478 = vadd.f32 %v1096, %v6477
    %v6479 = vpop.f32.mrf.mxu0
    %v6480 = vadd.f32 %v1096, %v6479
    %6481 = vmatmul.bf16.gmra.mxu0 %v3597
    %v6482 = vpop.f32.mrf.mxu0
    %v6483 = vadd.f32 %v1096, %v6482
    %v6484 = vpop.f32.mrf.mxu0
    %v6485 = vadd.f32 %v1096, %v6484
    %6486 = vmatmul.bf16.gmra.mxu0 %v3598
    %v6487 = vpop.f32.mrf.mxu0
    %v6488 = vadd.f32 %v1096, %v6487
    %v6489 = vpop.f32.mrf.mxu0
    %v6490 = vadd.f32 %v1096, %v6489
    %6491 = vmatmul.bf16.gmra.mxu0 %v3599
    %v6492 = vpop.f32.mrf.mxu0
    %v6493 = vadd.f32 %v1096, %v6492
    %v6494 = vpop.f32.mrf.mxu0
    %v6495 = vadd.f32 %v1096, %v6494
    %6496 = vmatmul.bf16.gmra.mxu0 %v3600
    %v6497 = vpop.f32.mrf.mxu0
    %v6498 = vadd.f32 %v1096, %v6497
    %v6499 = vpop.f32.mrf.mxu0
    %v6500 = vadd.f32 %v1096, %v6499
    %6501 = vmatmul.bf16.gmra.mxu0 %v3601
    %v6502 = vpop.f32.mrf.mxu0
    %v6503 = vadd.f32 %v1096, %v6502
    %v6504 = vpop.f32.mrf.mxu0
    %v6505 = vadd.f32 %v1096, %v6504
    %6506 = vmatmul.bf16.gmra.mxu0 %v3602
    %v6507 = vpop.f32.mrf.mxu0
    %v6508 = vadd.f32 %v1096, %v6507
    %v6509 = vpop.f32.mrf.mxu0
    %v6510 = vadd.f32 %v1096, %v6509
    %6511 = vmatmul.bf16.gmra.mxu0 %v3603
    %v6512 = vpop.f32.mrf.mxu0
    %v6513 = vadd.f32 %v1096, %v6512
    %v6514 = vpop.f32.mrf.mxu0
    %v6515 = vadd.f32 %v1096, %v6514
    %6516 = vmatmul.bf16.gmra.mxu0 %v3604
    %v6517 = vpop.f32.mrf.mxu0
    %v6518 = vadd.f32 %v1096, %v6517
    %v6519 = vpop.f32.mrf.mxu0
    %v6520 = vadd.f32 %v1096, %v6519
    %6521 = vmatmul.bf16.gmra.mxu0 %v3605
    %v6522 = vpop.f32.mrf.mxu0
    %v6523 = vadd.f32 %v1096, %v6522
    %v6524 = vpop.f32.mrf.mxu0
    %v6525 = vadd.f32 %v1096, %v6524
    %6526 = vmatmul.bf16.gmra.mxu0 %v3606
    %v6527 = vpop.f32.mrf.mxu0
    %v6528 = vadd.f32 %v1096, %v6527
    %v6529 = vpop.f32.mrf.mxu0
    %v6530 = vadd.f32 %v1096, %v6529
    %6531 = vmatmul.bf16.gmra.mxu0 %v3607
    %v6532 = vpop.f32.mrf.mxu0
    %v6533 = vadd.f32 %v1096, %v6532
    %v6534 = vpop.f32.mrf.mxu0
    %v6535 = vadd.f32 %v1096, %v6534
    %6536 = vmatmul.bf16.gmra.mxu0 %v3608
    %v6537 = vpop.f32.mrf.mxu0
    %v6538 = vadd.f32 %v1096, %v6537
    %v6539 = vpop.f32.mrf.mxu0
    %v6540 = vadd.f32 %v1096, %v6539
    %6541 = vmatmul.bf16.gmra.mxu0 %v3609
    %v6542 = vpop.f32.mrf.mxu0
    %v6543 = vadd.f32 %v1096, %v6542
    %v6544 = vpop.f32.mrf.mxu0
    %v6545 = vadd.f32 %v1096, %v6544
    %6546 = vmatmul.bf16.gmra.mxu0 %v3610
    %v6547 = vpop.f32.mrf.mxu0
    %v6548 = vadd.f32 %v1096, %v6547
    %v6549 = vpop.f32.mrf.mxu0
    %v6550 = vadd.f32 %v1096, %v6549
    %6551 = vmatmul.bf16.gmra.mxu0 %v3611
    %v6552 = vpop.f32.mrf.mxu0
    %v6553 = vadd.f32 %v1096, %v6552
    %v6554 = vpop.f32.mrf.mxu0
    %v6555 = vadd.f32 %v1096, %v6554
    %6556 = vmatmul.bf16.gmra.mxu0 %v3612
    %v6557 = vpop.f32.mrf.mxu0
    %v6558 = vadd.f32 %v1096, %v6557
    %v6559 = vpop.f32.mrf.mxu0
    %v6560 = vadd.f32 %v1096, %v6559
    %6561 = vmatmul.bf16.gmra.mxu0 %v3613
    %v6562 = vpop.f32.mrf.mxu0
    %v6563 = vadd.f32 %v1096, %v6562
    %v6564 = vpop.f32.mrf.mxu0
    %v6565 = vadd.f32 %v1096, %v6564
    %6566 = vmatmul.bf16.gmra.mxu0 %v3614
    %v6567 = vpop.f32.mrf.mxu0
    %v6568 = vadd.f32 %v1096, %v6567
    %v6569 = vpop.f32.mrf.mxu0
    %v6570 = vadd.f32 %v1096, %v6569
    %6571 = vmatmul.bf16.gmra.mxu0 %v3615
    %v6572 = vpop.f32.mrf.mxu0
    %v6573 = vadd.f32 %v1096, %v6572
    %v6574 = vpop.f32.mrf.mxu0
    %v6575 = vadd.f32 %v1096, %v6574
    %6576 = vmatmul.bf16.gmra.mxu0 %v3616
    %v6577 = vpop.f32.mrf.mxu0
    %v6578 = vadd.f32 %v1096, %v6577
    %v6579 = vpop.f32.mrf.mxu0
    %v6580 = vadd.f32 %v1096, %v6579
    %6581 = vmatmul.bf16.gmra.mxu0 %v3617
    %v6582 = vpop.f32.mrf.mxu0
    %v6583 = vadd.f32 %v1096, %v6582
    %v6584 = vpop.f32.mrf.mxu0
    %v6585 = vadd.f32 %v1096, %v6584
    %6586 = vmatmul.bf16.gmra.mxu0 %v3618
    %v6587 = vpop.f32.mrf.mxu0
    %v6588 = vadd.f32 %v1096, %v6587
    %v6589 = vpop.f32.mrf.mxu0
    %v6590 = vadd.f32 %v1096, %v6589
    %6591 = vmatmul.bf16.gmra.mxu0 %v3619
    %v6592 = vpop.f32.mrf.mxu0
    %v6593 = vadd.f32 %v1096, %v6592
    %v6594 = vpop.f32.mrf.mxu0
    %v6595 = vadd.f32 %v1096, %v6594
    %6596 = vmatmul.bf16.gmra.mxu0 %v3620
    %v6597 = vpop.f32.mrf.mxu0
    %v6598 = vadd.f32 %v1096, %v6597
    %v6599 = vpop.f32.mrf.mxu0
    %v6600 = vadd.f32 %v1096, %v6599
    %6601 = vmatmul.bf16.gmra.mxu0 %v3621
    %v6602 = vpop.f32.mrf.mxu0
    %v6603 = vadd.f32 %v1096, %v6602
    %v6604 = vpop.f32.mrf.mxu0
    %v6605 = vadd.f32 %v1096, %v6604
    %6606 = vmatmul.bf16.gmra.mxu0 %v3622
    %v6607 = vpop.f32.mrf.mxu0
    %v6608 = vadd.f32 %v1096, %v6607
    %v6609 = vpop.f32.mrf.mxu0
    %v6610 = vadd.f32 %v1096, %v6609
    %6611 = vmatmul.bf16.gmra.mxu0 %v3623
    %v6612 = vpop.f32.mrf.mxu0
    %v6613 = vadd.f32 %v1096, %v6612
    %v6614 = vpop.f32.mrf.mxu0
    %v6615 = vadd.f32 %v1096, %v6614
    %6616 = vmatmul.bf16.gmra.mxu0 %v3624
    %v6617 = vpop.f32.mrf.mxu0
    %v6618 = vadd.f32 %v1096, %v6617
    %v6619 = vpop.f32.mrf.mxu0
    %v6620 = vadd.f32 %v1096, %v6619
    %6621 = vmatmul.bf16.gmra.mxu0 %v3625
    %v6622 = vpop.f32.mrf.mxu0
    %v6623 = vadd.f32 %v1096, %v6622
    %v6624 = vpop.f32.mrf.mxu0
    %v6625 = vadd.f32 %v1096, %v6624
    %6626 = vmatmul.bf16.gmra.mxu0 %v3626
    %v6627 = vpop.f32.mrf.mxu0
    %v6628 = vadd.f32 %v1096, %v6627
    %v6629 = vpop.f32.mrf.mxu0
    %v6630 = vadd.f32 %v1096, %v6629
    %6631 = vmatmul.bf16.gmra.mxu0 %v3627
    %v6632 = vpop.f32.mrf.mxu0
    %v6633 = vadd.f32 %v1096, %v6632
    %v6634 = vpop.f32.mrf.mxu0
    %v6635 = vadd.f32 %v1096, %v6634
    %6636 = vmatmul.bf16.gmra.mxu0 %v3628
    %v6637 = vpop.f32.mrf.mxu0
    %v6638 = vadd.f32 %v1096, %v6637
    %v6639 = vpop.f32.mrf.mxu0
    %v6640 = vadd.f32 %v1096, %v6639
    %6641 = vmatmul.bf16.gmra.mxu0 %v3629
    %v6642 = vpop.f32.mrf.mxu0
    %v6643 = vadd.f32 %v1096, %v6642
    %v6644 = vpop.f32.mrf.mxu0
    %v6645 = vadd.f32 %v1096, %v6644
    %6646 = vmatmul.bf16.gmra.mxu0 %v3630
    %v6647 = vpop.f32.mrf.mxu0
    %v6648 = vadd.f32 %v1096, %v6647
    %v6649 = vpop.f32.mrf.mxu0
    %v6650 = vadd.f32 %v1096, %v6649
    %6651 = vmatmul.bf16.gmra.mxu0 %v3631
    %v6652 = vpop.f32.mrf.mxu0
    %v6653 = vadd.f32 %v1096, %v6652
    %v6654 = vpop.f32.mrf.mxu0
    %v6655 = vadd.f32 %v1096, %v6654
    %6656 = vmatmul.bf16.gmra.mxu0 %v3632
    %v6657 = vpop.f32.mrf.mxu0
    %v6658 = vadd.f32 %v1096, %v6657
    %v6659 = vpop.f32.mrf.mxu0
    %v6660 = vadd.f32 %v1096, %v6659
    %6661 = vmatmul.bf16.gmra.mxu0 %v3633
    %v6662 = vpop.f32.mrf.mxu0
    %v6663 = vadd.f32 %v1096, %v6662
    %v6664 = vpop.f32.mrf.mxu0
    %v6665 = vadd.f32 %v1096, %v6664
    %6666 = vmatmul.bf16.gmra.mxu0 %v3634
    %v6667 = vpop.f32.mrf.mxu0
    %v6668 = vadd.f32 %v1096, %v6667
    %v6669 = vpop.f32.mrf.mxu0
    %v6670 = vadd.f32 %v1096, %v6669
    %6671 = vmatmul.bf16.gmra.mxu0 %v3635
    %v6672 = vpop.f32.mrf.mxu0
    %v6673 = vadd.f32 %v1096, %v6672
    %v6674 = vpop.f32.mrf.mxu0
    %v6675 = vadd.f32 %v1096, %v6674
    %6676 = vmatmul.bf16.gmra.mxu0 %v3636
    %v6677 = vpop.f32.mrf.mxu0
    %v6678 = vadd.f32 %v1096, %v6677
    %v6679 = vpop.f32.mrf.mxu0
    %v6680 = vadd.f32 %v1096, %v6679
    %6681 = vmatmul.bf16.gmra.mxu0 %v3637
    %v6682 = vpop.f32.mrf.mxu0
    %v6683 = vadd.f32 %v1096, %v6682
    %v6684 = vpop.f32.mrf.mxu0
    %v6685 = vadd.f32 %v1096, %v6684
    %6686 = vmatmul.bf16.gmra.mxu0 %v3638
    %v6687 = vpop.f32.mrf.mxu0
    %v6688 = vadd.f32 %v1096, %v6687
    %v6689 = vpop.f32.mrf.mxu0
    %v6690 = vadd.f32 %v1096, %v6689
    %6691 = vmatmul.bf16.gmra.mxu0 %v3639
    %v6692 = vpop.f32.mrf.mxu0
    %v6693 = vadd.f32 %v1096, %v6692
    %v6694 = vpop.f32.mrf.mxu0
    %v6695 = vadd.f32 %v1096, %v6694
    %6696 = vmatmul.bf16.gmra.mxu0 %v3640
    %v6697 = vpop.f32.mrf.mxu0
    %v6698 = vadd.f32 %v1096, %v6697
    %v6699 = vpop.f32.mrf.mxu0
    %v6700 = vadd.f32 %v1096, %v6699
    %6701 = vmatmul.bf16.gmra.mxu0 %v3641
    %v6702 = vpop.f32.mrf.mxu0
    %v6703 = vadd.f32 %v1096, %v6702
    %v6704 = vpop.f32.mrf.mxu0
    %v6705 = vadd.f32 %v1096, %v6704
    %6706 = vmatmul.bf16.gmra.mxu0 %v3642
    %v6707 = vpop.f32.mrf.mxu0
    %v6708 = vadd.f32 %v1096, %v6707
    %v6709 = vpop.f32.mrf.mxu0
    %v6710 = vadd.f32 %v1096, %v6709
    %6711 = vmatmul.bf16.gmra.mxu0 %v3643
    %v6712 = vpop.f32.mrf.mxu0
    %v6713 = vadd.f32 %v1096, %v6712
    %v6714 = vpop.f32.mrf.mxu0
    %v6715 = vadd.f32 %v1096, %v6714
    %6716 = vmatmul.bf16.gmra.mxu0 %v3644
    %v6717 = vpop.f32.mrf.mxu0
    %v6718 = vadd.f32 %v1096, %v6717
    %v6719 = vpop.f32.mrf.mxu0
    %v6720 = vadd.f32 %v1096, %v6719
    %6721 = vmatmul.bf16.gmra.mxu0 %v3645
    %v6722 = vpop.f32.mrf.mxu0
    %v6723 = vadd.f32 %v1096, %v6722
    %v6724 = vpop.f32.mrf.mxu0
    %v6725 = vadd.f32 %v1096, %v6724
    %6726 = vmatmul.bf16.gmra.mxu0 %v3646
    %v6727 = vpop.f32.mrf.mxu0
    %v6728 = vadd.f32 %v1096, %v6727
    %v6729 = vpop.f32.mrf.mxu0
    %v6730 = vadd.f32 %v1096, %v6729
    %6731 = vmatmul.bf16.gmra.mxu0 %v3647
    %v6732 = vpop.f32.mrf.mxu0
    %v6733 = vadd.f32 %v1096, %v6732
    %v6734 = vpop.f32.mrf.mxu0
    %v6735 = vadd.f32 %v1096, %v6734
    %6736 = vmatmul.bf16.gmra.mxu0 %v3648
    %v6737 = vpop.f32.mrf.mxu0
    %v6738 = vadd.f32 %v1096, %v6737
    %v6739 = vpop.f32.mrf.mxu0
    %v6740 = vadd.f32 %v1096, %v6739
    %6741 = vmatmul.bf16.gmra.mxu0 %v3649
    %v6742 = vpop.f32.mrf.mxu0
    %v6743 = vadd.f32 %v1096, %v6742
    %v6744 = vpop.f32.mrf.mxu0
    %v6745 = vadd.f32 %v1096, %v6744
    %6746 = vmatmul.bf16.gmra.mxu0 %v3650
    %v6747 = vpop.f32.mrf.mxu0
    %v6748 = vadd.f32 %v1096, %v6747
    %v6749 = vpop.f32.mrf.mxu0
    %v6750 = vadd.f32 %v1096, %v6749
    %6751 = vmatmul.bf16.gmra.mxu0 %v3651
    %v6752 = vpop.f32.mrf.mxu0
    %v6753 = vadd.f32 %v1096, %v6752
    %v6754 = vpop.f32.mrf.mxu0
    %v6755 = vadd.f32 %v1096, %v6754
    %6756 = vmatmul.bf16.gmra.mxu0 %v3652
    %v6757 = vpop.f32.mrf.mxu0
    %v6758 = vadd.f32 %v1096, %v6757
    %v6759 = vpop.f32.mrf.mxu0
    %v6760 = vadd.f32 %v1096, %v6759
    %6761 = vmatmul.bf16.gmra.mxu0 %v3653
    %v6762 = vpop.f32.mrf.mxu0
    %v6763 = vadd.f32 %v1096, %v6762
    %v6764 = vpop.f32.mrf.mxu0
    %v6765 = vadd.f32 %v1096, %v6764
    %6766 = vmatmul.bf16.gmra.mxu0 %v3654
    %v6767 = vpop.f32.mrf.mxu0
    %v6768 = vadd.f32 %v1096, %v6767
    %v6769 = vpop.f32.mrf.mxu0
    %v6770 = vadd.f32 %v1096, %v6769
    %6771 = vmatmul.bf16.gmra.mxu0 %v3655
    %v6772 = vpop.f32.mrf.mxu0
    %v6773 = vadd.f32 %v1096, %v6772
    %v6774 = vpop.f32.mrf.mxu0
    %v6775 = vadd.f32 %v1096, %v6774
    %6776 = vmatmul.bf16.gmra.mxu0 %v3656
    %v6777 = vpop.f32.mrf.mxu0
    %v6778 = vadd.f32 %v1096, %v6777
    %v6779 = vpop.f32.mrf.mxu0
    %v6780 = vadd.f32 %v1096, %v6779
    %6781 = vmatmul.bf16.gmra.mxu0 %v3657
    %v6782 = vpop.f32.mrf.mxu0
    %v6783 = vadd.f32 %v1096, %v6782
    %v6784 = vpop.f32.mrf.mxu0
    %v6785 = vadd.f32 %v1096, %v6784
    %6786 = vdwg.mxu0
    %v6787 = vmax.f32 %v4228, 0.0
    %v6788 = vmax.f32 %v4230, 0.0
    %v6789 = vmax.f32 %v4233, 0.0
    %v6790 = vmax.f32 %v4235, 0.0
    %v6791 = vmax.f32 %v4238, 0.0
    %v6792 = vmax.f32 %v4240, 0.0
    %v6793 = vmax.f32 %v4243, 0.0
    %v6794 = vmax.f32 %v4245, 0.0
    %v6795 = vmax.f32 %v4248, 0.0
    %v6796 = vmax.f32 %v4250, 0.0
    %v6797 = vmax.f32 %v4253, 0.0
    %v6798 = vmax.f32 %v4255, 0.0
    %v6799 = vmax.f32 %v4258, 0.0
    %v6800 = vmax.f32 %v4260, 0.0
    %v6801 = vmax.f32 %v4263, 0.0
    %v6802 = vmax.f32 %v4265, 0.0
    %v6803 = vmax.f32 %v4268, 0.0
    %v6804 = vmax.f32 %v4270, 0.0
    %v6805 = vmax.f32 %v4273, 0.0
    %v6806 = vmax.f32 %v4275, 0.0
    %v6807 = vmax.f32 %v4278, 0.0
    %v6808 = vmax.f32 %v4280, 0.0
    %v6809 = vmax.f32 %v4283, 0.0
    %v6810 = vmax.f32 %v4285, 0.0
    %v6811 = vmax.f32 %v4288, 0.0
    %v6812 = vmax.f32 %v4290, 0.0
    %v6813 = vmax.f32 %v4293, 0.0
    %v6814 = vmax.f32 %v4295, 0.0
    %v6815 = vmax.f32 %v4298, 0.0
    %v6816 = vmax.f32 %v4300, 0.0
    %v6817 = vmax.f32 %v4303, 0.0
    %v6818 = vmax.f32 %v4305, 0.0
    %v6819 = vmax.f32 %v4308, 0.0
    %v6820 = vmax.f32 %v4310, 0.0
    %v6821 = vmax.f32 %v4313, 0.0
    %v6822 = vmax.f32 %v4315, 0.0
    %v6823 = vmax.f32 %v4318, 0.0
    %v6824 = vmax.f32 %v4320, 0.0
    %v6825 = vmax.f32 %v4323, 0.0
    %v6826 = vmax.f32 %v4325, 0.0
    %v6827 = vmax.f32 %v4328, 0.0
    %v6828 = vmax.f32 %v4330, 0.0
    %v6829 = vmax.f32 %v4333, 0.0
    %v6830 = vmax.f32 %v4335, 0.0
    %v6831 = vmax.f32 %v4338, 0.0
    %v6832 = vmax.f32 %v4340, 0.0
    %v6833 = vmax.f32 %v4343, 0.0
    %v6834 = vmax.f32 %v4345, 0.0
    %v6835 = vmax.f32 %v4348, 0.0
    %v6836 = vmax.f32 %v4350, 0.0
    %v6837 = vmax.f32 %v4353, 0.0
    %v6838 = vmax.f32 %v4355, 0.0
    %v6839 = vmax.f32 %v4358, 0.0
    %v6840 = vmax.f32 %v4360, 0.0
    %v6841 = vmax.f32 %v4363, 0.0
    %v6842 = vmax.f32 %v4365, 0.0
    %v6843 = vmax.f32 %v4368, 0.0
    %v6844 = vmax.f32 %v4370, 0.0
    %v6845 = vmax.f32 %v4373, 0.0
    %v6846 = vmax.f32 %v4375, 0.0
    %v6847 = vmax.f32 %v4378, 0.0
    %v6848 = vmax.f32 %v4380, 0.0
    %v6849 = vmax.f32 %v4383, 0.0
    %v6850 = vmax.f32 %v4385, 0.0
    %v6851 = vmax.f32 %v4388, 0.0
    %v6852 = vmax.f32 %v4390, 0.0
    %v6853 = vmax.f32 %v4393, 0.0
    %v6854 = vmax.f32 %v4395, 0.0
    %v6855 = vmax.f32 %v4398, 0.0
    %v6856 = vmax.f32 %v4400, 0.0
    %v6857 = vmax.f32 %v4403, 0.0
    %v6858 = vmax.f32 %v4405, 0.0
    %v6859 = vmax.f32 %v4408, 0.0
    %v6860 = vmax.f32 %v4410, 0.0
    %v6861 = vmax.f32 %v4413, 0.0
    %v6862 = vmax.f32 %v4415, 0.0
    %v6863 = vmax.f32 %v4418, 0.0
    %v6864 = vmax.f32 %v4420, 0.0
    %v6865 = vmax.f32 %v4423, 0.0
    %v6866 = vmax.f32 %v4425, 0.0
    %v6867 = vmax.f32 %v4428, 0.0
    %v6868 = vmax.f32 %v4430, 0.0
    %v6869 = vmax.f32 %v4433, 0.0
    %v6870 = vmax.f32 %v4435, 0.0
    %v6871 = vmax.f32 %v4438, 0.0
    %v6872 = vmax.f32 %v4440, 0.0
    %v6873 = vmax.f32 %v4443, 0.0
    %v6874 = vmax.f32 %v4445, 0.0
    %v6875 = vmax.f32 %v4448, 0.0
    %v6876 = vmax.f32 %v4450, 0.0
    %v6877 = vmax.f32 %v4453, 0.0
    %v6878 = vmax.f32 %v4455, 0.0
    %v6879 = vmax.f32 %v4458, 0.0
    %v6880 = vmax.f32 %v4460, 0.0
    %v6881 = vmax.f32 %v4463, 0.0
    %v6882 = vmax.f32 %v4465, 0.0
    %v6883 = vmax.f32 %v4468, 0.0
    %v6884 = vmax.f32 %v4470, 0.0
    %v6885 = vmax.f32 %v4473, 0.0
    %v6886 = vmax.f32 %v4475, 0.0
    %v6887 = vmax.f32 %v4478, 0.0
    %v6888 = vmax.f32 %v4480, 0.0
    %v6889 = vmax.f32 %v4483, 0.0
    %v6890 = vmax.f32 %v4485, 0.0
    %v6891 = vmax.f32 %v4488, 0.0
    %v6892 = vmax.f32 %v4490, 0.0
    %v6893 = vmax.f32 %v4493, 0.0
    %v6894 = vmax.f32 %v4495, 0.0
    %v6895 = vmax.f32 %v4498, 0.0
    %v6896 = vmax.f32 %v4500, 0.0
    %v6897 = vmax.f32 %v4503, 0.0
    %v6898 = vmax.f32 %v4505, 0.0
    %v6899 = vmax.f32 %v4508, 0.0
    %v6900 = vmax.f32 %v4510, 0.0
    %v6901 = vmax.f32 %v4513, 0.0
    %v6902 = vmax.f32 %v4515, 0.0
    %v6903 = vmax.f32 %v4518, 0.0
    %v6904 = vmax.f32 %v4520, 0.0
    %v6905 = vmax.f32 %v4523, 0.0
    %v6906 = vmax.f32 %v4525, 0.0
    %v6907 = vmax.f32 %v4528, 0.0
    %v6908 = vmax.f32 %v4530, 0.0
    %v6909 = vmax.f32 %v4533, 0.0
    %v6910 = vmax.f32 %v4535, 0.0
    %v6911 = vmax.f32 %v4538, 0.0
    %v6912 = vmax.f32 %v4540, 0.0
    %v6913 = vmax.f32 %v4543, 0.0
    %v6914 = vmax.f32 %v4545, 0.0
    %v6915 = vmax.f32 %v4548, 0.0
    %v6916 = vmax.f32 %v4550, 0.0
    %v6917 = vmax.f32 %v4553, 0.0
    %v6918 = vmax.f32 %v4555, 0.0
    %v6919 = vmax.f32 %v4558, 0.0
    %v6920 = vmax.f32 %v4560, 0.0
    %v6921 = vmax.f32 %v4563, 0.0
    %v6922 = vmax.f32 %v4565, 0.0
    %v6923 = vmax.f32 %v4568, 0.0
    %v6924 = vmax.f32 %v4570, 0.0
    %v6925 = vmax.f32 %v4573, 0.0
    %v6926 = vmax.f32 %v4575, 0.0
    %v6927 = vmax.f32 %v4578, 0.0
    %v6928 = vmax.f32 %v4580, 0.0
    %v6929 = vmax.f32 %v4583, 0.0
    %v6930 = vmax.f32 %v4585, 0.0
    %v6931 = vmax.f32 %v4588, 0.0
    %v6932 = vmax.f32 %v4590, 0.0
    %v6933 = vmax.f32 %v4593, 0.0
    %v6934 = vmax.f32 %v4595, 0.0
    %v6935 = vmax.f32 %v4598, 0.0
    %v6936 = vmax.f32 %v4600, 0.0
    %v6937 = vmax.f32 %v4603, 0.0
    %v6938 = vmax.f32 %v4605, 0.0
    %v6939 = vmax.f32 %v4608, 0.0
    %v6940 = vmax.f32 %v4610, 0.0
    %v6941 = vmax.f32 %v4613, 0.0
    %v6942 = vmax.f32 %v4615, 0.0
    %v6943 = vmax.f32 %v4618, 0.0
    %v6944 = vmax.f32 %v4620, 0.0
    %v6945 = vmax.f32 %v4623, 0.0
    %v6946 = vmax.f32 %v4625, 0.0
    %v6947 = vmax.f32 %v4628, 0.0
    %v6948 = vmax.f32 %v4630, 0.0
    %v6949 = vmax.f32 %v4633, 0.0
    %v6950 = vmax.f32 %v4635, 0.0
    %v6951 = vmax.f32 %v4638, 0.0
    %v6952 = vmax.f32 %v4640, 0.0
    %v6953 = vmax.f32 %v4643, 0.0
    %v6954 = vmax.f32 %v4645, 0.0
    %v6955 = vmax.f32 %v4648, 0.0
    %v6956 = vmax.f32 %v4650, 0.0
    %v6957 = vmax.f32 %v4653, 0.0
    %v6958 = vmax.f32 %v4655, 0.0
    %v6959 = vmax.f32 %v4658, 0.0
    %v6960 = vmax.f32 %v4660, 0.0
    %v6961 = vmax.f32 %v4663, 0.0
    %v6962 = vmax.f32 %v4665, 0.0
    %v6963 = vmax.f32 %v4668, 0.0
    %v6964 = vmax.f32 %v4670, 0.0
    %v6965 = vmax.f32 %v4673, 0.0
    %v6966 = vmax.f32 %v4675, 0.0
    %v6967 = vmax.f32 %v4678, 0.0
    %v6968 = vmax.f32 %v4680, 0.0
    %v6969 = vmax.f32 %v4683, 0.0
    %v6970 = vmax.f32 %v4685, 0.0
    %v6971 = vmax.f32 %v4688, 0.0
    %v6972 = vmax.f32 %v4690, 0.0
    %v6973 = vmax.f32 %v4693, 0.0
    %v6974 = vmax.f32 %v4695, 0.0
    %v6975 = vmax.f32 %v4698, 0.0
    %v6976 = vmax.f32 %v4700, 0.0
    %v6977 = vmax.f32 %v4703, 0.0
    %v6978 = vmax.f32 %v4705, 0.0
    %v6979 = vmax.f32 %v4708, 0.0
    %v6980 = vmax.f32 %v4710, 0.0
    %v6981 = vmax.f32 %v4713, 0.0
    %v6982 = vmax.f32 %v4715, 0.0
    %v6983 = vmax.f32 %v4718, 0.0
    %v6984 = vmax.f32 %v4720, 0.0
    %v6985 = vmax.f32 %v4723, 0.0
    %v6986 = vmax.f32 %v4725, 0.0
    %v6987 = vmax.f32 %v4728, 0.0
    %v6988 = vmax.f32 %v4730, 0.0
    %v6989 = vmax.f32 %v4733, 0.0
    %v6990 = vmax.f32 %v4735, 0.0
    %v6991 = vmax.f32 %v4738, 0.0
    %v6992 = vmax.f32 %v4740, 0.0
    %v6993 = vmax.f32 %v4743, 0.0
    %v6994 = vmax.f32 %v4745, 0.0
    %v6995 = vmax.f32 %v4748, 0.0
    %v6996 = vmax.f32 %v4750, 0.0
    %v6997 = vmax.f32 %v4753, 0.0
    %v6998 = vmax.f32 %v4755, 0.0
    %v6999 = vmax.f32 %v4758, 0.0
    %v7000 = vmax.f32 %v4760, 0.0
    %v7001 = vmax.f32 %v4763, 0.0
    %v7002 = vmax.f32 %v4765, 0.0
    %v7003 = vmax.f32 %v4768, 0.0
    %v7004 = vmax.f32 %v4770, 0.0
    %v7005 = vmax.f32 %v4773, 0.0
    %v7006 = vmax.f32 %v4775, 0.0
    %v7007 = vmax.f32 %v4778, 0.0
    %v7008 = vmax.f32 %v4780, 0.0
    %v7009 = vmax.f32 %v4783, 0.0
    %v7010 = vmax.f32 %v4785, 0.0
    %v7011 = vmax.f32 %v4788, 0.0
    %v7012 = vmax.f32 %v4790, 0.0
    %v7013 = vmax.f32 %v4793, 0.0
    %v7014 = vmax.f32 %v4795, 0.0
    %v7015 = vmax.f32 %v4798, 0.0
    %v7016 = vmax.f32 %v4800, 0.0
    %v7017 = vmax.f32 %v4803, 0.0
    %v7018 = vmax.f32 %v4805, 0.0
    %v7019 = vmax.f32 %v4808, 0.0
    %v7020 = vmax.f32 %v4810, 0.0
    %v7021 = vmax.f32 %v4813, 0.0
    %v7022 = vmax.f32 %v4815, 0.0
    %v7023 = vmax.f32 %v4818, 0.0
    %v7024 = vmax.f32 %v4820, 0.0
    %v7025 = vmax.f32 %v4823, 0.0
    %v7026 = vmax.f32 %v4825, 0.0
    %v7027 = vmax.f32 %v4828, 0.0
    %v7028 = vmax.f32 %v4830, 0.0
    %v7029 = vmax.f32 %v4833, 0.0
    %v7030 = vmax.f32 %v4835, 0.0
    %v7031 = vmax.f32 %v4838, 0.0
    %v7032 = vmax.f32 %v4840, 0.0
    %v7033 = vmax.f32 %v4843, 0.0
    %v7034 = vmax.f32 %v4845, 0.0
    %v7035 = vmax.f32 %v4848, 0.0
    %v7036 = vmax.f32 %v4850, 0.0
    %v7037 = vmax.f32 %v4853, 0.0
    %v7038 = vmax.f32 %v4855, 0.0
    %v7039 = vmax.f32 %v4858, 0.0
    %v7040 = vmax.f32 %v4860, 0.0
    %v7041 = vmax.f32 %v4863, 0.0
    %v7042 = vmax.f32 %v4865, 0.0
    %v7043 = vmax.f32 %v4868, 0.0
    %v7044 = vmax.f32 %v4870, 0.0
    %v7045 = vmax.f32 %v4873, 0.0
    %v7046 = vmax.f32 %v4875, 0.0
    %v7047 = vmax.f32 %v4878, 0.0
    %v7048 = vmax.f32 %v4880, 0.0
    %v7049 = vmax.f32 %v4883, 0.0
    %v7050 = vmax.f32 %v4885, 0.0
    %v7051 = vmax.f32 %v4888, 0.0
    %v7052 = vmax.f32 %v4890, 0.0
    %v7053 = vmax.f32 %v4893, 0.0
    %v7054 = vmax.f32 %v4895, 0.0
    %v7055 = vmax.f32 %v4898, 0.0
    %v7056 = vmax.f32 %v4900, 0.0
    %v7057 = vmax.f32 %v4903, 0.0
    %v7058 = vmax.f32 %v4905, 0.0
    %v7059 = vmax.f32 %v4908, 0.0
    %v7060 = vmax.f32 %v4910, 0.0
    %v7061 = vmax.f32 %v4913, 0.0
    %v7062 = vmax.f32 %v4915, 0.0
    %v7063 = vmax.f32 %v4918, 0.0
    %v7064 = vmax.f32 %v4920, 0.0
    %v7065 = vmax.f32 %v4923, 0.0
    %v7066 = vmax.f32 %v4925, 0.0
    %v7067 = vmax.f32 %v4928, 0.0
    %v7068 = vmax.f32 %v4930, 0.0
    %v7069 = vmax.f32 %v4933, 0.0
    %v7070 = vmax.f32 %v4935, 0.0
    %v7071 = vmax.f32 %v4938, 0.0
    %v7072 = vmax.f32 %v4940, 0.0
    %v7073 = vmax.f32 %v4943, 0.0
    %v7074 = vmax.f32 %v4945, 0.0
    %v7075 = vmax.f32 %v4948, 0.0
    %v7076 = vmax.f32 %v4950, 0.0
    %v7077 = vmax.f32 %v4953, 0.0
    %v7078 = vmax.f32 %v4955, 0.0
    %v7079 = vmax.f32 %v4958, 0.0
    %v7080 = vmax.f32 %v4960, 0.0
    %v7081 = vmax.f32 %v4963, 0.0
    %v7082 = vmax.f32 %v4965, 0.0
    %v7083 = vmax.f32 %v4968, 0.0
    %v7084 = vmax.f32 %v4970, 0.0
    %v7085 = vmax.f32 %v4973, 0.0
    %v7086 = vmax.f32 %v4975, 0.0
    %v7087 = vmax.f32 %v4978, 0.0
    %v7088 = vmax.f32 %v4980, 0.0
    %v7089 = vmax.f32 %v4983, 0.0
    %v7090 = vmax.f32 %v4985, 0.0
    %v7091 = vmax.f32 %v4988, 0.0
    %v7092 = vmax.f32 %v4990, 0.0
    %v7093 = vmax.f32 %v4993, 0.0
    %v7094 = vmax.f32 %v4995, 0.0
    %v7095 = vmax.f32 %v4998, 0.0
    %v7096 = vmax.f32 %v5000, 0.0
    %v7097 = vmax.f32 %v5003, 0.0
    %v7098 = vmax.f32 %v5005, 0.0
    %v7099 = vmax.f32 %v5008, 0.0
    %v7100 = vmax.f32 %v5010, 0.0
    %v7101 = vmax.f32 %v5013, 0.0
    %v7102 = vmax.f32 %v5015, 0.0
    %v7103 = vmax.f32 %v5018, 0.0
    %v7104 = vmax.f32 %v5020, 0.0
    %v7105 = vmax.f32 %v5023, 0.0
    %v7106 = vmax.f32 %v5025, 0.0
    %v7107 = vmax.f32 %v5028, 0.0
    %v7108 = vmax.f32 %v5030, 0.0
    %v7109 = vmax.f32 %v5033, 0.0
    %v7110 = vmax.f32 %v5035, 0.0
    %v7111 = vmax.f32 %v5038, 0.0
    %v7112 = vmax.f32 %v5040, 0.0
    %v7113 = vmax.f32 %v5043, 0.0
    %v7114 = vmax.f32 %v5045, 0.0
    %v7115 = vmax.f32 %v5048, 0.0
    %v7116 = vmax.f32 %v5050, 0.0
    %v7117 = vmax.f32 %v5053, 0.0
    %v7118 = vmax.f32 %v5055, 0.0
    %v7119 = vmax.f32 %v5058, 0.0
    %v7120 = vmax.f32 %v5060, 0.0
    %v7121 = vmax.f32 %v5063, 0.0
    %v7122 = vmax.f32 %v5065, 0.0
    %v7123 = vmax.f32 %v5068, 0.0
    %v7124 = vmax.f32 %v5070, 0.0
    %v7125 = vmax.f32 %v5073, 0.0
    %v7126 = vmax.f32 %v5075, 0.0
    %v7127 = vmax.f32 %v5078, 0.0
    %v7128 = vmax.f32 %v5080, 0.0
    %v7129 = vmax.f32 %v5083, 0.0
    %v7130 = vmax.f32 %v5085, 0.0
    %v7131 = vmax.f32 %v5088, 0.0
    %v7132 = vmax.f32 %v5090, 0.0
    %v7133 = vmax.f32 %v5093, 0.0
    %v7134 = vmax.f32 %v5095, 0.0
    %v7135 = vmax.f32 %v5098, 0.0
    %v7136 = vmax.f32 %v5100, 0.0
    %v7137 = vmax.f32 %v5103, 0.0
    %v7138 = vmax.f32 %v5105, 0.0
    %v7139 = vmax.f32 %v5108, 0.0
    %v7140 = vmax.f32 %v5110, 0.0
    %v7141 = vmax.f32 %v5113, 0.0
    %v7142 = vmax.f32 %v5115, 0.0
    %v7143 = vmax.f32 %v5118, 0.0
    %v7144 = vmax.f32 %v5120, 0.0
    %v7145 = vmax.f32 %v5123, 0.0
    %v7146 = vmax.f32 %v5125, 0.0
    %v7147 = vmax.f32 %v5128, 0.0
    %v7148 = vmax.f32 %v5130, 0.0
    %v7149 = vmax.f32 %v5133, 0.0
    %v7150 = vmax.f32 %v5135, 0.0
    %v7151 = vmax.f32 %v5138, 0.0
    %v7152 = vmax.f32 %v5140, 0.0
    %v7153 = vmax.f32 %v5143, 0.0
    %v7154 = vmax.f32 %v5145, 0.0
    %v7155 = vmax.f32 %v5148, 0.0
    %v7156 = vmax.f32 %v5150, 0.0
    %v7157 = vmax.f32 %v5153, 0.0
    %v7158 = vmax.f32 %v5155, 0.0
    %v7159 = vmax.f32 %v5158, 0.0
    %v7160 = vmax.f32 %v5160, 0.0
    %v7161 = vmax.f32 %v5163, 0.0
    %v7162 = vmax.f32 %v5165, 0.0
    %v7163 = vmax.f32 %v5168, 0.0
    %v7164 = vmax.f32 %v5170, 0.0
    %v7165 = vmax.f32 %v5173, 0.0
    %v7166 = vmax.f32 %v5175, 0.0
    %v7167 = vmax.f32 %v5178, 0.0
    %v7168 = vmax.f32 %v5180, 0.0
    %v7169 = vmax.f32 %v5183, 0.0
    %v7170 = vmax.f32 %v5185, 0.0
    %v7171 = vmax.f32 %v5188, 0.0
    %v7172 = vmax.f32 %v5190, 0.0
    %v7173 = vmax.f32 %v5193, 0.0
    %v7174 = vmax.f32 %v5195, 0.0
    %v7175 = vmax.f32 %v5198, 0.0
    %v7176 = vmax.f32 %v5200, 0.0
    %v7177 = vmax.f32 %v5203, 0.0
    %v7178 = vmax.f32 %v5205, 0.0
    %v7179 = vmax.f32 %v5208, 0.0
    %v7180 = vmax.f32 %v5210, 0.0
    %v7181 = vmax.f32 %v5213, 0.0
    %v7182 = vmax.f32 %v5215, 0.0
    %v7183 = vmax.f32 %v5218, 0.0
    %v7184 = vmax.f32 %v5220, 0.0
    %v7185 = vmax.f32 %v5223, 0.0
    %v7186 = vmax.f32 %v5225, 0.0
    %v7187 = vmax.f32 %v5228, 0.0
    %v7188 = vmax.f32 %v5230, 0.0
    %v7189 = vmax.f32 %v5233, 0.0
    %v7190 = vmax.f32 %v5235, 0.0
    %v7191 = vmax.f32 %v5238, 0.0
    %v7192 = vmax.f32 %v5240, 0.0
    %v7193 = vmax.f32 %v5243, 0.0
    %v7194 = vmax.f32 %v5245, 0.0
    %v7195 = vmax.f32 %v5248, 0.0
    %v7196 = vmax.f32 %v5250, 0.0
    %v7197 = vmax.f32 %v5253, 0.0
    %v7198 = vmax.f32 %v5255, 0.0
    %v7199 = vmax.f32 %v5258, 0.0
    %v7200 = vmax.f32 %v5260, 0.0
    %v7201 = vmax.f32 %v5263, 0.0
    %v7202 = vmax.f32 %v5265, 0.0
    %v7203 = vmax.f32 %v5268, 0.0
    %v7204 = vmax.f32 %v5270, 0.0
    %v7205 = vmax.f32 %v5273, 0.0
    %v7206 = vmax.f32 %v5275, 0.0
    %v7207 = vmax.f32 %v5278, 0.0
    %v7208 = vmax.f32 %v5280, 0.0
    %v7209 = vmax.f32 %v5283, 0.0
    %v7210 = vmax.f32 %v5285, 0.0
    %v7211 = vmax.f32 %v5288, 0.0
    %v7212 = vmax.f32 %v5290, 0.0
    %v7213 = vmax.f32 %v5293, 0.0
    %v7214 = vmax.f32 %v5295, 0.0
    %v7215 = vmax.f32 %v5298, 0.0
    %v7216 = vmax.f32 %v5300, 0.0
    %v7217 = vmax.f32 %v5303, 0.0
    %v7218 = vmax.f32 %v5305, 0.0
    %v7219 = vmax.f32 %v5308, 0.0
    %v7220 = vmax.f32 %v5310, 0.0
    %v7221 = vmax.f32 %v5313, 0.0
    %v7222 = vmax.f32 %v5315, 0.0
    %v7223 = vmax.f32 %v5318, 0.0
    %v7224 = vmax.f32 %v5320, 0.0
    %v7225 = vmax.f32 %v5323, 0.0
    %v7226 = vmax.f32 %v5325, 0.0
    %v7227 = vmax.f32 %v5328, 0.0
    %v7228 = vmax.f32 %v5330, 0.0
    %v7229 = vmax.f32 %v5333, 0.0
    %v7230 = vmax.f32 %v5335, 0.0
    %v7231 = vmax.f32 %v5338, 0.0
    %v7232 = vmax.f32 %v5340, 0.0
    %v7233 = vmax.f32 %v5343, 0.0
    %v7234 = vmax.f32 %v5345, 0.0
    %v7235 = vmax.f32 %v5348, 0.0
    %v7236 = vmax.f32 %v5350, 0.0
    %v7237 = vmax.f32 %v5353, 0.0
    %v7238 = vmax.f32 %v5355, 0.0
    %v7239 = vmax.f32 %v5358, 0.0
    %v7240 = vmax.f32 %v5360, 0.0
    %v7241 = vmax.f32 %v5363, 0.0
    %v7242 = vmax.f32 %v5365, 0.0
    %v7243 = vmax.f32 %v5368, 0.0
    %v7244 = vmax.f32 %v5370, 0.0
    %v7245 = vmax.f32 %v5373, 0.0
    %v7246 = vmax.f32 %v5375, 0.0
    %v7247 = vmax.f32 %v5378, 0.0
    %v7248 = vmax.f32 %v5380, 0.0
    %v7249 = vmax.f32 %v5383, 0.0
    %v7250 = vmax.f32 %v5385, 0.0
    %v7251 = vmax.f32 %v5388, 0.0
    %v7252 = vmax.f32 %v5390, 0.0
    %v7253 = vmax.f32 %v5393, 0.0
    %v7254 = vmax.f32 %v5395, 0.0
    %v7255 = vmax.f32 %v5398, 0.0
    %v7256 = vmax.f32 %v5400, 0.0
    %v7257 = vmax.f32 %v5403, 0.0
    %v7258 = vmax.f32 %v5405, 0.0
    %v7259 = vmax.f32 %v5408, 0.0
    %v7260 = vmax.f32 %v5410, 0.0
    %v7261 = vmax.f32 %v5413, 0.0
    %v7262 = vmax.f32 %v5415, 0.0
    %v7263 = vmax.f32 %v5418, 0.0
    %v7264 = vmax.f32 %v5420, 0.0
    %v7265 = vmax.f32 %v5423, 0.0
    %v7266 = vmax.f32 %v5425, 0.0
    %v7267 = vmax.f32 %v5428, 0.0
    %v7268 = vmax.f32 %v5430, 0.0
    %v7269 = vmax.f32 %v5433, 0.0
    %v7270 = vmax.f32 %v5435, 0.0
    %v7271 = vmax.f32 %v5438, 0.0
    %v7272 = vmax.f32 %v5440, 0.0
    %v7273 = vmax.f32 %v5443, 0.0
    %v7274 = vmax.f32 %v5445, 0.0
    %v7275 = vmax.f32 %v5448, 0.0
    %v7276 = vmax.f32 %v5450, 0.0
    %v7277 = vmax.f32 %v5453, 0.0
    %v7278 = vmax.f32 %v5455, 0.0
    %v7279 = vmax.f32 %v5458, 0.0
    %v7280 = vmax.f32 %v5460, 0.0
    %v7281 = vmax.f32 %v5463, 0.0
    %v7282 = vmax.f32 %v5465, 0.0
    %v7283 = vmax.f32 %v5468, 0.0
    %v7284 = vmax.f32 %v5470, 0.0
    %v7285 = vmax.f32 %v5473, 0.0
    %v7286 = vmax.f32 %v5475, 0.0
    %v7287 = vmax.f32 %v5478, 0.0
    %v7288 = vmax.f32 %v5480, 0.0
    %v7289 = vmax.f32 %v5483, 0.0
    %v7290 = vmax.f32 %v5485, 0.0
    %v7291 = vmax.f32 %v5488, 0.0
    %v7292 = vmax.f32 %v5490, 0.0
    %v7293 = vmax.f32 %v5493, 0.0
    %v7294 = vmax.f32 %v5495, 0.0
    %v7295 = vmax.f32 %v5498, 0.0
    %v7296 = vmax.f32 %v5500, 0.0
    %v7297 = vmax.f32 %v5503, 0.0
    %v7298 = vmax.f32 %v5505, 0.0
    %v7299 = vmax.f32 %v5508, 0.0
    %v7300 = vmax.f32 %v5510, 0.0
    %v7301 = vmax.f32 %v5513, 0.0
    %v7302 = vmax.f32 %v5515, 0.0
    %v7303 = vmax.f32 %v5518, 0.0
    %v7304 = vmax.f32 %v5520, 0.0
    %v7305 = vmax.f32 %v5523, 0.0
    %v7306 = vmax.f32 %v5525, 0.0
    %v7307 = vmax.f32 %v5528, 0.0
    %v7308 = vmax.f32 %v5530, 0.0
    %v7309 = vmax.f32 %v5533, 0.0
    %v7310 = vmax.f32 %v5535, 0.0
    %v7311 = vmax.f32 %v5538, 0.0
    %v7312 = vmax.f32 %v5540, 0.0
    %v7313 = vmax.f32 %v5543, 0.0
    %v7314 = vmax.f32 %v5545, 0.0
    %v7315 = vmax.f32 %v5548, 0.0
    %v7316 = vmax.f32 %v5550, 0.0
    %v7317 = vmax.f32 %v5553, 0.0
    %v7318 = vmax.f32 %v5555, 0.0
    %v7319 = vmax.f32 %v5558, 0.0
    %v7320 = vmax.f32 %v5560, 0.0
    %v7321 = vmax.f32 %v5563, 0.0
    %v7322 = vmax.f32 %v5565, 0.0
    %v7323 = vmax.f32 %v5568, 0.0
    %v7324 = vmax.f32 %v5570, 0.0
    %v7325 = vmax.f32 %v5573, 0.0
    %v7326 = vmax.f32 %v5575, 0.0
    %v7327 = vmax.f32 %v5578, 0.0
    %v7328 = vmax.f32 %v5580, 0.0
    %v7329 = vmax.f32 %v5583, 0.0
    %v7330 = vmax.f32 %v5585, 0.0
    %v7331 = vmax.f32 %v5588, 0.0
    %v7332 = vmax.f32 %v5590, 0.0
    %v7333 = vmax.f32 %v5593, 0.0
    %v7334 = vmax.f32 %v5595, 0.0
    %v7335 = vmax.f32 %v5598, 0.0
    %v7336 = vmax.f32 %v5600, 0.0
    %v7337 = vmax.f32 %v5603, 0.0
    %v7338 = vmax.f32 %v5605, 0.0
    %v7339 = vmax.f32 %v5608, 0.0
    %v7340 = vmax.f32 %v5610, 0.0
    %v7341 = vmax.f32 %v5613, 0.0
    %v7342 = vmax.f32 %v5615, 0.0
    %v7343 = vmax.f32 %v5618, 0.0
    %v7344 = vmax.f32 %v5620, 0.0
    %v7345 = vmax.f32 %v5623, 0.0
    %v7346 = vmax.f32 %v5625, 0.0
    %v7347 = vmax.f32 %v5628, 0.0
    %v7348 = vmax.f32 %v5630, 0.0
    %v7349 = vmax.f32 %v5633, 0.0
    %v7350 = vmax.f32 %v5635, 0.0
    %v7351 = vmax.f32 %v5638, 0.0
    %v7352 = vmax.f32 %v5640, 0.0
    %v7353 = vmax.f32 %v5643, 0.0
    %v7354 = vmax.f32 %v5645, 0.0
    %v7355 = vmax.f32 %v5648, 0.0
    %v7356 = vmax.f32 %v5650, 0.0
    %v7357 = vmax.f32 %v5653, 0.0
    %v7358 = vmax.f32 %v5655, 0.0
    %v7359 = vmax.f32 %v5658, 0.0
    %v7360 = vmax.f32 %v5660, 0.0
    %v7361 = vmax.f32 %v5663, 0.0
    %v7362 = vmax.f32 %v5665, 0.0
    %v7363 = vmax.f32 %v5668, 0.0
    %v7364 = vmax.f32 %v5670, 0.0
    %v7365 = vmax.f32 %v5673, 0.0
    %v7366 = vmax.f32 %v5675, 0.0
    %v7367 = vmax.f32 %v5678, 0.0
    %v7368 = vmax.f32 %v5680, 0.0
    %v7369 = vmax.f32 %v5683, 0.0
    %v7370 = vmax.f32 %v5685, 0.0
    %v7371 = vmax.f32 %v5688, 0.0
    %v7372 = vmax.f32 %v5690, 0.0
    %v7373 = vmax.f32 %v5693, 0.0
    %v7374 = vmax.f32 %v5695, 0.0
    %v7375 = vmax.f32 %v5698, 0.0
    %v7376 = vmax.f32 %v5700, 0.0
    %v7377 = vmax.f32 %v5703, 0.0
    %v7378 = vmax.f32 %v5705, 0.0
    %v7379 = vmax.f32 %v5708, 0.0
    %v7380 = vmax.f32 %v5710, 0.0
    %v7381 = vmax.f32 %v5713, 0.0
    %v7382 = vmax.f32 %v5715, 0.0
    %v7383 = vmax.f32 %v5718, 0.0
    %v7384 = vmax.f32 %v5720, 0.0
    %v7385 = vmax.f32 %v5723, 0.0
    %v7386 = vmax.f32 %v5725, 0.0
    %v7387 = vmax.f32 %v5728, 0.0
    %v7388 = vmax.f32 %v5730, 0.0
    %v7389 = vmax.f32 %v5733, 0.0
    %v7390 = vmax.f32 %v5735, 0.0
    %v7391 = vmax.f32 %v5738, 0.0
    %v7392 = vmax.f32 %v5740, 0.0
    %v7393 = vmax.f32 %v5743, 0.0
    %v7394 = vmax.f32 %v5745, 0.0
    %v7395 = vmax.f32 %v5748, 0.0
    %v7396 = vmax.f32 %v5750, 0.0
    %v7397 = vmax.f32 %v5753, 0.0
    %v7398 = vmax.f32 %v5755, 0.0
    %v7399 = vmax.f32 %v5758, 0.0
    %v7400 = vmax.f32 %v5760, 0.0
    %v7401 = vmax.f32 %v5763, 0.0
    %v7402 = vmax.f32 %v5765, 0.0
    %v7403 = vmax.f32 %v5768, 0.0
    %v7404 = vmax.f32 %v5770, 0.0
    %v7405 = vmax.f32 %v5773, 0.0
    %v7406 = vmax.f32 %v5775, 0.0
    %v7407 = vmax.f32 %v5778, 0.0
    %v7408 = vmax.f32 %v5780, 0.0
    %v7409 = vmax.f32 %v5783, 0.0
    %v7410 = vmax.f32 %v5785, 0.0
    %v7411 = vmax.f32 %v5788, 0.0
    %v7412 = vmax.f32 %v5790, 0.0
    %v7413 = vmax.f32 %v5793, 0.0
    %v7414 = vmax.f32 %v5795, 0.0
    %v7415 = vmax.f32 %v5798, 0.0
    %v7416 = vmax.f32 %v5800, 0.0
    %v7417 = vmax.f32 %v5803, 0.0
    %v7418 = vmax.f32 %v5805, 0.0
    %v7419 = vmax.f32 %v5808, 0.0
    %v7420 = vmax.f32 %v5810, 0.0
    %v7421 = vmax.f32 %v5813, 0.0
    %v7422 = vmax.f32 %v5815, 0.0
    %v7423 = vmax.f32 %v5818, 0.0
    %v7424 = vmax.f32 %v5820, 0.0
    %v7425 = vmax.f32 %v5823, 0.0
    %v7426 = vmax.f32 %v5825, 0.0
    %v7427 = vmax.f32 %v5828, 0.0
    %v7428 = vmax.f32 %v5830, 0.0
    %v7429 = vmax.f32 %v5833, 0.0
    %v7430 = vmax.f32 %v5835, 0.0
    %v7431 = vmax.f32 %v5838, 0.0
    %v7432 = vmax.f32 %v5840, 0.0
    %v7433 = vmax.f32 %v5843, 0.0
    %v7434 = vmax.f32 %v5845, 0.0
    %v7435 = vmax.f32 %v5848, 0.0
    %v7436 = vmax.f32 %v5850, 0.0
    %v7437 = vmax.f32 %v5853, 0.0
    %v7438 = vmax.f32 %v5855, 0.0
    %v7439 = vmax.f32 %v5858, 0.0
    %v7440 = vmax.f32 %v5860, 0.0
    %v7441 = vmax.f32 %v5863, 0.0
    %v7442 = vmax.f32 %v5865, 0.0
    %v7443 = vmax.f32 %v5868, 0.0
    %v7444 = vmax.f32 %v5870, 0.0
    %v7445 = vmax.f32 %v5873, 0.0
    %v7446 = vmax.f32 %v5875, 0.0
    %v7447 = vmax.f32 %v5878, 0.0
    %v7448 = vmax.f32 %v5880, 0.0
    %v7449 = vmax.f32 %v5883, 0.0
    %v7450 = vmax.f32 %v5885, 0.0
    %v7451 = vmax.f32 %v5888, 0.0
    %v7452 = vmax.f32 %v5890, 0.0
    %v7453 = vmax.f32 %v5893, 0.0
    %v7454 = vmax.f32 %v5895, 0.0
    %v7455 = vmax.f32 %v5898, 0.0
    %v7456 = vmax.f32 %v5900, 0.0
    %v7457 = vmax.f32 %v5903, 0.0
    %v7458 = vmax.f32 %v5905, 0.0
    %v7459 = vmax.f32 %v5908, 0.0
    %v7460 = vmax.f32 %v5910, 0.0
    %v7461 = vmax.f32 %v5913, 0.0
    %v7462 = vmax.f32 %v5915, 0.0
    %v7463 = vmax.f32 %v5918, 0.0
    %v7464 = vmax.f32 %v5920, 0.0
    %v7465 = vmax.f32 %v5923, 0.0
    %v7466 = vmax.f32 %v5925, 0.0
    %v7467 = vmax.f32 %v5928, 0.0
    %v7468 = vmax.f32 %v5930, 0.0
    %v7469 = vmax.f32 %v5933, 0.0
    %v7470 = vmax.f32 %v5935, 0.0
    %v7471 = vmax.f32 %v5938, 0.0
    %v7472 = vmax.f32 %v5940, 0.0
    %v7473 = vmax.f32 %v5943, 0.0
    %v7474 = vmax.f32 %v5945, 0.0
    %v7475 = vmax.f32 %v5948, 0.0
    %v7476 = vmax.f32 %v5950, 0.0
    %v7477 = vmax.f32 %v5953, 0.0
    %v7478 = vmax.f32 %v5955, 0.0
    %v7479 = vmax.f32 %v5958, 0.0
    %v7480 = vmax.f32 %v5960, 0.0
    %v7481 = vmax.f32 %v5963, 0.0
    %v7482 = vmax.f32 %v5965, 0.0
    %v7483 = vmax.f32 %v5968, 0.0
    %v7484 = vmax.f32 %v5970, 0.0
    %v7485 = vmax.f32 %v5973, 0.0
    %v7486 = vmax.f32 %v5975, 0.0
    %v7487 = vmax.f32 %v5978, 0.0
    %v7488 = vmax.f32 %v5980, 0.0
    %v7489 = vmax.f32 %v5983, 0.0
    %v7490 = vmax.f32 %v5985, 0.0
    %v7491 = vmax.f32 %v5988, 0.0
    %v7492 = vmax.f32 %v5990, 0.0
    %v7493 = vmax.f32 %v5993, 0.0
    %v7494 = vmax.f32 %v5995, 0.0
    %v7495 = vmax.f32 %v5998, 0.0
    %v7496 = vmax.f32 %v6000, 0.0
    %v7497 = vmax.f32 %v6003, 0.0
    %v7498 = vmax.f32 %v6005, 0.0
    %v7499 = vmax.f32 %v6008, 0.0
    %v7500 = vmax.f32 %v6010, 0.0
    %v7501 = vmax.f32 %v6013, 0.0
    %v7502 = vmax.f32 %v6015, 0.0
    %v7503 = vmax.f32 %v6018, 0.0
    %v7504 = vmax.f32 %v6020, 0.0
    %v7505 = vmax.f32 %v6023, 0.0
    %v7506 = vmax.f32 %v6025, 0.0
    %v7507 = vmax.f32 %v6028, 0.0
    %v7508 = vmax.f32 %v6030, 0.0
    %v7509 = vmax.f32 %v6033, 0.0
    %v7510 = vmax.f32 %v6035, 0.0
    %v7511 = vmax.f32 %v6038, 0.0
    %v7512 = vmax.f32 %v6040, 0.0
    %v7513 = vmax.f32 %v6043, 0.0
    %v7514 = vmax.f32 %v6045, 0.0
    %v7515 = vmax.f32 %v6048, 0.0
    %v7516 = vmax.f32 %v6050, 0.0
    %v7517 = vmax.f32 %v6053, 0.0
    %v7518 = vmax.f32 %v6055, 0.0
    %v7519 = vmax.f32 %v6058, 0.0
    %v7520 = vmax.f32 %v6060, 0.0
    %v7521 = vmax.f32 %v6063, 0.0
    %v7522 = vmax.f32 %v6065, 0.0
    %v7523 = vmax.f32 %v6068, 0.0
    %v7524 = vmax.f32 %v6070, 0.0
    %v7525 = vmax.f32 %v6073, 0.0
    %v7526 = vmax.f32 %v6075, 0.0
    %v7527 = vmax.f32 %v6078, 0.0
    %v7528 = vmax.f32 %v6080, 0.0
    %v7529 = vmax.f32 %v6083, 0.0
    %v7530 = vmax.f32 %v6085, 0.0
    %v7531 = vmax.f32 %v6088, 0.0
    %v7532 = vmax.f32 %v6090, 0.0
    %v7533 = vmax.f32 %v6093, 0.0
    %v7534 = vmax.f32 %v6095, 0.0
    %v7535 = vmax.f32 %v6098, 0.0
    %v7536 = vmax.f32 %v6100, 0.0
    %v7537 = vmax.f32 %v6103, 0.0
    %v7538 = vmax.f32 %v6105, 0.0
    %v7539 = vmax.f32 %v6108, 0.0
    %v7540 = vmax.f32 %v6110, 0.0
    %v7541 = vmax.f32 %v6113, 0.0
    %v7542 = vmax.f32 %v6115, 0.0
    %v7543 = vmax.f32 %v6118, 0.0
    %v7544 = vmax.f32 %v6120, 0.0
    %v7545 = vmax.f32 %v6123, 0.0
    %v7546 = vmax.f32 %v6125, 0.0
    %v7547 = vmax.f32 %v6128, 0.0
    %v7548 = vmax.f32 %v6130, 0.0
    %v7549 = vmax.f32 %v6133, 0.0
    %v7550 = vmax.f32 %v6135, 0.0
    %v7551 = vmax.f32 %v6138, 0.0
    %v7552 = vmax.f32 %v6140, 0.0
    %v7553 = vmax.f32 %v6143, 0.0
    %v7554 = vmax.f32 %v6145, 0.0
    %v7555 = vmax.f32 %v6148, 0.0
    %v7556 = vmax.f32 %v6150, 0.0
    %v7557 = vmax.f32 %v6153, 0.0
    %v7558 = vmax.f32 %v6155, 0.0
    %v7559 = vmax.f32 %v6158, 0.0
    %v7560 = vmax.f32 %v6160, 0.0
    %v7561 = vmax.f32 %v6163, 0.0
    %v7562 = vmax.f32 %v6165, 0.0
    %v7563 = vmax.f32 %v6168, 0.0
    %v7564 = vmax.f32 %v6170, 0.0
    %v7565 = vmax.f32 %v6173, 0.0
    %v7566 = vmax.f32 %v6175, 0.0
    %v7567 = vmax.f32 %v6178, 0.0
    %v7568 = vmax.f32 %v6180, 0.0
    %v7569 = vmax.f32 %v6183, 0.0
    %v7570 = vmax.f32 %v6185, 0.0
    %v7571 = vmax.f32 %v6188, 0.0
    %v7572 = vmax.f32 %v6190, 0.0
    %v7573 = vmax.f32 %v6193, 0.0
    %v7574 = vmax.f32 %v6195, 0.0
    %v7575 = vmax.f32 %v6198, 0.0
    %v7576 = vmax.f32 %v6200, 0.0
    %v7577 = vmax.f32 %v6203, 0.0
    %v7578 = vmax.f32 %v6205, 0.0
    %v7579 = vmax.f32 %v6208, 0.0
    %v7580 = vmax.f32 %v6210, 0.0
    %v7581 = vmax.f32 %v6213, 0.0
    %v7582 = vmax.f32 %v6215, 0.0
    %v7583 = vmax.f32 %v6218, 0.0
    %v7584 = vmax.f32 %v6220, 0.0
    %v7585 = vmax.f32 %v6223, 0.0
    %v7586 = vmax.f32 %v6225, 0.0
    %v7587 = vmax.f32 %v6228, 0.0
    %v7588 = vmax.f32 %v6230, 0.0
    %v7589 = vmax.f32 %v6233, 0.0
    %v7590 = vmax.f32 %v6235, 0.0
    %v7591 = vmax.f32 %v6238, 0.0
    %v7592 = vmax.f32 %v6240, 0.0
    %v7593 = vmax.f32 %v6243, 0.0
    %v7594 = vmax.f32 %v6245, 0.0
    %v7595 = vmax.f32 %v6248, 0.0
    %v7596 = vmax.f32 %v6250, 0.0
    %v7597 = vmax.f32 %v6253, 0.0
    %v7598 = vmax.f32 %v6255, 0.0
    %v7599 = vmax.f32 %v6258, 0.0
    %v7600 = vmax.f32 %v6260, 0.0
    %v7601 = vmax.f32 %v6263, 0.0
    %v7602 = vmax.f32 %v6265, 0.0
    %v7603 = vmax.f32 %v6268, 0.0
    %v7604 = vmax.f32 %v6270, 0.0
    %v7605 = vmax.f32 %v6273, 0.0
    %v7606 = vmax.f32 %v6275, 0.0
    %v7607 = vmax.f32 %v6278, 0.0
    %v7608 = vmax.f32 %v6280, 0.0
    %v7609 = vmax.f32 %v6283, 0.0
    %v7610 = vmax.f32 %v6285, 0.0
    %v7611 = vmax.f32 %v6288, 0.0
    %v7612 = vmax.f32 %v6290, 0.0
    %v7613 = vmax.f32 %v6293, 0.0
    %v7614 = vmax.f32 %v6295, 0.0
    %v7615 = vmax.f32 %v6298, 0.0
    %v7616 = vmax.f32 %v6300, 0.0
    %v7617 = vmax.f32 %v6303, 0.0
    %v7618 = vmax.f32 %v6305, 0.0
    %v7619 = vmax.f32 %v6308, 0.0
    %v7620 = vmax.f32 %v6310, 0.0
    %v7621 = vmax.f32 %v6313, 0.0
    %v7622 = vmax.f32 %v6315, 0.0
    %v7623 = vmax.f32 %v6318, 0.0
    %v7624 = vmax.f32 %v6320, 0.0
    %v7625 = vmax.f32 %v6323, 0.0
    %v7626 = vmax.f32 %v6325, 0.0
    %v7627 = vmax.f32 %v6328, 0.0
    %v7628 = vmax.f32 %v6330, 0.0
    %v7629 = vmax.f32 %v6333, 0.0
    %v7630 = vmax.f32 %v6335, 0.0
    %v7631 = vmax.f32 %v6338, 0.0
    %v7632 = vmax.f32 %v6340, 0.0
    %v7633 = vmax.f32 %v6343, 0.0
    %v7634 = vmax.f32 %v6345, 0.0
    %v7635 = vmax.f32 %v6348, 0.0
    %v7636 = vmax.f32 %v6350, 0.0
    %v7637 = vmax.f32 %v6353, 0.0
    %v7638 = vmax.f32 %v6355, 0.0
    %v7639 = vmax.f32 %v6358, 0.0
    %v7640 = vmax.f32 %v6360, 0.0
    %v7641 = vmax.f32 %v6363, 0.0
    %v7642 = vmax.f32 %v6365, 0.0
    %v7643 = vmax.f32 %v6368, 0.0
    %v7644 = vmax.f32 %v6370, 0.0
    %v7645 = vmax.f32 %v6373, 0.0
    %v7646 = vmax.f32 %v6375, 0.0
    %v7647 = vmax.f32 %v6378, 0.0
    %v7648 = vmax.f32 %v6380, 0.0
    %v7649 = vmax.f32 %v6383, 0.0
    %v7650 = vmax.f32 %v6385, 0.0
    %v7651 = vmax.f32 %v6388, 0.0
    %v7652 = vmax.f32 %v6390, 0.0
    %v7653 = vmax.f32 %v6393, 0.0
    %v7654 = vmax.f32 %v6395, 0.0
    %v7655 = vmax.f32 %v6398, 0.0
    %v7656 = vmax.f32 %v6400, 0.0
    %v7657 = vmax.f32 %v6403, 0.0
    %v7658 = vmax.f32 %v6405, 0.0
    %v7659 = vmax.f32 %v6408, 0.0
    %v7660 = vmax.f32 %v6410, 0.0
    %v7661 = vmax.f32 %v6413, 0.0
    %v7662 = vmax.f32 %v6415, 0.0
    %v7663 = vmax.f32 %v6418, 0.0
    %v7664 = vmax.f32 %v6420, 0.0
    %v7665 = vmax.f32 %v6423, 0.0
    %v7666 = vmax.f32 %v6425, 0.0
    %v7667 = vmax.f32 %v6428, 0.0
    %v7668 = vmax.f32 %v6430, 0.0
    %v7669 = vmax.f32 %v6433, 0.0
    %v7670 = vmax.f32 %v6435, 0.0
    %v7671 = vmax.f32 %v6438, 0.0
    %v7672 = vmax.f32 %v6440, 0.0
    %v7673 = vmax.f32 %v6443, 0.0
    %v7674 = vmax.f32 %v6445, 0.0
    %v7675 = vmax.f32 %v6448, 0.0
    %v7676 = vmax.f32 %v6450, 0.0
    %v7677 = vmax.f32 %v6453, 0.0
    %v7678 = vmax.f32 %v6455, 0.0
    %v7679 = vmax.f32 %v6458, 0.0
    %v7680 = vmax.f32 %v6460, 0.0
    %v7681 = vmax.f32 %v6463, 0.0
    %v7682 = vmax.f32 %v6465, 0.0
    %v7683 = vmax.f32 %v6468, 0.0
    %v7684 = vmax.f32 %v6470, 0.0
    %v7685 = vmax.f32 %v6473, 0.0
    %v7686 = vmax.f32 %v6475, 0.0
    %v7687 = vmax.f32 %v6478, 0.0
    %v7688 = vmax.f32 %v6480, 0.0
    %v7689 = vmax.f32 %v6483, 0.0
    %v7690 = vmax.f32 %v6485, 0.0
    %v7691 = vmax.f32 %v6488, 0.0
    %v7692 = vmax.f32 %v6490, 0.0
    %v7693 = vmax.f32 %v6493, 0.0
    %v7694 = vmax.f32 %v6495, 0.0
    %v7695 = vmax.f32 %v6498, 0.0
    %v7696 = vmax.f32 %v6500, 0.0
    %v7697 = vmax.f32 %v6503, 0.0
    %v7698 = vmax.f32 %v6505, 0.0
    %v7699 = vmax.f32 %v6508, 0.0
    %v7700 = vmax.f32 %v6510, 0.0
    %v7701 = vmax.f32 %v6513, 0.0
    %v7702 = vmax.f32 %v6515, 0.0
    %v7703 = vmax.f32 %v6518, 0.0
    %v7704 = vmax.f32 %v6520, 0.0
    %v7705 = vmax.f32 %v6523, 0.0
    %v7706 = vmax.f32 %v6525, 0.0
    %v7707 = vmax.f32 %v6528, 0.0
    %v7708 = vmax.f32 %v6530, 0.0
    %v7709 = vmax.f32 %v6533, 0.0
    %v7710 = vmax.f32 %v6535, 0.0
    %v7711 = vmax.f32 %v6538, 0.0
    %v7712 = vmax.f32 %v6540, 0.0
    %v7713 = vmax.f32 %v6543, 0.0
    %v7714 = vmax.f32 %v6545, 0.0
    %v7715 = vmax.f32 %v6548, 0.0
    %v7716 = vmax.f32 %v6550, 0.0
    %v7717 = vmax.f32 %v6553, 0.0
    %v7718 = vmax.f32 %v6555, 0.0
    %v7719 = vmax.f32 %v6558, 0.0
    %v7720 = vmax.f32 %v6560, 0.0
    %v7721 = vmax.f32 %v6563, 0.0
    %v7722 = vmax.f32 %v6565, 0.0
    %v7723 = vmax.f32 %v6568, 0.0
    %v7724 = vmax.f32 %v6570, 0.0
    %v7725 = vmax.f32 %v6573, 0.0
    %v7726 = vmax.f32 %v6575, 0.0
    %v7727 = vmax.f32 %v6578, 0.0
    %v7728 = vmax.f32 %v6580, 0.0
    %v7729 = vmax.f32 %v6583, 0.0
    %v7730 = vmax.f32 %v6585, 0.0
    %v7731 = vmax.f32 %v6588, 0.0
    %v7732 = vmax.f32 %v6590, 0.0
    %v7733 = vmax.f32 %v6593, 0.0
    %v7734 = vmax.f32 %v6595, 0.0
    %v7735 = vmax.f32 %v6598, 0.0
    %v7736 = vmax.f32 %v6600, 0.0
    %v7737 = vmax.f32 %v6603, 0.0
    %v7738 = vmax.f32 %v6605, 0.0
    %v7739 = vmax.f32 %v6608, 0.0
    %v7740 = vmax.f32 %v6610, 0.0
    %v7741 = vmax.f32 %v6613, 0.0
    %v7742 = vmax.f32 %v6615, 0.0
    %v7743 = vmax.f32 %v6618, 0.0
    %v7744 = vmax.f32 %v6620, 0.0
    %v7745 = vmax.f32 %v6623, 0.0
    %v7746 = vmax.f32 %v6625, 0.0
    %v7747 = vmax.f32 %v6628, 0.0
    %v7748 = vmax.f32 %v6630, 0.0
    %v7749 = vmax.f32 %v6633, 0.0
    %v7750 = vmax.f32 %v6635, 0.0
    %v7751 = vmax.f32 %v6638, 0.0
    %v7752 = vmax.f32 %v6640, 0.0
    %v7753 = vmax.f32 %v6643, 0.0
    %v7754 = vmax.f32 %v6645, 0.0
    %v7755 = vmax.f32 %v6648, 0.0
    %v7756 = vmax.f32 %v6650, 0.0
    %v7757 = vmax.f32 %v6653, 0.0
    %v7758 = vmax.f32 %v6655, 0.0
    %v7759 = vmax.f32 %v6658, 0.0
    %v7760 = vmax.f32 %v6660, 0.0
    %v7761 = vmax.f32 %v6663, 0.0
    %v7762 = vmax.f32 %v6665, 0.0
    %v7763 = vmax.f32 %v6668, 0.0
    %v7764 = vmax.f32 %v6670, 0.0
    %v7765 = vmax.f32 %v6673, 0.0
    %v7766 = vmax.f32 %v6675, 0.0
    %v7767 = vmax.f32 %v6678, 0.0
    %v7768 = vmax.f32 %v6680, 0.0
    %v7769 = vmax.f32 %v6683, 0.0
    %v7770 = vmax.f32 %v6685, 0.0
    %v7771 = vmax.f32 %v6688, 0.0
    %v7772 = vmax.f32 %v6690, 0.0
    %v7773 = vmax.f32 %v6693, 0.0
    %v7774 = vmax.f32 %v6695, 0.0
    %v7775 = vmax.f32 %v6698, 0.0
    %v7776 = vmax.f32 %v6700, 0.0
    %v7777 = vmax.f32 %v6703, 0.0
    %v7778 = vmax.f32 %v6705, 0.0
    %v7779 = vmax.f32 %v6708, 0.0
    %v7780 = vmax.f32 %v6710, 0.0
    %v7781 = vmax.f32 %v6713, 0.0
    %v7782 = vmax.f32 %v6715, 0.0
    %v7783 = vmax.f32 %v6718, 0.0
    %v7784 = vmax.f32 %v6720, 0.0
    %v7785 = vmax.f32 %v6723, 0.0
    %v7786 = vmax.f32 %v6725, 0.0
    %v7787 = vmax.f32 %v6728, 0.0
    %v7788 = vmax.f32 %v6730, 0.0
    %v7789 = vmax.f32 %v6733, 0.0
    %v7790 = vmax.f32 %v6735, 0.0
    %v7791 = vmax.f32 %v6738, 0.0
    %v7792 = vmax.f32 %v6740, 0.0
    %v7793 = vmax.f32 %v6743, 0.0
    %v7794 = vmax.f32 %v6745, 0.0
    %v7795 = vmax.f32 %v6748, 0.0
    %v7796 = vmax.f32 %v6750, 0.0
    %v7797 = vmax.f32 %v6753, 0.0
    %v7798 = vmax.f32 %v6755, 0.0
    %v7799 = vmax.f32 %v6758, 0.0
    %v7800 = vmax.f32 %v6760, 0.0
    %v7801 = vmax.f32 %v6763, 0.0
    %v7802 = vmax.f32 %v6765, 0.0
    %v7803 = vmax.f32 %v6768, 0.0
    %v7804 = vmax.f32 %v6770, 0.0
    %v7805 = vmax.f32 %v6773, 0.0
    %v7806 = vmax.f32 %v6775, 0.0
    %v7807 = vmax.f32 %v6778, 0.0
    %v7808 = vmax.f32 %v6780, 0.0
    %v7809 = vmax.f32 %v6783, 0.0
    %v7810 = vmax.f32 %v6785, 0.0
    %v7811 = vadd.f32 %v6787, %v6788
    %v7812 = vadd.f32 %v7811, %v6789
    %v7813 = vadd.f32 %v7812, %v6790
    %v7814 = vadd.f32 %v7813, %v6791
    %v7815 = vadd.f32 %v7814, %v6792
    %v7816 = vadd.f32 %v7815, %v6793
    %v7817 = vadd.f32 %v7816, %v6794
    %v7818 = vadd.f32 %v7817, %v6795
    %v7819 = vadd.f32 %v7818, %v6796
    %v7820 = vadd.f32 %v7819, %v6797
    %v7821 = vadd.f32 %v7820, %v6798
    %v7822 = vadd.f32 %v7821, %v6799
    %v7823 = vadd.f32 %v7822, %v6800
    %v7824 = vadd.f32 %v7823, %v6801
    %v7825 = vadd.f32 %v7824, %v6802
    %v7826 = vadd.f32 %v7825, %v6803
    %v7827 = vadd.f32 %v7826, %v6804
    %v7828 = vadd.f32 %v7827, %v6805
    %v7829 = vadd.f32 %v7828, %v6806
    %v7830 = vadd.f32 %v7829, %v6807
    %v7831 = vadd.f32 %v7830, %v6808
    %v7832 = vadd.f32 %v7831, %v6809
    %v7833 = vadd.f32 %v7832, %v6810
    %v7834 = vadd.f32 %v7833, %v6811
    %v7835 = vadd.f32 %v7834, %v6812
    %v7836 = vadd.f32 %v7835, %v6813
    %v7837 = vadd.f32 %v7836, %v6814
    %v7838 = vadd.f32 %v7837, %v6815
    %v7839 = vadd.f32 %v7838, %v6816
    %v7840 = vadd.f32 %v7839, %v6817
    %v7841 = vadd.f32 %v7840, %v6818
    %v7842 = vrot.slane %v7841, 4
    %v7843 = vadd.f32 %v7841, %v7842
    %v7844 = vrot.slane %v7843, 2
    %v7845 = vadd.f32 %v7843, %v7844
    %v7846 = vrot.slane %v7845, 1
    %v7847 = vadd.f32 %v7845, %v7846
    %v7848 = vadd.f32 %v6819, %v6820
    %v7849 = vadd.f32 %v7848, %v6821
    %v7850 = vadd.f32 %v7849, %v6822
    %v7851 = vadd.f32 %v7850, %v6823
    %v7852 = vadd.f32 %v7851, %v6824
    %v7853 = vadd.f32 %v7852, %v6825
    %v7854 = vadd.f32 %v7853, %v6826
    %v7855 = vadd.f32 %v7854, %v6827
    %v7856 = vadd.f32 %v7855, %v6828
    %v7857 = vadd.f32 %v7856, %v6829
    %v7858 = vadd.f32 %v7857, %v6830
    %v7859 = vadd.f32 %v7858, %v6831
    %v7860 = vadd.f32 %v7859, %v6832
    %v7861 = vadd.f32 %v7860, %v6833
    %v7862 = vadd.f32 %v7861, %v6834
    %v7863 = vadd.f32 %v7862, %v6835
    %v7864 = vadd.f32 %v7863, %v6836
    %v7865 = vadd.f32 %v7864, %v6837
    %v7866 = vadd.f32 %v7865, %v6838
    %v7867 = vadd.f32 %v7866, %v6839
    %v7868 = vadd.f32 %v7867, %v6840
    %v7869 = vadd.f32 %v7868, %v6841
    %v7870 = vadd.f32 %v7869, %v6842
    %v7871 = vadd.f32 %v7870, %v6843
    %v7872 = vadd.f32 %v7871, %v6844
    %v7873 = vadd.f32 %v7872, %v6845
    %v7874 = vadd.f32 %v7873, %v6846
    %v7875 = vadd.f32 %v7874, %v6847
    %v7876 = vadd.f32 %v7875, %v6848
    %v7877 = vadd.f32 %v7876, %v6849
    %v7878 = vadd.f32 %v7877, %v6850
    %v7879 = vrot.slane %v7878, 4
    %v7880 = vadd.f32 %v7878, %v7879
    %v7881 = vrot.slane %v7880, 2
    %v7882 = vadd.f32 %v7880, %v7881
    %v7883 = vrot.slane %v7882, 1
    %v7884 = vadd.f32 %v7882, %v7883
    %v7885 = vadd.f32 %v6851, %v6852
    %v7886 = vadd.f32 %v7885, %v6853
    %v7887 = vadd.f32 %v7886, %v6854
    %v7888 = vadd.f32 %v7887, %v6855
    %v7889 = vadd.f32 %v7888, %v6856
    %v7890 = vadd.f32 %v7889, %v6857
    %v7891 = vadd.f32 %v7890, %v6858
    %v7892 = vadd.f32 %v7891, %v6859
    %v7893 = vadd.f32 %v7892, %v6860
    %v7894 = vadd.f32 %v7893, %v6861
    %v7895 = vadd.f32 %v7894, %v6862
    %v7896 = vadd.f32 %v7895, %v6863
    %v7897 = vadd.f32 %v7896, %v6864
    %v7898 = vadd.f32 %v7897, %v6865
    %v7899 = vadd.f32 %v7898, %v6866
    %v7900 = vadd.f32 %v7899, %v6867
    %v7901 = vadd.f32 %v7900, %v6868
    %v7902 = vadd.f32 %v7901, %v6869
    %v7903 = vadd.f32 %v7902, %v6870
    %v7904 = vadd.f32 %v7903, %v6871
    %v7905 = vadd.f32 %v7904, %v6872
    %v7906 = vadd.f32 %v7905, %v6873
    %v7907 = vadd.f32 %v7906, %v6874
    %v7908 = vadd.f32 %v7907, %v6875
    %v7909 = vadd.f32 %v7908, %v6876
    %v7910 = vadd.f32 %v7909, %v6877
    %v7911 = vadd.f32 %v7910, %v6878
    %v7912 = vadd.f32 %v7911, %v6879
    %v7913 = vadd.f32 %v7912, %v6880
    %v7914 = vadd.f32 %v7913, %v6881
    %v7915 = vadd.f32 %v7914, %v6882
    %v7916 = vrot.slane %v7915, 4
    %v7917 = vadd.f32 %v7915, %v7916
    %v7918 = vrot.slane %v7917, 2
    %v7919 = vadd.f32 %v7917, %v7918
    %v7920 = vrot.slane %v7919, 1
    %v7921 = vadd.f32 %v7919, %v7920
    %v7922 = vadd.f32 %v6883, %v6884
    %v7923 = vadd.f32 %v7922, %v6885
    %v7924 = vadd.f32 %v7923, %v6886
    %v7925 = vadd.f32 %v7924, %v6887
    %v7926 = vadd.f32 %v7925, %v6888
    %v7927 = vadd.f32 %v7926, %v6889
    %v7928 = vadd.f32 %v7927, %v6890
    %v7929 = vadd.f32 %v7928, %v6891
    %v7930 = vadd.f32 %v7929, %v6892
    %v7931 = vadd.f32 %v7930, %v6893
    %v7932 = vadd.f32 %v7931, %v6894
    %v7933 = vadd.f32 %v7932, %v6895
    %v7934 = vadd.f32 %v7933, %v6896
    %v7935 = vadd.f32 %v7934, %v6897
    %v7936 = vadd.f32 %v7935, %v6898
    %v7937 = vadd.f32 %v7936, %v6899
    %v7938 = vadd.f32 %v7937, %v6900
    %v7939 = vadd.f32 %v7938, %v6901
    %v7940 = vadd.f32 %v7939, %v6902
    %v7941 = vadd.f32 %v7940, %v6903
    %v7942 = vadd.f32 %v7941, %v6904
    %v7943 = vadd.f32 %v7942, %v6905
    %v7944 = vadd.f32 %v7943, %v6906
    %v7945 = vadd.f32 %v7944, %v6907
    %v7946 = vadd.f32 %v7945, %v6908
    %v7947 = vadd.f32 %v7946, %v6909
    %v7948 = vadd.f32 %v7947, %v6910
    %v7949 = vadd.f32 %v7948, %v6911
    %v7950 = vadd.f32 %v7949, %v6912
    %v7951 = vadd.f32 %v7950, %v6913
    %v7952 = vadd.f32 %v7951, %v6914
    %v7953 = vrot.slane %v7952, 4
    %v7954 = vadd.f32 %v7952, %v7953
    %v7955 = vrot.slane %v7954, 2
    %v7956 = vadd.f32 %v7954, %v7955
    %v7957 = vrot.slane %v7956, 1
    %v7958 = vadd.f32 %v7956, %v7957
    %v7959 = vadd.f32 %v6915, %v6916
    %v7960 = vadd.f32 %v7959, %v6917
    %v7961 = vadd.f32 %v7960, %v6918
    %v7962 = vadd.f32 %v7961, %v6919
    %v7963 = vadd.f32 %v7962, %v6920
    %v7964 = vadd.f32 %v7963, %v6921
    %v7965 = vadd.f32 %v7964, %v6922
    %v7966 = vadd.f32 %v7965, %v6923
    %v7967 = vadd.f32 %v7966, %v6924
    %v7968 = vadd.f32 %v7967, %v6925
    %v7969 = vadd.f32 %v7968, %v6926
    %v7970 = vadd.f32 %v7969, %v6927
    %v7971 = vadd.f32 %v7970, %v6928
    %v7972 = vadd.f32 %v7971, %v6929
    %v7973 = vadd.f32 %v7972, %v6930
    %v7974 = vadd.f32 %v7973, %v6931
    %v7975 = vadd.f32 %v7974, %v6932
    %v7976 = vadd.f32 %v7975, %v6933
    %v7977 = vadd.f32 %v7976, %v6934
    %v7978 = vadd.f32 %v7977, %v6935
    %v7979 = vadd.f32 %v7978, %v6936
    %v7980 = vadd.f32 %v7979, %v6937
    %v7981 = vadd.f32 %v7980, %v6938
    %v7982 = vadd.f32 %v7981, %v6939
    %v7983 = vadd.f32 %v7982, %v6940
    %v7984 = vadd.f32 %v7983, %v6941
    %v7985 = vadd.f32 %v7984, %v6942
    %v7986 = vadd.f32 %v7985, %v6943
    %v7987 = vadd.f32 %v7986, %v6944
    %v7988 = vadd.f32 %v7987, %v6945
    %v7989 = vadd.f32 %v7988, %v6946
    %v7990 = vrot.slane %v7989, 4
    %v7991 = vadd.f32 %v7989, %v7990
    %v7992 = vrot.slane %v7991, 2
    %v7993 = vadd.f32 %v7991, %v7992
    %v7994 = vrot.slane %v7993, 1
    %v7995 = vadd.f32 %v7993, %v7994
    %v7996 = vadd.f32 %v6947, %v6948
    %v7997 = vadd.f32 %v7996, %v6949
    %v7998 = vadd.f32 %v7997, %v6950
    %v7999 = vadd.f32 %v7998, %v6951
    %v8000 = vadd.f32 %v7999, %v6952
    %v8001 = vadd.f32 %v8000, %v6953
    %v8002 = vadd.f32 %v8001, %v6954
    %v8003 = vadd.f32 %v8002, %v6955
    %v8004 = vadd.f32 %v8003, %v6956
    %v8005 = vadd.f32 %v8004, %v6957
    %v8006 = vadd.f32 %v8005, %v6958
    %v8007 = vadd.f32 %v8006, %v6959
    %v8008 = vadd.f32 %v8007, %v6960
    %v8009 = vadd.f32 %v8008, %v6961
    %v8010 = vadd.f32 %v8009, %v6962
    %v8011 = vadd.f32 %v8010, %v6963
    %v8012 = vadd.f32 %v8011, %v6964
    %v8013 = vadd.f32 %v8012, %v6965
    %v8014 = vadd.f32 %v8013, %v6966
    %v8015 = vadd.f32 %v8014, %v6967
    %v8016 = vadd.f32 %v8015, %v6968
    %v8017 = vadd.f32 %v8016, %v6969
    %v8018 = vadd.f32 %v8017, %v6970
    %v8019 = vadd.f32 %v8018, %v6971
    %v8020 = vadd.f32 %v8019, %v6972
    %v8021 = vadd.f32 %v8020, %v6973
    %v8022 = vadd.f32 %v8021, %v6974
    %v8023 = vadd.f32 %v8022, %v6975
    %v8024 = vadd.f32 %v8023, %v6976
    %v8025 = vadd.f32 %v8024, %v6977
    %v8026 = vadd.f32 %v8025, %v6978
    %v8027 = vrot.slane %v8026, 4
    %v8028 = vadd.f32 %v8026, %v8027
    %v8029 = vrot.slane %v8028, 2
    %v8030 = vadd.f32 %v8028, %v8029
    %v8031 = vrot.slane %v8030, 1
    %v8032 = vadd.f32 %v8030, %v8031
    %v8033 = vadd.f32 %v6979, %v6980
    %v8034 = vadd.f32 %v8033, %v6981
    %v8035 = vadd.f32 %v8034, %v6982
    %v8036 = vadd.f32 %v8035, %v6983
    %v8037 = vadd.f32 %v8036, %v6984
    %v8038 = vadd.f32 %v8037, %v6985
    %v8039 = vadd.f32 %v8038, %v6986
    %v8040 = vadd.f32 %v8039, %v6987
    %v8041 = vadd.f32 %v8040, %v6988
    %v8042 = vadd.f32 %v8041, %v6989
    %v8043 = vadd.f32 %v8042, %v6990
    %v8044 = vadd.f32 %v8043, %v6991
    %v8045 = vadd.f32 %v8044, %v6992
    %v8046 = vadd.f32 %v8045, %v6993
    %v8047 = vadd.f32 %v8046, %v6994
    %v8048 = vadd.f32 %v8047, %v6995
    %v8049 = vadd.f32 %v8048, %v6996
    %v8050 = vadd.f32 %v8049, %v6997
    %v8051 = vadd.f32 %v8050, %v6998
    %v8052 = vadd.f32 %v8051, %v6999
    %v8053 = vadd.f32 %v8052, %v7000
    %v8054 = vadd.f32 %v8053, %v7001
    %v8055 = vadd.f32 %v8054, %v7002
    %v8056 = vadd.f32 %v8055, %v7003
    %v8057 = vadd.f32 %v8056, %v7004
    %v8058 = vadd.f32 %v8057, %v7005
    %v8059 = vadd.f32 %v8058, %v7006
    %v8060 = vadd.f32 %v8059, %v7007
    %v8061 = vadd.f32 %v8060, %v7008
    %v8062 = vadd.f32 %v8061, %v7009
    %v8063 = vadd.f32 %v8062, %v7010
    %v8064 = vrot.slane %v8063, 4
    %v8065 = vadd.f32 %v8063, %v8064
    %v8066 = vrot.slane %v8065, 2
    %v8067 = vadd.f32 %v8065, %v8066
    %v8068 = vrot.slane %v8067, 1
    %v8069 = vadd.f32 %v8067, %v8068
    %v8070 = vadd.f32 %v7011, %v7012
    %v8071 = vadd.f32 %v8070, %v7013
    %v8072 = vadd.f32 %v8071, %v7014
    %v8073 = vadd.f32 %v8072, %v7015
    %v8074 = vadd.f32 %v8073, %v7016
    %v8075 = vadd.f32 %v8074, %v7017
    %v8076 = vadd.f32 %v8075, %v7018
    %v8077 = vadd.f32 %v8076, %v7019
    %v8078 = vadd.f32 %v8077, %v7020
    %v8079 = vadd.f32 %v8078, %v7021
    %v8080 = vadd.f32 %v8079, %v7022
    %v8081 = vadd.f32 %v8080, %v7023
    %v8082 = vadd.f32 %v8081, %v7024
    %v8083 = vadd.f32 %v8082, %v7025
    %v8084 = vadd.f32 %v8083, %v7026
    %v8085 = vadd.f32 %v8084, %v7027
    %v8086 = vadd.f32 %v8085, %v7028
    %v8087 = vadd.f32 %v8086, %v7029
    %v8088 = vadd.f32 %v8087, %v7030
    %v8089 = vadd.f32 %v8088, %v7031
    %v8090 = vadd.f32 %v8089, %v7032
    %v8091 = vadd.f32 %v8090, %v7033
    %v8092 = vadd.f32 %v8091, %v7034
    %v8093 = vadd.f32 %v8092, %v7035
    %v8094 = vadd.f32 %v8093, %v7036
    %v8095 = vadd.f32 %v8094, %v7037
    %v8096 = vadd.f32 %v8095, %v7038
    %v8097 = vadd.f32 %v8096, %v7039
    %v8098 = vadd.f32 %v8097, %v7040
    %v8099 = vadd.f32 %v8098, %v7041
    %v8100 = vadd.f32 %v8099, %v7042
    %v8101 = vrot.slane %v8100, 4
    %v8102 = vadd.f32 %v8100, %v8101
    %v8103 = vrot.slane %v8102, 2
    %v8104 = vadd.f32 %v8102, %v8103
    %v8105 = vrot.slane %v8104, 1
    %v8106 = vadd.f32 %v8104, %v8105
    %v8107 = vadd.f32 %v7043, %v7044
    %v8108 = vadd.f32 %v8107, %v7045
    %v8109 = vadd.f32 %v8108, %v7046
    %v8110 = vadd.f32 %v8109, %v7047
    %v8111 = vadd.f32 %v8110, %v7048
    %v8112 = vadd.f32 %v8111, %v7049
    %v8113 = vadd.f32 %v8112, %v7050
    %v8114 = vadd.f32 %v8113, %v7051
    %v8115 = vadd.f32 %v8114, %v7052
    %v8116 = vadd.f32 %v8115, %v7053
    %v8117 = vadd.f32 %v8116, %v7054
    %v8118 = vadd.f32 %v8117, %v7055
    %v8119 = vadd.f32 %v8118, %v7056
    %v8120 = vadd.f32 %v8119, %v7057
    %v8121 = vadd.f32 %v8120, %v7058
    %v8122 = vadd.f32 %v8121, %v7059
    %v8123 = vadd.f32 %v8122, %v7060
    %v8124 = vadd.f32 %v8123, %v7061
    %v8125 = vadd.f32 %v8124, %v7062
    %v8126 = vadd.f32 %v8125, %v7063
    %v8127 = vadd.f32 %v8126, %v7064
    %v8128 = vadd.f32 %v8127, %v7065
    %v8129 = vadd.f32 %v8128, %v7066
    %v8130 = vadd.f32 %v8129, %v7067
    %v8131 = vadd.f32 %v8130, %v7068
    %v8132 = vadd.f32 %v8131, %v7069
    %v8133 = vadd.f32 %v8132, %v7070
    %v8134 = vadd.f32 %v8133, %v7071
    %v8135 = vadd.f32 %v8134, %v7072
    %v8136 = vadd.f32 %v8135, %v7073
    %v8137 = vadd.f32 %v8136, %v7074
    %v8138 = vrot.slane %v8137, 4
    %v8139 = vadd.f32 %v8137, %v8138
    %v8140 = vrot.slane %v8139, 2
    %v8141 = vadd.f32 %v8139, %v8140
    %v8142 = vrot.slane %v8141, 1
    %v8143 = vadd.f32 %v8141, %v8142
    %v8144 = vadd.f32 %v7075, %v7076
    %v8145 = vadd.f32 %v8144, %v7077
    %v8146 = vadd.f32 %v8145, %v7078
    %v8147 = vadd.f32 %v8146, %v7079
    %v8148 = vadd.f32 %v8147, %v7080
    %v8149 = vadd.f32 %v8148, %v7081
    %v8150 = vadd.f32 %v8149, %v7082
    %v8151 = vadd.f32 %v8150, %v7083
    %v8152 = vadd.f32 %v8151, %v7084
    %v8153 = vadd.f32 %v8152, %v7085
    %v8154 = vadd.f32 %v8153, %v7086
    %v8155 = vadd.f32 %v8154, %v7087
    %v8156 = vadd.f32 %v8155, %v7088
    %v8157 = vadd.f32 %v8156, %v7089
    %v8158 = vadd.f32 %v8157, %v7090
    %v8159 = vadd.f32 %v8158, %v7091
    %v8160 = vadd.f32 %v8159, %v7092
    %v8161 = vadd.f32 %v8160, %v7093
    %v8162 = vadd.f32 %v8161, %v7094
    %v8163 = vadd.f32 %v8162, %v7095
    %v8164 = vadd.f32 %v8163, %v7096
    %v8165 = vadd.f32 %v8164, %v7097
    %v8166 = vadd.f32 %v8165, %v7098
    %v8167 = vadd.f32 %v8166, %v7099
    %v8168 = vadd.f32 %v8167, %v7100
    %v8169 = vadd.f32 %v8168, %v7101
    %v8170 = vadd.f32 %v8169, %v7102
    %v8171 = vadd.f32 %v8170, %v7103
    %v8172 = vadd.f32 %v8171, %v7104
    %v8173 = vadd.f32 %v8172, %v7105
    %v8174 = vadd.f32 %v8173, %v7106
    %v8175 = vrot.slane %v8174, 4
    %v8176 = vadd.f32 %v8174, %v8175
    %v8177 = vrot.slane %v8176, 2
    %v8178 = vadd.f32 %v8176, %v8177
    %v8179 = vrot.slane %v8178, 1
    %v8180 = vadd.f32 %v8178, %v8179
    %v8181 = vadd.f32 %v7107, %v7108
    %v8182 = vadd.f32 %v8181, %v7109
    %v8183 = vadd.f32 %v8182, %v7110
    %v8184 = vadd.f32 %v8183, %v7111
    %v8185 = vadd.f32 %v8184, %v7112
    %v8186 = vadd.f32 %v8185, %v7113
    %v8187 = vadd.f32 %v8186, %v7114
    %v8188 = vadd.f32 %v8187, %v7115
    %v8189 = vadd.f32 %v8188, %v7116
    %v8190 = vadd.f32 %v8189, %v7117
    %v8191 = vadd.f32 %v8190, %v7118
    %v8192 = vadd.f32 %v8191, %v7119
    %v8193 = vadd.f32 %v8192, %v7120
    %v8194 = vadd.f32 %v8193, %v7121
    %v8195 = vadd.f32 %v8194, %v7122
    %v8196 = vadd.f32 %v8195, %v7123
    %v8197 = vadd.f32 %v8196, %v7124
    %v8198 = vadd.f32 %v8197, %v7125
    %v8199 = vadd.f32 %v8198, %v7126
    %v8200 = vadd.f32 %v8199, %v7127
    %v8201 = vadd.f32 %v8200, %v7128
    %v8202 = vadd.f32 %v8201, %v7129
    %v8203 = vadd.f32 %v8202, %v7130
    %v8204 = vadd.f32 %v8203, %v7131
    %v8205 = vadd.f32 %v8204, %v7132
    %v8206 = vadd.f32 %v8205, %v7133
    %v8207 = vadd.f32 %v8206, %v7134
    %v8208 = vadd.f32 %v8207, %v7135
    %v8209 = vadd.f32 %v8208, %v7136
    %v8210 = vadd.f32 %v8209, %v7137
    %v8211 = vadd.f32 %v8210, %v7138
    %v8212 = vrot.slane %v8211, 4
    %v8213 = vadd.f32 %v8211, %v8212
    %v8214 = vrot.slane %v8213, 2
    %v8215 = vadd.f32 %v8213, %v8214
    %v8216 = vrot.slane %v8215, 1
    %v8217 = vadd.f32 %v8215, %v8216
    %v8218 = vadd.f32 %v7139, %v7140
    %v8219 = vadd.f32 %v8218, %v7141
    %v8220 = vadd.f32 %v8219, %v7142
    %v8221 = vadd.f32 %v8220, %v7143
    %v8222 = vadd.f32 %v8221, %v7144
    %v8223 = vadd.f32 %v8222, %v7145
    %v8224 = vadd.f32 %v8223, %v7146
    %v8225 = vadd.f32 %v8224, %v7147
    %v8226 = vadd.f32 %v8225, %v7148
    %v8227 = vadd.f32 %v8226, %v7149
    %v8228 = vadd.f32 %v8227, %v7150
    %v8229 = vadd.f32 %v8228, %v7151
    %v8230 = vadd.f32 %v8229, %v7152
    %v8231 = vadd.f32 %v8230, %v7153
    %v8232 = vadd.f32 %v8231, %v7154
    %v8233 = vadd.f32 %v8232, %v7155
    %v8234 = vadd.f32 %v8233, %v7156
    %v8235 = vadd.f32 %v8234, %v7157
    %v8236 = vadd.f32 %v8235, %v7158
    %v8237 = vadd.f32 %v8236, %v7159
    %v8238 = vadd.f32 %v8237, %v7160
    %v8239 = vadd.f32 %v8238, %v7161
    %v8240 = vadd.f32 %v8239, %v7162
    %v8241 = vadd.f32 %v8240, %v7163
    %v8242 = vadd.f32 %v8241, %v7164
    %v8243 = vadd.f32 %v8242, %v7165
    %v8244 = vadd.f32 %v8243, %v7166
    %v8245 = vadd.f32 %v8244, %v7167
    %v8246 = vadd.f32 %v8245, %v7168
    %v8247 = vadd.f32 %v8246, %v7169
    %v8248 = vadd.f32 %v8247, %v7170
    %v8249 = vrot.slane %v8248, 4
    %v8250 = vadd.f32 %v8248, %v8249
    %v8251 = vrot.slane %v8250, 2
    %v8252 = vadd.f32 %v8250, %v8251
    %v8253 = vrot.slane %v8252, 1
    %v8254 = vadd.f32 %v8252, %v8253
    %v8255 = vadd.f32 %v7171, %v7172
    %v8256 = vadd.f32 %v8255, %v7173
    %v8257 = vadd.f32 %v8256, %v7174
    %v8258 = vadd.f32 %v8257, %v7175
    %v8259 = vadd.f32 %v8258, %v7176
    %v8260 = vadd.f32 %v8259, %v7177
    %v8261 = vadd.f32 %v8260, %v7178
    %v8262 = vadd.f32 %v8261, %v7179
    %v8263 = vadd.f32 %v8262, %v7180
    %v8264 = vadd.f32 %v8263, %v7181
    %v8265 = vadd.f32 %v8264, %v7182
    %v8266 = vadd.f32 %v8265, %v7183
    %v8267 = vadd.f32 %v8266, %v7184
    %v8268 = vadd.f32 %v8267, %v7185
    %v8269 = vadd.f32 %v8268, %v7186
    %v8270 = vadd.f32 %v8269, %v7187
    %v8271 = vadd.f32 %v8270, %v7188
    %v8272 = vadd.f32 %v8271, %v7189
    %v8273 = vadd.f32 %v8272, %v7190
    %v8274 = vadd.f32 %v8273, %v7191
    %v8275 = vadd.f32 %v8274, %v7192
    %v8276 = vadd.f32 %v8275, %v7193
    %v8277 = vadd.f32 %v8276, %v7194
    %v8278 = vadd.f32 %v8277, %v7195
    %v8279 = vadd.f32 %v8278, %v7196
    %v8280 = vadd.f32 %v8279, %v7197
    %v8281 = vadd.f32 %v8280, %v7198
    %v8282 = vadd.f32 %v8281, %v7199
    %v8283 = vadd.f32 %v8282, %v7200
    %v8284 = vadd.f32 %v8283, %v7201
    %v8285 = vadd.f32 %v8284, %v7202
    %v8286 = vrot.slane %v8285, 4
    %v8287 = vadd.f32 %v8285, %v8286
    %v8288 = vrot.slane %v8287, 2
    %v8289 = vadd.f32 %v8287, %v8288
    %v8290 = vrot.slane %v8289, 1
    %v8291 = vadd.f32 %v8289, %v8290
    %v8292 = vadd.f32 %v7203, %v7204
    %v8293 = vadd.f32 %v8292, %v7205
    %v8294 = vadd.f32 %v8293, %v7206
    %v8295 = vadd.f32 %v8294, %v7207
    %v8296 = vadd.f32 %v8295, %v7208
    %v8297 = vadd.f32 %v8296, %v7209
    %v8298 = vadd.f32 %v8297, %v7210
    %v8299 = vadd.f32 %v8298, %v7211
    %v8300 = vadd.f32 %v8299, %v7212
    %v8301 = vadd.f32 %v8300, %v7213
    %v8302 = vadd.f32 %v8301, %v7214
    %v8303 = vadd.f32 %v8302, %v7215
    %v8304 = vadd.f32 %v8303, %v7216
    %v8305 = vadd.f32 %v8304, %v7217
    %v8306 = vadd.f32 %v8305, %v7218
    %v8307 = vadd.f32 %v8306, %v7219
    %v8308 = vadd.f32 %v8307, %v7220
    %v8309 = vadd.f32 %v8308, %v7221
    %v8310 = vadd.f32 %v8309, %v7222
    %v8311 = vadd.f32 %v8310, %v7223
    %v8312 = vadd.f32 %v8311, %v7224
    %v8313 = vadd.f32 %v8312, %v7225
    %v8314 = vadd.f32 %v8313, %v7226
    %v8315 = vadd.f32 %v8314, %v7227
    %v8316 = vadd.f32 %v8315, %v7228
    %v8317 = vadd.f32 %v8316, %v7229
    %v8318 = vadd.f32 %v8317, %v7230
    %v8319 = vadd.f32 %v8318, %v7231
    %v8320 = vadd.f32 %v8319, %v7232
    %v8321 = vadd.f32 %v8320, %v7233
    %v8322 = vadd.f32 %v8321, %v7234
    %v8323 = vrot.slane %v8322, 4
    %v8324 = vadd.f32 %v8322, %v8323
    %v8325 = vrot.slane %v8324, 2
    %v8326 = vadd.f32 %v8324, %v8325
    %v8327 = vrot.slane %v8326, 1
    %v8328 = vadd.f32 %v8326, %v8327
    %v8329 = vadd.f32 %v7235, %v7236
    %v8330 = vadd.f32 %v8329, %v7237
    %v8331 = vadd.f32 %v8330, %v7238
    %v8332 = vadd.f32 %v8331, %v7239
    %v8333 = vadd.f32 %v8332, %v7240
    %v8334 = vadd.f32 %v8333, %v7241
    %v8335 = vadd.f32 %v8334, %v7242
    %v8336 = vadd.f32 %v8335, %v7243
    %v8337 = vadd.f32 %v8336, %v7244
    %v8338 = vadd.f32 %v8337, %v7245
    %v8339 = vadd.f32 %v8338, %v7246
    %v8340 = vadd.f32 %v8339, %v7247
    %v8341 = vadd.f32 %v8340, %v7248
    %v8342 = vadd.f32 %v8341, %v7249
    %v8343 = vadd.f32 %v8342, %v7250
    %v8344 = vadd.f32 %v8343, %v7251
    %v8345 = vadd.f32 %v8344, %v7252
    %v8346 = vadd.f32 %v8345, %v7253
    %v8347 = vadd.f32 %v8346, %v7254
    %v8348 = vadd.f32 %v8347, %v7255
    %v8349 = vadd.f32 %v8348, %v7256
    %v8350 = vadd.f32 %v8349, %v7257
    %v8351 = vadd.f32 %v8350, %v7258
    %v8352 = vadd.f32 %v8351, %v7259
    %v8353 = vadd.f32 %v8352, %v7260
    %v8354 = vadd.f32 %v8353, %v7261
    %v8355 = vadd.f32 %v8354, %v7262
    %v8356 = vadd.f32 %v8355, %v7263
    %v8357 = vadd.f32 %v8356, %v7264
    %v8358 = vadd.f32 %v8357, %v7265
    %v8359 = vadd.f32 %v8358, %v7266
    %v8360 = vrot.slane %v8359, 4
    %v8361 = vadd.f32 %v8359, %v8360
    %v8362 = vrot.slane %v8361, 2
    %v8363 = vadd.f32 %v8361, %v8362
    %v8364 = vrot.slane %v8363, 1
    %v8365 = vadd.f32 %v8363, %v8364
    %v8366 = vadd.f32 %v7267, %v7268
    %v8367 = vadd.f32 %v8366, %v7269
    %v8368 = vadd.f32 %v8367, %v7270
    %v8369 = vadd.f32 %v8368, %v7271
    %v8370 = vadd.f32 %v8369, %v7272
    %v8371 = vadd.f32 %v8370, %v7273
    %v8372 = vadd.f32 %v8371, %v7274
    %v8373 = vadd.f32 %v8372, %v7275
    %v8374 = vadd.f32 %v8373, %v7276
    %v8375 = vadd.f32 %v8374, %v7277
    %v8376 = vadd.f32 %v8375, %v7278
    %v8377 = vadd.f32 %v8376, %v7279
    %v8378 = vadd.f32 %v8377, %v7280
    %v8379 = vadd.f32 %v8378, %v7281
    %v8380 = vadd.f32 %v8379, %v7282
    %v8381 = vadd.f32 %v8380, %v7283
    %v8382 = vadd.f32 %v8381, %v7284
    %v8383 = vadd.f32 %v8382, %v7285
    %v8384 = vadd.f32 %v8383, %v7286
    %v8385 = vadd.f32 %v8384, %v7287
    %v8386 = vadd.f32 %v8385, %v7288
    %v8387 = vadd.f32 %v8386, %v7289
    %v8388 = vadd.f32 %v8387, %v7290
    %v8389 = vadd.f32 %v8388, %v7291
    %v8390 = vadd.f32 %v8389, %v7292
    %v8391 = vadd.f32 %v8390, %v7293
    %v8392 = vadd.f32 %v8391, %v7294
    %v8393 = vadd.f32 %v8392, %v7295
    %v8394 = vadd.f32 %v8393, %v7296
    %v8395 = vadd.f32 %v8394, %v7297
    %v8396 = vadd.f32 %v8395, %v7298
    %v8397 = vrot.slane %v8396, 4
    %v8398 = vadd.f32 %v8396, %v8397
    %v8399 = vrot.slane %v8398, 2
    %v8400 = vadd.f32 %v8398, %v8399
    %v8401 = vrot.slane %v8400, 1
    %v8402 = vadd.f32 %v8400, %v8401
    %v8403 = vadd.f32 %v7299, %v7300
    %v8404 = vadd.f32 %v8403, %v7301
    %v8405 = vadd.f32 %v8404, %v7302
    %v8406 = vadd.f32 %v8405, %v7303
    %v8407 = vadd.f32 %v8406, %v7304
    %v8408 = vadd.f32 %v8407, %v7305
    %v8409 = vadd.f32 %v8408, %v7306
    %v8410 = vadd.f32 %v8409, %v7307
    %v8411 = vadd.f32 %v8410, %v7308
    %v8412 = vadd.f32 %v8411, %v7309
    %v8413 = vadd.f32 %v8412, %v7310
    %v8414 = vadd.f32 %v8413, %v7311
    %v8415 = vadd.f32 %v8414, %v7312
    %v8416 = vadd.f32 %v8415, %v7313
    %v8417 = vadd.f32 %v8416, %v7314
    %v8418 = vadd.f32 %v8417, %v7315
    %v8419 = vadd.f32 %v8418, %v7316
    %v8420 = vadd.f32 %v8419, %v7317
    %v8421 = vadd.f32 %v8420, %v7318
    %v8422 = vadd.f32 %v8421, %v7319
    %v8423 = vadd.f32 %v8422, %v7320
    %v8424 = vadd.f32 %v8423, %v7321
    %v8425 = vadd.f32 %v8424, %v7322
    %v8426 = vadd.f32 %v8425, %v7323
    %v8427 = vadd.f32 %v8426, %v7324
    %v8428 = vadd.f32 %v8427, %v7325
    %v8429 = vadd.f32 %v8428, %v7326
    %v8430 = vadd.f32 %v8429, %v7327
    %v8431 = vadd.f32 %v8430, %v7328
    %v8432 = vadd.f32 %v8431, %v7329
    %v8433 = vadd.f32 %v8432, %v7330
    %v8434 = vrot.slane %v8433, 4
    %v8435 = vadd.f32 %v8433, %v8434
    %v8436 = vrot.slane %v8435, 2
    %v8437 = vadd.f32 %v8435, %v8436
    %v8438 = vrot.slane %v8437, 1
    %v8439 = vadd.f32 %v8437, %v8438
    %v8440 = vadd.f32 %v7331, %v7332
    %v8441 = vadd.f32 %v8440, %v7333
    %v8442 = vadd.f32 %v8441, %v7334
    %v8443 = vadd.f32 %v8442, %v7335
    %v8444 = vadd.f32 %v8443, %v7336
    %v8445 = vadd.f32 %v8444, %v7337
    %v8446 = vadd.f32 %v8445, %v7338
    %v8447 = vadd.f32 %v8446, %v7339
    %v8448 = vadd.f32 %v8447, %v7340
    %v8449 = vadd.f32 %v8448, %v7341
    %v8450 = vadd.f32 %v8449, %v7342
    %v8451 = vadd.f32 %v8450, %v7343
    %v8452 = vadd.f32 %v8451, %v7344
    %v8453 = vadd.f32 %v8452, %v7345
    %v8454 = vadd.f32 %v8453, %v7346
    %v8455 = vadd.f32 %v8454, %v7347
    %v8456 = vadd.f32 %v8455, %v7348
    %v8457 = vadd.f32 %v8456, %v7349
    %v8458 = vadd.f32 %v8457, %v7350
    %v8459 = vadd.f32 %v8458, %v7351
    %v8460 = vadd.f32 %v8459, %v7352
    %v8461 = vadd.f32 %v8460, %v7353
    %v8462 = vadd.f32 %v8461, %v7354
    %v8463 = vadd.f32 %v8462, %v7355
    %v8464 = vadd.f32 %v8463, %v7356
    %v8465 = vadd.f32 %v8464, %v7357
    %v8466 = vadd.f32 %v8465, %v7358
    %v8467 = vadd.f32 %v8466, %v7359
    %v8468 = vadd.f32 %v8467, %v7360
    %v8469 = vadd.f32 %v8468, %v7361
    %v8470 = vadd.f32 %v8469, %v7362
    %v8471 = vrot.slane %v8470, 4
    %v8472 = vadd.f32 %v8470, %v8471
    %v8473 = vrot.slane %v8472, 2
    %v8474 = vadd.f32 %v8472, %v8473
    %v8475 = vrot.slane %v8474, 1
    %v8476 = vadd.f32 %v8474, %v8475
    %v8477 = vadd.f32 %v7363, %v7364
    %v8478 = vadd.f32 %v8477, %v7365
    %v8479 = vadd.f32 %v8478, %v7366
    %v8480 = vadd.f32 %v8479, %v7367
    %v8481 = vadd.f32 %v8480, %v7368
    %v8482 = vadd.f32 %v8481, %v7369
    %v8483 = vadd.f32 %v8482, %v7370
    %v8484 = vadd.f32 %v8483, %v7371
    %v8485 = vadd.f32 %v8484, %v7372
    %v8486 = vadd.f32 %v8485, %v7373
    %v8487 = vadd.f32 %v8486, %v7374
    %v8488 = vadd.f32 %v8487, %v7375
    %v8489 = vadd.f32 %v8488, %v7376
    %v8490 = vadd.f32 %v8489, %v7377
    %v8491 = vadd.f32 %v8490, %v7378
    %v8492 = vadd.f32 %v8491, %v7379
    %v8493 = vadd.f32 %v8492, %v7380
    %v8494 = vadd.f32 %v8493, %v7381
    %v8495 = vadd.f32 %v8494, %v7382
    %v8496 = vadd.f32 %v8495, %v7383
    %v8497 = vadd.f32 %v8496, %v7384
    %v8498 = vadd.f32 %v8497, %v7385
    %v8499 = vadd.f32 %v8498, %v7386
    %v8500 = vadd.f32 %v8499, %v7387
    %v8501 = vadd.f32 %v8500, %v7388
    %v8502 = vadd.f32 %v8501, %v7389
    %v8503 = vadd.f32 %v8502, %v7390
    %v8504 = vadd.f32 %v8503, %v7391
    %v8505 = vadd.f32 %v8504, %v7392
    %v8506 = vadd.f32 %v8505, %v7393
    %v8507 = vadd.f32 %v8506, %v7394
    %v8508 = vrot.slane %v8507, 4
    %v8509 = vadd.f32 %v8507, %v8508
    %v8510 = vrot.slane %v8509, 2
    %v8511 = vadd.f32 %v8509, %v8510
    %v8512 = vrot.slane %v8511, 1
    %v8513 = vadd.f32 %v8511, %v8512
    %v8514 = vadd.f32 %v7395, %v7396
    %v8515 = vadd.f32 %v8514, %v7397
    %v8516 = vadd.f32 %v8515, %v7398
    %v8517 = vadd.f32 %v8516, %v7399
    %v8518 = vadd.f32 %v8517, %v7400
    %v8519 = vadd.f32 %v8518, %v7401
    %v8520 = vadd.f32 %v8519, %v7402
    %v8521 = vadd.f32 %v8520, %v7403
    %v8522 = vadd.f32 %v8521, %v7404
    %v8523 = vadd.f32 %v8522, %v7405
    %v8524 = vadd.f32 %v8523, %v7406
    %v8525 = vadd.f32 %v8524, %v7407
    %v8526 = vadd.f32 %v8525, %v7408
    %v8527 = vadd.f32 %v8526, %v7409
    %v8528 = vadd.f32 %v8527, %v7410
    %v8529 = vadd.f32 %v8528, %v7411
    %v8530 = vadd.f32 %v8529, %v7412
    %v8531 = vadd.f32 %v8530, %v7413
    %v8532 = vadd.f32 %v8531, %v7414
    %v8533 = vadd.f32 %v8532, %v7415
    %v8534 = vadd.f32 %v8533, %v7416
    %v8535 = vadd.f32 %v8534, %v7417
    %v8536 = vadd.f32 %v8535, %v7418
    %v8537 = vadd.f32 %v8536, %v7419
    %v8538 = vadd.f32 %v8537, %v7420
    %v8539 = vadd.f32 %v8538, %v7421
    %v8540 = vadd.f32 %v8539, %v7422
    %v8541 = vadd.f32 %v8540, %v7423
    %v8542 = vadd.f32 %v8541, %v7424
    %v8543 = vadd.f32 %v8542, %v7425
    %v8544 = vadd.f32 %v8543, %v7426
    %v8545 = vrot.slane %v8544, 4
    %v8546 = vadd.f32 %v8544, %v8545
    %v8547 = vrot.slane %v8546, 2
    %v8548 = vadd.f32 %v8546, %v8547
    %v8549 = vrot.slane %v8548, 1
    %v8550 = vadd.f32 %v8548, %v8549
    %v8551 = vadd.f32 %v7427, %v7428
    %v8552 = vadd.f32 %v8551, %v7429
    %v8553 = vadd.f32 %v8552, %v7430
    %v8554 = vadd.f32 %v8553, %v7431
    %v8555 = vadd.f32 %v8554, %v7432
    %v8556 = vadd.f32 %v8555, %v7433
    %v8557 = vadd.f32 %v8556, %v7434
    %v8558 = vadd.f32 %v8557, %v7435
    %v8559 = vadd.f32 %v8558, %v7436
    %v8560 = vadd.f32 %v8559, %v7437
    %v8561 = vadd.f32 %v8560, %v7438
    %v8562 = vadd.f32 %v8561, %v7439
    %v8563 = vadd.f32 %v8562, %v7440
    %v8564 = vadd.f32 %v8563, %v7441
    %v8565 = vadd.f32 %v8564, %v7442
    %v8566 = vadd.f32 %v8565, %v7443
    %v8567 = vadd.f32 %v8566, %v7444
    %v8568 = vadd.f32 %v8567, %v7445
    %v8569 = vadd.f32 %v8568, %v7446
    %v8570 = vadd.f32 %v8569, %v7447
    %v8571 = vadd.f32 %v8570, %v7448
    %v8572 = vadd.f32 %v8571, %v7449
    %v8573 = vadd.f32 %v8572, %v7450
    %v8574 = vadd.f32 %v8573, %v7451
    %v8575 = vadd.f32 %v8574, %v7452
    %v8576 = vadd.f32 %v8575, %v7453
    %v8577 = vadd.f32 %v8576, %v7454
    %v8578 = vadd.f32 %v8577, %v7455
    %v8579 = vadd.f32 %v8578, %v7456
    %v8580 = vadd.f32 %v8579, %v7457
    %v8581 = vadd.f32 %v8580, %v7458
    %v8582 = vrot.slane %v8581, 4
    %v8583 = vadd.f32 %v8581, %v8582
    %v8584 = vrot.slane %v8583, 2
    %v8585 = vadd.f32 %v8583, %v8584
    %v8586 = vrot.slane %v8585, 1
    %v8587 = vadd.f32 %v8585, %v8586
    %v8588 = vadd.f32 %v7459, %v7460
    %v8589 = vadd.f32 %v8588, %v7461
    %v8590 = vadd.f32 %v8589, %v7462
    %v8591 = vadd.f32 %v8590, %v7463
    %v8592 = vadd.f32 %v8591, %v7464
    %v8593 = vadd.f32 %v8592, %v7465
    %v8594 = vadd.f32 %v8593, %v7466
    %v8595 = vadd.f32 %v8594, %v7467
    %v8596 = vadd.f32 %v8595, %v7468
    %v8597 = vadd.f32 %v8596, %v7469
    %v8598 = vadd.f32 %v8597, %v7470
    %v8599 = vadd.f32 %v8598, %v7471
    %v8600 = vadd.f32 %v8599, %v7472
    %v8601 = vadd.f32 %v8600, %v7473
    %v8602 = vadd.f32 %v8601, %v7474
    %v8603 = vadd.f32 %v8602, %v7475
    %v8604 = vadd.f32 %v8603, %v7476
    %v8605 = vadd.f32 %v8604, %v7477
    %v8606 = vadd.f32 %v8605, %v7478
    %v8607 = vadd.f32 %v8606, %v7479
    %v8608 = vadd.f32 %v8607, %v7480
    %v8609 = vadd.f32 %v8608, %v7481
    %v8610 = vadd.f32 %v8609, %v7482
    %v8611 = vadd.f32 %v8610, %v7483
    %v8612 = vadd.f32 %v8611, %v7484
    %v8613 = vadd.f32 %v8612, %v7485
    %v8614 = vadd.f32 %v8613, %v7486
    %v8615 = vadd.f32 %v8614, %v7487
    %v8616 = vadd.f32 %v8615, %v7488
    %v8617 = vadd.f32 %v8616, %v7489
    %v8618 = vadd.f32 %v8617, %v7490
    %v8619 = vrot.slane %v8618, 4
    %v8620 = vadd.f32 %v8618, %v8619
    %v8621 = vrot.slane %v8620, 2
    %v8622 = vadd.f32 %v8620, %v8621
    %v8623 = vrot.slane %v8622, 1
    %v8624 = vadd.f32 %v8622, %v8623
    %v8625 = vadd.f32 %v7491, %v7492
    %v8626 = vadd.f32 %v8625, %v7493
    %v8627 = vadd.f32 %v8626, %v7494
    %v8628 = vadd.f32 %v8627, %v7495
    %v8629 = vadd.f32 %v8628, %v7496
    %v8630 = vadd.f32 %v8629, %v7497
    %v8631 = vadd.f32 %v8630, %v7498
    %v8632 = vadd.f32 %v8631, %v7499
    %v8633 = vadd.f32 %v8632, %v7500
    %v8634 = vadd.f32 %v8633, %v7501
    %v8635 = vadd.f32 %v8634, %v7502
    %v8636 = vadd.f32 %v8635, %v7503
    %v8637 = vadd.f32 %v8636, %v7504
    %v8638 = vadd.f32 %v8637, %v7505
    %v8639 = vadd.f32 %v8638, %v7506
    %v8640 = vadd.f32 %v8639, %v7507
    %v8641 = vadd.f32 %v8640, %v7508
    %v8642 = vadd.f32 %v8641, %v7509
    %v8643 = vadd.f32 %v8642, %v7510
    %v8644 = vadd.f32 %v8643, %v7511
    %v8645 = vadd.f32 %v8644, %v7512
    %v8646 = vadd.f32 %v8645, %v7513
    %v8647 = vadd.f32 %v8646, %v7514
    %v8648 = vadd.f32 %v8647, %v7515
    %v8649 = vadd.f32 %v8648, %v7516
    %v8650 = vadd.f32 %v8649, %v7517
    %v8651 = vadd.f32 %v8650, %v7518
    %v8652 = vadd.f32 %v8651, %v7519
    %v8653 = vadd.f32 %v8652, %v7520
    %v8654 = vadd.f32 %v8653, %v7521
    %v8655 = vadd.f32 %v8654, %v7522
    %v8656 = vrot.slane %v8655, 4
    %v8657 = vadd.f32 %v8655, %v8656
    %v8658 = vrot.slane %v8657, 2
    %v8659 = vadd.f32 %v8657, %v8658
    %v8660 = vrot.slane %v8659, 1
    %v8661 = vadd.f32 %v8659, %v8660
    %v8662 = vadd.f32 %v7523, %v7524
    %v8663 = vadd.f32 %v8662, %v7525
    %v8664 = vadd.f32 %v8663, %v7526
    %v8665 = vadd.f32 %v8664, %v7527
    %v8666 = vadd.f32 %v8665, %v7528
    %v8667 = vadd.f32 %v8666, %v7529
    %v8668 = vadd.f32 %v8667, %v7530
    %v8669 = vadd.f32 %v8668, %v7531
    %v8670 = vadd.f32 %v8669, %v7532
    %v8671 = vadd.f32 %v8670, %v7533
    %v8672 = vadd.f32 %v8671, %v7534
    %v8673 = vadd.f32 %v8672, %v7535
    %v8674 = vadd.f32 %v8673, %v7536
    %v8675 = vadd.f32 %v8674, %v7537
    %v8676 = vadd.f32 %v8675, %v7538
    %v8677 = vadd.f32 %v8676, %v7539
    %v8678 = vadd.f32 %v8677, %v7540
    %v8679 = vadd.f32 %v8678, %v7541
    %v8680 = vadd.f32 %v8679, %v7542
    %v8681 = vadd.f32 %v8680, %v7543
    %v8682 = vadd.f32 %v8681, %v7544
    %v8683 = vadd.f32 %v8682, %v7545
    %v8684 = vadd.f32 %v8683, %v7546
    %v8685 = vadd.f32 %v8684, %v7547
    %v8686 = vadd.f32 %v8685, %v7548
    %v8687 = vadd.f32 %v8686, %v7549
    %v8688 = vadd.f32 %v8687, %v7550
    %v8689 = vadd.f32 %v8688, %v7551
    %v8690 = vadd.f32 %v8689, %v7552
    %v8691 = vadd.f32 %v8690, %v7553
    %v8692 = vadd.f32 %v8691, %v7554
    %v8693 = vrot.slane %v8692, 4
    %v8694 = vadd.f32 %v8692, %v8693
    %v8695 = vrot.slane %v8694, 2
    %v8696 = vadd.f32 %v8694, %v8695
    %v8697 = vrot.slane %v8696, 1
    %v8698 = vadd.f32 %v8696, %v8697
    %v8699 = vadd.f32 %v7555, %v7556
    %v8700 = vadd.f32 %v8699, %v7557
    %v8701 = vadd.f32 %v8700, %v7558
    %v8702 = vadd.f32 %v8701, %v7559
    %v8703 = vadd.f32 %v8702, %v7560
    %v8704 = vadd.f32 %v8703, %v7561
    %v8705 = vadd.f32 %v8704, %v7562
    %v8706 = vadd.f32 %v8705, %v7563
    %v8707 = vadd.f32 %v8706, %v7564
    %v8708 = vadd.f32 %v8707, %v7565
    %v8709 = vadd.f32 %v8708, %v7566
    %v8710 = vadd.f32 %v8709, %v7567
    %v8711 = vadd.f32 %v8710, %v7568
    %v8712 = vadd.f32 %v8711, %v7569
    %v8713 = vadd.f32 %v8712, %v7570
    %v8714 = vadd.f32 %v8713, %v7571
    %v8715 = vadd.f32 %v8714, %v7572
    %v8716 = vadd.f32 %v8715, %v7573
    %v8717 = vadd.f32 %v8716, %v7574
    %v8718 = vadd.f32 %v8717, %v7575
    %v8719 = vadd.f32 %v8718, %v7576
    %v8720 = vadd.f32 %v8719, %v7577
    %v8721 = vadd.f32 %v8720, %v7578
    %v8722 = vadd.f32 %v8721, %v7579
    %v8723 = vadd.f32 %v8722, %v7580
    %v8724 = vadd.f32 %v8723, %v7581
    %v8725 = vadd.f32 %v8724, %v7582
    %v8726 = vadd.f32 %v8725, %v7583
    %v8727 = vadd.f32 %v8726, %v7584
    %v8728 = vadd.f32 %v8727, %v7585
    %v8729 = vadd.f32 %v8728, %v7586
    %v8730 = vrot.slane %v8729, 4
    %v8731 = vadd.f32 %v8729, %v8730
    %v8732 = vrot.slane %v8731, 2
    %v8733 = vadd.f32 %v8731, %v8732
    %v8734 = vrot.slane %v8733, 1
    %v8735 = vadd.f32 %v8733, %v8734
    %v8736 = vadd.f32 %v7587, %v7588
    %v8737 = vadd.f32 %v8736, %v7589
    %v8738 = vadd.f32 %v8737, %v7590
    %v8739 = vadd.f32 %v8738, %v7591
    %v8740 = vadd.f32 %v8739, %v7592
    %v8741 = vadd.f32 %v8740, %v7593
    %v8742 = vadd.f32 %v8741, %v7594
    %v8743 = vadd.f32 %v8742, %v7595
    %v8744 = vadd.f32 %v8743, %v7596
    %v8745 = vadd.f32 %v8744, %v7597
    %v8746 = vadd.f32 %v8745, %v7598
    %v8747 = vadd.f32 %v8746, %v7599
    %v8748 = vadd.f32 %v8747, %v7600
    %v8749 = vadd.f32 %v8748, %v7601
    %v8750 = vadd.f32 %v8749, %v7602
    %v8751 = vadd.f32 %v8750, %v7603
    %v8752 = vadd.f32 %v8751, %v7604
    %v8753 = vadd.f32 %v8752, %v7605
    %v8754 = vadd.f32 %v8753, %v7606
    %v8755 = vadd.f32 %v8754, %v7607
    %v8756 = vadd.f32 %v8755, %v7608
    %v8757 = vadd.f32 %v8756, %v7609
    %v8758 = vadd.f32 %v8757, %v7610
    %v8759 = vadd.f32 %v8758, %v7611
    %v8760 = vadd.f32 %v8759, %v7612
    %v8761 = vadd.f32 %v8760, %v7613
    %v8762 = vadd.f32 %v8761, %v7614
    %v8763 = vadd.f32 %v8762, %v7615
    %v8764 = vadd.f32 %v8763, %v7616
    %v8765 = vadd.f32 %v8764, %v7617
    %v8766 = vadd.f32 %v8765, %v7618
    %v8767 = vrot.slane %v8766, 4
    %v8768 = vadd.f32 %v8766, %v8767
    %v8769 = vrot.slane %v8768, 2
    %v8770 = vadd.f32 %v8768, %v8769
    %v8771 = vrot.slane %v8770, 1
    %v8772 = vadd.f32 %v8770, %v8771
    %v8773 = vadd.f32 %v7619, %v7620
    %v8774 = vadd.f32 %v8773, %v7621
    %v8775 = vadd.f32 %v8774, %v7622
    %v8776 = vadd.f32 %v8775, %v7623
    %v8777 = vadd.f32 %v8776, %v7624
    %v8778 = vadd.f32 %v8777, %v7625
    %v8779 = vadd.f32 %v8778, %v7626
    %v8780 = vadd.f32 %v8779, %v7627
    %v8781 = vadd.f32 %v8780, %v7628
    %v8782 = vadd.f32 %v8781, %v7629
    %v8783 = vadd.f32 %v8782, %v7630
    %v8784 = vadd.f32 %v8783, %v7631
    %v8785 = vadd.f32 %v8784, %v7632
    %v8786 = vadd.f32 %v8785, %v7633
    %v8787 = vadd.f32 %v8786, %v7634
    %v8788 = vadd.f32 %v8787, %v7635
    %v8789 = vadd.f32 %v8788, %v7636
    %v8790 = vadd.f32 %v8789, %v7637
    %v8791 = vadd.f32 %v8790, %v7638
    %v8792 = vadd.f32 %v8791, %v7639
    %v8793 = vadd.f32 %v8792, %v7640
    %v8794 = vadd.f32 %v8793, %v7641
    %v8795 = vadd.f32 %v8794, %v7642
    %v8796 = vadd.f32 %v8795, %v7643
    %v8797 = vadd.f32 %v8796, %v7644
    %v8798 = vadd.f32 %v8797, %v7645
    %v8799 = vadd.f32 %v8798, %v7646
    %v8800 = vadd.f32 %v8799, %v7647
    %v8801 = vadd.f32 %v8800, %v7648
    %v8802 = vadd.f32 %v8801, %v7649
    %v8803 = vadd.f32 %v8802, %v7650
    %v8804 = vrot.slane %v8803, 4
    %v8805 = vadd.f32 %v8803, %v8804
    %v8806 = vrot.slane %v8805, 2
    %v8807 = vadd.f32 %v8805, %v8806
    %v8808 = vrot.slane %v8807, 1
    %v8809 = vadd.f32 %v8807, %v8808
    %v8810 = vadd.f32 %v7651, %v7652
    %v8811 = vadd.f32 %v8810, %v7653
    %v8812 = vadd.f32 %v8811, %v7654
    %v8813 = vadd.f32 %v8812, %v7655
    %v8814 = vadd.f32 %v8813, %v7656
    %v8815 = vadd.f32 %v8814, %v7657
    %v8816 = vadd.f32 %v8815, %v7658
    %v8817 = vadd.f32 %v8816, %v7659
    %v8818 = vadd.f32 %v8817, %v7660
    %v8819 = vadd.f32 %v8818, %v7661
    %v8820 = vadd.f32 %v8819, %v7662
    %v8821 = vadd.f32 %v8820, %v7663
    %v8822 = vadd.f32 %v8821, %v7664
    %v8823 = vadd.f32 %v8822, %v7665
    %v8824 = vadd.f32 %v8823, %v7666
    %v8825 = vadd.f32 %v8824, %v7667
    %v8826 = vadd.f32 %v8825, %v7668
    %v8827 = vadd.f32 %v8826, %v7669
    %v8828 = vadd.f32 %v8827, %v7670
    %v8829 = vadd.f32 %v8828, %v7671
    %v8830 = vadd.f32 %v8829, %v7672
    %v8831 = vadd.f32 %v8830, %v7673
    %v8832 = vadd.f32 %v8831, %v7674
    %v8833 = vadd.f32 %v8832, %v7675
    %v8834 = vadd.f32 %v8833, %v7676
    %v8835 = vadd.f32 %v8834, %v7677
    %v8836 = vadd.f32 %v8835, %v7678
    %v8837 = vadd.f32 %v8836, %v7679
    %v8838 = vadd.f32 %v8837, %v7680
    %v8839 = vadd.f32 %v8838, %v7681
    %v8840 = vadd.f32 %v8839, %v7682
    %v8841 = vrot.slane %v8840, 4
    %v8842 = vadd.f32 %v8840, %v8841
    %v8843 = vrot.slane %v8842, 2
    %v8844 = vadd.f32 %v8842, %v8843
    %v8845 = vrot.slane %v8844, 1
    %v8846 = vadd.f32 %v8844, %v8845
    %v8847 = vadd.f32 %v7683, %v7684
    %v8848 = vadd.f32 %v8847, %v7685
    %v8849 = vadd.f32 %v8848, %v7686
    %v8850 = vadd.f32 %v8849, %v7687
    %v8851 = vadd.f32 %v8850, %v7688
    %v8852 = vadd.f32 %v8851, %v7689
    %v8853 = vadd.f32 %v8852, %v7690
    %v8854 = vadd.f32 %v8853, %v7691
    %v8855 = vadd.f32 %v8854, %v7692
    %v8856 = vadd.f32 %v8855, %v7693
    %v8857 = vadd.f32 %v8856, %v7694
    %v8858 = vadd.f32 %v8857, %v7695
    %v8859 = vadd.f32 %v8858, %v7696
    %v8860 = vadd.f32 %v8859, %v7697
    %v8861 = vadd.f32 %v8860, %v7698
    %v8862 = vadd.f32 %v8861, %v7699
    %v8863 = vadd.f32 %v8862, %v7700
    %v8864 = vadd.f32 %v8863, %v7701
    %v8865 = vadd.f32 %v8864, %v7702
    %v8866 = vadd.f32 %v8865, %v7703
    %v8867 = vadd.f32 %v8866, %v7704
    %v8868 = vadd.f32 %v8867, %v7705
    %v8869 = vadd.f32 %v8868, %v7706
    %v8870 = vadd.f32 %v8869, %v7707
    %v8871 = vadd.f32 %v8870, %v7708
    %v8872 = vadd.f32 %v8871, %v7709
    %v8873 = vadd.f32 %v8872, %v7710
    %v8874 = vadd.f32 %v8873, %v7711
    %v8875 = vadd.f32 %v8874, %v7712
    %v8876 = vadd.f32 %v8875, %v7713
    %v8877 = vadd.f32 %v8876, %v7714
    %v8878 = vrot.slane %v8877, 4
    %v8879 = vadd.f32 %v8877, %v8878
    %v8880 = vrot.slane %v8879, 2
    %v8881 = vadd.f32 %v8879, %v8880
    %v8882 = vrot.slane %v8881, 1
    %v8883 = vadd.f32 %v8881, %v8882
    %v8884 = vadd.f32 %v7715, %v7716
    %v8885 = vadd.f32 %v8884, %v7717
    %v8886 = vadd.f32 %v8885, %v7718
    %v8887 = vadd.f32 %v8886, %v7719
    %v8888 = vadd.f32 %v8887, %v7720
    %v8889 = vadd.f32 %v8888, %v7721
    %v8890 = vadd.f32 %v8889, %v7722
    %v8891 = vadd.f32 %v8890, %v7723
    %v8892 = vadd.f32 %v8891, %v7724
    %v8893 = vadd.f32 %v8892, %v7725
    %v8894 = vadd.f32 %v8893, %v7726
    %v8895 = vadd.f32 %v8894, %v7727
    %v8896 = vadd.f32 %v8895, %v7728
    %v8897 = vadd.f32 %v8896, %v7729
    %v8898 = vadd.f32 %v8897, %v7730
    %v8899 = vadd.f32 %v8898, %v7731
    %v8900 = vadd.f32 %v8899, %v7732
    %v8901 = vadd.f32 %v8900, %v7733
    %v8902 = vadd.f32 %v8901, %v7734
    %v8903 = vadd.f32 %v8902, %v7735
    %v8904 = vadd.f32 %v8903, %v7736
    %v8905 = vadd.f32 %v8904, %v7737
    %v8906 = vadd.f32 %v8905, %v7738
    %v8907 = vadd.f32 %v8906, %v7739
    %v8908 = vadd.f32 %v8907, %v7740
    %v8909 = vadd.f32 %v8908, %v7741
    %v8910 = vadd.f32 %v8909, %v7742
    %v8911 = vadd.f32 %v8910, %v7743
    %v8912 = vadd.f32 %v8911, %v7744
    %v8913 = vadd.f32 %v8912, %v7745
    %v8914 = vadd.f32 %v8913, %v7746
    %v8915 = vrot.slane %v8914, 4
    %v8916 = vadd.f32 %v8914, %v8915
    %v8917 = vrot.slane %v8916, 2
    %v8918 = vadd.f32 %v8916, %v8917
    %v8919 = vrot.slane %v8918, 1
    %v8920 = vadd.f32 %v8918, %v8919
    %v8921 = vadd.f32 %v7747, %v7748
    %v8922 = vadd.f32 %v8921, %v7749
    %v8923 = vadd.f32 %v8922, %v7750
    %v8924 = vadd.f32 %v8923, %v7751
    %v8925 = vadd.f32 %v8924, %v7752
    %v8926 = vadd.f32 %v8925, %v7753
    %v8927 = vadd.f32 %v8926, %v7754
    %v8928 = vadd.f32 %v8927, %v7755
    %v8929 = vadd.f32 %v8928, %v7756
    %v8930 = vadd.f32 %v8929, %v7757
    %v8931 = vadd.f32 %v8930, %v7758
    %v8932 = vadd.f32 %v8931, %v7759
    %v8933 = vadd.f32 %v8932, %v7760
    %v8934 = vadd.f32 %v8933, %v7761
    %v8935 = vadd.f32 %v8934, %v7762
    %v8936 = vadd.f32 %v8935, %v7763
    %v8937 = vadd.f32 %v8936, %v7764
    %v8938 = vadd.f32 %v8937, %v7765
    %v8939 = vadd.f32 %v8938, %v7766
    %v8940 = vadd.f32 %v8939, %v7767
    %v8941 = vadd.f32 %v8940, %v7768
    %v8942 = vadd.f32 %v8941, %v7769
    %v8943 = vadd.f32 %v8942, %v7770
    %v8944 = vadd.f32 %v8943, %v7771
    %v8945 = vadd.f32 %v8944, %v7772
    %v8946 = vadd.f32 %v8945, %v7773
    %v8947 = vadd.f32 %v8946, %v7774
    %v8948 = vadd.f32 %v8947, %v7775
    %v8949 = vadd.f32 %v8948, %v7776
    %v8950 = vadd.f32 %v8949, %v7777
    %v8951 = vadd.f32 %v8950, %v7778
    %v8952 = vrot.slane %v8951, 4
    %v8953 = vadd.f32 %v8951, %v8952
    %v8954 = vrot.slane %v8953, 2
    %v8955 = vadd.f32 %v8953, %v8954
    %v8956 = vrot.slane %v8955, 1
    %v8957 = vadd.f32 %v8955, %v8956
    %v8958 = vadd.f32 %v7779, %v7780
    %v8959 = vadd.f32 %v8958, %v7781
    %v8960 = vadd.f32 %v8959, %v7782
    %v8961 = vadd.f32 %v8960, %v7783
    %v8962 = vadd.f32 %v8961, %v7784
    %v8963 = vadd.f32 %v8962, %v7785
    %v8964 = vadd.f32 %v8963, %v7786
    %v8965 = vadd.f32 %v8964, %v7787
    %v8966 = vadd.f32 %v8965, %v7788
    %v8967 = vadd.f32 %v8966, %v7789
    %v8968 = vadd.f32 %v8967, %v7790
    %v8969 = vadd.f32 %v8968, %v7791
    %v8970 = vadd.f32 %v8969, %v7792
    %v8971 = vadd.f32 %v8970, %v7793
    %v8972 = vadd.f32 %v8971, %v7794
    %v8973 = vadd.f32 %v8972, %v7795
    %v8974 = vadd.f32 %v8973, %v7796
    %v8975 = vadd.f32 %v8974, %v7797
    %v8976 = vadd.f32 %v8975, %v7798
    %v8977 = vadd.f32 %v8976, %v7799
    %v8978 = vadd.f32 %v8977, %v7800
    %v8979 = vadd.f32 %v8978, %v7801
    %v8980 = vadd.f32 %v8979, %v7802
    %v8981 = vadd.f32 %v8980, %v7803
    %v8982 = vadd.f32 %v8981, %v7804
    %v8983 = vadd.f32 %v8982, %v7805
    %v8984 = vadd.f32 %v8983, %v7806
    %v8985 = vadd.f32 %v8984, %v7807
    %v8986 = vadd.f32 %v8985, %v7808
    %v8987 = vadd.f32 %v8986, %v7809
    %v8988 = vadd.f32 %v8987, %v7810
    %v8989 = vrot.slane %v8988, 4
    %v8990 = vadd.f32 %v8988, %v8989
    %v8991 = vrot.slane %v8990, 2
    %v8992 = vadd.f32 %v8990, %v8991
    %v8993 = vrot.slane %v8992, 1
    %v8994 = vadd.f32 %v8992, %v8993
    %v8995 = vmul.f32 %v7847, 0.00390625
    %v8996 = vmul.f32 %v7884, 0.00390625
    %v8997 = vmul.f32 %v7921, 0.00390625
    %v8998 = vmul.f32 %v7958, 0.00390625
    %v8999 = vmul.f32 %v7995, 0.00390625
    %v9000 = vmul.f32 %v8032, 0.00390625
    %v9001 = vmul.f32 %v8069, 0.00390625
    %v9002 = vmul.f32 %v8106, 0.00390625
    %v9003 = vmul.f32 %v8143, 0.00390625
    %v9004 = vmul.f32 %v8180, 0.00390625
    %v9005 = vmul.f32 %v8217, 0.00390625
    %v9006 = vmul.f32 %v8254, 0.00390625
    %v9007 = vmul.f32 %v8291, 0.00390625
    %v9008 = vmul.f32 %v8328, 0.00390625
    %v9009 = vmul.f32 %v8365, 0.00390625
    %v9010 = vmul.f32 %v8402, 0.00390625
    %v9011 = vmul.f32 %v8439, 0.00390625
    %v9012 = vmul.f32 %v8476, 0.00390625
    %v9013 = vmul.f32 %v8513, 0.00390625
    %v9014 = vmul.f32 %v8550, 0.00390625
    %v9015 = vmul.f32 %v8587, 0.00390625
    %v9016 = vmul.f32 %v8624, 0.00390625
    %v9017 = vmul.f32 %v8661, 0.00390625
    %v9018 = vmul.f32 %v8698, 0.00390625
    %v9019 = vmul.f32 %v8735, 0.00390625
    %v9020 = vmul.f32 %v8772, 0.00390625
    %v9021 = vmul.f32 %v8809, 0.00390625
    %v9022 = vmul.f32 %v8846, 0.00390625
    %v9023 = vmul.f32 %v8883, 0.00390625
    %v9024 = vmul.f32 %v8920, 0.00390625
    %v9025 = vmul.f32 %v8957, 0.00390625
    %v9026 = vmul.f32 %v8994, 0.00390625
    %v9029 = vrot.slane %v52, 1
    %v9030 = vrot.slane %v52, 2
    %v9031 = vrot.slane %v52, 3
    %v9032 = vrot.slane %v52, 4
    %v9033 = vrot.slane %v52, 5
    %v9034 = vrot.slane %v52, 6
    %v9035 = vrot.slane %v52, 7
    %v9036 = vrot.slane %v53, 1
    %v9037 = vrot.slane %v53, 2
    %v9038 = vrot.slane %v53, 3
    %v9039 = vrot.slane %v53, 4
    %v9040 = vrot.slane %v53, 5
    %v9041 = vrot.slane %v53, 6
    %v9042 = vrot.slane %v53, 7
    %v9059 = vmul.f32 %v8995, %v52
    %v9060 = vmul.f32 %v8996, %v9029
    %v9061 = vmul.f32 %v8997, %v9030
    %v9062 = vmul.f32 %v8998, %v9031
    %v9063 = vmul.f32 %v8999, %v9032
    %v9064 = vmul.f32 %v9000, %v9033
    %v9065 = vmul.f32 %v9001, %v9034
    %v9066 = vmul.f32 %v9002, %v9035
    %v9067 = vmul.f32 %v9003, %v53
    %v9068 = vmul.f32 %v9004, %v9036
    %v9069 = vmul.f32 %v9005, %v9037
    %v9070 = vmul.f32 %v9006, %v9038
    %v9071 = vmul.f32 %v9007, %v9039
    %v9072 = vmul.f32 %v9008, %v9040
    %v9073 = vmul.f32 %v9009, %v9041
    %v9074 = vmul.f32 %v9010, %v9042
    %v9075 = vmul.f32 %v9011, %v52
    %v9076 = vmul.f32 %v9012, %v9029
    %v9077 = vmul.f32 %v9013, %v9030
    %v9078 = vmul.f32 %v9014, %v9031
    %v9079 = vmul.f32 %v9015, %v9032
    %v9080 = vmul.f32 %v9016, %v9033
    %v9081 = vmul.f32 %v9017, %v9034
    %v9082 = vmul.f32 %v9018, %v9035
    %v9083 = vmul.f32 %v9019, %v53
    %v9084 = vmul.f32 %v9020, %v9036
    %v9085 = vmul.f32 %v9021, %v9037
    %v9086 = vmul.f32 %v9022, %v9038
    %v9087 = vmul.f32 %v9023, %v9039
    %v9088 = vmul.f32 %v9024, %v9040
    %v9089 = vmul.f32 %v9025, %v9041
    %v9090 = vmul.f32 %v9026, %v9042
    %v9091 = vpack.c.bf16 %v9059, %v9059
    %v9092 = vpack.c.bf16 %v9060, %v9060
    %v9093 = vpack.c.bf16 %v9061, %v9061
    %v9094 = vpack.c.bf16 %v9062, %v9062
    %v9095 = vpack.c.bf16 %v9063, %v9063
    %v9096 = vpack.c.bf16 %v9064, %v9064
    %v9097 = vpack.c.bf16 %v9065, %v9065
    %v9098 = vpack.c.bf16 %v9066, %v9066
    %v9099 = vpack.c.bf16 %v9067, %v9067
    %v9100 = vpack.c.bf16 %v9068, %v9068
    %v9101 = vpack.c.bf16 %v9069, %v9069
    %v9102 = vpack.c.bf16 %v9070, %v9070
    %v9103 = vpack.c.bf16 %v9071, %v9071
    %v9104 = vpack.c.bf16 %v9072, %v9072
    %v9105 = vpack.c.bf16 %v9073, %v9073
    %v9106 = vpack.c.bf16 %v9074, %v9074
    %v9107 = vpack.c.bf16 %v9075, %v9075
    %v9108 = vpack.c.bf16 %v9076, %v9076
    %v9109 = vpack.c.bf16 %v9077, %v9077
    %v9110 = vpack.c.bf16 %v9078, %v9078
    %v9111 = vpack.c.bf16 %v9079, %v9079
    %v9112 = vpack.c.bf16 %v9080, %v9080
    %v9113 = vpack.c.bf16 %v9081, %v9081
    %v9114 = vpack.c.bf16 %v9082, %v9082
    %v9115 = vpack.c.bf16 %v9083, %v9083
    %v9116 = vpack.c.bf16 %v9084, %v9084
    %v9117 = vpack.c.bf16 %v9085, %v9085
    %v9118 = vpack.c.bf16 %v9086, %v9086
    %v9119 = vpack.c.bf16 %v9087, %v9087
    %v9120 = vpack.c.bf16 %v9088, %v9088
    %v9121 = vpack.c.bf16 %v9089, %v9089
    %v9122 = vpack.c.bf16 %v9090, %v9090
    %v9123 = vld [vmem:[%s3] sm:$0xf]
    %v9124 = vld [vmem:[%s3 + $0x4] sm:$0xf]
    %v9125 = vld [vmem:[%s3 + $0x8] sm:$0xf]
    %v9126 = vld [vmem:[%s3 + $0xc] sm:$0xf]
    %v9127 = vld [vmem:[%s3 + $0x10] sm:$0xf]
    %v9128 = vld [vmem:[%s3 + $0x14] sm:$0xf]
    %v9129 = vld [vmem:[%s3 + $0x18] sm:$0xf]
    %v9130 = vld [vmem:[%s3 + $0x1c] sm:$0xf]
    %v9131 = vld [vmem:[%s3 + $0x20] sm:$0xf]
    %v9132 = vld [vmem:[%s3 + $0x24] sm:$0xf]
    %v9133 = vld [vmem:[%s3 + $0x28] sm:$0xf]
    %v9134 = vld [vmem:[%s3 + $0x2c] sm:$0xf]
    %v9135 = vld [vmem:[%s3 + $0x30] sm:$0xf]
    %v9136 = vld [vmem:[%s3 + $0x34] sm:$0xf]
    %v9137 = vld [vmem:[%s3 + $0x38] sm:$0xf]
    %v9138 = vld [vmem:[%s3 + $0x3c] sm:$0xf]
    %v9171 = vunpack.c.l.b16 %v9091
    %v9172 = vunpack.c.l.b16 %v9092
    %v9173 = vunpack.c.l.b16 %v9093
    %v9174 = vunpack.c.l.b16 %v9094
    %v9175 = vunpack.c.l.b16 %v9095
    %v9176 = vunpack.c.l.b16 %v9096
    %v9177 = vunpack.c.l.b16 %v9097
    %v9178 = vunpack.c.l.b16 %v9098
    %v9179 = vunpack.c.l.b16 %v9099
    %v9180 = vunpack.c.l.b16 %v9100
    %v9181 = vunpack.c.l.b16 %v9101
    %v9182 = vunpack.c.l.b16 %v9102
    %v9183 = vunpack.c.l.b16 %v9103
    %v9184 = vunpack.c.l.b16 %v9104
    %v9185 = vunpack.c.l.b16 %v9105
    %v9186 = vunpack.c.l.b16 %v9106
    %v9187 = vunpack.c.l.b16 %v9107
    %v9188 = vunpack.c.l.b16 %v9108
    %v9189 = vunpack.c.l.b16 %v9109
    %v9190 = vunpack.c.l.b16 %v9110
    %v9191 = vunpack.c.l.b16 %v9111
    %v9192 = vunpack.c.l.b16 %v9112
    %v9193 = vunpack.c.l.b16 %v9113
    %v9194 = vunpack.c.l.b16 %v9114
    %v9195 = vunpack.c.l.b16 %v9115
    %v9196 = vunpack.c.l.b16 %v9116
    %v9197 = vunpack.c.l.b16 %v9117
    %v9198 = vunpack.c.l.b16 %v9118
    %v9199 = vunpack.c.l.b16 %v9119
    %v9200 = vunpack.c.l.b16 %v9120
    %v9201 = vunpack.c.l.b16 %v9121
    %v9202 = vunpack.c.l.b16 %v9122
    %v9203 = vrot.slane %v9172, 7
    %vm9204 = vcmask 1041409
    %v9205 = vsel %vm9204, %v9203, %v9171
    %v9206 = vrot.slane %v9173, 6
    %vm9207 = vcmask 1042434
    %v9208 = vsel %vm9207, %v9206, %v9205
    %v9209 = vrot.slane %v9174, 5
    %vm9210 = vcmask 1043459
    %v9211 = vsel %vm9210, %v9209, %v9208
    %v9212 = vrot.slane %v9175, 4
    %vm9213 = vcmask 1044484
    %v9214 = vsel %vm9213, %v9212, %v9211
    %v9215 = vrot.slane %v9176, 3
    %vm9216 = vcmask 1045509
    %v9217 = vsel %vm9216, %v9215, %v9214
    %v9218 = vrot.slane %v9177, 2
    %vm9219 = vcmask 1046534
    %v9220 = vsel %vm9219, %v9218, %v9217
    %v9221 = vrot.slane %v9178, 1
    %vm9222 = vcmask 1047559
    %v9223 = vsel %vm9222, %v9221, %v9220
    %v9224 = vrot.slane %v9180, 7
    %v9225 = vsel %vm9204, %v9224, %v9179
    %v9226 = vrot.slane %v9181, 6
    %v9227 = vsel %vm9207, %v9226, %v9225
    %v9228 = vrot.slane %v9182, 5
    %v9229 = vsel %vm9210, %v9228, %v9227
    %v9230 = vrot.slane %v9183, 4
    %v9231 = vsel %vm9213, %v9230, %v9229
    %v9232 = vrot.slane %v9184, 3
    %v9233 = vsel %vm9216, %v9232, %v9231
    %v9234 = vrot.slane %v9185, 2
    %v9235 = vsel %vm9219, %v9234, %v9233
    %v9236 = vrot.slane %v9186, 1
    %v9237 = vsel %vm9222, %v9236, %v9235
    %v9238 = vrot.slane %v9188, 7
    %v9239 = vsel %vm9204, %v9238, %v9187
    %v9240 = vrot.slane %v9189, 6
    %v9241 = vsel %vm9207, %v9240, %v9239
    %v9242 = vrot.slane %v9190, 5
    %v9243 = vsel %vm9210, %v9242, %v9241
    %v9244 = vrot.slane %v9191, 4
    %v9245 = vsel %vm9213, %v9244, %v9243
    %v9246 = vrot.slane %v9192, 3
    %v9247 = vsel %vm9216, %v9246, %v9245
    %v9248 = vrot.slane %v9193, 2
    %v9249 = vsel %vm9219, %v9248, %v9247
    %v9250 = vrot.slane %v9194, 1
    %v9251 = vsel %vm9222, %v9250, %v9249
    %v9252 = vrot.slane %v9196, 7
    %v9253 = vsel %vm9204, %v9252, %v9195
    %v9254 = vrot.slane %v9197, 6
    %v9255 = vsel %vm9207, %v9254, %v9253
    %v9256 = vrot.slane %v9198, 5
    %v9257 = vsel %vm9210, %v9256, %v9255
    %v9258 = vrot.slane %v9199, 4
    %v9259 = vsel %vm9213, %v9258, %v9257
    %v9260 = vrot.slane %v9200, 3
    %v9261 = vsel %vm9216, %v9260, %v9259
    %v9262 = vrot.slane %v9201, 2
    %v9263 = vsel %vm9219, %v9262, %v9261
    %v9264 = vrot.slane %v9202, 1
    %v9265 = vsel %vm9222, %v9264, %v9263
    %v9266 = vpack.c.b16 %v9237, %v9223
    %v9267 = vpack.c.b16 %v9265, %v9251
    %v9286 = vunpack.c.l.b16 %v9123
    %v9287 = vunpack.c.l.b16 %v9124
    %v9288 = vunpack.c.l.b16 %v9125
    %v9289 = vunpack.c.l.b16 %v9126
    %v9290 = vunpack.c.l.b16 %v9127
    %v9291 = vunpack.c.l.b16 %v9128
    %v9292 = vunpack.c.l.b16 %v9129
    %v9293 = vunpack.c.l.b16 %v9130
    %v9294 = vunpack.c.l.b16 %v9131
    %v9295 = vunpack.c.l.b16 %v9132
    %v9296 = vunpack.c.l.b16 %v9133
    %v9297 = vunpack.c.l.b16 %v9134
    %v9298 = vunpack.c.l.b16 %v9135
    %v9299 = vunpack.c.l.b16 %v9136
    %v9300 = vunpack.c.l.b16 %v9137
    %v9301 = vunpack.c.l.b16 %v9138
    %v9302 = vpack.c.b16 %v9287, %v9286
    %v9303 = vpack.c.b16 %v9289, %v9288
    %v9304 = vpack.c.b16 %v9291, %v9290
    %v9305 = vpack.c.b16 %v9293, %v9292
    %v9306 = vpack.c.b16 %v9295, %v9294
    %v9307 = vpack.c.b16 %v9297, %v9296
    %v9308 = vpack.c.b16 %v9299, %v9298
    %v9309 = vpack.c.b16 %v9301, %v9300
    %9318 = vmatpush.bf16.msra.mxu0 %v9309
    %9319 = vmatpush.bf16.msra.mxu0 %v9308
    %9320 = vmatpush.bf16.msra.mxu0 %v9307
    %9321 = vmatpush.bf16.msra.mxu0 %v9306
    %9322 = vmatpush.bf16.msra.mxu0 %v9305
    %9323 = vmatpush.bf16.msra.mxu0 %v9304
    %9324 = vmatpush.bf16.msra.mxu0 %v9303
    %9325 = vmatpush.bf16.msra.mxu0 %v9302
    %9326 = vmatmul.bf16.gmra.mxu0 %v9266
    %v9327 = vpop.f32.mrf.mxu0
    %v9328 = vadd.f32 0.0, %v9327
    %v9329 = vpop.f32.mrf.mxu0
    %v9330 = vadd.f32 0.0, %v9329
    %9331 = vmatmul.bf16.gmra.mxu0 %v9267
    %v9332 = vpop.f32.mrf.mxu0
    %v9333 = vadd.f32 0.0, %v9332
    %v9334 = vpop.f32.mrf.mxu0
    %v9335 = vadd.f32 0.0, %v9334
    %9336 = vdwg.mxu0
    %v9337 = vld [vmem:[%s4] sm:$0x1]
    %v9338 = vld [vmem:[%s4 + $0x1] sm:$0x1]
    %v9339 = vadd.f32 %v9328, %v9330
    %v9340 = vrot.slane %v9339, 4
    %v9341 = vadd.f32 %v9339, %v9340
    %v9342 = vrot.slane %v9341, 2
    %v9343 = vadd.f32 %v9341, %v9342
    %v9344 = vrot.slane %v9343, 1
    %v9345 = vadd.f32 %v9343, %v9344
    %v9346 = vadd.f32 %v9333, %v9335
    %v9347 = vrot.slane %v9346, 4
    %v9348 = vadd.f32 %v9346, %v9347
    %v9349 = vrot.slane %v9348, 2
    %v9350 = vadd.f32 %v9348, %v9349
    %v9351 = vrot.slane %v9350, 1
    %v9352 = vadd.f32 %v9350, %v9351
    %v9353 = vmul.f32 %v9345, 0.5
    %v9354 = vmul.f32 %v9352, 0.5
    %v9355 = vmul.f32 %v9328, %v9328
    %v9356 = vmul.f32 %v9330, %v9330
    %v9357 = vmul.f32 %v9333, %v9333
    %v9358 = vmul.f32 %v9335, %v9335
    %v9359 = vadd.f32 %v9355, %v9356
    %v9360 = vrot.slane %v9359, 4
    %v9361 = vadd.f32 %v9359, %v9360
    %v9362 = vrot.slane %v9361, 2
    %v9363 = vadd.f32 %v9361, %v9362
    %v9364 = vrot.slane %v9363, 1
    %v9365 = vadd.f32 %v9363, %v9364
    %v9366 = vadd.f32 %v9357, %v9358
    %v9367 = vrot.slane %v9366, 4
    %v9368 = vadd.f32 %v9366, %v9367
    %v9369 = vrot.slane %v9368, 2
    %v9370 = vadd.f32 %v9368, %v9369
    %v9371 = vrot.slane %v9370, 1
    %v9372 = vadd.f32 %v9370, %v9371
    %v9373 = vmul.f32 %v9365, 0.5
    %v9374 = vmul.f32 %v9372, 0.5
    %v9375 = vmul.f32 %v9353, %v9353
    %v9376 = vmul.f32 %v9354, %v9354
    %v9377 = vsub.f32 %v9373, %v9375
    %v9378 = vsub.f32 %v9374, %v9376
    %v9379 = vmax.f32 %v9377, 0.0
    %v9380 = vmax.f32 %v9378, 0.0
    %v9381 = vadd.f32 %v9379, 1e-05
    %v9382 = vadd.f32 %v9380, 1e-05
    %v9383 = vrsqrt.pop %v9381
    %v9384 = vmul.f32 %v9383, %v9381
    %v9385 = vmul.f32 %v9384, %v9383
    %v9386 = vmul.f32 0.5, %v9385
    %v9387 = vsub.f32 1.5, %v9386
    %v9388 = vmul.f32 %v9383, %v9387
    %vm9389 = vweird.f32 %v9381
    %vm9390 = vweird.f32 %v9383
    %vm9391 = vmor %vm9389, %vm9390
    %v9392 = vsel %vm9391, %v9383, %v9388
    %v9393 = vrsqrt.pop %v9382
    %v9394 = vmul.f32 %v9393, %v9382
    %v9395 = vmul.f32 %v9394, %v9393
    %v9396 = vmul.f32 0.5, %v9395
    %v9397 = vsub.f32 1.5, %v9396
    %v9398 = vmul.f32 %v9393, %v9397
    %vm9399 = vweird.f32 %v9382
    %vm9400 = vweird.f32 %v9393
    %vm9401 = vmor %vm9399, %vm9400
    %v9402 = vsel %vm9401, %v9393, %v9398
    %v9403 = vmul.f32 %v9337, %v9392
    %v9404 = vmul.f32 %v9337, %v9402
    %v9405 = vmul.f32 %v9353, %v9403
    %v9406 = vmul.f32 %v9354, %v9404
    %v9407 = vsub.f32 %v9338, %v9405
    %v9408 = vsub.f32 %v9338, %v9406
    %v9409 = vperm.slane %v9403, 0
    %v9410 = vperm.slane %v9404, 0
    %v9411 = vmul.f32 %v9328, %v9409
    %v9412 = vmul.f32 %v9330, %v9409
    %v9413 = vmul.f32 %v9333, %v9410
    %v9414 = vmul.f32 %v9335, %v9410
    %v9415 = vperm.slane %v9407, 0
    %v9416 = vperm.slane %v9408, 0
    %v9417 = vadd.f32 %v9411, %v9415
    %v9418 = vadd.f32 %v9412, %v9415
    %v9419 = vadd.f32 %v9413, %v9416
    %v9420 = vadd.f32 %v9414, %v9416
    %v9421 = vmax.f32 %v9417, 0.0
    %v9422 = vmax.f32 %v9418, 0.0
    %v9423 = vmax.f32 %v9419, 0.0
    %v9424 = vmax.f32 %v9420, 0.0
    %v9425 = vmul.f32 %v9421, %v52
    %v9426 = vmul.f32 %v9422, %v53
    %v9427 = vmul.f32 %v9423, %v52
    %v9428 = vmul.f32 %v9424, %v53
    %v9429 = vpack.c.bf16 %v9426, %v9425
    %v9430 = vpack.c.bf16 %v9428, %v9427
    %v9431 = vld [vmem:[%s5] sm:$0xf]
    %v9432 = vld [vmem:[%s5 + $0x4] sm:$0xf]
    %v9433 = vld [vmem:[%s5 + $0x8] sm:$0xf]
    %v9434 = vld [vmem:[%s5 + $0xc] sm:$0xf]
    %v9435 = vld [vmem:[%s5 + $0x10] sm:$0xf]
    %v9436 = vld [vmem:[%s5 + $0x14] sm:$0xf]
    %v9437 = vld [vmem:[%s5 + $0x18] sm:$0xf]
    %v9438 = vld [vmem:[%s5 + $0x1c] sm:$0xf]
    %v9439 = vld [vmem:[%s5 + $0x20] sm:$0xf]
    %v9440 = vld [vmem:[%s5 + $0x24] sm:$0xf]
    %v9441 = vld [vmem:[%s5 + $0x28] sm:$0xf]
    %v9442 = vld [vmem:[%s5 + $0x2c] sm:$0xf]
    %v9443 = vld [vmem:[%s5 + $0x30] sm:$0xf]
    %v9444 = vld [vmem:[%s5 + $0x34] sm:$0xf]
    %v9445 = vld [vmem:[%s5 + $0x38] sm:$0xf]
    %v9446 = vld [vmem:[%s5 + $0x3c] sm:$0xf]
    %v9463 = vunpack.c.l.b16 %v9431
    %v9464 = vunpack.c.l.b16 %v9432
    %v9465 = vunpack.c.l.b16 %v9433
    %v9466 = vunpack.c.l.b16 %v9434
    %v9467 = vunpack.c.l.b16 %v9435
    %v9468 = vunpack.c.l.b16 %v9436
    %v9469 = vunpack.c.l.b16 %v9437
    %v9470 = vunpack.c.l.b16 %v9438
    %v9471 = vunpack.c.l.b16 %v9439
    %v9472 = vunpack.c.l.b16 %v9440
    %v9473 = vunpack.c.l.b16 %v9441
    %v9474 = vunpack.c.l.b16 %v9442
    %v9475 = vunpack.c.l.b16 %v9443
    %v9476 = vunpack.c.l.b16 %v9444
    %v9477 = vunpack.c.l.b16 %v9445
    %v9478 = vunpack.c.l.b16 %v9446
    %v9479 = vpack.c.b16 %v9464, %v9463
    %v9480 = vpack.c.b16 %v9466, %v9465
    %v9481 = vpack.c.b16 %v9468, %v9467
    %v9482 = vpack.c.b16 %v9470, %v9469
    %v9483 = vpack.c.b16 %v9472, %v9471
    %v9484 = vpack.c.b16 %v9474, %v9473
    %v9485 = vpack.c.b16 %v9476, %v9475
    %v9486 = vpack.c.b16 %v9478, %v9477
    %9495 = vmatpush.bf16.msra.mxu0 %v9486
    %9496 = vmatpush.bf16.msra.mxu0 %v9485
    %9497 = vmatpush.bf16.msra.mxu0 %v9484
    %9498 = vmatpush.bf16.msra.mxu0 %v9483
    %9499 = vmatpush.bf16.msra.mxu0 %v9482
    %9500 = vmatpush.bf16.msra.mxu0 %v9481
    %9501 = vmatpush.bf16.msra.mxu0 %v9480
    %9502 = vmatpush.bf16.msra.mxu0 %v9479
    %9503 = vmatmul.bf16.gmra.mxu0 %v9429
    %v9504 = vpop.f32.mrf.mxu0
    %v9505 = vadd.f32 0.0, %v9504
    %v9506 = vpop.f32.mrf.mxu0
    %v9507 = vadd.f32 0.0, %v9506
    %9508 = vmatmul.bf16.gmra.mxu0 %v9430
    %v9509 = vpop.f32.mrf.mxu0
    %v9510 = vadd.f32 0.0, %v9509
    %v9511 = vpop.f32.mrf.mxu0
    %v9512 = vadd.f32 0.0, %v9511
    %9513 = vdwg.mxu0
    %v9514 = vld [vmem:[%s6] sm:$0x1]
    %v9515 = vld [vmem:[%s6 + $0x1] sm:$0x1]
    %v9516 = vadd.f32 %v9505, %v9507
    %v9517 = vrot.slane %v9516, 4
    %v9518 = vadd.f32 %v9516, %v9517
    %v9519 = vrot.slane %v9518, 2
    %v9520 = vadd.f32 %v9518, %v9519
    %v9521 = vrot.slane %v9520, 1
    %v9522 = vadd.f32 %v9520, %v9521
    %v9523 = vadd.f32 %v9510, %v9512
    %v9524 = vrot.slane %v9523, 4
    %v9525 = vadd.f32 %v9523, %v9524
    %v9526 = vrot.slane %v9525, 2
    %v9527 = vadd.f32 %v9525, %v9526
    %v9528 = vrot.slane %v9527, 1
    %v9529 = vadd.f32 %v9527, %v9528
    %v9530 = vmul.f32 %v9522, 0.5
    %v9531 = vmul.f32 %v9529, 0.5
    %v9532 = vmul.f32 %v9505, %v9505
    %v9533 = vmul.f32 %v9507, %v9507
    %v9534 = vmul.f32 %v9510, %v9510
    %v9535 = vmul.f32 %v9512, %v9512
    %v9536 = vadd.f32 %v9532, %v9533
    %v9537 = vrot.slane %v9536, 4
    %v9538 = vadd.f32 %v9536, %v9537
    %v9539 = vrot.slane %v9538, 2
    %v9540 = vadd.f32 %v9538, %v9539
    %v9541 = vrot.slane %v9540, 1
    %v9542 = vadd.f32 %v9540, %v9541
    %v9543 = vadd.f32 %v9534, %v9535
    %v9544 = vrot.slane %v9543, 4
    %v9545 = vadd.f32 %v9543, %v9544
    %v9546 = vrot.slane %v9545, 2
    %v9547 = vadd.f32 %v9545, %v9546
    %v9548 = vrot.slane %v9547, 1
    %v9549 = vadd.f32 %v9547, %v9548
    %v9550 = vmul.f32 %v9542, 0.5
    %v9551 = vmul.f32 %v9549, 0.5
    %v9552 = vmul.f32 %v9530, %v9530
    %v9553 = vmul.f32 %v9531, %v9531
    %v9554 = vsub.f32 %v9550, %v9552
    %v9555 = vsub.f32 %v9551, %v9553
    %v9556 = vmax.f32 %v9554, 0.0
    %v9557 = vmax.f32 %v9555, 0.0
    %v9558 = vadd.f32 %v9556, 1e-05
    %v9559 = vadd.f32 %v9557, 1e-05
    %v9560 = vrsqrt.pop %v9558
    %v9561 = vmul.f32 %v9560, %v9558
    %v9562 = vmul.f32 %v9561, %v9560
    %v9563 = vmul.f32 0.5, %v9562
    %v9564 = vsub.f32 1.5, %v9563
    %v9565 = vmul.f32 %v9560, %v9564
    %vm9566 = vweird.f32 %v9558
    %vm9567 = vweird.f32 %v9560
    %vm9568 = vmor %vm9566, %vm9567
    %v9569 = vsel %vm9568, %v9560, %v9565
    %v9570 = vrsqrt.pop %v9559
    %v9571 = vmul.f32 %v9570, %v9559
    %v9572 = vmul.f32 %v9571, %v9570
    %v9573 = vmul.f32 0.5, %v9572
    %v9574 = vsub.f32 1.5, %v9573
    %v9575 = vmul.f32 %v9570, %v9574
    %vm9576 = vweird.f32 %v9559
    %vm9577 = vweird.f32 %v9570
    %vm9578 = vmor %vm9576, %vm9577
    %v9579 = vsel %vm9578, %v9570, %v9575
    %v9580 = vmul.f32 %v9514, %v9569
    %v9581 = vmul.f32 %v9514, %v9579
    %v9582 = vmul.f32 %v9530, %v9580
    %v9583 = vmul.f32 %v9531, %v9581
    %v9584 = vsub.f32 %v9515, %v9582
    %v9585 = vsub.f32 %v9515, %v9583
    %v9586 = vperm.slane %v9580, 0
    %v9587 = vperm.slane %v9581, 0
    %v9588 = vmul.f32 %v9505, %v9586
    %v9589 = vmul.f32 %v9507, %v9586
    %v9590 = vmul.f32 %v9510, %v9587
    %v9591 = vmul.f32 %v9512, %v9587
    %v9592 = vperm.slane %v9584, 0
    %v9593 = vperm.slane %v9585, 0
    %v9594 = vadd.f32 %v9588, %v9592
    %v9595 = vadd.f32 %v9589, %v9592
    %v9596 = vadd.f32 %v9590, %v9593
    %v9597 = vadd.f32 %v9591, %v9593
    %v9598 = vmax.f32 %v9594, 0.0
    %v9599 = vmax.f32 %v9595, 0.0
    %v9600 = vmax.f32 %v9596, 0.0
    %v9601 = vmax.f32 %v9597, 0.0
    %v9602 = vmul.f32 %v9598, %v52
    %v9603 = vmul.f32 %v9599, %v53
    %v9604 = vmul.f32 %v9600, %v52
    %v9605 = vmul.f32 %v9601, %v53
    %v9606 = vpack.c.bf16 %v9603, %v9602
    %v9607 = vpack.c.bf16 %v9605, %v9604
    %v9608 = vld [vmem:[%s7] sm:$0xf]
    %v9609 = vld [vmem:[%s7 + $0x4] sm:$0xf]
    %v9610 = vld [vmem:[%s7 + $0x8] sm:$0xf]
    %v9611 = vld [vmem:[%s7 + $0xc] sm:$0xf]
    %v9612 = vld [vmem:[%s7 + $0x10] sm:$0xf]
    %v9613 = vld [vmem:[%s7 + $0x14] sm:$0xf]
    %v9614 = vld [vmem:[%s7 + $0x18] sm:$0xf]
    %v9615 = vld [vmem:[%s7 + $0x1c] sm:$0xf]
    %v9616 = vld [vmem:[%s7 + $0x20] sm:$0xf]
    %v9617 = vld [vmem:[%s7 + $0x24] sm:$0xf]
    %v9618 = vld [vmem:[%s7 + $0x28] sm:$0xf]
    %v9619 = vld [vmem:[%s7 + $0x2c] sm:$0xf]
    %v9620 = vld [vmem:[%s7 + $0x30] sm:$0xf]
    %v9621 = vld [vmem:[%s7 + $0x34] sm:$0xf]
    %v9622 = vld [vmem:[%s7 + $0x38] sm:$0xf]
    %v9623 = vld [vmem:[%s7 + $0x3c] sm:$0xf]
    %v9640 = vunpack.c.l.b16 %v9608
    %v9641 = vunpack.c.l.b16 %v9609
    %v9642 = vunpack.c.l.b16 %v9610
    %v9643 = vunpack.c.l.b16 %v9611
    %v9644 = vunpack.c.l.b16 %v9612
    %v9645 = vunpack.c.l.b16 %v9613
    %v9646 = vunpack.c.l.b16 %v9614
    %v9647 = vunpack.c.l.b16 %v9615
    %v9648 = vunpack.c.l.b16 %v9616
    %v9649 = vunpack.c.l.b16 %v9617
    %v9650 = vunpack.c.l.b16 %v9618
    %v9651 = vunpack.c.l.b16 %v9619
    %v9652 = vunpack.c.l.b16 %v9620
    %v9653 = vunpack.c.l.b16 %v9621
    %v9654 = vunpack.c.l.b16 %v9622
    %v9655 = vunpack.c.l.b16 %v9623
    %v9656 = vpack.c.b16 %v9641, %v9640
    %v9657 = vpack.c.b16 %v9643, %v9642
    %v9658 = vpack.c.b16 %v9645, %v9644
    %v9659 = vpack.c.b16 %v9647, %v9646
    %v9660 = vpack.c.b16 %v9649, %v9648
    %v9661 = vpack.c.b16 %v9651, %v9650
    %v9662 = vpack.c.b16 %v9653, %v9652
    %v9663 = vpack.c.b16 %v9655, %v9654
    %9672 = vmatpush.bf16.msra.mxu0 %v9663
    %9673 = vmatpush.bf16.msra.mxu0 %v9662
    %9674 = vmatpush.bf16.msra.mxu0 %v9661
    %9675 = vmatpush.bf16.msra.mxu0 %v9660
    %9676 = vmatpush.bf16.msra.mxu0 %v9659
    %9677 = vmatpush.bf16.msra.mxu0 %v9658
    %9678 = vmatpush.bf16.msra.mxu0 %v9657
    %9679 = vmatpush.bf16.msra.mxu0 %v9656
    %9680 = vmatmul.bf16.gmra.mxu0 %v9606
    %v9681 = vpop.f32.mrf.mxu0
    %v9682 = vadd.f32 0.0, %v9681
    %v9683 = vpop.f32.mrf.mxu0
    %v9684 = vadd.f32 0.0, %v9683
    %9685 = vmatmul.bf16.gmra.mxu0 %v9607
    %v9686 = vpop.f32.mrf.mxu0
    %v9687 = vadd.f32 0.0, %v9686
    %v9688 = vpop.f32.mrf.mxu0
    %v9689 = vadd.f32 0.0, %v9688
    %9690 = vdwg.mxu0
    %v9691 = vld [vmem:[%s8] sm:$0x1]
    %v9692 = vld [vmem:[%s8 + $0x1] sm:$0x1]
    %v9693 = vadd.f32 %v9682, %v9684
    %v9694 = vrot.slane %v9693, 4
    %v9695 = vadd.f32 %v9693, %v9694
    %v9696 = vrot.slane %v9695, 2
    %v9697 = vadd.f32 %v9695, %v9696
    %v9698 = vrot.slane %v9697, 1
    %v9699 = vadd.f32 %v9697, %v9698
    %v9700 = vadd.f32 %v9687, %v9689
    %v9701 = vrot.slane %v9700, 4
    %v9702 = vadd.f32 %v9700, %v9701
    %v9703 = vrot.slane %v9702, 2
    %v9704 = vadd.f32 %v9702, %v9703
    %v9705 = vrot.slane %v9704, 1
    %v9706 = vadd.f32 %v9704, %v9705
    %v9707 = vmul.f32 %v9699, 0.5
    %v9708 = vmul.f32 %v9706, 0.5
    %v9709 = vmul.f32 %v9682, %v9682
    %v9710 = vmul.f32 %v9684, %v9684
    %v9711 = vmul.f32 %v9687, %v9687
    %v9712 = vmul.f32 %v9689, %v9689
    %v9713 = vadd.f32 %v9709, %v9710
    %v9714 = vrot.slane %v9713, 4
    %v9715 = vadd.f32 %v9713, %v9714
    %v9716 = vrot.slane %v9715, 2
    %v9717 = vadd.f32 %v9715, %v9716
    %v9718 = vrot.slane %v9717, 1
    %v9719 = vadd.f32 %v9717, %v9718
    %v9720 = vadd.f32 %v9711, %v9712
    %v9721 = vrot.slane %v9720, 4
    %v9722 = vadd.f32 %v9720, %v9721
    %v9723 = vrot.slane %v9722, 2
    %v9724 = vadd.f32 %v9722, %v9723
    %v9725 = vrot.slane %v9724, 1
    %v9726 = vadd.f32 %v9724, %v9725
    %v9727 = vmul.f32 %v9719, 0.5
    %v9728 = vmul.f32 %v9726, 0.5
    %v9729 = vmul.f32 %v9707, %v9707
    %v9730 = vmul.f32 %v9708, %v9708
    %v9731 = vsub.f32 %v9727, %v9729
    %v9732 = vsub.f32 %v9728, %v9730
    %v9733 = vmax.f32 %v9731, 0.0
    %v9734 = vmax.f32 %v9732, 0.0
    %v9735 = vadd.f32 %v9733, 1e-05
    %v9736 = vadd.f32 %v9734, 1e-05
    %v9737 = vrsqrt.pop %v9735
    %v9738 = vmul.f32 %v9737, %v9735
    %v9739 = vmul.f32 %v9738, %v9737
    %v9740 = vmul.f32 0.5, %v9739
    %v9741 = vsub.f32 1.5, %v9740
    %v9742 = vmul.f32 %v9737, %v9741
    %vm9743 = vweird.f32 %v9735
    %vm9744 = vweird.f32 %v9737
    %vm9745 = vmor %vm9743, %vm9744
    %v9746 = vsel %vm9745, %v9737, %v9742
    %v9747 = vrsqrt.pop %v9736
    %v9748 = vmul.f32 %v9747, %v9736
    %v9749 = vmul.f32 %v9748, %v9747
    %v9750 = vmul.f32 0.5, %v9749
    %v9751 = vsub.f32 1.5, %v9750
    %v9752 = vmul.f32 %v9747, %v9751
    %vm9753 = vweird.f32 %v9736
    %vm9754 = vweird.f32 %v9747
    %vm9755 = vmor %vm9753, %vm9754
    %v9756 = vsel %vm9755, %v9747, %v9752
    %v9757 = vmul.f32 %v9691, %v9746
    %v9758 = vmul.f32 %v9691, %v9756
    %v9759 = vmul.f32 %v9707, %v9757
    %v9760 = vmul.f32 %v9708, %v9758
    %v9761 = vsub.f32 %v9692, %v9759
    %v9762 = vsub.f32 %v9692, %v9760
    %v9763 = vperm.slane %v9757, 0
    %v9764 = vperm.slane %v9758, 0
    %v9765 = vmul.f32 %v9682, %v9763
    %v9766 = vmul.f32 %v9684, %v9763
    %v9767 = vmul.f32 %v9687, %v9764
    %v9768 = vmul.f32 %v9689, %v9764
    %v9769 = vperm.slane %v9761, 0
    %v9770 = vperm.slane %v9762, 0
    %v9771 = vadd.f32 %v9765, %v9769
    %v9772 = vadd.f32 %v9766, %v9769
    %v9773 = vadd.f32 %v9767, %v9770
    %v9774 = vadd.f32 %v9768, %v9770
    %v9775 = vmul.f32 %v9771, %v52
    %v9776 = vmul.f32 %v9772, %v53
    %v9777 = vmul.f32 %v9773, %v52
    %v9778 = vmul.f32 %v9774, %v53
    %v9779 = vpack.c.bf16 %v9776, %v9775
    %v9780 = vpack.c.bf16 %v9778, %v9777
    %v9781 = vld [vmem:[%s9] sm:$0xf]
    %v9782 = vld [vmem:[%s9 + $0x4] sm:$0xf]
    %v9783 = vld [vmem:[%s9 + $0x8] sm:$0xf]
    %v9784 = vld [vmem:[%s9 + $0xc] sm:$0xf]
    %v9785 = vld [vmem:[%s9 + $0x10] sm:$0xf]
    %v9786 = vld [vmem:[%s9 + $0x14] sm:$0xf]
    %v9787 = vld [vmem:[%s9 + $0x18] sm:$0xf]
    %v9788 = vld [vmem:[%s9 + $0x1c] sm:$0xf]
    %v9789 = vld [vmem:[%s9 + $0x20] sm:$0xf]
    %v9790 = vld [vmem:[%s9 + $0x24] sm:$0xf]
    %v9791 = vld [vmem:[%s9 + $0x28] sm:$0xf]
    %v9792 = vld [vmem:[%s9 + $0x2c] sm:$0xf]
    %v9793 = vld [vmem:[%s9 + $0x30] sm:$0xf]
    %v9794 = vld [vmem:[%s9 + $0x34] sm:$0xf]
    %v9795 = vld [vmem:[%s9 + $0x38] sm:$0xf]
    %v9796 = vld [vmem:[%s9 + $0x3c] sm:$0xf]
    %v9813 = vunpack.c.l.b16 %v9781
    %v9814 = vunpack.c.l.b16 %v9782
    %v9815 = vunpack.c.l.b16 %v9783
    %v9816 = vunpack.c.l.b16 %v9784
    %v9817 = vunpack.c.l.b16 %v9785
    %v9818 = vunpack.c.l.b16 %v9786
    %v9819 = vunpack.c.l.b16 %v9787
    %v9820 = vunpack.c.l.b16 %v9788
    %v9821 = vunpack.c.l.b16 %v9789
    %v9822 = vunpack.c.l.b16 %v9790
    %v9823 = vunpack.c.l.b16 %v9791
    %v9824 = vunpack.c.l.b16 %v9792
    %v9825 = vunpack.c.l.b16 %v9793
    %v9826 = vunpack.c.l.b16 %v9794
    %v9827 = vunpack.c.l.b16 %v9795
    %v9828 = vunpack.c.l.b16 %v9796
    %v9829 = vpack.c.b16 %v9814, %v9813
    %v9830 = vpack.c.b16 %v9816, %v9815
    %v9831 = vpack.c.b16 %v9818, %v9817
    %v9832 = vpack.c.b16 %v9820, %v9819
    %v9833 = vpack.c.b16 %v9822, %v9821
    %v9834 = vpack.c.b16 %v9824, %v9823
    %v9835 = vpack.c.b16 %v9826, %v9825
    %v9836 = vpack.c.b16 %v9828, %v9827
    %9845 = vmatpush.bf16.msra.mxu0 %v9836
    %9846 = vmatpush.bf16.msra.mxu0 %v9835
    %9847 = vmatpush.bf16.msra.mxu0 %v9834
    %9848 = vmatpush.bf16.msra.mxu0 %v9833
    %9849 = vmatpush.bf16.msra.mxu0 %v9832
    %9850 = vmatpush.bf16.msra.mxu0 %v9831
    %9851 = vmatpush.bf16.msra.mxu0 %v9830
    %9852 = vmatpush.bf16.msra.mxu0 %v9829
    %9853 = vmatmul.bf16.gmra.mxu0 %v9779
    %v9854 = vpop.f32.mrf.mxu0
    %v9855 = vadd.f32 0.0, %v9854
    %v9856 = vpop.f32.mrf.mxu0
    %v9857 = vadd.f32 0.0, %v9856
    %9858 = vmatmul.bf16.gmra.mxu0 %v9780
    %v9859 = vpop.f32.mrf.mxu0
    %v9860 = vadd.f32 0.0, %v9859
    %v9861 = vpop.f32.mrf.mxu0
    %v9862 = vadd.f32 0.0, %v9861
    %9863 = vdwg.mxu0
    %v9864 = vld [vmem:[%s10] sm:$0x1]
    %v9865 = vld [vmem:[%s10 + $0x1] sm:$0x1]
    %v9866 = vadd.f32 %v9855, %v9857
    %v9867 = vrot.slane %v9866, 4
    %v9868 = vadd.f32 %v9866, %v9867
    %v9869 = vrot.slane %v9868, 2
    %v9870 = vadd.f32 %v9868, %v9869
    %v9871 = vrot.slane %v9870, 1
    %v9872 = vadd.f32 %v9870, %v9871
    %v9873 = vadd.f32 %v9860, %v9862
    %v9874 = vrot.slane %v9873, 4
    %v9875 = vadd.f32 %v9873, %v9874
    %v9876 = vrot.slane %v9875, 2
    %v9877 = vadd.f32 %v9875, %v9876
    %v9878 = vrot.slane %v9877, 1
    %v9879 = vadd.f32 %v9877, %v9878
    %v9880 = vmul.f32 %v9872, 0.5
    %v9881 = vmul.f32 %v9879, 0.5
    %v9882 = vmul.f32 %v9855, %v9855
    %v9883 = vmul.f32 %v9857, %v9857
    %v9884 = vmul.f32 %v9860, %v9860
    %v9885 = vmul.f32 %v9862, %v9862
    %v9886 = vadd.f32 %v9882, %v9883
    %v9887 = vrot.slane %v9886, 4
    %v9888 = vadd.f32 %v9886, %v9887
    %v9889 = vrot.slane %v9888, 2
    %v9890 = vadd.f32 %v9888, %v9889
    %v9891 = vrot.slane %v9890, 1
    %v9892 = vadd.f32 %v9890, %v9891
    %v9893 = vadd.f32 %v9884, %v9885
    %v9894 = vrot.slane %v9893, 4
    %v9895 = vadd.f32 %v9893, %v9894
    %v9896 = vrot.slane %v9895, 2
    %v9897 = vadd.f32 %v9895, %v9896
    %v9898 = vrot.slane %v9897, 1
    %v9899 = vadd.f32 %v9897, %v9898
    %v9900 = vmul.f32 %v9892, 0.5
    %v9901 = vmul.f32 %v9899, 0.5
    %v9902 = vmul.f32 %v9880, %v9880
    %v9903 = vmul.f32 %v9881, %v9881
    %v9904 = vsub.f32 %v9900, %v9902
    %v9905 = vsub.f32 %v9901, %v9903
    %v9906 = vmax.f32 %v9904, 0.0
    %v9907 = vmax.f32 %v9905, 0.0
    %v9908 = vadd.f32 %v9906, 1e-05
    %v9909 = vadd.f32 %v9907, 1e-05
    %v9910 = vrsqrt.pop %v9908
    %v9911 = vmul.f32 %v9910, %v9908
    %v9912 = vmul.f32 %v9911, %v9910
    %v9913 = vmul.f32 0.5, %v9912
    %v9914 = vsub.f32 1.5, %v9913
    %v9915 = vmul.f32 %v9910, %v9914
    %vm9916 = vweird.f32 %v9908
    %vm9917 = vweird.f32 %v9910
    %vm9918 = vmor %vm9916, %vm9917
    %v9919 = vsel %vm9918, %v9910, %v9915
    %v9920 = vrsqrt.pop %v9909
    %v9921 = vmul.f32 %v9920, %v9909
    %v9922 = vmul.f32 %v9921, %v9920
    %v9923 = vmul.f32 0.5, %v9922
    %v9924 = vsub.f32 1.5, %v9923
    %v9925 = vmul.f32 %v9920, %v9924
    %vm9926 = vweird.f32 %v9909
    %vm9927 = vweird.f32 %v9920
    %vm9928 = vmor %vm9926, %vm9927
    %v9929 = vsel %vm9928, %v9920, %v9925
    %v9930 = vmul.f32 %v9864, %v9919
    %v9931 = vmul.f32 %v9864, %v9929
    %v9932 = vmul.f32 %v9880, %v9930
    %v9933 = vmul.f32 %v9881, %v9931
    %v9934 = vsub.f32 %v9865, %v9932
    %v9935 = vsub.f32 %v9865, %v9933
    %v9936 = vperm.slane %v9930, 0
    %v9937 = vperm.slane %v9931, 0
    %v9938 = vmul.f32 %v9855, %v9936
    %v9939 = vmul.f32 %v9857, %v9936
    %v9940 = vmul.f32 %v9860, %v9937
    %v9941 = vmul.f32 %v9862, %v9937
    %v9942 = vperm.slane %v9934, 0
    %v9943 = vperm.slane %v9935, 0
    %v9944 = vadd.f32 %v9938, %v9942
    %v9945 = vadd.f32 %v9939, %v9942
    %v9946 = vadd.f32 %v9940, %v9943
    %v9947 = vadd.f32 %v9941, %v9943
    %v9948 = vmax.f32 %v9944, 0.0
    %v9949 = vmax.f32 %v9945, 0.0
    %v9950 = vmax.f32 %v9946, 0.0
    %v9951 = vmax.f32 %v9947, 0.0
    %v9952 = vmul.f32 %v9948, %v52
    %v9953 = vmul.f32 %v9949, %v53
    %v9954 = vmul.f32 %v9950, %v52
    %v9955 = vmul.f32 %v9951, %v53
    %v9956 = vpack.c.bf16 %v9953, %v9952
    %v9957 = vpack.c.bf16 %v9955, %v9954
    %v9958 = vld [vmem:[%s11] sm:$0xf]
    %v9959 = vld [vmem:[%s11 + $0x4] sm:$0xf]
    %v9960 = vld [vmem:[%s11 + $0x8] sm:$0xf]
    %v9961 = vld [vmem:[%s11 + $0xc] sm:$0xf]
    %v9962 = vld [vmem:[%s11 + $0x10] sm:$0xf]
    %v9963 = vld [vmem:[%s11 + $0x14] sm:$0xf]
    %v9964 = vld [vmem:[%s11 + $0x18] sm:$0xf]
    %v9965 = vld [vmem:[%s11 + $0x1c] sm:$0xf]
    %v9966 = vld [vmem:[%s11 + $0x20] sm:$0xf]
    %v9967 = vld [vmem:[%s11 + $0x24] sm:$0xf]
    %v9968 = vld [vmem:[%s11 + $0x28] sm:$0xf]
    %v9969 = vld [vmem:[%s11 + $0x2c] sm:$0xf]
    %v9970 = vld [vmem:[%s11 + $0x30] sm:$0xf]
    %v9971 = vld [vmem:[%s11 + $0x34] sm:$0xf]
    %v9972 = vld [vmem:[%s11 + $0x38] sm:$0xf]
    %v9973 = vld [vmem:[%s11 + $0x3c] sm:$0xf]
    %v9990 = vunpack.c.l.b16 %v9958
    %v9991 = vunpack.c.l.b16 %v9959
    %v9992 = vunpack.c.l.b16 %v9960
    %v9993 = vunpack.c.l.b16 %v9961
    %v9994 = vunpack.c.l.b16 %v9962
    %v9995 = vunpack.c.l.b16 %v9963
    %v9996 = vunpack.c.l.b16 %v9964
    %v9997 = vunpack.c.l.b16 %v9965
    %v9998 = vunpack.c.l.b16 %v9966
    %v9999 = vunpack.c.l.b16 %v9967
    %v10000 = vunpack.c.l.b16 %v9968
    %v10001 = vunpack.c.l.b16 %v9969
    %v10002 = vunpack.c.l.b16 %v9970
    %v10003 = vunpack.c.l.b16 %v9971
    %v10004 = vunpack.c.l.b16 %v9972
    %v10005 = vunpack.c.l.b16 %v9973
    %v10006 = vpack.c.b16 %v9991, %v9990
    %v10007 = vpack.c.b16 %v9993, %v9992
    %v10008 = vpack.c.b16 %v9995, %v9994
    %v10009 = vpack.c.b16 %v9997, %v9996
    %v10010 = vpack.c.b16 %v9999, %v9998
    %v10011 = vpack.c.b16 %v10001, %v10000
    %v10012 = vpack.c.b16 %v10003, %v10002
    %v10013 = vpack.c.b16 %v10005, %v10004
    %10022 = vmatpush.bf16.msra.mxu0 %v10013
    %10023 = vmatpush.bf16.msra.mxu0 %v10012
    %10024 = vmatpush.bf16.msra.mxu0 %v10011
    %10025 = vmatpush.bf16.msra.mxu0 %v10010
    %10026 = vmatpush.bf16.msra.mxu0 %v10009
    %10027 = vmatpush.bf16.msra.mxu0 %v10008
    %10028 = vmatpush.bf16.msra.mxu0 %v10007
    %10029 = vmatpush.bf16.msra.mxu0 %v10006
    %10030 = vmatmul.bf16.gmra.mxu0 %v9956
    %v10031 = vpop.f32.mrf.mxu0
    %v10032 = vadd.f32 0.0, %v10031
    %v10033 = vpop.f32.mrf.mxu0
    %v10034 = vadd.f32 0.0, %v10033
    %10035 = vmatmul.bf16.gmra.mxu0 %v9957
    %v10036 = vpop.f32.mrf.mxu0
    %v10037 = vadd.f32 0.0, %v10036
    %v10038 = vpop.f32.mrf.mxu0
    %v10039 = vadd.f32 0.0, %v10038
    %10040 = vdwg.mxu0
    %v10041 = vld [vmem:[%s12] sm:$0x1]
    %v10042 = vperm.slane %v10041, 0
    %v10043 = vadd.f32 %v10032, %v10042
    %v10044 = vadd.f32 %v10034, %v10042
    %v10045 = vadd.f32 %v10037, %v10042
    %v10046 = vadd.f32 %v10039, %v10042
    %v10047 = vmul.f32 %v10043, %v9777
    %v10048 = vmul.f32 %v10044, %v9778
    %10049 = vadd.xlane.f32.xlu0 %v10047
    %v10050 = vpop.xlane.xlu0 %10049
    %10051 = vadd.xlane.f32.xlu0 %v10048
    %v10052 = vpop.xlane.xlu0 %10051
    %v10053 = vmul.f32 %v10043, %v10043
    %v10054 = vmul.f32 %v10044, %v10044
    %10055 = vadd.xlane.f32.xlu0 %v10053
    %v10056 = vpop.xlane.xlu0 %10055
    %10057 = vadd.xlane.f32.xlu0 %v10054
    %v10058 = vpop.xlane.xlu0 %10057
    %v10059 = vmul.f32 %v9777, %v9777
    %v10060 = vmul.f32 %v9778, %v9778
    %10061 = vadd.xlane.f32.xlu0 %v10059
    %v10062 = vpop.xlane.xlu0 %10061
    %10063 = vadd.xlane.f32.xlu0 %v10060
    %v10064 = vpop.xlane.xlu0 %10063
    %v10065 = vmax.f32 %v10056, 1e-16
    %v10066 = vmax.f32 %v10058, 1e-16
    %v10067 = vrsqrt.pop %v10065
    %v10068 = vmul.f32 %v10067, %v10065
    %v10069 = vmul.f32 %v10068, %v10067
    %v10070 = vmul.f32 0.5, %v10069
    %v10071 = vsub.f32 1.5, %v10070
    %v10072 = vmul.f32 %v10067, %v10071
    %vm10073 = vweird.f32 %v10065
    %vm10074 = vweird.f32 %v10067
    %vm10075 = vmor %vm10073, %vm10074
    %v10076 = vsel %vm10075, %v10067, %v10072
    %v10077 = vrsqrt.pop %v10066
    %v10078 = vmul.f32 %v10077, %v10066
    %v10079 = vmul.f32 %v10078, %v10077
    %v10080 = vmul.f32 0.5, %v10079
    %v10081 = vsub.f32 1.5, %v10080
    %v10082 = vmul.f32 %v10077, %v10081
    %vm10083 = vweird.f32 %v10066
    %vm10084 = vweird.f32 %v10077
    %vm10085 = vmor %vm10083, %vm10084
    %v10086 = vsel %vm10085, %v10077, %v10082
    %v10087 = vmax.f32 %v10062, 1e-16
    %v10088 = vmax.f32 %v10064, 1e-16
    %v10089 = vrsqrt.pop %v10087
    %v10090 = vmul.f32 %v10089, %v10087
    %v10091 = vmul.f32 %v10090, %v10089
    %v10092 = vmul.f32 0.5, %v10091
    %v10093 = vsub.f32 1.5, %v10092
    %v10094 = vmul.f32 %v10089, %v10093
    %vm10095 = vweird.f32 %v10087
    %vm10096 = vweird.f32 %v10089
    %vm10097 = vmor %vm10095, %vm10096
    %v10098 = vsel %vm10097, %v10089, %v10094
    %v10099 = vrsqrt.pop %v10088
    %v10100 = vmul.f32 %v10099, %v10088
    %v10101 = vmul.f32 %v10100, %v10099
    %v10102 = vmul.f32 0.5, %v10101
    %v10103 = vsub.f32 1.5, %v10102
    %v10104 = vmul.f32 %v10099, %v10103
    %vm10105 = vweird.f32 %v10088
    %vm10106 = vweird.f32 %v10099
    %vm10107 = vmor %vm10105, %vm10106
    %v10108 = vsel %vm10107, %v10099, %v10104
    %v10109 = vmul.f32 %v10076, %v10098
    %v10110 = vmul.f32 %v10086, %v10108
    %v10111 = vmul.f32 %v10050, %v10109
    %v10112 = vmul.f32 %v10052, %v10110
    %v10113 = vmul.f32 %v10045, %v9775
    %v10114 = vmul.f32 %v10046, %v9776
    %10115 = vadd.xlane.f32.xlu0 %v10113
    %v10116 = vpop.xlane.xlu0 %10115
    %10117 = vadd.xlane.f32.xlu0 %v10114
    %v10118 = vpop.xlane.xlu0 %10117
    %v10119 = vmul.f32 %v10045, %v10045
    %v10120 = vmul.f32 %v10046, %v10046
    %10121 = vadd.xlane.f32.xlu0 %v10119
    %v10122 = vpop.xlane.xlu0 %10121
    %10123 = vadd.xlane.f32.xlu0 %v10120
    %v10124 = vpop.xlane.xlu0 %10123
    %v10125 = vmul.f32 %v9775, %v9775
    %v10126 = vmul.f32 %v9776, %v9776
    %10127 = vadd.xlane.f32.xlu0 %v10125
    %v10128 = vpop.xlane.xlu0 %10127
    %10129 = vadd.xlane.f32.xlu0 %v10126
    %v10130 = vpop.xlane.xlu0 %10129
    %v10131 = vmax.f32 %v10122, 1e-16
    %v10132 = vmax.f32 %v10124, 1e-16
    %v10133 = vrsqrt.pop %v10131
    %v10134 = vmul.f32 %v10133, %v10131
    %v10135 = vmul.f32 %v10134, %v10133
    %v10136 = vmul.f32 0.5, %v10135
    %v10137 = vsub.f32 1.5, %v10136
    %v10138 = vmul.f32 %v10133, %v10137
    %vm10139 = vweird.f32 %v10131
    %vm10140 = vweird.f32 %v10133
    %vm10141 = vmor %vm10139, %vm10140
    %v10142 = vsel %vm10141, %v10133, %v10138
    %v10143 = vrsqrt.pop %v10132
    %v10144 = vmul.f32 %v10143, %v10132
    %v10145 = vmul.f32 %v10144, %v10143
    %v10146 = vmul.f32 0.5, %v10145
    %v10147 = vsub.f32 1.5, %v10146
    %v10148 = vmul.f32 %v10143, %v10147
    %vm10149 = vweird.f32 %v10132
    %vm10150 = vweird.f32 %v10143
    %vm10151 = vmor %vm10149, %vm10150
    %v10152 = vsel %vm10151, %v10143, %v10148
    %v10153 = vmax.f32 %v10128, 1e-16
    %v10154 = vmax.f32 %v10130, 1e-16
    %v10155 = vrsqrt.pop %v10153
    %v10156 = vmul.f32 %v10155, %v10153
    %v10157 = vmul.f32 %v10156, %v10155
    %v10158 = vmul.f32 0.5, %v10157
    %v10159 = vsub.f32 1.5, %v10158
    %v10160 = vmul.f32 %v10155, %v10159
    %vm10161 = vweird.f32 %v10153
    %vm10162 = vweird.f32 %v10155
    %vm10163 = vmor %vm10161, %vm10162
    %v10164 = vsel %vm10163, %v10155, %v10160
    %v10165 = vrsqrt.pop %v10154
    %v10166 = vmul.f32 %v10165, %v10154
    %v10167 = vmul.f32 %v10166, %v10165
    %v10168 = vmul.f32 0.5, %v10167
    %v10169 = vsub.f32 1.5, %v10168
    %v10170 = vmul.f32 %v10165, %v10169
    %vm10171 = vweird.f32 %v10154
    %vm10172 = vweird.f32 %v10165
    %vm10173 = vmor %vm10171, %vm10172
    %v10174 = vsel %vm10173, %v10165, %v10170
    %v10175 = vmul.f32 %v10142, %v10164
    %v10176 = vmul.f32 %v10152, %v10174
    %v10177 = vmul.f32 %v10116, %v10175
    %v10178 = vmul.f32 %v10118, %v10176
    %v10179 = vadd.f32 %v10111, %v10177
    %v10180 = vadd.f32 %v10112, %v10178
    %v10181 = vadd.f32 %v10179, %v10180
    %v10182 = vrot.slane %v10181, 4
    %v10183 = vadd.f32 %v10181, %v10182
    %v10184 = vrot.slane %v10183, 2
    %v10185 = vadd.f32 %v10183, %v10184
    %v10186 = vrot.slane %v10185, 1
    %v10187 = vadd.f32 %v10185, %v10186
    %v10188 = vmul.f32 %v10187, 0.25
    %v10189 = vsub.f32 1.0, %v10188
    %vm10190 = vcmask 0
    %10191 = vst.msk [vmem:[#allocation2] sm:$0x1] %vm10190, %v10189
    // Predicated region
    $region54: #{simsiam_forward.1} parent=1 // pred_check
      _
    $region55: #{simsiam_forward.1} parent=1 // pred_check_branch
      %10193 = sbr.rel (0) target = $region57
    $region56: #{simsiam_forward.1} parent=1 // pred_region
      %10195 = vsyncadd [#allocation3], 0
      %s10197 = sshll.u32 [#allocation2], 4
      %s10198 = int_to_ptr.vmem [resolvable:$true] %s10197
      %s10199 = sshll.u32 %s13, 4
      %s10200 = int_to_ptr.hbm [resolvable:$true] %s10199
      %10202 = dma.vmem_to_hbm [thread:$0]  %s10198, 16, %s10200, [#allocation3]
    $region57: #{simsiam_forward.1} parent=1 // pred_fallthru
      _
    // Predicated region
    $region58: #{simsiam_forward.1} parent=1 // pred_check
      _
    $region59: #{simsiam_forward.1} parent=1 // pred_check_branch
      %10204 = sbr.rel (0) target = $region61
    $region60: #{simsiam_forward.1} parent=1 // pred_region
      %10206 = dma.done [#allocation3], 16
    $region61: #{simsiam_forward.1} parent=1 // pred_fallthru
      _
    %10207 = vsyncpa [#allocation3], 1

</llo_original>
